<compile_context>
chip_gen: v7x
topology: tpu7x:2x2x1
jax: 0.10.0
libtpu: 0.0.40
codegen_flags: <defaults>
</compile_context>

<pallas_src>
import jax
import jax.numpy as jnp
from jax.experimental import pallas as pl
from jax.experimental.pallas import tpu as pltpu


def _round_up(x, m):
    return (x + m - 1) // m * m


# ----------------------------------------------------------------------------
# Kernel: fused encoder -> reparameterize -> decoder for one batch tile.
# ----------------------------------------------------------------------------
def _vae_kernel(
    x_ref, eps_ref,
    w1_ref, b1_ref, w2_ref, b2_ref,
    wml_ref, bml_ref,                      # fused [fc_mu | fc_logvar]
    w3_ref, b3_ref, w4_ref, b4_ref, w5_ref, b5_ref,
    recon_ref, ml_ref,
):
    cdt = w1_ref.dtype                     # MXU operand dtype (bf16 or f32)
    f32 = jnp.float32

    def dense(a, w_ref, b_ref, relu):
        # bf16 (or f32) operands, f32 accumulation, f32 bias add / relu.
        y = jnp.dot(a.astype(cdt), w_ref[...], preferred_element_type=f32) + b_ref[...]
        return jnp.maximum(y, 0.0) if relu else y

    x = x_ref[...]

    # ---- encode ----
    h = dense(x, w1_ref, b1_ref, relu=True)        # (tile, 1024)
    h = dense(h, w2_ref, b2_ref, relu=True)        # (tile, 512)
    ml = dense(h, wml_ref, bml_ref, relu=False)    # (tile, 2*latent_pad) = [mu | logvar]

    lp = ml.shape[-1] // 2                         # lane-aligned (multiple of 128)
    mu = ml[:, :lp]
    logvar = ml[:, lp:]

    # ---- reparameterize (elementwise in f32; exp goes to the EUP slot) ----
    std = jnp.exp(logvar * 0.5)
    z = mu + eps_ref[...] * std

    # ---- decode ----
    d = dense(z, w3_ref, b3_ref, relu=True)        # (tile, 512)
    d = dense(d, w4_ref, b4_ref, relu=True)        # (tile, 1024)
    logits = dense(d, w5_ref, b5_ref, relu=False)  # (tile, input_dim)

    recon_ref[...] = jax.nn.sigmoid(logits).astype(recon_ref.dtype)
    ml_ref[...] = ml


# ----------------------------------------------------------------------------
# Wrapper
# ----------------------------------------------------------------------------
def molecular_vae_forward(x, eps, params, *, batch_tile=None,
                          compute_dtype=jnp.bfloat16,
                          recon_dtype=jnp.float32):
    """Fused Pallas forward.

    x:   (B, input_dim) float32
    eps: (B, latent_dim) float32  -- the torch.randn_like noise
    params: (w1,b1,w2,b2,wmu,bmu,wlv,blv,w3,b3,w4,b4,w5,b5), W=(in,out), b=(1,out)

    batch_tile:    None -> 256 when B >= 512 (fills v6e/v7x 2x256x256 MXU),
                   else 128 (v5e-matched, keeps >= 2 grid steps on v7x for
                   typical batches).
    compute_dtype: bf16 (default) -> native MXU rate + halved weight VMEM;
                   pass jnp.float32 for exact parity with the reference.
    recon_dtype:   dtype of the reconstruction output (bf16 halves the largest
                   per-step HBM write if the downstream loss tolerates it).
    """
    B, input_dim = x.shape
    latent_dim = eps.shape[1]
    (w1, b1, w2, b2, wmu, bmu, wlv, blv, w3, b3, w4, b4, w5, b5) = params
    h1, h2 = w1.shape[1], w2.shape[1]
    f32 = jnp.float32

    if batch_tile is None:
        batch_tile = 256 if B >= 512 else 128

    # --- fuse fc_mu / fc_logvar into one lane-padded matmul ---------------------
    lp = _round_up(latent_dim, 128)                  # lane-pad latent -> no masked stores
    if lp == latent_dim:
        wml = jnp.concatenate([wmu, wlv], axis=1)
        bml = jnp.concatenate([bmu, blv], axis=1)
        w3p = w3
        epsp = eps
    else:
        wml = jnp.zeros((h2, 2 * lp), f32)
        wml = wml.at[:, :latent_dim].set(wmu).at[:, lp:lp + latent_dim].set(wlv)
        bml = jnp.zeros((1, 2 * lp), f32)
        bml = bml.at[:, :latent_dim].set(bmu).at[:, lp:lp + latent_dim].set(blv)
        w3p = jnp.zeros((lp, h2), f32).at[:latent_dim, :].set(w3)   # zero rows: exact
        epsp = jnp.zeros((B, lp), f32).at[:, :latent_dim].set(eps)

    # --- cast weight matrices (not biases) to the MXU compute dtype -------------
    cdt = compute_dtype
    weights = (w1.astype(cdt), b1, w2.astype(cdt), b2,
               wml.astype(cdt), bml, w3p.astype(cdt), b3,
               w4.astype(cdt), b4, w5.astype(cdt), b5)

    # --- block specs (no batch pad: cdiv grid + masked edge block) --------------
    n_steps = pl.cdiv(B, batch_tile)

    def streamed(feat):                      # batch-tiled, default double-buffered
        return pl.BlockSpec((batch_tile, feat), lambda i: (i, 0))

    def resident(arr):                       # constant across grid: single buffer
        return pl.BlockSpec(arr.shape, lambda i: (0, 0),
                            pipeline_mode=pl.Buffered(1))

    in_specs = [streamed(input_dim), streamed(lp)] + [resident(w) for w in weights]
    out_specs = [streamed(input_dim), streamed(2 * lp)]
    out_shape = [jax.ShapeDtypeStruct((B, input_dim), recon_dtype),
                 jax.ShapeDtypeStruct((B, 2 * lp), f32)]

    # --- right-sized VMEM limit, capped for v7x's 64 MiB/TC ---------------------
    wbytes = sum(int(w.size) * w.dtype.itemsize for w in weights)   # single-buffered
    io_per_step = batch_tile * (input_dim * 4                       # x in (f32)
                                + lp * 4                            # eps in (f32)
                                + input_dim * jnp.dtype(recon_dtype).itemsize
                                + 2 * lp * 4)                       # ml out (f32)
    iobytes = 2 * io_per_step                                       # double-buffered streams
    actbytes = 4 * batch_tile * (h1 + h2 + 2 * lp + h2 + h1 + input_dim)
    vmem_limit = min(int(1.5 * (wbytes + iobytes + actbytes)) + (8 << 20), 48 << 20)

    recon, ml_p = pl.pallas_call(
        _vae_kernel,
        out_shape=out_shape,
        grid_spec=pltpu.PrefetchScalarGridSpec(
            num_scalar_prefetch=0,
            grid=(n_steps,),
            in_specs=in_specs,
            out_specs=out_specs,
        ),
        compiler_params=pltpu.CompilerParams(
            dimension_semantics=("parallel",),       # batch tiles are independent
            vmem_limit_bytes=vmem_limit,
        ),
    )(x, epsp, *weights)

    mu = ml_p[:, :latent_dim]
    logvar = ml_p[:, lp:lp + latent_dim]
    return recon, mu, logvar


# ----------------------------------------------------------------------------
# Deterministic parameter init (PyTorch Linear-style uniform(-1/sqrt(fan_in)))
# ----------------------------------------------------------------------------
def init_params(key, input_dim, latent_dim, h1=1024, h2=512):
    dims = [
        (input_dim, h1),   # fc1
        (h1, h2),          # fc2
        (h2, latent_dim),  # fc_mu
        (h2, latent_dim),  # fc_logvar
        (latent_dim, h2),  # fc3
        (h2, h1),          # fc4
        (h1, input_dim),   # fc5
    ]
    params = []
    for (fan_in, fan_out) in dims:
        key, kw, kb = jax.random.split(key, 3)
        bound = 1.0 / jnp.sqrt(fan_in)
        W = jax.random.uniform(kw, (fan_in, fan_out), jnp.float32, -bound, bound)
        b = jax.random.uniform(kb, (1, fan_out), jnp.float32, -bound, bound)
        params += [W, b]
    return tuple(params)


# ----------------------------------------------------------------------------
# Pure-JAX reference (mirrors the PyTorch forward)
# ----------------------------------------------------------------------------
def reference_forward(x, eps, params):
    (w1, b1, w2, b2, wmu, bmu, wlv, blv, w3, b3, w4, b4, w5, b5) = params
    h = jax.nn.relu(x @ w1 + b1)
    h = jax.nn.relu(h @ w2 + b2)
    mu = h @ wmu + bmu
    logvar = h @ wlv + blv
    z = mu + eps * jnp.exp(0.5 * logvar)
    d = jax.nn.relu(z @ w3 + b3)
    d = jax.nn.relu(d @ w4 + b4)
    return jax.nn.sigmoid(d @ w5 + b5), mu, logvar


if __name__ == "__main__":
    # Small shapes consistent with the module (hidden 1024/512 are hardcoded by
    # the module; input_dim / latent_dim kept small for the test).  B=200 is
    # deliberately not a multiple of the tile so the masked edge-block path and
    # a multi-step ("parallel") grid are both exercised.
    B, INPUT_DIM, LATENT_DIM = 200, 256, 32

    key = jax.random.PRNGKey(0)
    kx, keps, kparams = jax.random.split(key, 3)

    x = jax.random.uniform(kx, (B, INPUT_DIM), jnp.float32)      # fingerprint-like input
    eps = jax.random.normal(keps, (B, LATENT_DIM), jnp.float32)  # torch.randn_like(std)
    params = init_params(kparams, INPUT_DIM, LATENT_DIM)

    recon_ref, mu_ref, logvar_ref = reference_forward(x, eps, params)

    # Default path (bf16 MXU operands, f32 elementwise): relaxed tolerance.
    recon_bf, mu_bf, logvar_bf = jax.block_until_ready(
        molecular_vae_forward(x, eps, params))
    assert recon_bf.shape == (B, INPUT_DIM) and mu_bf.shape == (B, LATENT_DIM)
    assert logvar_bf.shape == (B, LATENT_DIM)
    assert jnp.allclose(recon_bf, recon_ref, atol=5e-2, rtol=5e-2)
    assert jnp.allclose(mu_bf, mu_ref, atol=5e-2, rtol=5e-2)
    assert jnp.allclose(logvar_bf, logvar_ref, atol=5e-2, rtol=5e-2)

    # f32 path: exact parity with the reference.
    recon, mu, logvar = jax.block_until_ready(
        molecular_vae_forward(x, eps, params, compute_dtype=jnp.float32))
    assert jnp.allclose(recon, recon_ref, atol=1e-5, rtol=1e-5)
    assert jnp.allclose(mu, mu_ref, atol=1e-5, rtol=1e-5)
    assert jnp.allclose(logvar, logvar_ref, atol=1e-5, rtol=1e-5)

    print("KERNEL_OK")
</pallas_src>

<mosaic_0001>
module attributes {stable_mosaic.version = 11 : i64} {
  func.func @_vae_kernel(%arg0: i32, %arg1: memref<128x256xf32, #tpu.memory_space<vmem>>, %arg2: memref<128x128xf32, #tpu.memory_space<vmem>>, %arg3: memref<256x1024xbf16, #tpu.memory_space<vmem>>, %arg4: memref<1x1024xf32, #tpu.memory_space<vmem>>, %arg5: memref<1024x512xbf16, #tpu.memory_space<vmem>>, %arg6: memref<1x512xf32, #tpu.memory_space<vmem>>, %arg7: memref<512x256xbf16, #tpu.memory_space<vmem>>, %arg8: memref<1x256xf32, #tpu.memory_space<vmem>>, %arg9: memref<128x512xbf16, #tpu.memory_space<vmem>>, %arg10: memref<1x512xf32, #tpu.memory_space<vmem>>, %arg11: memref<512x1024xbf16, #tpu.memory_space<vmem>>, %arg12: memref<1x1024xf32, #tpu.memory_space<vmem>>, %arg13: memref<1024x256xbf16, #tpu.memory_space<vmem>>, %arg14: memref<1x256xf32, #tpu.memory_space<vmem>>, %arg15: memref<128x256xf32, #tpu.memory_space<vmem>>, %arg16: memref<128x256xf32, #tpu.memory_space<vmem>>) attributes {dimension_semantics = [#tpu.dimension_semantics<parallel>], iteration_bounds = array<i64: 2>, scalar_prefetch = 0 : i64, scratch_operands = 0 : i64, tpu.core_type = #tpu.core_type<tc>, window_params = [{transform_indices = @transform_0, window_bounds = array<i64: 128, 256>}, {transform_indices = @transform_1, window_bounds = array<i64: 128, 128>}, {pipeline_mode = #tpu.pipeline_mode<synchronous>, transform_indices = @transform_2, window_bounds = array<i64: 256, 1024>}, {pipeline_mode = #tpu.pipeline_mode<synchronous>, transform_indices = @transform_3, window_bounds = array<i64: 1, 1024>}, {pipeline_mode = #tpu.pipeline_mode<synchronous>, transform_indices = @transform_4, window_bounds = array<i64: 1024, 512>}, {pipeline_mode = #tpu.pipeline_mode<synchronous>, transform_indices = @transform_5, window_bounds = array<i64: 1, 512>}, {pipeline_mode = #tpu.pipeline_mode<synchronous>, transform_indices = @transform_6, window_bounds = array<i64: 512, 256>}, {pipeline_mode = #tpu.pipeline_mode<synchronous>, transform_indices = @transform_7, window_bounds = array<i64: 1, 256>}, {pipeline_mode = #tpu.pipeline_mode<synchronous>, transform_indices = @transform_8, window_bounds = array<i64: 128, 512>}, {pipeline_mode = #tpu.pipeline_mode<synchronous>, transform_indices = @transform_9, window_bounds = array<i64: 1, 512>}, {pipeline_mode = #tpu.pipeline_mode<synchronous>, transform_indices = @transform_10, window_bounds = array<i64: 512, 1024>}, {pipeline_mode = #tpu.pipeline_mode<synchronous>, transform_indices = @transform_11, window_bounds = array<i64: 1, 1024>}, {pipeline_mode = #tpu.pipeline_mode<synchronous>, transform_indices = @transform_12, window_bounds = array<i64: 1024, 256>}, {pipeline_mode = #tpu.pipeline_mode<synchronous>, transform_indices = @transform_13, window_bounds = array<i64: 1, 256>}, {transform_indices = @transform_14, window_bounds = array<i64: 128, 256>}, {transform_indices = @transform_15, window_bounds = array<i64: 128, 256>}]} {
    %c0 = arith.constant 0 : index
    %c0_0 = arith.constant 0 : index
    %0 = vector.load %arg1[%c0, %c0_0] : memref<128x256xf32, #tpu.memory_space<vmem>>, vector<128x256xf32>
    %1 = arith.truncf %0 : vector<128x256xf32> to vector<128x256xbf16>
    %c0_1 = arith.constant 0 : index
    %c0_2 = arith.constant 0 : index
    %2 = vector.load %arg3[%c0_1, %c0_2] : memref<256x1024xbf16, #tpu.memory_space<vmem>>, vector<256x1024xbf16>
    %cst = arith.constant dense<0.000000e+00> : vector<128x1024xf32>
    %3 = tpu.matmul %1, %2, %cst {dimension_numbers = #tpu.dot_dimension_numbers<[1], [0], [0], [1], [0, 0, 1, 1], [], []>} : vector<128x256xbf16>, vector<256x1024xbf16>, vector<128x1024xf32> -> vector<128x1024xf32>
    %c0_3 = arith.constant 0 : index
    %c0_4 = arith.constant 0 : index
    %4 = vector.load %arg4[%c0_3, %c0_4] : memref<1x1024xf32, #tpu.memory_space<vmem>>, vector<1x1024xf32>
    %5 = vector.broadcast %4 : vector<1x1024xf32> to vector<128x1024xf32>
    %6 = arith.addf %3, %5 : vector<128x1024xf32>
    %cst_5 = arith.constant 0.000000e+00 : f32
    %7 = vector.broadcast %cst_5 : f32 to vector<128x1024xf32>
    %8 = arith.maximumf %6, %7 : vector<128x1024xf32>
    %9 = arith.truncf %8 : vector<128x1024xf32> to vector<128x1024xbf16>
    %c0_6 = arith.constant 0 : index
    %c0_7 = arith.constant 0 : index
    %10 = vector.load %arg5[%c0_6, %c0_7] : memref<1024x512xbf16, #tpu.memory_space<vmem>>, vector<1024x512xbf16>
    %cst_8 = arith.constant dense<0.000000e+00> : vector<128x512xf32>
    %11 = tpu.matmul %9, %10, %cst_8 {dimension_numbers = #tpu.dot_dimension_numbers<[1], [0], [0], [1], [0, 0, 1, 1], [], []>} : vector<128x1024xbf16>, vector<1024x512xbf16>, vector<128x512xf32> -> vector<128x512xf32>
    %c0_9 = arith.constant 0 : index
    %c0_10 = arith.constant 0 : index
    %12 = vector.load %arg6[%c0_9, %c0_10] : memref<1x512xf32, #tpu.memory_space<vmem>>, vector<1x512xf32>
    %13 = vector.broadcast %12 : vector<1x512xf32> to vector<128x512xf32>
    %14 = arith.addf %11, %13 : vector<128x512xf32>
    %cst_11 = arith.constant 0.000000e+00 : f32
    %15 = vector.broadcast %cst_11 : f32 to vector<128x512xf32>
    %16 = arith.maximumf %14, %15 : vector<128x512xf32>
    %17 = arith.truncf %16 : vector<128x512xf32> to vector<128x512xbf16>
    %c0_12 = arith.constant 0 : index
    %c0_13 = arith.constant 0 : index
    %18 = vector.load %arg7[%c0_12, %c0_13] : memref<512x256xbf16, #tpu.memory_space<vmem>>, vector<512x256xbf16>
    %cst_14 = arith.constant dense<0.000000e+00> : vector<128x256xf32>
    %19 = tpu.matmul %17, %18, %cst_14 {dimension_numbers = #tpu.dot_dimension_numbers<[1], [0], [0], [1], [0, 0, 1, 1], [], []>} : vector<128x512xbf16>, vector<512x256xbf16>, vector<128x256xf32> -> vector<128x256xf32>
    %c0_15 = arith.constant 0 : index
    %c0_16 = arith.constant 0 : index
    %20 = vector.load %arg8[%c0_15, %c0_16] : memref<1x256xf32, #tpu.memory_space<vmem>>, vector<1x256xf32>
    %21 = vector.broadcast %20 : vector<1x256xf32> to vector<128x256xf32>
    %22 = arith.addf %19, %21 : vector<128x256xf32>
    %23 = vector.extract_strided_slice %22 {offsets = [0, 0], sizes = [128, 128], strides = [1, 1]} : vector<128x256xf32> to vector<128x128xf32>
    %24 = vector.extract_strided_slice %22 {offsets = [0, 128], sizes = [128, 128], strides = [1, 1]} : vector<128x256xf32> to vector<128x128xf32>
    %cst_17 = arith.constant 5.000000e-01 : f32
    %25 = vector.broadcast %cst_17 : f32 to vector<128x128xf32>
    %26 = arith.mulf %24, %25 : vector<128x128xf32>
    %27 = math.exp %26 : vector<128x128xf32>
    %c0_18 = arith.constant 0 : index
    %c0_19 = arith.constant 0 : index
    %28 = vector.load %arg2[%c0_18, %c0_19] : memref<128x128xf32, #tpu.memory_space<vmem>>, vector<128x128xf32>
    %29 = arith.mulf %28, %27 : vector<128x128xf32>
    %30 = arith.addf %23, %29 : vector<128x128xf32>
    %31 = arith.truncf %30 : vector<128x128xf32> to vector<128x128xbf16>
    %c0_20 = arith.constant 0 : index
    %c0_21 = arith.constant 0 : index
    %32 = vector.load %arg9[%c0_20, %c0_21] : memref<128x512xbf16, #tpu.memory_space<vmem>>, vector<128x512xbf16>
    %cst_22 = arith.constant dense<0.000000e+00> : vector<128x512xf32>
    %33 = tpu.matmul %31, %32, %cst_22 {dimension_numbers = #tpu.dot_dimension_numbers<[1], [0], [0], [1], [0, 0, 1, 1], [], []>} : vector<128x128xbf16>, vector<128x512xbf16>, vector<128x512xf32> -> vector<128x512xf32>
    %c0_23 = arith.constant 0 : index
    %c0_24 = arith.constant 0 : index
    %34 = vector.load %arg10[%c0_23, %c0_24] : memref<1x512xf32, #tpu.memory_space<vmem>>, vector<1x512xf32>
    %35 = vector.broadcast %34 : vector<1x512xf32> to vector<128x512xf32>
    %36 = arith.addf %33, %35 : vector<128x512xf32>
    %cst_25 = arith.constant 0.000000e+00 : f32
    %37 = vector.broadcast %cst_25 : f32 to vector<128x512xf32>
    %38 = arith.maximumf %36, %37 : vector<128x512xf32>
    %39 = arith.truncf %38 : vector<128x512xf32> to vector<128x512xbf16>
    %c0_26 = arith.constant 0 : index
    %c0_27 = arith.constant 0 : index
    %40 = vector.load %arg11[%c0_26, %c0_27] : memref<512x1024xbf16, #tpu.memory_space<vmem>>, vector<512x1024xbf16>
    %cst_28 = arith.constant dense<0.000000e+00> : vector<128x1024xf32>
    %41 = tpu.matmul %39, %40, %cst_28 {dimension_numbers = #tpu.dot_dimension_numbers<[1], [0], [0], [1], [0, 0, 1, 1], [], []>} : vector<128x512xbf16>, vector<512x1024xbf16>, vector<128x1024xf32> -> vector<128x1024xf32>
    %c0_29 = arith.constant 0 : index
    %c0_30 = arith.constant 0 : index
    %42 = vector.load %arg12[%c0_29, %c0_30] : memref<1x1024xf32, #tpu.memory_space<vmem>>, vector<1x1024xf32>
    %43 = vector.broadcast %42 : vector<1x1024xf32> to vector<128x1024xf32>
    %44 = arith.addf %41, %43 : vector<128x1024xf32>
    %cst_31 = arith.constant 0.000000e+00 : f32
    %45 = vector.broadcast %cst_31 : f32 to vector<128x1024xf32>
    %46 = arith.maximumf %44, %45 : vector<128x1024xf32>
    %47 = arith.truncf %46 : vector<128x1024xf32> to vector<128x1024xbf16>
    %c0_32 = arith.constant 0 : index
    %c0_33 = arith.constant 0 : index
    %48 = vector.load %arg13[%c0_32, %c0_33] : memref<1024x256xbf16, #tpu.memory_space<vmem>>, vector<1024x256xbf16>
    %cst_34 = arith.constant dense<0.000000e+00> : vector<128x256xf32>
    %49 = tpu.matmul %47, %48, %cst_34 {dimension_numbers = #tpu.dot_dimension_numbers<[1], [0], [0], [1], [0, 0, 1, 1], [], []>} : vector<128x1024xbf16>, vector<1024x256xbf16>, vector<128x256xf32> -> vector<128x256xf32>
    %c0_35 = arith.constant 0 : index
    %c0_36 = arith.constant 0 : index
    %50 = vector.load %arg14[%c0_35, %c0_36] : memref<1x256xf32, #tpu.memory_space<vmem>>, vector<1x256xf32>
    %51 = vector.broadcast %50 : vector<1x256xf32> to vector<128x256xf32>
    %52 = arith.addf %49, %51 : vector<128x256xf32>
    %53 = arith.negf %52 : vector<128x256xf32>
    %54 = math.exp %53 : vector<128x256xf32>
    %cst_37 = arith.constant 1.000000e+00 : f32
    %55 = vector.broadcast %cst_37 : f32 to vector<128x256xf32>
    %56 = arith.addf %55, %54 : vector<128x256xf32>
    %57 = arith.divf %55, %56 : vector<128x256xf32>
    %c0_38 = arith.constant 0 : index
    %c0_39 = arith.constant 0 : index
    %58 = vector.load %arg15[%c0_38, %c0_39] : memref<128x256xf32, #tpu.memory_space<vmem>>, vector<128x256xf32>
    tpu.vector_store %arg15[%c0_38, %c0_39], %57 {strides = array<i32>} : memref<128x256xf32, #tpu.memory_space<vmem>>, vector<128x256xf32>,
    %c0_40 = arith.constant 0 : index
    %c0_41 = arith.constant 0 : index
    %59 = vector.load %arg16[%c0_40, %c0_41] : memref<128x256xf32, #tpu.memory_space<vmem>>, vector<128x256xf32>
    tpu.vector_store %arg16[%c0_40, %c0_41], %22 {strides = array<i32>} : memref<128x256xf32, #tpu.memory_space<vmem>>, vector<128x256xf32>,
    return
  }
  func.func @transform_0(%arg0: i32) -> (i32, i32) {
    %c0_i32 = arith.constant 0 : i32
    %c0_i32_0 = arith.constant 0 : i32
    return %arg0, %c0_i32 : i32, i32
  }
  func.func @transform_1(%arg0: i32) -> (i32, i32) {
    %c0_i32 = arith.constant 0 : i32
    %c0_i32_0 = arith.constant 0 : i32
    return %arg0, %c0_i32 : i32, i32
  }
  func.func @transform_2(%arg0: i32) -> (i32, i32) {
    %c0_i32 = arith.constant 0 : i32
    %c0_i32_0 = arith.constant 0 : i32
    %c0_i32_1 = arith.constant 0 : i32
    return %c0_i32, %c0_i32_0 : i32, i32
  }
  func.func @transform_3(%arg0: i32) -> (i32, i32) {
    %c0_i32 = arith.constant 0 : i32
    %c0_i32_0 = arith.constant 0 : i32
    %c0_i32_1 = arith.constant 0 : i32
    return %c0_i32, %c0_i32_0 : i32, i32
  }
  func.func @transform_4(%arg0: i32) -> (i32, i32) {
    %c0_i32 = arith.constant 0 : i32
    %c0_i32_0 = arith.constant 0 : i32
    %c0_i32_1 = arith.constant 0 : i32
    return %c0_i32, %c0_i32_0 : i32, i32
  }
  func.func @transform_5(%arg0: i32) -> (i32, i32) {
    %c0_i32 = arith.constant 0 : i32
    %c0_i32_0 = arith.constant 0 : i32
    %c0_i32_1 = arith.constant 0 : i32
    return %c0_i32, %c0_i32_0 : i32, i32
  }
  func.func @transform_6(%arg0: i32) -> (i32, i32) {
    %c0_i32 = arith.constant 0 : i32
    %c0_i32_0 = arith.constant 0 : i32
    %c0_i32_1 = arith.constant 0 : i32
    return %c0_i32, %c0_i32_0 : i32, i32
  }
  func.func @transform_7(%arg0: i32) -> (i32, i32) {
    %c0_i32 = arith.constant 0 : i32
    %c0_i32_0 = arith.constant 0 : i32
    %c0_i32_1 = arith.constant 0 : i32
    return %c0_i32, %c0_i32_0 : i32, i32
  }
  func.func @transform_8(%arg0: i32) -> (i32, i32) {
    %c0_i32 = arith.constant 0 : i32
    %c0_i32_0 = arith.constant 0 : i32
    %c0_i32_1 = arith.constant 0 : i32
    return %c0_i32, %c0_i32_0 : i32, i32
  }
  func.func @transform_9(%arg0: i32) -> (i32, i32) {
    %c0_i32 = arith.constant 0 : i32
    %c0_i32_0 = arith.constant 0 : i32
    %c0_i32_1 = arith.constant 0 : i32
    return %c0_i32, %c0_i32_0 : i32, i32
  }
  func.func @transform_10(%arg0: i32) -> (i32, i32) {
    %c0_i32 = arith.constant 0 : i32
    %c0_i32_0 = arith.constant 0 : i32
    %c0_i32_1 = arith.constant 0 : i32
    return %c0_i32, %c0_i32_0 : i32, i32
  }
  func.func @transform_11(%arg0: i32) -> (i32, i32) {
    %c0_i32 = arith.constant 0 : i32
    %c0_i32_0 = arith.constant 0 : i32
    %c0_i32_1 = arith.constant 0 : i32
    return %c0_i32, %c0_i32_0 : i32, i32
  }
  func.func @transform_12(%arg0: i32) -> (i32, i32) {
    %c0_i32 = arith.constant 0 : i32
    %c0_i32_0 = arith.constant 0 : i32
    %c0_i32_1 = arith.constant 0 : i32
    return %c0_i32, %c0_i32_0 : i32, i32
  }
  func.func @transform_13(%arg0: i32) -> (i32, i32) {
    %c0_i32 = arith.constant 0 : i32
    %c0_i32_0 = arith.constant 0 : i32
    %c0_i32_1 = arith.constant 0 : i32
    return %c0_i32, %c0_i32_0 : i32, i32
  }
  func.func @transform_14(%arg0: i32) -> (i32, i32) {
    %c0_i32 = arith.constant 0 : i32
    %c0_i32_0 = arith.constant 0 : i32
    return %arg0, %c0_i32 : i32, i32
  }
  func.func @transform_15(%arg0: i32) -> (i32, i32) {
    %c0_i32 = arith.constant 0 : i32
    %c0_i32_0 = arith.constant 0 : i32
    return %arg0, %c0_i32 : i32, i32
  }
}

</mosaic_0001>

<llo_original>
// kernel: tpu_custom_call.1
$region0: #{tpu_custom_call.1}
  #allocation0 [shape = 'u32[]', space=smem, size = 0x4, offset = 0x4, fixed_abs, tag = 'smem constant byte address 0x4 - core index']
  #allocation1 [shape = 'u32[144,128]{1,0:T(1,128)}', space=vmem, size = 0x12000, scoped, tag = 'internal scratch']
  %s0 = inlined_call_operand.hbm [shape: f32[200,256], index: 0, kind: input, shape index: {}]
  %s1 = inlined_call_operand.hbm [shape: f32[200,128], index: 1, kind: input, shape index: {}]
  %s2 = inlined_call_operand.hbm [shape: bf16[256,1024], index: 2, kind: input, shape index: {}]
  %s3 = inlined_call_operand.vmem [shape: f32[1,1024], index: 3, kind: input, shape index: {}]
  %s4 = inlined_call_operand.hbm [shape: bf16[1024,512], index: 4, kind: input, shape index: {}]
  %s5 = inlined_call_operand.hbm [shape: f32[1,512], index: 5, kind: input, shape index: {}]
  %s6 = inlined_call_operand.hbm [shape: bf16[512,256], index: 6, kind: input, shape index: {}]
  %s7 = inlined_call_operand.vmem [shape: f32[1,256], index: 7, kind: input, shape index: {}]
  %s8 = inlined_call_operand.hbm [shape: bf16[128,512], index: 8, kind: input, shape index: {}]
  %s9 = inlined_call_operand.vmem [shape: f32[1,512], index: 9, kind: input, shape index: {}]
  %s10 = inlined_call_operand.hbm [shape: bf16[512,1024], index: 10, kind: input, shape index: {}]
  %s11 = inlined_call_operand.vmem [shape: f32[1,1024], index: 11, kind: input, shape index: {}]
  %s12 = inlined_call_operand.hbm [shape: bf16[1024,256], index: 12, kind: input, shape index: {}]
  %s13 = inlined_call_operand.vmem [shape: f32[1,256], index: 13, kind: input, shape index: {}]
  %s14 = inlined_call_operand.hbm [shape: f32[200,256], index: 14, kind: output, shape index: {0}]
  %s15 = inlined_call_operand.hbm [shape: f32[200,256], index: 15, kind: output, shape index: {1}]
  %16 = xla_tuple %s14, %s15
  %s17 = sld [smem:[#allocation0]]
  $region133: #{tpu_custom_call.1} parent=0
    _
  %s19 = ssub.s32 1, %s17
  %s20 = scalar_select 0, %s19, %s17
  $region1: #{tpu_custom_call.1} parent=0
    #allocation2 [shape = 'u8[262144]{0}', space=vmem, size = 0x40000, scoped, tag = 'input window, operand 0']
    #allocation3 [shape = 's32[2]{0}', space=sflag, size = 0x8, scoped, tag = 'scoped memory for tpu_custom_call.1']
    #allocation4 [shape = 's32[2]{0}', space=sflag, size = 0x8, scoped, tag = 'scoped memory for tpu_custom_call.1']
    #allocation5 [shape = 'u8[131072]{0}', space=vmem, size = 0x20000, scoped, tag = 'input window, operand 1']
    #allocation6 [shape = 's32[2]{0}', space=sflag, size = 0x8, scoped, tag = 'scoped memory for tpu_custom_call.1']
    #allocation7 [shape = 'u8[524288]{0}', space=vmem, size = 0x80000, scoped, tag = 'input window, operand 2, single buffered']
    #allocation8 [shape = 'u8[1048576]{0}', space=vmem, size = 0x100000, scoped, tag = 'input window, operand 4, single buffered']
    #allocation9 [shape = 's32[1]{0}', space=sflag, size = 0x4, scoped, tag = 'scoped memory for tpu_custom_call.1']
    #allocation10 [shape = 'u8[2048]{0}', space=vmem, size = 0x800, scoped, tag = 'input window, operand 5, single buffered']
    #allocation11 [shape = 'u8[262144]{0}', space=vmem, size = 0x40000, scoped, tag = 'input window, operand 6, single buffered']
    #allocation12 [shape = 's32[1]{0}', space=sflag, size = 0x4, scoped, tag = 'scoped memory for tpu_custom_call.1']
    #allocation13 [shape = 'u8[131072]{0}', space=vmem, size = 0x20000, scoped, tag = 'input window, operand 8, single buffered']
    #allocation14 [shape = 'u8[1048576]{0}', space=vmem, size = 0x100000, scoped, tag = 'input window, operand 10, single buffered']
    #allocation15 [shape = 's32[1]{0}', space=sflag, size = 0x4, scoped, tag = 'scoped memory for tpu_custom_call.1']
    #allocation16 [shape = 'u8[524288]{0}', space=vmem, size = 0x80000, scoped, tag = 'input window, operand 12, single buffered']
    #allocation17 [shape = 'u8[262144]{0}', space=vmem, size = 0x40000, scoped, tag = 'output window, operand 0']
    #allocation18 [shape = 'u8[262144]{0}', space=vmem, size = 0x40000, scoped, tag = 'output window, operand 1']
    #allocation19 [shape = 's32[2]{0}', space=sflag, size = 0x8, scoped, tag = 'scoped memory for tpu_custom_call.1']
    %21 = vsyncpa [#allocation3], 0
    %s22 = scalar_lea.sflag [#allocation3], 1
    %23 = vsyncpa %s22, 0
    %24 = vsyncpa [#allocation6], 0
    %s25 = scalar_lea.sflag [#allocation6], 1
    %26 = vsyncpa %s25, 0
    %27 = vsyncpa [#allocation9], 0
    %28 = vsyncpa [#allocation12], 0
    %29 = vsyncpa [#allocation15], 0
    %30 = vsyncpa [#allocation4], 0
    %s31 = scalar_lea.sflag [#allocation4], 1
    %32 = vsyncpa %s31, 0
    %33 = vsyncpa [#allocation19], 0
    %s34 = scalar_lea.sflag [#allocation19], 1
    %35 = vsyncpa %s34, 0
    loop: start=0, step=1, limit=4
    $region2: #{tpu_custom_call.1} parent=1 // loop_pre_header
      _
    $region3: #{tpu_custom_call.1} parent=1 // loop_header
      %s37 = sphi 0, %s41
      %p38 = scmp.ge.s32.totalorder %s37, 4
      %s47 = sphi 0, %s49
      %s50 = sphi 0, %s47
      %s51 = sphi 0, %s50
      %s67 = sphi 0, %s51
      %s73 = sphi 0, %s75
      %s76 = sphi 0, %s73
      %s77 = sphi 0, %s76
      %s93 = sphi 0, %s77
      %s97 = sphi 0, %s97
      %s99 = sphi 0, %s97
      %s100 = sphi 0, %s99
      %s114 = sphi 0, %s100
      %s118 = sphi 0, %s118
      %s120 = sphi 0, %s118
      %s121 = sphi 0, %s120
      %s135 = sphi 0, %s121
      %s139 = sphi 0, %s139
      %s141 = sphi 0, %s139
      %s142 = sphi 0, %s141
      %s156 = sphi 0, %s142
      %s160 = sphi 0, %s160
      %s162 = sphi 0, %s160
      %s163 = sphi 0, %s162
      %s177 = sphi 0, %s163
      %s181 = sphi 0, %s181
      %s183 = sphi 0, %s181
      %s184 = sphi 0, %s183
      %s198 = sphi 0, %s184
      %s202 = sphi 0, %s202
      %s204 = sphi 0, %s202
      %s205 = sphi 0, %s204
      %s219 = sphi 0, %s205
      %s223 = sphi 0, %s223
      %s225 = sphi 0, %s223
      %s226 = sphi 0, %s225
      %s240 = sphi 0, %s226
      %s244 = sphi 0, %s244
      %s246 = sphi 0, %s244
      %s247 = sphi 0, %s246
      %s261 = sphi 0, %s247
      %s265 = sphi 0, %s265
      %s267 = sphi 0, %s265
      %s268 = sphi 0, %s267
      %s282 = sphi 0, %s268
      %s286 = sphi 0, %s286
      %s288 = sphi 0, %s286
      %s289 = sphi 0, %s288
      %s303 = sphi 0, %s289
      %s307 = sphi 0, %s307
      %s309 = sphi 0, %s307
      %s310 = sphi 0, %s309
      %s324 = sphi 0, %s310
      %s328 = sphi 0, %s328
      %s330 = sphi 0, %s328
      %s331 = sphi 0, %s330
      %s345 = sphi 0, %s331
      %s351 = sphi 0, %s353
      %s354 = sphi 0, %s351
      %s355 = sphi 0, %s354
      %s371 = sphi 0, %s355
      %s377 = sphi 0, %s379
      %s380 = sphi 0, %s377
      %s381 = sphi 0, %s380
      %s397 = sphi 0, %s381
    $region4: #{tpu_custom_call.1} parent=1 // loop_header_branch
      %40 = sbr.rel (%p38) target = $region8
    $region5: #{tpu_custom_call.1} parent=1 // loop_body
      %s42 = ssub.s32 %s37, 1
      %s43 = ssub.s32 %s37, 2
      %s44 = sadd.s32 %s37, 1
      %s45 = ssub.s32 %s37, %s44
      %p46 = scmp.eq.s32.totalorder %s45, 0
      %s48 = sadd.s32 %s47, 1
      %s49 = scalar_select %p46, %s47, %s48
      %p52 = pneg %p46
      %p53 = scmp.eq.s32.totalorder %s37, 1
      %p54 = por %p52, %p53
      %p55 = scmp.ne.s32.totalorder %s47, %s50
      %p56 = scmp.eq.s32.totalorder %s37, 0
      %p57 = por %p55, %p56
      %p58 = scmp.ne.s32.totalorder %s47, %s50
      %p59 = scmp.eq.s32.totalorder %s42, 1
      %p60 = por %p58, %p59
      %p61 = scmp.ne.s32.totalorder %s50, %s51
      %p62 = scmp.eq.s32.totalorder %s42, 0
      %p63 = por %p61, %p62
      %p64 = scmp.ne.s32.totalorder %s50, %s51
      %p65 = scmp.eq.s32.totalorder %s43, 1
      %p66 = por %p64, %p65
      %p68 = scmp.ne.s32.totalorder %s51, %s67
      %p69 = scmp.eq.s32.totalorder %s43, 0
      %p70 = por %p68, %p69
      %s71 = ssub.s32 %s37, %s44
      %p72 = scmp.eq.s32.totalorder %s71, 0
      %s74 = sadd.s32 %s73, 1
      %s75 = scalar_select %p72, %s73, %s74
      %p78 = pneg %p72
      %p79 = scmp.eq.s32.totalorder %s37, 1
      %p80 = por %p78, %p79
      %p81 = scmp.ne.s32.totalorder %s73, %s76
      %p82 = scmp.eq.s32.totalorder %s37, 0
      %p83 = por %p81, %p82
      %p84 = scmp.ne.s32.totalorder %s73, %s76
      %p85 = scmp.eq.s32.totalorder %s42, 1
      %p86 = por %p84, %p85
      %p87 = scmp.ne.s32.totalorder %s76, %s77
      %p88 = scmp.eq.s32.totalorder %s42, 0
      %p89 = por %p87, %p88
      %p90 = scmp.ne.s32.totalorder %s76, %s77
      %p91 = scmp.eq.s32.totalorder %s43, 1
      %p92 = por %p90, %p91
      %p94 = scmp.ne.s32.totalorder %s77, %s93
      %p95 = scmp.eq.s32.totalorder %s43, 0
      %p96 = por %p94, %p95
      %s98 = sadd.s32 %s97, 1
      %p101 = scmp.eq.s32.totalorder %s37, 1
      %p102 = scmp.ne.s32.totalorder %s97, %s99
      %p103 = scmp.eq.s32.totalorder %s37, 0
      %p104 = por %p102, %p103
      %p105 = scmp.ne.s32.totalorder %s97, %s99
      %p106 = scmp.eq.s32.totalorder %s42, 1
      %p107 = por %p105, %p106
      %p108 = scmp.ne.s32.totalorder %s99, %s100
      %p109 = scmp.eq.s32.totalorder %s42, 0
      %p110 = por %p108, %p109
      %p111 = scmp.ne.s32.totalorder %s99, %s100
      %p112 = scmp.eq.s32.totalorder %s43, 1
      %p113 = por %p111, %p112
      %p115 = scmp.ne.s32.totalorder %s100, %s114
      %p116 = scmp.eq.s32.totalorder %s43, 0
      %p117 = por %p115, %p116
      %s119 = sadd.s32 %s118, 1
      %p122 = scmp.eq.s32.totalorder %s37, 1
      %p123 = scmp.ne.s32.totalorder %s118, %s120
      %p124 = scmp.eq.s32.totalorder %s37, 0
      %p125 = por %p123, %p124
      %p126 = scmp.ne.s32.totalorder %s118, %s120
      %p127 = scmp.eq.s32.totalorder %s42, 1
      %p128 = por %p126, %p127
      %p129 = scmp.ne.s32.totalorder %s120, %s121
      %p130 = scmp.eq.s32.totalorder %s42, 0
      %p131 = por %p129, %p130
      %p132 = scmp.ne.s32.totalorder %s120, %s121
      %p133 = scmp.eq.s32.totalorder %s43, 1
      %p134 = por %p132, %p133
      %p136 = scmp.ne.s32.totalorder %s121, %s135
      %p137 = scmp.eq.s32.totalorder %s43, 0
      %p138 = por %p136, %p137
      %s140 = sadd.s32 %s139, 1
      %p143 = scmp.eq.s32.totalorder %s37, 1
      %p144 = scmp.ne.s32.totalorder %s139, %s141
      %p145 = scmp.eq.s32.totalorder %s37, 0
      %p146 = por %p144, %p145
      %p147 = scmp.ne.s32.totalorder %s139, %s141
      %p148 = scmp.eq.s32.totalorder %s42, 1
      %p149 = por %p147, %p148
      %p150 = scmp.ne.s32.totalorder %s141, %s142
      %p151 = scmp.eq.s32.totalorder %s42, 0
      %p152 = por %p150, %p151
      %p153 = scmp.ne.s32.totalorder %s141, %s142
      %p154 = scmp.eq.s32.totalorder %s43, 1
      %p155 = por %p153, %p154
      %p157 = scmp.ne.s32.totalorder %s142, %s156
      %p158 = scmp.eq.s32.totalorder %s43, 0
      %p159 = por %p157, %p158
      %s161 = sadd.s32 %s160, 1
      %p164 = scmp.eq.s32.totalorder %s37, 1
      %p165 = scmp.ne.s32.totalorder %s160, %s162
      %p166 = scmp.eq.s32.totalorder %s37, 0
      %p167 = por %p165, %p166
      %p168 = scmp.ne.s32.totalorder %s160, %s162
      %p169 = scmp.eq.s32.totalorder %s42, 1
      %p170 = por %p168, %p169
      %p171 = scmp.ne.s32.totalorder %s162, %s163
      %p172 = scmp.eq.s32.totalorder %s42, 0
      %p173 = por %p171, %p172
      %p174 = scmp.ne.s32.totalorder %s162, %s163
      %p175 = scmp.eq.s32.totalorder %s43, 1
      %p176 = por %p174, %p175
      %p178 = scmp.ne.s32.totalorder %s163, %s177
      %p179 = scmp.eq.s32.totalorder %s43, 0
      %p180 = por %p178, %p179
      %s182 = sadd.s32 %s181, 1
      %p185 = scmp.eq.s32.totalorder %s37, 1
      %p186 = scmp.ne.s32.totalorder %s181, %s183
      %p187 = scmp.eq.s32.totalorder %s37, 0
      %p188 = por %p186, %p187
      %p189 = scmp.ne.s32.totalorder %s181, %s183
      %p190 = scmp.eq.s32.totalorder %s42, 1
      %p191 = por %p189, %p190
      %p192 = scmp.ne.s32.totalorder %s183, %s184
      %p193 = scmp.eq.s32.totalorder %s42, 0
      %p194 = por %p192, %p193
      %p195 = scmp.ne.s32.totalorder %s183, %s184
      %p196 = scmp.eq.s32.totalorder %s43, 1
      %p197 = por %p195, %p196
      %p199 = scmp.ne.s32.totalorder %s184, %s198
      %p200 = scmp.eq.s32.totalorder %s43, 0
      %p201 = por %p199, %p200
      %s203 = sadd.s32 %s202, 1
      %p206 = scmp.eq.s32.totalorder %s37, 1
      %p207 = scmp.ne.s32.totalorder %s202, %s204
      %p208 = scmp.eq.s32.totalorder %s37, 0
      %p209 = por %p207, %p208
      %p210 = scmp.ne.s32.totalorder %s202, %s204
      %p211 = scmp.eq.s32.totalorder %s42, 1
      %p212 = por %p210, %p211
      %p213 = scmp.ne.s32.totalorder %s204, %s205
      %p214 = scmp.eq.s32.totalorder %s42, 0
      %p215 = por %p213, %p214
      %p216 = scmp.ne.s32.totalorder %s204, %s205
      %p217 = scmp.eq.s32.totalorder %s43, 1
      %p218 = por %p216, %p217
      %p220 = scmp.ne.s32.totalorder %s205, %s219
      %p221 = scmp.eq.s32.totalorder %s43, 0
      %p222 = por %p220, %p221
      %s224 = sadd.s32 %s223, 1
      %p227 = scmp.eq.s32.totalorder %s37, 1
      %p228 = scmp.ne.s32.totalorder %s223, %s225
      %p229 = scmp.eq.s32.totalorder %s37, 0
      %p230 = por %p228, %p229
      %p231 = scmp.ne.s32.totalorder %s223, %s225
      %p232 = scmp.eq.s32.totalorder %s42, 1
      %p233 = por %p231, %p232
      %p234 = scmp.ne.s32.totalorder %s225, %s226
      %p235 = scmp.eq.s32.totalorder %s42, 0
      %p236 = por %p234, %p235
      %p237 = scmp.ne.s32.totalorder %s225, %s226
      %p238 = scmp.eq.s32.totalorder %s43, 1
      %p239 = por %p237, %p238
      %p241 = scmp.ne.s32.totalorder %s226, %s240
      %p242 = scmp.eq.s32.totalorder %s43, 0
      %p243 = por %p241, %p242
      %s245 = sadd.s32 %s244, 1
      %p248 = scmp.eq.s32.totalorder %s37, 1
      %p249 = scmp.ne.s32.totalorder %s244, %s246
      %p250 = scmp.eq.s32.totalorder %s37, 0
      %p251 = por %p249, %p250
      %p252 = scmp.ne.s32.totalorder %s244, %s246
      %p253 = scmp.eq.s32.totalorder %s42, 1
      %p254 = por %p252, %p253
      %p255 = scmp.ne.s32.totalorder %s246, %s247
      %p256 = scmp.eq.s32.totalorder %s42, 0
      %p257 = por %p255, %p256
      %p258 = scmp.ne.s32.totalorder %s246, %s247
      %p259 = scmp.eq.s32.totalorder %s43, 1
      %p260 = por %p258, %p259
      %p262 = scmp.ne.s32.totalorder %s247, %s261
      %p263 = scmp.eq.s32.totalorder %s43, 0
      %p264 = por %p262, %p263
      %s266 = sadd.s32 %s265, 1
      %p269 = scmp.eq.s32.totalorder %s37, 1
      %p270 = scmp.ne.s32.totalorder %s265, %s267
      %p271 = scmp.eq.s32.totalorder %s37, 0
      %p272 = por %p270, %p271
      %p273 = scmp.ne.s32.totalorder %s265, %s267
      %p274 = scmp.eq.s32.totalorder %s42, 1
      %p275 = por %p273, %p274
      %p276 = scmp.ne.s32.totalorder %s267, %s268
      %p277 = scmp.eq.s32.totalorder %s42, 0
      %p278 = por %p276, %p277
      %p279 = scmp.ne.s32.totalorder %s267, %s268
      %p280 = scmp.eq.s32.totalorder %s43, 1
      %p281 = por %p279, %p280
      %p283 = scmp.ne.s32.totalorder %s268, %s282
      %p284 = scmp.eq.s32.totalorder %s43, 0
      %p285 = por %p283, %p284
      %s287 = sadd.s32 %s286, 1
      %p290 = scmp.eq.s32.totalorder %s37, 1
      %p291 = scmp.ne.s32.totalorder %s286, %s288
      %p292 = scmp.eq.s32.totalorder %s37, 0
      %p293 = por %p291, %p292
      %p294 = scmp.ne.s32.totalorder %s286, %s288
      %p295 = scmp.eq.s32.totalorder %s42, 1
      %p296 = por %p294, %p295
      %p297 = scmp.ne.s32.totalorder %s288, %s289
      %p298 = scmp.eq.s32.totalorder %s42, 0
      %p299 = por %p297, %p298
      %p300 = scmp.ne.s32.totalorder %s288, %s289
      %p301 = scmp.eq.s32.totalorder %s43, 1
      %p302 = por %p300, %p301
      %p304 = scmp.ne.s32.totalorder %s289, %s303
      %p305 = scmp.eq.s32.totalorder %s43, 0
      %p306 = por %p304, %p305
      %s308 = sadd.s32 %s307, 1
      %p311 = scmp.eq.s32.totalorder %s37, 1
      %p312 = scmp.ne.s32.totalorder %s307, %s309
      %p313 = scmp.eq.s32.totalorder %s37, 0
      %p314 = por %p312, %p313
      %p315 = scmp.ne.s32.totalorder %s307, %s309
      %p316 = scmp.eq.s32.totalorder %s42, 1
      %p317 = por %p315, %p316
      %p318 = scmp.ne.s32.totalorder %s309, %s310
      %p319 = scmp.eq.s32.totalorder %s42, 0
      %p320 = por %p318, %p319
      %p321 = scmp.ne.s32.totalorder %s309, %s310
      %p322 = scmp.eq.s32.totalorder %s43, 1
      %p323 = por %p321, %p322
      %p325 = scmp.ne.s32.totalorder %s310, %s324
      %p326 = scmp.eq.s32.totalorder %s43, 0
      %p327 = por %p325, %p326
      %s329 = sadd.s32 %s328, 1
      %p332 = scmp.eq.s32.totalorder %s37, 1
      %p333 = scmp.ne.s32.totalorder %s328, %s330
      %p334 = scmp.eq.s32.totalorder %s37, 0
      %p335 = por %p333, %p334
      %p336 = scmp.ne.s32.totalorder %s328, %s330
      %p337 = scmp.eq.s32.totalorder %s42, 1
      %p338 = por %p336, %p337
      %p339 = scmp.ne.s32.totalorder %s330, %s331
      %p340 = scmp.eq.s32.totalorder %s42, 0
      %p341 = por %p339, %p340
      %p342 = scmp.ne.s32.totalorder %s330, %s331
      %p343 = scmp.eq.s32.totalorder %s43, 1
      %p344 = por %p342, %p343
      %p346 = scmp.ne.s32.totalorder %s331, %s345
      %p347 = scmp.eq.s32.totalorder %s43, 0
      %p348 = por %p346, %p347
      %s349 = ssub.s32 %s37, %s44
      %p350 = scmp.eq.s32.totalorder %s349, 0
      %s352 = sadd.s32 %s351, 1
      %s353 = scalar_select %p350, %s351, %s352
      %p356 = pneg %p350
      %p357 = scmp.eq.s32.totalorder %s37, 1
      %p358 = por %p356, %p357
      %p359 = scmp.ne.s32.totalorder %s351, %s354
      %p360 = scmp.eq.s32.totalorder %s37, 0
      %p361 = por %p359, %p360
      %p362 = scmp.ne.s32.totalorder %s351, %s354
      %p363 = scmp.eq.s32.totalorder %s42, 1
      %p364 = por %p362, %p363
      %p365 = scmp.ne.s32.totalorder %s354, %s355
      %p366 = scmp.eq.s32.totalorder %s42, 0
      %p367 = por %p365, %p366
      %p368 = scmp.ne.s32.totalorder %s354, %s355
      %p369 = scmp.eq.s32.totalorder %s43, 1
      %p370 = por %p368, %p369
      %p372 = scmp.ne.s32.totalorder %s355, %s371
      %p373 = scmp.eq.s32.totalorder %s43, 0
      %p374 = por %p372, %p373
      %s375 = ssub.s32 %s37, %s44
      %p376 = scmp.eq.s32.totalorder %s375, 0
      %s378 = sadd.s32 %s377, 1
      %s379 = scalar_select %p376, %s377, %s378
      %p382 = pneg %p376
      %p383 = scmp.eq.s32.totalorder %s37, 1
      %p384 = por %p382, %p383
      %p385 = scmp.ne.s32.totalorder %s377, %s380
      %p386 = scmp.eq.s32.totalorder %s37, 0
      %p387 = por %p385, %p386
      %p388 = scmp.ne.s32.totalorder %s377, %s380
      %p389 = scmp.eq.s32.totalorder %s42, 1
      %p390 = por %p388, %p389
      %p391 = scmp.ne.s32.totalorder %s380, %s381
      %p392 = scmp.eq.s32.totalorder %s42, 0
      %p393 = por %p391, %p392
      %p394 = scmp.ne.s32.totalorder %s380, %s381
      %p395 = scmp.eq.s32.totalorder %s43, 1
      %p396 = por %p394, %p395
      %p398 = scmp.ne.s32.totalorder %s381, %s397
      %p399 = scmp.eq.s32.totalorder %s43, 0
      %p400 = por %p398, %p399
      %p401 = scmp.le.s32.totalorder 1, %s37
      %p402 = scmp.lt.s32.totalorder %s37, 3
      %p403 = pnand %p401, %p402
      %p404 = pneg %p403
      // Predicated region
      $region9: #{tpu_custom_call.1} parent=5 // pred_check
        _
      $region10: #{tpu_custom_call.1} parent=5 // pred_check_branch
        %406 = sbr.rel (%p403) target = $region12
      $region11: #{tpu_custom_call.1} parent=5 // pred_region
        %s407 = ssub.s32 %s37, 1
        // Predicated region
        $region13: #{tpu_custom_call.1} parent=11 // pred_check
          %p408 = pneg %p110
        $region14: #{tpu_custom_call.1} parent=11 // pred_check_branch
          %410 = sbr.rel (%p408) target = $region16
        $region15: #{tpu_custom_call.1} parent=11 // pred_region
          %s412 = ssub.s32 16384, 16384
          %413 = vsyncadd [#allocation6], %s412
          %s414 = sshll.u32 [#allocation7], 4
          %s415 = int_to_ptr.vmem [resolvable:$true] %s414
          %420 = dma.hbm_to_vmem [thread:$0]  %s2, 16384, %s415, [#allocation6], 512, 512, 32
        $region16: #{tpu_custom_call.1} parent=11 // pred_fallthru
          _
        // Predicated region
        $region17: #{tpu_custom_call.1} parent=11 // pred_check
          %p421 = pneg %p131
        $region18: #{tpu_custom_call.1} parent=11 // pred_check_branch
          %423 = sbr.rel (%p421) target = $region20
        $region19: #{tpu_custom_call.1} parent=11 // pred_region
          _
        $region20: #{tpu_custom_call.1} parent=11 // pred_fallthru
          _
        // Predicated region
        $region21: #{tpu_custom_call.1} parent=11 // pred_check
          %p424 = pneg %p152
        $region22: #{tpu_custom_call.1} parent=11 // pred_check_branch
          %426 = sbr.rel (%p424) target = $region24
        $region23: #{tpu_custom_call.1} parent=11 // pred_region
          %s428 = ssub.s32 32768, 32768
          %429 = vsyncadd [#allocation9], %s428
          %s430 = sshll.u32 [#allocation8], 4
          %s431 = int_to_ptr.vmem [resolvable:$true] %s430
          %436 = dma.hbm_to_vmem [thread:$0]  %s4, 32768, %s431, [#allocation9], 256, 256, 16
        $region24: #{tpu_custom_call.1} parent=11 // pred_fallthru
          _
        // Predicated region
        $region25: #{tpu_custom_call.1} parent=11 // pred_check
          %p437 = pneg %p173
        $region26: #{tpu_custom_call.1} parent=11 // pred_check_branch
          %439 = sbr.rel (%p437) target = $region28
        $region27: #{tpu_custom_call.1} parent=11 // pred_region
          %s441 = ssub.s32 64, 64
          %442 = vsyncadd [#allocation9], %s441
          %s444 = sshll.u32 [#allocation10], 4
          %s445 = int_to_ptr.vmem [resolvable:$true] %s444
          %447 = dma.hbm_to_vmem [thread:$0]  %s5, 64, %s445, [#allocation9]
        $region28: #{tpu_custom_call.1} parent=11 // pred_fallthru
          _
        // Predicated region
        $region29: #{tpu_custom_call.1} parent=11 // pred_check
          %p448 = pneg %p194
        $region30: #{tpu_custom_call.1} parent=11 // pred_check_branch
          %450 = sbr.rel (%p448) target = $region32
        $region31: #{tpu_custom_call.1} parent=11 // pred_region
          %s452 = ssub.s32 8192, 8192
          %453 = vsyncadd [#allocation12], %s452
          %s454 = sshll.u32 [#allocation11], 4
          %s455 = int_to_ptr.vmem [resolvable:$true] %s454
          %460 = dma.hbm_to_vmem [thread:$0]  %s6, 8192, %s455, [#allocation12], 128, 128, 8
        $region32: #{tpu_custom_call.1} parent=11 // pred_fallthru
          _
        // Predicated region
        $region33: #{tpu_custom_call.1} parent=11 // pred_check
          %p461 = pneg %p215
        $region34: #{tpu_custom_call.1} parent=11 // pred_check_branch
          %463 = sbr.rel (%p461) target = $region36
        $region35: #{tpu_custom_call.1} parent=11 // pred_region
          _
        $region36: #{tpu_custom_call.1} parent=11 // pred_fallthru
          _
        // Predicated region
        $region37: #{tpu_custom_call.1} parent=11 // pred_check
          %p464 = pneg %p236
        $region38: #{tpu_custom_call.1} parent=11 // pred_check_branch
          %466 = sbr.rel (%p464) target = $region40
        $region39: #{tpu_custom_call.1} parent=11 // pred_region
          %s468 = ssub.s32 4096, 4096
          %469 = vsyncadd [#allocation12], %s468
          %s470 = sshll.u32 [#allocation13], 4
          %s471 = int_to_ptr.vmem [resolvable:$true] %s470
          %476 = dma.hbm_to_vmem [thread:$0]  %s8, 4096, %s471, [#allocation12], 256, 256, 16
        $region40: #{tpu_custom_call.1} parent=11 // pred_fallthru
          _
        // Predicated region
        $region41: #{tpu_custom_call.1} parent=11 // pred_check
          %p477 = pneg %p257
        $region42: #{tpu_custom_call.1} parent=11 // pred_check_branch
          %479 = sbr.rel (%p477) target = $region44
        $region43: #{tpu_custom_call.1} parent=11 // pred_region
          _
        $region44: #{tpu_custom_call.1} parent=11 // pred_fallthru
          _
        // Predicated region
        $region45: #{tpu_custom_call.1} parent=11 // pred_check
          %p480 = pneg %p278
        $region46: #{tpu_custom_call.1} parent=11 // pred_check_branch
          %482 = sbr.rel (%p480) target = $region48
        $region47: #{tpu_custom_call.1} parent=11 // pred_region
          %s484 = ssub.s32 32768, 32768
          %485 = vsyncadd [#allocation15], %s484
          %s486 = sshll.u32 [#allocation14], 4
          %s487 = int_to_ptr.vmem [resolvable:$true] %s486
          %492 = dma.hbm_to_vmem [thread:$0]  %s10, 32768, %s487, [#allocation15], 512, 512, 32
        $region48: #{tpu_custom_call.1} parent=11 // pred_fallthru
          _
        // Predicated region
        $region49: #{tpu_custom_call.1} parent=11 // pred_check
          %p493 = pneg %p299
        $region50: #{tpu_custom_call.1} parent=11 // pred_check_branch
          %495 = sbr.rel (%p493) target = $region52
        $region51: #{tpu_custom_call.1} parent=11 // pred_region
          _
        $region52: #{tpu_custom_call.1} parent=11 // pred_fallthru
          _
        // Predicated region
        $region53: #{tpu_custom_call.1} parent=11 // pred_check
          %p496 = pneg %p320
        $region54: #{tpu_custom_call.1} parent=11 // pred_check_branch
          %498 = sbr.rel (%p496) target = $region56
        $region55: #{tpu_custom_call.1} parent=11 // pred_region
          %s500 = ssub.s32 16384, 16384
          %501 = vsyncadd [#allocation15], %s500
          %s502 = sshll.u32 [#allocation16], 4
          %s503 = int_to_ptr.vmem [resolvable:$true] %s502
          %508 = dma.hbm_to_vmem [thread:$0]  %s12, 16384, %s503, [#allocation15], 128, 128, 8
        $region56: #{tpu_custom_call.1} parent=11 // pred_fallthru
          _
        // Predicated region
        $region57: #{tpu_custom_call.1} parent=11 // pred_check
          %p509 = pneg %p341
        $region58: #{tpu_custom_call.1} parent=11 // pred_check_branch
          %511 = sbr.rel (%p509) target = $region60
        $region59: #{tpu_custom_call.1} parent=11 // pred_region
          _
        $region60: #{tpu_custom_call.1} parent=11 // pred_fallthru
          _
      $region12: #{tpu_custom_call.1} parent=5 // pred_fallthru
        _
      %p512 = scmp.lt.s32.totalorder %s37, 2
      // Predicated region
      $region61: #{tpu_custom_call.1} parent=5 // pred_check
        %p513 = pneg %p512
      $region62: #{tpu_custom_call.1} parent=5 // pred_check_branch
        %515 = sbr.rel (%p513) target = $region64
      $region63: #{tpu_custom_call.1} parent=5 // pred_region
        // Predicated region
        $region65: #{tpu_custom_call.1} parent=63 // pred_check
          %p516 = pneg %p57
        $region66: #{tpu_custom_call.1} parent=63 // pred_check_branch
          %518 = sbr.rel (%p516) target = $region68
        $region67: #{tpu_custom_call.1} parent=63 // pred_region
          %s519 = sand.u32 %s47, 1
          %s520 = scalar_lea.sflag [#allocation3], %s519
          %s521 = sand.u32 %s47, 1
          %s522 = smul.addr %s521, 256
          %s523 = scalar_lea.vmem [#allocation2], %s522
          %s524 = smul.u32 16, %s37
          %s525 = ssub.s32 25, %s524
          %p526 = scmp.lt.s32.totalorder %s525, 16
          %s527 = scalar_select %p526, %s525, 16
          %s528 = smul.u32 128, %s527
          %s529 = smul.u32 %s528, 2
          %s531 = ssub.s32 4096, %s529
          %532 = vsyncadd %s520, %s531
          %p533 = scmp.ne.s32.totalorder 0, %s529
          %s534 = smul.addr %s524, 2
          %s535 = smul.addr %s534, 128
          %s536 = scalar_lea.hbm %s0, %s535
          %s537 = smul.u32 16, %s527
          %s538 = sshll.u32 %s523, 4
          %s539 = int_to_ptr.vmem [resolvable:$true] %s538
          %s540 = sshll.u32 %s537, 4
          %544 = dma.hbm_to_vmem [thread:$0]  (%p533), %s536, %s540, %s539, %s520, 256, 256, 16
        $region68: #{tpu_custom_call.1} parent=63 // pred_fallthru
          _
        // Predicated region
        $region69: #{tpu_custom_call.1} parent=63 // pred_check
          %p545 = pneg %p83
        $region70: #{tpu_custom_call.1} parent=63 // pred_check_branch
          %547 = sbr.rel (%p545) target = $region72
        $region71: #{tpu_custom_call.1} parent=63 // pred_region
          %s548 = sand.u32 %s37, 1
          %s549 = scalar_lea.sflag [#allocation6], %s548
          %s550 = sand.u32 %s73, 1
          %s551 = smul.addr %s550, 128
          %s552 = scalar_lea.vmem [#allocation5], %s551
          %s553 = smul.u32 16, %s37
          %s554 = ssub.s32 25, %s553
          %p555 = scmp.lt.s32.totalorder %s554, 16
          %s556 = scalar_select %p555, %s554, 16
          %s557 = smul.u32 128, %s556
          %s559 = ssub.s32 2048, %s557
          %560 = vsyncadd %s549, %s559
          %p561 = scmp.ne.s32.totalorder 0, %s557
          %s562 = smul.addr %s553, 128
          %s563 = scalar_lea.hbm %s1, %s562
          %s564 = smul.u32 8, %s556
          %s565 = sshll.u32 %s552, 4
          %s566 = int_to_ptr.vmem [resolvable:$true] %s565
          %s567 = sshll.u32 %s564, 4
          %571 = dma.hbm_to_vmem [thread:$0]  (%p561), %s563, %s567, %s566, %s549, 128, 128, 8
        $region72: #{tpu_custom_call.1} parent=63 // pred_fallthru
          _
      $region64: #{tpu_custom_call.1} parent=5 // pred_fallthru
        _
      %p572 = scmp.le.s32.totalorder 1, %s37
      %p573 = scmp.lt.s32.totalorder %s37, 3
      %p574 = pnand %p572, %p573
      %p575 = pneg %p574
      // Predicated region
      $region73: #{tpu_custom_call.1} parent=5 // pred_check
        _
      $region74: #{tpu_custom_call.1} parent=5 // pred_check_branch
        %577 = sbr.rel (%p574) target = $region76
      $region75: #{tpu_custom_call.1} parent=5 // pred_region
        %s578 = ssub.s32 %s37, 1
        %s579 = sand.u32 %s50, 1
        %s580 = scalar_lea.sflag [#allocation3], %s579
        %s581 = sand.u32 %s50, 1
        %s582 = smul.addr %s581, 256
        %s583 = scalar_lea.vmem [#allocation2], %s582
        // Predicated region
        $region77: #{tpu_custom_call.1} parent=75 // pred_check
          %p584 = pneg %p63
        $region78: #{tpu_custom_call.1} parent=75 // pred_check_branch
          %586 = sbr.rel (%p584) target = $region80
        $region79: #{tpu_custom_call.1} parent=75 // pred_region
          %587 = dma.done %s580, 4096
        $region80: #{tpu_custom_call.1} parent=75 // pred_fallthru
          _
        %s588 = sand.u32 %s42, 1
        %s589 = scalar_lea.sflag [#allocation6], %s588
        %s590 = sand.u32 %s76, 1
        %s591 = smul.addr %s590, 128
        %s592 = scalar_lea.vmem [#allocation5], %s591
        // Predicated region
        $region81: #{tpu_custom_call.1} parent=75 // pred_check
          %p593 = pneg %p89
        $region82: #{tpu_custom_call.1} parent=75 // pred_check_branch
          %595 = sbr.rel (%p593) target = $region84
        $region83: #{tpu_custom_call.1} parent=75 // pred_region
          %596 = dma.done %s589, 2048
        $region84: #{tpu_custom_call.1} parent=75 // pred_fallthru
          _
        // Predicated region
        $region85: #{tpu_custom_call.1} parent=75 // pred_check
          %p597 = pneg %p110
        $region86: #{tpu_custom_call.1} parent=75 // pred_check_branch
          %599 = sbr.rel (%p597) target = $region88
        $region87: #{tpu_custom_call.1} parent=75 // pred_region
          %600 = dma.done [#allocation6], 16384
        $region88: #{tpu_custom_call.1} parent=75 // pred_fallthru
          _
        // Predicated region
        $region89: #{tpu_custom_call.1} parent=75 // pred_check
          %p601 = pneg %p152
        $region90: #{tpu_custom_call.1} parent=75 // pred_check_branch
          %603 = sbr.rel (%p601) target = $region92
        $region91: #{tpu_custom_call.1} parent=75 // pred_region
          %604 = dma.done [#allocation9], 32768
        $region92: #{tpu_custom_call.1} parent=75 // pred_fallthru
          _
        // Predicated region
        $region93: #{tpu_custom_call.1} parent=75 // pred_check
          %p605 = pneg %p173
        $region94: #{tpu_custom_call.1} parent=75 // pred_check_branch
          %607 = sbr.rel (%p605) target = $region96
        $region95: #{tpu_custom_call.1} parent=75 // pred_region
          %608 = dma.done [#allocation9], 64
        $region96: #{tpu_custom_call.1} parent=75 // pred_fallthru
          _
        // Predicated region
        $region97: #{tpu_custom_call.1} parent=75 // pred_check
          %p609 = pneg %p194
        $region98: #{tpu_custom_call.1} parent=75 // pred_check_branch
          %611 = sbr.rel (%p609) target = $region100
        $region99: #{tpu_custom_call.1} parent=75 // pred_region
          %612 = dma.done [#allocation12], 8192
        $region100: #{tpu_custom_call.1} parent=75 // pred_fallthru
          _
        // Predicated region
        $region101: #{tpu_custom_call.1} parent=75 // pred_check
          %p613 = pneg %p236
        $region102: #{tpu_custom_call.1} parent=75 // pred_check_branch
          %615 = sbr.rel (%p613) target = $region104
        $region103: #{tpu_custom_call.1} parent=75 // pred_region
          %616 = dma.done [#allocation12], 4096
        $region104: #{tpu_custom_call.1} parent=75 // pred_fallthru
          _
        // Predicated region
        $region105: #{tpu_custom_call.1} parent=75 // pred_check
          %p617 = pneg %p278
        $region106: #{tpu_custom_call.1} parent=75 // pred_check_branch
          %619 = sbr.rel (%p617) target = $region108
        $region107: #{tpu_custom_call.1} parent=75 // pred_region
          %620 = dma.done [#allocation15], 32768
        $region108: #{tpu_custom_call.1} parent=75 // pred_fallthru
          _
        // Predicated region
        $region109: #{tpu_custom_call.1} parent=75 // pred_check
          %p621 = pneg %p320
        $region110: #{tpu_custom_call.1} parent=75 // pred_check_branch
          %623 = sbr.rel (%p621) target = $region112
        $region111: #{tpu_custom_call.1} parent=75 // pred_region
          %624 = dma.done [#allocation15], 16384
        $region112: #{tpu_custom_call.1} parent=75 // pred_fallthru
          _
        %s625 = sand.u32 %s50, 1
        %s626 = scalar_lea.sflag [#allocation3], %s625
        %s627 = sand.u32 %s50, 1
        %s628 = smul.addr %s627, 256
        %s629 = scalar_lea.vmem [#allocation2], %s628
        %p630 = pneg %p63
        %p631 = pneg %p60
        %s632 = sand.u32 %s42, 1
        %s633 = scalar_lea.sflag [#allocation6], %s632
        %s634 = sand.u32 %s76, 1
        %s635 = smul.addr %s634, 128
        %s636 = scalar_lea.vmem [#allocation5], %s635
        %p637 = pneg %p89
        %p638 = pneg %p86
        %p639 = pneg %p110
        %p640 = pneg %p107
        %p641 = pneg %p131
        %p642 = pneg %p128
        %p643 = pneg %p152
        %p644 = pneg %p149
        %p645 = pneg %p173
        %p646 = pneg %p170
        %p647 = pneg %p194
        %p648 = pneg %p191
        %p649 = pneg %p215
        %p650 = pneg %p212
        %p651 = pneg %p236
        %p652 = pneg %p233
        %p653 = pneg %p257
        %p654 = pneg %p254
        %p655 = pneg %p278
        %p656 = pneg %p275
        %p657 = pneg %p299
        %p658 = pneg %p296
        %p659 = pneg %p320
        %p660 = pneg %p317
        %p661 = pneg %p341
        %p662 = pneg %p338
        %p663 = pneg %p367
        %p664 = pneg %p364
        %s665 = sand.u32 %s354, 1
        %s666 = scalar_lea.sflag [#allocation4], %s665
        %s667 = sand.u32 %s354, 1
        %s668 = smul.addr %s667, 256
        %s669 = scalar_lea.vmem [#allocation17], %s668
        %p670 = pneg %p393
        %p671 = pneg %p390
        %s672 = sand.u32 %s380, 1
        %s673 = scalar_lea.sflag [#allocation19], %s672
        %s674 = sand.u32 %s380, 1
        %s675 = smul.addr %s674, 256
        %s676 = scalar_lea.vmem [#allocation18], %s675
        %s677 = smul.u32 16, %s42
        %s678 = ssub.s32 25, %s677
        %p679 = scmp.lt.s32.totalorder %s678, 16
        %s680 = scalar_select %p679, %s678, 16
        %s681 = smul.u32 128, %s680
        %s682 = smul.u32 %s681, 2
        %s683 = smul.u32 16, %s42
        %s684 = ssub.s32 25, %s683
        %p685 = scmp.lt.s32.totalorder %s684, 16
        %s686 = scalar_select %p685, %s684, 16
        %s687 = smul.u32 128, %s686
        %s688 = smul.u32 16, %s42
        %s689 = ssub.s32 25, %s688
        %p690 = scmp.lt.s32.totalorder %s689, 16
        %s691 = scalar_select %p690, %s689, 16
        %s692 = smul.u32 128, %s691
        %s693 = smul.u32 %s692, 2
        %s694 = smul.u32 16, %s42
        %s695 = ssub.s32 25, %s694
        %p696 = scmp.lt.s32.totalorder %s695, 16
        %s697 = scalar_select %p696, %s695, 16
        %s698 = smul.u32 128, %s697
        %s699 = smul.u32 %s698, 2
        %v701 = vld [vmem:[%s583] sm:$0xff]
        %v702 = vld [vmem:[%s583 + $0x8] sm:$0xff]
        %v703 = vld [vmem:[%s583 + $0x10] sm:$0xff]
        %v704 = vld [vmem:[%s583 + $0x18] sm:$0xff]
        %v705 = vld [vmem:[%s583 + $0x20] sm:$0xff]
        %v706 = vld [vmem:[%s583 + $0x28] sm:$0xff]
        %v707 = vld [vmem:[%s583 + $0x30] sm:$0xff]
        %v708 = vld [vmem:[%s583 + $0x38] sm:$0xff]
        %v709 = vld [vmem:[%s583 + $0x40] sm:$0xff]
        %v710 = vld [vmem:[%s583 + $0x48] sm:$0xff]
        %v711 = vld [vmem:[%s583 + $0x50] sm:$0xff]
        %v712 = vld [vmem:[%s583 + $0x58] sm:$0xff]
        %v713 = vld [vmem:[%s583 + $0x60] sm:$0xff]
        %v714 = vld [vmem:[%s583 + $0x68] sm:$0xff]
        %v715 = vld [vmem:[%s583 + $0x70] sm:$0xff]
        %v716 = vld [vmem:[%s583 + $0x78] sm:$0xff]
        %v717 = vld [vmem:[%s583 + $0x80] sm:$0xff]
        %v718 = vld [vmem:[%s583 + $0x88] sm:$0xff]
        %v719 = vld [vmem:[%s583 + $0x90] sm:$0xff]
        %v720 = vld [vmem:[%s583 + $0x98] sm:$0xff]
        %v721 = vld [vmem:[%s583 + $0xa0] sm:$0xff]
        %v722 = vld [vmem:[%s583 + $0xa8] sm:$0xff]
        %v723 = vld [vmem:[%s583 + $0xb0] sm:$0xff]
        %v724 = vld [vmem:[%s583 + $0xb8] sm:$0xff]
        %v725 = vld [vmem:[%s583 + $0xc0] sm:$0xff]
        %v726 = vld [vmem:[%s583 + $0xc8] sm:$0xff]
        %v727 = vld [vmem:[%s583 + $0xd0] sm:$0xff]
        %v728 = vld [vmem:[%s583 + $0xd8] sm:$0xff]
        %v729 = vld [vmem:[%s583 + $0xe0] sm:$0xff]
        %v730 = vld [vmem:[%s583 + $0xe8] sm:$0xff]
        %v731 = vld [vmem:[%s583 + $0xf0] sm:$0xff]
        %v732 = vld [vmem:[%s583 + $0xf8] sm:$0xff]
        %v733 = vpack.c.bf16 %v703, %v701
        %v734 = vpack.c.bf16 %v704, %v702
        %v735 = vpack.c.bf16 %v707, %v705
        %v736 = vpack.c.bf16 %v708, %v706
        %v737 = vpack.c.bf16 %v711, %v709
        %v738 = vpack.c.bf16 %v712, %v710
        %v739 = vpack.c.bf16 %v715, %v713
        %v740 = vpack.c.bf16 %v716, %v714
        %v741 = vpack.c.bf16 %v719, %v717
        %v742 = vpack.c.bf16 %v720, %v718
        %v743 = vpack.c.bf16 %v723, %v721
        %v744 = vpack.c.bf16 %v724, %v722
        %v745 = vpack.c.bf16 %v727, %v725
        %v746 = vpack.c.bf16 %v728, %v726
        %v747 = vpack.c.bf16 %v731, %v729
        %v748 = vpack.c.bf16 %v732, %v730
        %v749 = vld [vmem:[#allocation7] sm:$0xff]
        %v750 = vld [vmem:[#allocation7 + $0x8] sm:$0xff]
        %v751 = vld [vmem:[#allocation7 + $0x10] sm:$0xff]
        %v752 = vld [vmem:[#allocation7 + $0x18] sm:$0xff]
        %v753 = vld [vmem:[#allocation7 + $0x20] sm:$0xff]
        %v754 = vld [vmem:[#allocation7 + $0x28] sm:$0xff]
        %v755 = vld [vmem:[#allocation7 + $0x30] sm:$0xff]
        %v756 = vld [vmem:[#allocation7 + $0x38] sm:$0xff]
        %v757 = vld [vmem:[#allocation7 + $0x40] sm:$0xff]
        %v758 = vld [vmem:[#allocation7 + $0x48] sm:$0xff]
        %v759 = vld [vmem:[#allocation7 + $0x50] sm:$0xff]
        %v760 = vld [vmem:[#allocation7 + $0x58] sm:$0xff]
        %v761 = vld [vmem:[#allocation7 + $0x60] sm:$0xff]
        %v762 = vld [vmem:[#allocation7 + $0x68] sm:$0xff]
        %v763 = vld [vmem:[#allocation7 + $0x70] sm:$0xff]
        %v764 = vld [vmem:[#allocation7 + $0x78] sm:$0xff]
        %v765 = vld [vmem:[#allocation7 + $0x80] sm:$0xff]
        %v766 = vld [vmem:[#allocation7 + $0x88] sm:$0xff]
        %v767 = vld [vmem:[#allocation7 + $0x90] sm:$0xff]
        %v768 = vld [vmem:[#allocation7 + $0x98] sm:$0xff]
        %v769 = vld [vmem:[#allocation7 + $0xa0] sm:$0xff]
        %v770 = vld [vmem:[#allocation7 + $0xa8] sm:$0xff]
        %v771 = vld [vmem:[#allocation7 + $0xb0] sm:$0xff]
        %v772 = vld [vmem:[#allocation7 + $0xb8] sm:$0xff]
        %v773 = vld [vmem:[#allocation7 + $0xc0] sm:$0xff]
        %v774 = vld [vmem:[#allocation7 + $0xc8] sm:$0xff]
        %v775 = vld [vmem:[#allocation7 + $0xd0] sm:$0xff]
        %v776 = vld [vmem:[#allocation7 + $0xd8] sm:$0xff]
        %v777 = vld [vmem:[#allocation7 + $0xe0] sm:$0xff]
        %v778 = vld [vmem:[#allocation7 + $0xe8] sm:$0xff]
        %v779 = vld [vmem:[#allocation7 + $0xf0] sm:$0xff]
        %v780 = vld [vmem:[#allocation7 + $0xf8] sm:$0xff]
        %v781 = vld [vmem:[#allocation7 + $0x100] sm:$0xff]
        %v782 = vld [vmem:[#allocation7 + $0x108] sm:$0xff]
        %v783 = vld [vmem:[#allocation7 + $0x110] sm:$0xff]
        %v784 = vld [vmem:[#allocation7 + $0x118] sm:$0xff]
        %v785 = vld [vmem:[#allocation7 + $0x120] sm:$0xff]
        %v786 = vld [vmem:[#allocation7 + $0x128] sm:$0xff]
        %v787 = vld [vmem:[#allocation7 + $0x130] sm:$0xff]
        %v788 = vld [vmem:[#allocation7 + $0x138] sm:$0xff]
        %v789 = vld [vmem:[#allocation7 + $0x140] sm:$0xff]
        %v790 = vld [vmem:[#allocation7 + $0x148] sm:$0xff]
        %v791 = vld [vmem:[#allocation7 + $0x150] sm:$0xff]
        %v792 = vld [vmem:[#allocation7 + $0x158] sm:$0xff]
        %v793 = vld [vmem:[#allocation7 + $0x160] sm:$0xff]
        %v794 = vld [vmem:[#allocation7 + $0x168] sm:$0xff]
        %v795 = vld [vmem:[#allocation7 + $0x170] sm:$0xff]
        %v796 = vld [vmem:[#allocation7 + $0x178] sm:$0xff]
        %v797 = vld [vmem:[#allocation7 + $0x180] sm:$0xff]
        %v798 = vld [vmem:[#allocation7 + $0x188] sm:$0xff]
        %v799 = vld [vmem:[#allocation7 + $0x190] sm:$0xff]
        %v800 = vld [vmem:[#allocation7 + $0x198] sm:$0xff]
        %v801 = vld [vmem:[#allocation7 + $0x1a0] sm:$0xff]
        %v802 = vld [vmem:[#allocation7 + $0x1a8] sm:$0xff]
        %v803 = vld [vmem:[#allocation7 + $0x1b0] sm:$0xff]
        %v804 = vld [vmem:[#allocation7 + $0x1b8] sm:$0xff]
        %v805 = vld [vmem:[#allocation7 + $0x1c0] sm:$0xff]
        %v806 = vld [vmem:[#allocation7 + $0x1c8] sm:$0xff]
        %v807 = vld [vmem:[#allocation7 + $0x1d0] sm:$0xff]
        %v808 = vld [vmem:[#allocation7 + $0x1d8] sm:$0xff]
        %v809 = vld [vmem:[#allocation7 + $0x1e0] sm:$0xff]
        %v810 = vld [vmem:[#allocation7 + $0x1e8] sm:$0xff]
        %v811 = vld [vmem:[#allocation7 + $0x1f0] sm:$0xff]
        %v812 = vld [vmem:[#allocation7 + $0x1f8] sm:$0xff]
        %v813 = vld [vmem:[#allocation7 + $0x200] sm:$0xff]
        %v814 = vld [vmem:[#allocation7 + $0x208] sm:$0xff]
        %v815 = vld [vmem:[#allocation7 + $0x210] sm:$0xff]
        %v816 = vld [vmem:[#allocation7 + $0x218] sm:$0xff]
        %v817 = vld [vmem:[#allocation7 + $0x220] sm:$0xff]
        %v818 = vld [vmem:[#allocation7 + $0x228] sm:$0xff]
        %v819 = vld [vmem:[#allocation7 + $0x230] sm:$0xff]
        %v820 = vld [vmem:[#allocation7 + $0x238] sm:$0xff]
        %v821 = vld [vmem:[#allocation7 + $0x240] sm:$0xff]
        %v822 = vld [vmem:[#allocation7 + $0x248] sm:$0xff]
        %v823 = vld [vmem:[#allocation7 + $0x250] sm:$0xff]
        %v824 = vld [vmem:[#allocation7 + $0x258] sm:$0xff]
        %v825 = vld [vmem:[#allocation7 + $0x260] sm:$0xff]
        %v826 = vld [vmem:[#allocation7 + $0x268] sm:$0xff]
        %v827 = vld [vmem:[#allocation7 + $0x270] sm:$0xff]
        %v828 = vld [vmem:[#allocation7 + $0x278] sm:$0xff]
        %v829 = vld [vmem:[#allocation7 + $0x280] sm:$0xff]
        %v830 = vld [vmem:[#allocation7 + $0x288] sm:$0xff]
        %v831 = vld [vmem:[#allocation7 + $0x290] sm:$0xff]
        %v832 = vld [vmem:[#allocation7 + $0x298] sm:$0xff]
        %v833 = vld [vmem:[#allocation7 + $0x2a0] sm:$0xff]
        %v834 = vld [vmem:[#allocation7 + $0x2a8] sm:$0xff]
        %v835 = vld [vmem:[#allocation7 + $0x2b0] sm:$0xff]
        %v836 = vld [vmem:[#allocation7 + $0x2b8] sm:$0xff]
        %v837 = vld [vmem:[#allocation7 + $0x2c0] sm:$0xff]
        %v838 = vld [vmem:[#allocation7 + $0x2c8] sm:$0xff]
        %v839 = vld [vmem:[#allocation7 + $0x2d0] sm:$0xff]
        %v840 = vld [vmem:[#allocation7 + $0x2d8] sm:$0xff]
        %v841 = vld [vmem:[#allocation7 + $0x2e0] sm:$0xff]
        %v842 = vld [vmem:[#allocation7 + $0x2e8] sm:$0xff]
        %v843 = vld [vmem:[#allocation7 + $0x2f0] sm:$0xff]
        %v844 = vld [vmem:[#allocation7 + $0x2f8] sm:$0xff]
        %v845 = vld [vmem:[#allocation7 + $0x300] sm:$0xff]
        %v846 = vld [vmem:[#allocation7 + $0x308] sm:$0xff]
        %v847 = vld [vmem:[#allocation7 + $0x310] sm:$0xff]
        %v848 = vld [vmem:[#allocation7 + $0x318] sm:$0xff]
        %v849 = vld [vmem:[#allocation7 + $0x320] sm:$0xff]
        %v850 = vld [vmem:[#allocation7 + $0x328] sm:$0xff]
        %v851 = vld [vmem:[#allocation7 + $0x330] sm:$0xff]
        %v852 = vld [vmem:[#allocation7 + $0x338] sm:$0xff]
        %v853 = vld [vmem:[#allocation7 + $0x340] sm:$0xff]
        %v854 = vld [vmem:[#allocation7 + $0x348] sm:$0xff]
        %v855 = vld [vmem:[#allocation7 + $0x350] sm:$0xff]
        %v856 = vld [vmem:[#allocation7 + $0x358] sm:$0xff]
        %v857 = vld [vmem:[#allocation7 + $0x360] sm:$0xff]
        %v858 = vld [vmem:[#allocation7 + $0x368] sm:$0xff]
        %v859 = vld [vmem:[#allocation7 + $0x370] sm:$0xff]
        %v860 = vld [vmem:[#allocation7 + $0x378] sm:$0xff]
        %v861 = vld [vmem:[#allocation7 + $0x380] sm:$0xff]
        %v862 = vld [vmem:[#allocation7 + $0x388] sm:$0xff]
        %v863 = vld [vmem:[#allocation7 + $0x390] sm:$0xff]
        %v864 = vld [vmem:[#allocation7 + $0x398] sm:$0xff]
        %v865 = vld [vmem:[#allocation7 + $0x3a0] sm:$0xff]
        %v866 = vld [vmem:[#allocation7 + $0x3a8] sm:$0xff]
        %v867 = vld [vmem:[#allocation7 + $0x3b0] sm:$0xff]
        %v868 = vld [vmem:[#allocation7 + $0x3b8] sm:$0xff]
        %v869 = vld [vmem:[#allocation7 + $0x3c0] sm:$0xff]
        %v870 = vld [vmem:[#allocation7 + $0x3c8] sm:$0xff]
        %v871 = vld [vmem:[#allocation7 + $0x3d0] sm:$0xff]
        %v872 = vld [vmem:[#allocation7 + $0x3d8] sm:$0xff]
        %v873 = vld [vmem:[#allocation7 + $0x3e0] sm:$0xff]
        %v874 = vld [vmem:[#allocation7 + $0x3e8] sm:$0xff]
        %v875 = vld [vmem:[#allocation7 + $0x3f0] sm:$0xff]
        %v876 = vld [vmem:[#allocation7 + $0x3f8] sm:$0xff]
        %v877 = vld [vmem:[%s3] sm:$0xff]
        %v879 = vlaneseq
        %v880 = vshrl.u32 %v879, 7
        %v881 = vsub.s32 0, %v880
        %v882 = vrot.slane %v877, %v881
        %v883 = vlaneseq
        %v884 = vshrl.u32 %v883, 7
        %v885 = vsub.s32 1, %v884
        %v886 = vrot.slane %v877, %v885
        %v887 = vlaneseq
        %v888 = vshrl.u32 %v887, 7
        %v889 = vsub.s32 2, %v888
        %v890 = vrot.slane %v877, %v889
        %v891 = vlaneseq
        %v892 = vshrl.u32 %v891, 7
        %v893 = vsub.s32 3, %v892
        %v894 = vrot.slane %v877, %v893
        %v895 = vlaneseq
        %v896 = vshrl.u32 %v895, 7
        %v897 = vsub.s32 4, %v896
        %v898 = vrot.slane %v877, %v897
        %v899 = vlaneseq
        %v900 = vshrl.u32 %v899, 7
        %v901 = vsub.s32 5, %v900
        %v902 = vrot.slane %v877, %v901
        %v903 = vlaneseq
        %v904 = vshrl.u32 %v903, 7
        %v905 = vsub.s32 6, %v904
        %v906 = vrot.slane %v877, %v905
        %v907 = vlaneseq
        %v908 = vshrl.u32 %v907, 7
        %v909 = vsub.s32 7, %v908
        %v910 = vrot.slane %v877, %v909
        %v1047 = vunpack.c.l.b16 %v749
        %v1048 = vunpack.c.h.b16 %v749
        %v1049 = vunpack.c.l.b16 %v750
        %v1050 = vunpack.c.h.b16 %v750
        %v1051 = vunpack.c.l.b16 %v751
        %v1052 = vunpack.c.h.b16 %v751
        %v1053 = vunpack.c.l.b16 %v752
        %v1054 = vunpack.c.h.b16 %v752
        %v1055 = vunpack.c.l.b16 %v753
        %v1056 = vunpack.c.h.b16 %v753
        %v1057 = vunpack.c.l.b16 %v754
        %v1058 = vunpack.c.h.b16 %v754
        %v1059 = vunpack.c.l.b16 %v755
        %v1060 = vunpack.c.h.b16 %v755
        %v1061 = vunpack.c.l.b16 %v756
        %v1062 = vunpack.c.h.b16 %v756
        %v1063 = vunpack.c.l.b16 %v757
        %v1064 = vunpack.c.h.b16 %v757
        %v1065 = vunpack.c.l.b16 %v758
        %v1066 = vunpack.c.h.b16 %v758
        %v1067 = vunpack.c.l.b16 %v759
        %v1068 = vunpack.c.h.b16 %v759
        %v1069 = vunpack.c.l.b16 %v760
        %v1070 = vunpack.c.h.b16 %v760
        %v1071 = vunpack.c.l.b16 %v761
        %v1072 = vunpack.c.h.b16 %v761
        %v1073 = vunpack.c.l.b16 %v762
        %v1074 = vunpack.c.h.b16 %v762
        %v1075 = vunpack.c.l.b16 %v763
        %v1076 = vunpack.c.h.b16 %v763
        %v1077 = vunpack.c.l.b16 %v764
        %v1078 = vunpack.c.h.b16 %v764
        %v1079 = vunpack.c.l.b16 %v765
        %v1080 = vunpack.c.h.b16 %v765
        %v1081 = vunpack.c.l.b16 %v766
        %v1082 = vunpack.c.h.b16 %v766
        %v1083 = vunpack.c.l.b16 %v767
        %v1084 = vunpack.c.h.b16 %v767
        %v1085 = vunpack.c.l.b16 %v768
        %v1086 = vunpack.c.h.b16 %v768
        %v1087 = vunpack.c.l.b16 %v769
        %v1088 = vunpack.c.h.b16 %v769
        %v1089 = vunpack.c.l.b16 %v770
        %v1090 = vunpack.c.h.b16 %v770
        %v1091 = vunpack.c.l.b16 %v771
        %v1092 = vunpack.c.h.b16 %v771
        %v1093 = vunpack.c.l.b16 %v772
        %v1094 = vunpack.c.h.b16 %v772
        %v1095 = vunpack.c.l.b16 %v773
        %v1096 = vunpack.c.h.b16 %v773
        %v1097 = vunpack.c.l.b16 %v774
        %v1098 = vunpack.c.h.b16 %v774
        %v1099 = vunpack.c.l.b16 %v775
        %v1100 = vunpack.c.h.b16 %v775
        %v1101 = vunpack.c.l.b16 %v776
        %v1102 = vunpack.c.h.b16 %v776
        %v1103 = vunpack.c.l.b16 %v777
        %v1104 = vunpack.c.h.b16 %v777
        %v1105 = vunpack.c.l.b16 %v778
        %v1106 = vunpack.c.h.b16 %v778
        %v1107 = vunpack.c.l.b16 %v779
        %v1108 = vunpack.c.h.b16 %v779
        %v1109 = vunpack.c.l.b16 %v780
        %v1110 = vunpack.c.h.b16 %v780
        %v1111 = vunpack.c.l.b16 %v781
        %v1112 = vunpack.c.h.b16 %v781
        %v1113 = vunpack.c.l.b16 %v782
        %v1114 = vunpack.c.h.b16 %v782
        %v1115 = vunpack.c.l.b16 %v783
        %v1116 = vunpack.c.h.b16 %v783
        %v1117 = vunpack.c.l.b16 %v784
        %v1118 = vunpack.c.h.b16 %v784
        %v1119 = vunpack.c.l.b16 %v785
        %v1120 = vunpack.c.h.b16 %v785
        %v1121 = vunpack.c.l.b16 %v786
        %v1122 = vunpack.c.h.b16 %v786
        %v1123 = vunpack.c.l.b16 %v787
        %v1124 = vunpack.c.h.b16 %v787
        %v1125 = vunpack.c.l.b16 %v788
        %v1126 = vunpack.c.h.b16 %v788
        %v1127 = vunpack.c.l.b16 %v789
        %v1128 = vunpack.c.h.b16 %v789
        %v1129 = vunpack.c.l.b16 %v790
        %v1130 = vunpack.c.h.b16 %v790
        %v1131 = vunpack.c.l.b16 %v791
        %v1132 = vunpack.c.h.b16 %v791
        %v1133 = vunpack.c.l.b16 %v792
        %v1134 = vunpack.c.h.b16 %v792
        %v1135 = vunpack.c.l.b16 %v793
        %v1136 = vunpack.c.h.b16 %v793
        %v1137 = vunpack.c.l.b16 %v794
        %v1138 = vunpack.c.h.b16 %v794
        %v1139 = vunpack.c.l.b16 %v795
        %v1140 = vunpack.c.h.b16 %v795
        %v1141 = vunpack.c.l.b16 %v796
        %v1142 = vunpack.c.h.b16 %v796
        %v1143 = vunpack.c.l.b16 %v797
        %v1144 = vunpack.c.h.b16 %v797
        %v1145 = vunpack.c.l.b16 %v798
        %v1146 = vunpack.c.h.b16 %v798
        %v1147 = vunpack.c.l.b16 %v799
        %v1148 = vunpack.c.h.b16 %v799
        %v1149 = vunpack.c.l.b16 %v800
        %v1150 = vunpack.c.h.b16 %v800
        %v1151 = vunpack.c.l.b16 %v801
        %v1152 = vunpack.c.h.b16 %v801
        %v1153 = vunpack.c.l.b16 %v802
        %v1154 = vunpack.c.h.b16 %v802
        %v1155 = vunpack.c.l.b16 %v803
        %v1156 = vunpack.c.h.b16 %v803
        %v1157 = vunpack.c.l.b16 %v804
        %v1158 = vunpack.c.h.b16 %v804
        %v1159 = vunpack.c.l.b16 %v805
        %v1160 = vunpack.c.h.b16 %v805
        %v1161 = vunpack.c.l.b16 %v806
        %v1162 = vunpack.c.h.b16 %v806
        %v1163 = vunpack.c.l.b16 %v807
        %v1164 = vunpack.c.h.b16 %v807
        %v1165 = vunpack.c.l.b16 %v808
        %v1166 = vunpack.c.h.b16 %v808
        %v1167 = vunpack.c.l.b16 %v809
        %v1168 = vunpack.c.h.b16 %v809
        %v1169 = vunpack.c.l.b16 %v810
        %v1170 = vunpack.c.h.b16 %v810
        %v1171 = vunpack.c.l.b16 %v811
        %v1172 = vunpack.c.h.b16 %v811
        %v1173 = vunpack.c.l.b16 %v812
        %v1174 = vunpack.c.h.b16 %v812
        %v1175 = vunpack.c.l.b16 %v813
        %v1176 = vunpack.c.h.b16 %v813
        %v1177 = vunpack.c.l.b16 %v814
        %v1178 = vunpack.c.h.b16 %v814
        %v1179 = vunpack.c.l.b16 %v815
        %v1180 = vunpack.c.h.b16 %v815
        %v1181 = vunpack.c.l.b16 %v816
        %v1182 = vunpack.c.h.b16 %v816
        %v1183 = vunpack.c.l.b16 %v817
        %v1184 = vunpack.c.h.b16 %v817
        %v1185 = vunpack.c.l.b16 %v818
        %v1186 = vunpack.c.h.b16 %v818
        %v1187 = vunpack.c.l.b16 %v819
        %v1188 = vunpack.c.h.b16 %v819
        %v1189 = vunpack.c.l.b16 %v820
        %v1190 = vunpack.c.h.b16 %v820
        %v1191 = vunpack.c.l.b16 %v821
        %v1192 = vunpack.c.h.b16 %v821
        %v1193 = vunpack.c.l.b16 %v822
        %v1194 = vunpack.c.h.b16 %v822
        %v1195 = vunpack.c.l.b16 %v823
        %v1196 = vunpack.c.h.b16 %v823
        %v1197 = vunpack.c.l.b16 %v824
        %v1198 = vunpack.c.h.b16 %v824
        %v1199 = vunpack.c.l.b16 %v825
        %v1200 = vunpack.c.h.b16 %v825
        %v1201 = vunpack.c.l.b16 %v826
        %v1202 = vunpack.c.h.b16 %v826
        %v1203 = vunpack.c.l.b16 %v827
        %v1204 = vunpack.c.h.b16 %v827
        %v1205 = vunpack.c.l.b16 %v828
        %v1206 = vunpack.c.h.b16 %v828
        %v1207 = vunpack.c.l.b16 %v829
        %v1208 = vunpack.c.h.b16 %v829
        %v1209 = vunpack.c.l.b16 %v830
        %v1210 = vunpack.c.h.b16 %v830
        %v1211 = vunpack.c.l.b16 %v831
        %v1212 = vunpack.c.h.b16 %v831
        %v1213 = vunpack.c.l.b16 %v832
        %v1214 = vunpack.c.h.b16 %v832
        %v1215 = vunpack.c.l.b16 %v833
        %v1216 = vunpack.c.h.b16 %v833
        %v1217 = vunpack.c.l.b16 %v834
        %v1218 = vunpack.c.h.b16 %v834
        %v1219 = vunpack.c.l.b16 %v835
        %v1220 = vunpack.c.h.b16 %v835
        %v1221 = vunpack.c.l.b16 %v836
        %v1222 = vunpack.c.h.b16 %v836
        %v1223 = vunpack.c.l.b16 %v837
        %v1224 = vunpack.c.h.b16 %v837
        %v1225 = vunpack.c.l.b16 %v838
        %v1226 = vunpack.c.h.b16 %v838
        %v1227 = vunpack.c.l.b16 %v839
        %v1228 = vunpack.c.h.b16 %v839
        %v1229 = vunpack.c.l.b16 %v840
        %v1230 = vunpack.c.h.b16 %v840
        %v1231 = vunpack.c.l.b16 %v841
        %v1232 = vunpack.c.h.b16 %v841
        %v1233 = vunpack.c.l.b16 %v842
        %v1234 = vunpack.c.h.b16 %v842
        %v1235 = vunpack.c.l.b16 %v843
        %v1236 = vunpack.c.h.b16 %v843
        %v1237 = vunpack.c.l.b16 %v844
        %v1238 = vunpack.c.h.b16 %v844
        %v1239 = vunpack.c.l.b16 %v845
        %v1240 = vunpack.c.h.b16 %v845
        %v1241 = vunpack.c.l.b16 %v846
        %v1242 = vunpack.c.h.b16 %v846
        %v1243 = vunpack.c.l.b16 %v847
        %v1244 = vunpack.c.h.b16 %v847
        %v1245 = vunpack.c.l.b16 %v848
        %v1246 = vunpack.c.h.b16 %v848
        %v1247 = vunpack.c.l.b16 %v849
        %v1248 = vunpack.c.h.b16 %v849
        %v1249 = vunpack.c.l.b16 %v850
        %v1250 = vunpack.c.h.b16 %v850
        %v1251 = vunpack.c.l.b16 %v851
        %v1252 = vunpack.c.h.b16 %v851
        %v1253 = vunpack.c.l.b16 %v852
        %v1254 = vunpack.c.h.b16 %v852
        %v1255 = vunpack.c.l.b16 %v853
        %v1256 = vunpack.c.h.b16 %v853
        %v1257 = vunpack.c.l.b16 %v854
        %v1258 = vunpack.c.h.b16 %v854
        %v1259 = vunpack.c.l.b16 %v855
        %v1260 = vunpack.c.h.b16 %v855
        %v1261 = vunpack.c.l.b16 %v856
        %v1262 = vunpack.c.h.b16 %v856
        %v1263 = vunpack.c.l.b16 %v857
        %v1264 = vunpack.c.h.b16 %v857
        %v1265 = vunpack.c.l.b16 %v858
        %v1266 = vunpack.c.h.b16 %v858
        %v1267 = vunpack.c.l.b16 %v859
        %v1268 = vunpack.c.h.b16 %v859
        %v1269 = vunpack.c.l.b16 %v860
        %v1270 = vunpack.c.h.b16 %v860
        %v1271 = vunpack.c.l.b16 %v861
        %v1272 = vunpack.c.h.b16 %v861
        %v1273 = vunpack.c.l.b16 %v862
        %v1274 = vunpack.c.h.b16 %v862
        %v1275 = vunpack.c.l.b16 %v863
        %v1276 = vunpack.c.h.b16 %v863
        %v1277 = vunpack.c.l.b16 %v864
        %v1278 = vunpack.c.h.b16 %v864
        %v1279 = vunpack.c.l.b16 %v865
        %v1280 = vunpack.c.h.b16 %v865
        %v1281 = vunpack.c.l.b16 %v866
        %v1282 = vunpack.c.h.b16 %v866
        %v1283 = vunpack.c.l.b16 %v867
        %v1284 = vunpack.c.h.b16 %v867
        %v1285 = vunpack.c.l.b16 %v868
        %v1286 = vunpack.c.h.b16 %v868
        %v1287 = vunpack.c.l.b16 %v869
        %v1288 = vunpack.c.h.b16 %v869
        %v1289 = vunpack.c.l.b16 %v870
        %v1290 = vunpack.c.h.b16 %v870
        %v1291 = vunpack.c.l.b16 %v871
        %v1292 = vunpack.c.h.b16 %v871
        %v1293 = vunpack.c.l.b16 %v872
        %v1294 = vunpack.c.h.b16 %v872
        %v1295 = vunpack.c.l.b16 %v873
        %v1296 = vunpack.c.h.b16 %v873
        %v1297 = vunpack.c.l.b16 %v874
        %v1298 = vunpack.c.h.b16 %v874
        %v1299 = vunpack.c.l.b16 %v875
        %v1300 = vunpack.c.h.b16 %v875
        %v1301 = vunpack.c.l.b16 %v876
        %v1302 = vunpack.c.h.b16 %v876
        %v1303 = vpack.c.b16 %v1055, %v1047
        %v1304 = vpack.c.b16 %v1056, %v1048
        %v1305 = vpack.c.b16 %v1057, %v1049
        %v1306 = vpack.c.b16 %v1058, %v1050
        %v1307 = vpack.c.b16 %v1059, %v1051
        %v1308 = vpack.c.b16 %v1060, %v1052
        %v1309 = vpack.c.b16 %v1061, %v1053
        %v1310 = vpack.c.b16 %v1062, %v1054
        %v1311 = vpack.c.b16 %v1071, %v1063
        %v1312 = vpack.c.b16 %v1072, %v1064
        %v1313 = vpack.c.b16 %v1073, %v1065
        %v1314 = vpack.c.b16 %v1074, %v1066
        %v1315 = vpack.c.b16 %v1075, %v1067
        %v1316 = vpack.c.b16 %v1076, %v1068
        %v1317 = vpack.c.b16 %v1077, %v1069
        %v1318 = vpack.c.b16 %v1078, %v1070
        %v1319 = vpack.c.b16 %v1087, %v1079
        %v1320 = vpack.c.b16 %v1088, %v1080
        %v1321 = vpack.c.b16 %v1089, %v1081
        %v1322 = vpack.c.b16 %v1090, %v1082
        %v1323 = vpack.c.b16 %v1091, %v1083
        %v1324 = vpack.c.b16 %v1092, %v1084
        %v1325 = vpack.c.b16 %v1093, %v1085
        %v1326 = vpack.c.b16 %v1094, %v1086
        %v1327 = vpack.c.b16 %v1103, %v1095
        %v1328 = vpack.c.b16 %v1104, %v1096
        %v1329 = vpack.c.b16 %v1105, %v1097
        %v1330 = vpack.c.b16 %v1106, %v1098
        %v1331 = vpack.c.b16 %v1107, %v1099
        %v1332 = vpack.c.b16 %v1108, %v1100
        %v1333 = vpack.c.b16 %v1109, %v1101
        %v1334 = vpack.c.b16 %v1110, %v1102
        %v1335 = vpack.c.b16 %v1119, %v1111
        %v1336 = vpack.c.b16 %v1120, %v1112
        %v1337 = vpack.c.b16 %v1121, %v1113
        %v1338 = vpack.c.b16 %v1122, %v1114
        %v1339 = vpack.c.b16 %v1123, %v1115
        %v1340 = vpack.c.b16 %v1124, %v1116
        %v1341 = vpack.c.b16 %v1125, %v1117
        %v1342 = vpack.c.b16 %v1126, %v1118
        %v1343 = vpack.c.b16 %v1135, %v1127
        %v1344 = vpack.c.b16 %v1136, %v1128
        %v1345 = vpack.c.b16 %v1137, %v1129
        %v1346 = vpack.c.b16 %v1138, %v1130
        %v1347 = vpack.c.b16 %v1139, %v1131
        %v1348 = vpack.c.b16 %v1140, %v1132
        %v1349 = vpack.c.b16 %v1141, %v1133
        %v1350 = vpack.c.b16 %v1142, %v1134
        %v1351 = vpack.c.b16 %v1151, %v1143
        %v1352 = vpack.c.b16 %v1152, %v1144
        %v1353 = vpack.c.b16 %v1153, %v1145
        %v1354 = vpack.c.b16 %v1154, %v1146
        %v1355 = vpack.c.b16 %v1155, %v1147
        %v1356 = vpack.c.b16 %v1156, %v1148
        %v1357 = vpack.c.b16 %v1157, %v1149
        %v1358 = vpack.c.b16 %v1158, %v1150
        %v1359 = vpack.c.b16 %v1167, %v1159
        %v1360 = vpack.c.b16 %v1168, %v1160
        %v1361 = vpack.c.b16 %v1169, %v1161
        %v1362 = vpack.c.b16 %v1170, %v1162
        %v1363 = vpack.c.b16 %v1171, %v1163
        %v1364 = vpack.c.b16 %v1172, %v1164
        %v1365 = vpack.c.b16 %v1173, %v1165
        %v1366 = vpack.c.b16 %v1174, %v1166
        %v1367 = vpack.c.b16 %v1183, %v1175
        %v1368 = vpack.c.b16 %v1184, %v1176
        %v1369 = vpack.c.b16 %v1185, %v1177
        %v1370 = vpack.c.b16 %v1186, %v1178
        %v1371 = vpack.c.b16 %v1187, %v1179
        %v1372 = vpack.c.b16 %v1188, %v1180
        %v1373 = vpack.c.b16 %v1189, %v1181
        %v1374 = vpack.c.b16 %v1190, %v1182
        %v1375 = vpack.c.b16 %v1199, %v1191
        %v1376 = vpack.c.b16 %v1200, %v1192
        %v1377 = vpack.c.b16 %v1201, %v1193
        %v1378 = vpack.c.b16 %v1202, %v1194
        %v1379 = vpack.c.b16 %v1203, %v1195
        %v1380 = vpack.c.b16 %v1204, %v1196
        %v1381 = vpack.c.b16 %v1205, %v1197
        %v1382 = vpack.c.b16 %v1206, %v1198
        %v1383 = vpack.c.b16 %v1215, %v1207
        %v1384 = vpack.c.b16 %v1216, %v1208
        %v1385 = vpack.c.b16 %v1217, %v1209
        %v1386 = vpack.c.b16 %v1218, %v1210
        %v1387 = vpack.c.b16 %v1219, %v1211
        %v1388 = vpack.c.b16 %v1220, %v1212
        %v1389 = vpack.c.b16 %v1221, %v1213
        %v1390 = vpack.c.b16 %v1222, %v1214
        %v1391 = vpack.c.b16 %v1231, %v1223
        %v1392 = vpack.c.b16 %v1232, %v1224
        %v1393 = vpack.c.b16 %v1233, %v1225
        %v1394 = vpack.c.b16 %v1234, %v1226
        %v1395 = vpack.c.b16 %v1235, %v1227
        %v1396 = vpack.c.b16 %v1236, %v1228
        %v1397 = vpack.c.b16 %v1237, %v1229
        %v1398 = vpack.c.b16 %v1238, %v1230
        %v1399 = vpack.c.b16 %v1247, %v1239
        %v1400 = vpack.c.b16 %v1248, %v1240
        %v1401 = vpack.c.b16 %v1249, %v1241
        %v1402 = vpack.c.b16 %v1250, %v1242
        %v1403 = vpack.c.b16 %v1251, %v1243
        %v1404 = vpack.c.b16 %v1252, %v1244
        %v1405 = vpack.c.b16 %v1253, %v1245
        %v1406 = vpack.c.b16 %v1254, %v1246
        %v1407 = vpack.c.b16 %v1263, %v1255
        %v1408 = vpack.c.b16 %v1264, %v1256
        %v1409 = vpack.c.b16 %v1265, %v1257
        %v1410 = vpack.c.b16 %v1266, %v1258
        %v1411 = vpack.c.b16 %v1267, %v1259
        %v1412 = vpack.c.b16 %v1268, %v1260
        %v1413 = vpack.c.b16 %v1269, %v1261
        %v1414 = vpack.c.b16 %v1270, %v1262
        %v1415 = vpack.c.b16 %v1279, %v1271
        %v1416 = vpack.c.b16 %v1280, %v1272
        %v1417 = vpack.c.b16 %v1281, %v1273
        %v1418 = vpack.c.b16 %v1282, %v1274
        %v1419 = vpack.c.b16 %v1283, %v1275
        %v1420 = vpack.c.b16 %v1284, %v1276
        %v1421 = vpack.c.b16 %v1285, %v1277
        %v1422 = vpack.c.b16 %v1286, %v1278
        %v1423 = vpack.c.b16 %v1295, %v1287
        %v1424 = vpack.c.b16 %v1296, %v1288
        %v1425 = vpack.c.b16 %v1297, %v1289
        %v1426 = vpack.c.b16 %v1298, %v1290
        %v1427 = vpack.c.b16 %v1299, %v1291
        %v1428 = vpack.c.b16 %v1300, %v1292
        %v1429 = vpack.c.b16 %v1301, %v1293
        %v1430 = vpack.c.b16 %v1302, %v1294
        %1559 = vmatprep.subr.bf16.mxu0 %v1304
        %1560 = vmatpush1.bf16.msra.mxu0 %v1303
        %1561 = vmatprep.subr.bf16.mxu0 %v1312
        %1562 = vmatpush1.bf16.msra.mxu0 %v1311
        %1563 = vmatprep.subr.bf16.mxu0 %v1320
        %1564 = vmatpush1.bf16.msra.mxu0 %v1319
        %1565 = vmatprep.subr.bf16.mxu0 %v1328
        %1566 = vmatpush1.bf16.msra.mxu0 %v1327
        %1567 = vmatprep.subr.bf16.mxu0 %v1336
        %1568 = vmatpush1.bf16.msra.mxu0 %v1335
        %1569 = vmatprep.subr.bf16.mxu0 %v1344
        %1570 = vmatpush1.bf16.msra.mxu0 %v1343
        %1571 = vmatprep.subr.bf16.mxu0 %v1352
        %1572 = vmatpush1.bf16.msra.mxu0 %v1351
        %1573 = vmatprep.subr.bf16.mxu0 %v1360
        %1574 = vmatpush1.bf16.msra.mxu0 %v1359
        %1575 = vmatprep.subr.bf16.mxu0 %v1368
        %1576 = vmatpush1.bf16.msra.mxu0 %v1367
        %1577 = vmatprep.subr.bf16.mxu0 %v1376
        %1578 = vmatpush1.bf16.msra.mxu0 %v1375
        %1579 = vmatprep.subr.bf16.mxu0 %v1384
        %1580 = vmatpush1.bf16.msra.mxu0 %v1383
        %1581 = vmatprep.subr.bf16.mxu0 %v1392
        %1582 = vmatpush1.bf16.msra.mxu0 %v1391
        %1583 = vmatprep.subr.bf16.mxu0 %v1400
        %1584 = vmatpush1.bf16.msra.mxu0 %v1399
        %1585 = vmatprep.subr.bf16.mxu0 %v1408
        %1586 = vmatpush1.bf16.msra.mxu0 %v1407
        %1587 = vmatprep.subr.bf16.mxu0 %v1416
        %1588 = vmatpush1.bf16.msra.mxu0 %v1415
        %1589 = vmatprep.subr.bf16.mxu0 %v1424
        %1590 = vmatpush1.bf16.msra.mxu0 %v1423
        %1591 = vmatprep.mubr.bf16.mxu0 %v734
        %1592 = vmatmul.mubr.bf16.gmra.mrb[0].mxu0 %v733
        %v1593 = vpop.f32.mrb[0].mxu0
        %v1594 = vadd.f32 %v882, %v1593
        %v1595 = vpop.f32.mrb[0].mxu0
        %v1596 = vadd.f32 %v886, %v1595
        %v1597 = vpop.f32.mrb[0].mxu0
        %v1598 = vadd.f32 %v882, %v1597
        %v1599 = vpop.f32.mrb[0].mxu0
        %v1600 = vadd.f32 %v886, %v1599
        %1601 = vmatprep.mubr.bf16.mxu0 %v736
        %1602 = vmatmul.mubr.bf16.gmra.mrb[0].mxu0 %v735
        %v1603 = vpop.f32.mrb[0].mxu0
        %v1604 = vadd.f32 %v882, %v1603
        %v1605 = vpop.f32.mrb[0].mxu0
        %v1606 = vadd.f32 %v886, %v1605
        %v1607 = vpop.f32.mrb[0].mxu0
        %v1608 = vadd.f32 %v882, %v1607
        %v1609 = vpop.f32.mrb[0].mxu0
        %v1610 = vadd.f32 %v886, %v1609
        %1611 = vmatprep.mubr.bf16.mxu0 %v738
        %1612 = vmatmul.mubr.bf16.gmra.mrb[0].mxu0 %v737
        %v1613 = vpop.f32.mrb[0].mxu0
        %v1614 = vadd.f32 %v882, %v1613
        %v1615 = vpop.f32.mrb[0].mxu0
        %v1616 = vadd.f32 %v886, %v1615
        %v1617 = vpop.f32.mrb[0].mxu0
        %v1618 = vadd.f32 %v882, %v1617
        %v1619 = vpop.f32.mrb[0].mxu0
        %v1620 = vadd.f32 %v886, %v1619
        %1621 = vmatprep.mubr.bf16.mxu0 %v740
        %1622 = vmatmul.mubr.bf16.gmra.mrb[0].mxu0 %v739
        %v1623 = vpop.f32.mrb[0].mxu0
        %v1624 = vadd.f32 %v882, %v1623
        %v1625 = vpop.f32.mrb[0].mxu0
        %v1626 = vadd.f32 %v886, %v1625
        %v1627 = vpop.f32.mrb[0].mxu0
        %v1628 = vadd.f32 %v882, %v1627
        %v1629 = vpop.f32.mrb[0].mxu0
        %v1630 = vadd.f32 %v886, %v1629
        %1631 = vmatprep.mubr.bf16.mxu0 %v742
        %1632 = vmatmul.mubr.bf16.gmra.mrb[0].mxu0 %v741
        %v1633 = vpop.f32.mrb[0].mxu0
        %v1634 = vadd.f32 %v882, %v1633
        %v1635 = vpop.f32.mrb[0].mxu0
        %v1636 = vadd.f32 %v886, %v1635
        %v1637 = vpop.f32.mrb[0].mxu0
        %v1638 = vadd.f32 %v882, %v1637
        %v1639 = vpop.f32.mrb[0].mxu0
        %v1640 = vadd.f32 %v886, %v1639
        %1641 = vmatprep.mubr.bf16.mxu0 %v744
        %1642 = vmatmul.mubr.bf16.gmra.mrb[0].mxu0 %v743
        %v1643 = vpop.f32.mrb[0].mxu0
        %v1644 = vadd.f32 %v882, %v1643
        %v1645 = vpop.f32.mrb[0].mxu0
        %v1646 = vadd.f32 %v886, %v1645
        %v1647 = vpop.f32.mrb[0].mxu0
        %v1648 = vadd.f32 %v882, %v1647
        %v1649 = vpop.f32.mrb[0].mxu0
        %v1650 = vadd.f32 %v886, %v1649
        %1651 = vmatprep.mubr.bf16.mxu0 %v746
        %1652 = vmatmul.mubr.bf16.gmra.mrb[0].mxu0 %v745
        %v1653 = vpop.f32.mrb[0].mxu0
        %v1654 = vadd.f32 %v882, %v1653
        %v1655 = vpop.f32.mrb[0].mxu0
        %v1656 = vadd.f32 %v886, %v1655
        %v1657 = vpop.f32.mrb[0].mxu0
        %v1658 = vadd.f32 %v882, %v1657
        %v1659 = vpop.f32.mrb[0].mxu0
        %v1660 = vadd.f32 %v886, %v1659
        %1661 = vmatprep.mubr.bf16.mxu0 %v748
        %1662 = vmatmul.mubr.bf16.gmra.mrb[0].mxu0 %v747
        %v1663 = vpop.f32.mrb[0].mxu0
        %v1664 = vadd.f32 %v882, %v1663
        %v1665 = vpop.f32.mrb[0].mxu0
        %v1666 = vadd.f32 %v886, %v1665
        %v1667 = vpop.f32.mrb[0].mxu0
        %v1668 = vadd.f32 %v882, %v1667
        %v1669 = vpop.f32.mrb[0].mxu0
        %v1670 = vadd.f32 %v886, %v1669
        %1671 = vdwg.mxu0
        %1672 = vmatprep.subr.bf16.mxu0 %v1306
        %1673 = vmatpush1.bf16.msra.mxu0 %v1305
        %1674 = vmatprep.subr.bf16.mxu0 %v1314
        %1675 = vmatpush1.bf16.msra.mxu0 %v1313
        %1676 = vmatprep.subr.bf16.mxu0 %v1322
        %1677 = vmatpush1.bf16.msra.mxu0 %v1321
        %1678 = vmatprep.subr.bf16.mxu0 %v1330
        %1679 = vmatpush1.bf16.msra.mxu0 %v1329
        %1680 = vmatprep.subr.bf16.mxu0 %v1338
        %1681 = vmatpush1.bf16.msra.mxu0 %v1337
        %1682 = vmatprep.subr.bf16.mxu0 %v1346
        %1683 = vmatpush1.bf16.msra.mxu0 %v1345
        %1684 = vmatprep.subr.bf16.mxu0 %v1354
        %1685 = vmatpush1.bf16.msra.mxu0 %v1353
        %1686 = vmatprep.subr.bf16.mxu0 %v1362
        %1687 = vmatpush1.bf16.msra.mxu0 %v1361
        %1688 = vmatprep.subr.bf16.mxu0 %v1370
        %1689 = vmatpush1.bf16.msra.mxu0 %v1369
        %1690 = vmatprep.subr.bf16.mxu0 %v1378
        %1691 = vmatpush1.bf16.msra.mxu0 %v1377
        %1692 = vmatprep.subr.bf16.mxu0 %v1386
        %1693 = vmatpush1.bf16.msra.mxu0 %v1385
        %1694 = vmatprep.subr.bf16.mxu0 %v1394
        %1695 = vmatpush1.bf16.msra.mxu0 %v1393
        %1696 = vmatprep.subr.bf16.mxu0 %v1402
        %1697 = vmatpush1.bf16.msra.mxu0 %v1401
        %1698 = vmatprep.subr.bf16.mxu0 %v1410
        %1699 = vmatpush1.bf16.msra.mxu0 %v1409
        %1700 = vmatprep.subr.bf16.mxu0 %v1418
        %1701 = vmatpush1.bf16.msra.mxu0 %v1417
        %1702 = vmatprep.subr.bf16.mxu0 %v1426
        %1703 = vmatpush1.bf16.msra.mxu0 %v1425
        %1704 = vmatprep.mubr.bf16.mxu0 %v734
        %1705 = vmatmul.mubr.bf16.gmra.mrb[0].mxu0 %v733
        %v1706 = vpop.f32.mrb[0].mxu0
        %v1707 = vadd.f32 %v890, %v1706
        %v1708 = vpop.f32.mrb[0].mxu0
        %v1709 = vadd.f32 %v894, %v1708
        %v1710 = vpop.f32.mrb[0].mxu0
        %v1711 = vadd.f32 %v890, %v1710
        %v1712 = vpop.f32.mrb[0].mxu0
        %v1713 = vadd.f32 %v894, %v1712
        %1714 = vmatprep.mubr.bf16.mxu0 %v736
        %1715 = vmatmul.mubr.bf16.gmra.mrb[0].mxu0 %v735
        %v1716 = vpop.f32.mrb[0].mxu0
        %v1717 = vadd.f32 %v890, %v1716
        %v1718 = vpop.f32.mrb[0].mxu0
        %v1719 = vadd.f32 %v894, %v1718
        %v1720 = vpop.f32.mrb[0].mxu0
        %v1721 = vadd.f32 %v890, %v1720
        %v1722 = vpop.f32.mrb[0].mxu0
        %v1723 = vadd.f32 %v894, %v1722
        %1724 = vmatprep.mubr.bf16.mxu0 %v738
        %1725 = vmatmul.mubr.bf16.gmra.mrb[0].mxu0 %v737
        %v1726 = vpop.f32.mrb[0].mxu0
        %v1727 = vadd.f32 %v890, %v1726
        %v1728 = vpop.f32.mrb[0].mxu0
        %v1729 = vadd.f32 %v894, %v1728
        %v1730 = vpop.f32.mrb[0].mxu0
        %v1731 = vadd.f32 %v890, %v1730
        %v1732 = vpop.f32.mrb[0].mxu0
        %v1733 = vadd.f32 %v894, %v1732
        %1734 = vmatprep.mubr.bf16.mxu0 %v740
        %1735 = vmatmul.mubr.bf16.gmra.mrb[0].mxu0 %v739
        %v1736 = vpop.f32.mrb[0].mxu0
        %v1737 = vadd.f32 %v890, %v1736
        %v1738 = vpop.f32.mrb[0].mxu0
        %v1739 = vadd.f32 %v894, %v1738
        %v1740 = vpop.f32.mrb[0].mxu0
        %v1741 = vadd.f32 %v890, %v1740
        %v1742 = vpop.f32.mrb[0].mxu0
        %v1743 = vadd.f32 %v894, %v1742
        %1744 = vmatprep.mubr.bf16.mxu0 %v742
        %1745 = vmatmul.mubr.bf16.gmra.mrb[0].mxu0 %v741
        %v1746 = vpop.f32.mrb[0].mxu0
        %v1747 = vadd.f32 %v890, %v1746
        %v1748 = vpop.f32.mrb[0].mxu0
        %v1749 = vadd.f32 %v894, %v1748
        %v1750 = vpop.f32.mrb[0].mxu0
        %v1751 = vadd.f32 %v890, %v1750
        %v1752 = vpop.f32.mrb[0].mxu0
        %v1753 = vadd.f32 %v894, %v1752
        %1754 = vmatprep.mubr.bf16.mxu0 %v744
        %1755 = vmatmul.mubr.bf16.gmra.mrb[0].mxu0 %v743
        %v1756 = vpop.f32.mrb[0].mxu0
        %v1757 = vadd.f32 %v890, %v1756
        %v1758 = vpop.f32.mrb[0].mxu0
        %v1759 = vadd.f32 %v894, %v1758
        %v1760 = vpop.f32.mrb[0].mxu0
        %v1761 = vadd.f32 %v890, %v1760
        %v1762 = vpop.f32.mrb[0].mxu0
        %v1763 = vadd.f32 %v894, %v1762
        %1764 = vmatprep.mubr.bf16.mxu0 %v746
        %1765 = vmatmul.mubr.bf16.gmra.mrb[0].mxu0 %v745
        %v1766 = vpop.f32.mrb[0].mxu0
        %v1767 = vadd.f32 %v890, %v1766
        %v1768 = vpop.f32.mrb[0].mxu0
        %v1769 = vadd.f32 %v894, %v1768
        %v1770 = vpop.f32.mrb[0].mxu0
        %v1771 = vadd.f32 %v890, %v1770
        %v1772 = vpop.f32.mrb[0].mxu0
        %v1773 = vadd.f32 %v894, %v1772
        %1774 = vmatprep.mubr.bf16.mxu0 %v748
        %1775 = vmatmul.mubr.bf16.gmra.mrb[0].mxu0 %v747
        %v1776 = vpop.f32.mrb[0].mxu0
        %v1777 = vadd.f32 %v890, %v1776
        %v1778 = vpop.f32.mrb[0].mxu0
        %v1779 = vadd.f32 %v894, %v1778
        %v1780 = vpop.f32.mrb[0].mxu0
        %v1781 = vadd.f32 %v890, %v1780
        %v1782 = vpop.f32.mrb[0].mxu0
        %v1783 = vadd.f32 %v894, %v1782
        %1784 = vdwg.mxu0
        %1785 = vmatprep.subr.bf16.mxu0 %v1308
        %1786 = vmatpush1.bf16.msra.mxu0 %v1307
        %1787 = vmatprep.subr.bf16.mxu0 %v1316
        %1788 = vmatpush1.bf16.msra.mxu0 %v1315
        %1789 = vmatprep.subr.bf16.mxu0 %v1324
        %1790 = vmatpush1.bf16.msra.mxu0 %v1323
        %1791 = vmatprep.subr.bf16.mxu0 %v1332
        %1792 = vmatpush1.bf16.msra.mxu0 %v1331
        %1793 = vmatprep.subr.bf16.mxu0 %v1340
        %1794 = vmatpush1.bf16.msra.mxu0 %v1339
        %1795 = vmatprep.subr.bf16.mxu0 %v1348
        %1796 = vmatpush1.bf16.msra.mxu0 %v1347
        %1797 = vmatprep.subr.bf16.mxu0 %v1356
        %1798 = vmatpush1.bf16.msra.mxu0 %v1355
        %1799 = vmatprep.subr.bf16.mxu0 %v1364
        %1800 = vmatpush1.bf16.msra.mxu0 %v1363
        %1801 = vmatprep.subr.bf16.mxu0 %v1372
        %1802 = vmatpush1.bf16.msra.mxu0 %v1371
        %1803 = vmatprep.subr.bf16.mxu0 %v1380
        %1804 = vmatpush1.bf16.msra.mxu0 %v1379
        %1805 = vmatprep.subr.bf16.mxu0 %v1388
        %1806 = vmatpush1.bf16.msra.mxu0 %v1387
        %1807 = vmatprep.subr.bf16.mxu0 %v1396
        %1808 = vmatpush1.bf16.msra.mxu0 %v1395
        %1809 = vmatprep.subr.bf16.mxu0 %v1404
        %1810 = vmatpush1.bf16.msra.mxu0 %v1403
        %1811 = vmatprep.subr.bf16.mxu0 %v1412
        %1812 = vmatpush1.bf16.msra.mxu0 %v1411
        %1813 = vmatprep.subr.bf16.mxu0 %v1420
        %1814 = vmatpush1.bf16.msra.mxu0 %v1419
        %1815 = vmatprep.subr.bf16.mxu0 %v1428
        %1816 = vmatpush1.bf16.msra.mxu0 %v1427
        %1817 = vmatprep.mubr.bf16.mxu0 %v734
        %1818 = vmatmul.mubr.bf16.gmra.mrb[0].mxu0 %v733
        %v1819 = vpop.f32.mrb[0].mxu0
        %v1820 = vadd.f32 %v898, %v1819
        %v1821 = vpop.f32.mrb[0].mxu0
        %v1822 = vadd.f32 %v902, %v1821
        %v1823 = vpop.f32.mrb[0].mxu0
        %v1824 = vadd.f32 %v898, %v1823
        %v1825 = vpop.f32.mrb[0].mxu0
        %v1826 = vadd.f32 %v902, %v1825
        %1827 = vmatprep.mubr.bf16.mxu0 %v736
        %1828 = vmatmul.mubr.bf16.gmra.mrb[0].mxu0 %v735
        %v1829 = vpop.f32.mrb[0].mxu0
        %v1830 = vadd.f32 %v898, %v1829
        %v1831 = vpop.f32.mrb[0].mxu0
        %v1832 = vadd.f32 %v902, %v1831
        %v1833 = vpop.f32.mrb[0].mxu0
        %v1834 = vadd.f32 %v898, %v1833
        %v1835 = vpop.f32.mrb[0].mxu0
        %v1836 = vadd.f32 %v902, %v1835
        %1837 = vmatprep.mubr.bf16.mxu0 %v738
        %1838 = vmatmul.mubr.bf16.gmra.mrb[0].mxu0 %v737
        %v1839 = vpop.f32.mrb[0].mxu0
        %v1840 = vadd.f32 %v898, %v1839
        %v1841 = vpop.f32.mrb[0].mxu0
        %v1842 = vadd.f32 %v902, %v1841
        %v1843 = vpop.f32.mrb[0].mxu0
        %v1844 = vadd.f32 %v898, %v1843
        %v1845 = vpop.f32.mrb[0].mxu0
        %v1846 = vadd.f32 %v902, %v1845
        %1847 = vmatprep.mubr.bf16.mxu0 %v740
        %1848 = vmatmul.mubr.bf16.gmra.mrb[0].mxu0 %v739
        %v1849 = vpop.f32.mrb[0].mxu0
        %v1850 = vadd.f32 %v898, %v1849
        %v1851 = vpop.f32.mrb[0].mxu0
        %v1852 = vadd.f32 %v902, %v1851
        %v1853 = vpop.f32.mrb[0].mxu0
        %v1854 = vadd.f32 %v898, %v1853
        %v1855 = vpop.f32.mrb[0].mxu0
        %v1856 = vadd.f32 %v902, %v1855
        %1857 = vmatprep.mubr.bf16.mxu0 %v742
        %1858 = vmatmul.mubr.bf16.gmra.mrb[0].mxu0 %v741
        %v1859 = vpop.f32.mrb[0].mxu0
        %v1860 = vadd.f32 %v898, %v1859
        %v1861 = vpop.f32.mrb[0].mxu0
        %v1862 = vadd.f32 %v902, %v1861
        %v1863 = vpop.f32.mrb[0].mxu0
        %v1864 = vadd.f32 %v898, %v1863
        %v1865 = vpop.f32.mrb[0].mxu0
        %v1866 = vadd.f32 %v902, %v1865
        %1867 = vmatprep.mubr.bf16.mxu0 %v744
        %1868 = vmatmul.mubr.bf16.gmra.mrb[0].mxu0 %v743
        %v1869 = vpop.f32.mrb[0].mxu0
        %v1870 = vadd.f32 %v898, %v1869
        %v1871 = vpop.f32.mrb[0].mxu0
        %v1872 = vadd.f32 %v902, %v1871
        %v1873 = vpop.f32.mrb[0].mxu0
        %v1874 = vadd.f32 %v898, %v1873
        %v1875 = vpop.f32.mrb[0].mxu0
        %v1876 = vadd.f32 %v902, %v1875
        %1877 = vmatprep.mubr.bf16.mxu0 %v746
        %1878 = vmatmul.mubr.bf16.gmra.mrb[0].mxu0 %v745
        %v1879 = vpop.f32.mrb[0].mxu0
        %v1880 = vadd.f32 %v898, %v1879
        %v1881 = vpop.f32.mrb[0].mxu0
        %v1882 = vadd.f32 %v902, %v1881
        %v1883 = vpop.f32.mrb[0].mxu0
        %v1884 = vadd.f32 %v898, %v1883
        %v1885 = vpop.f32.mrb[0].mxu0
        %v1886 = vadd.f32 %v902, %v1885
        %1887 = vmatprep.mubr.bf16.mxu0 %v748
        %1888 = vmatmul.mubr.bf16.gmra.mrb[0].mxu0 %v747
        %v1889 = vpop.f32.mrb[0].mxu0
        %v1890 = vadd.f32 %v898, %v1889
        %v1891 = vpop.f32.mrb[0].mxu0
        %v1892 = vadd.f32 %v902, %v1891
        %v1893 = vpop.f32.mrb[0].mxu0
        %v1894 = vadd.f32 %v898, %v1893
        %v1895 = vpop.f32.mrb[0].mxu0
        %v1896 = vadd.f32 %v902, %v1895
        %1897 = vdwg.mxu0
        %1898 = vmatprep.subr.bf16.mxu0 %v1310
        %1899 = vmatpush1.bf16.msra.mxu0 %v1309
        %1900 = vmatprep.subr.bf16.mxu0 %v1318
        %1901 = vmatpush1.bf16.msra.mxu0 %v1317
        %1902 = vmatprep.subr.bf16.mxu0 %v1326
        %1903 = vmatpush1.bf16.msra.mxu0 %v1325
        %1904 = vmatprep.subr.bf16.mxu0 %v1334
        %1905 = vmatpush1.bf16.msra.mxu0 %v1333
        %1906 = vmatprep.subr.bf16.mxu0 %v1342
        %1907 = vmatpush1.bf16.msra.mxu0 %v1341
        %1908 = vmatprep.subr.bf16.mxu0 %v1350
        %1909 = vmatpush1.bf16.msra.mxu0 %v1349
        %1910 = vmatprep.subr.bf16.mxu0 %v1358
        %1911 = vmatpush1.bf16.msra.mxu0 %v1357
        %1912 = vmatprep.subr.bf16.mxu0 %v1366
        %1913 = vmatpush1.bf16.msra.mxu0 %v1365
        %1914 = vmatprep.subr.bf16.mxu0 %v1374
        %1915 = vmatpush1.bf16.msra.mxu0 %v1373
        %1916 = vmatprep.subr.bf16.mxu0 %v1382
        %1917 = vmatpush1.bf16.msra.mxu0 %v1381
        %1918 = vmatprep.subr.bf16.mxu0 %v1390
        %1919 = vmatpush1.bf16.msra.mxu0 %v1389
        %1920 = vmatprep.subr.bf16.mxu0 %v1398
        %1921 = vmatpush1.bf16.msra.mxu0 %v1397
        %1922 = vmatprep.subr.bf16.mxu0 %v1406
        %1923 = vmatpush1.bf16.msra.mxu0 %v1405
        %1924 = vmatprep.subr.bf16.mxu0 %v1414
        %1925 = vmatpush1.bf16.msra.mxu0 %v1413
        %1926 = vmatprep.subr.bf16.mxu0 %v1422
        %1927 = vmatpush1.bf16.msra.mxu0 %v1421
        %1928 = vmatprep.subr.bf16.mxu0 %v1430
        %1929 = vmatpush1.bf16.msra.mxu0 %v1429
        %1930 = vmatprep.mubr.bf16.mxu0 %v734
        %1931 = vmatmul.mubr.bf16.gmra.mrb[0].mxu0 %v733
        %v1932 = vpop.f32.mrb[0].mxu0
        %v1933 = vadd.f32 %v906, %v1932
        %v1934 = vpop.f32.mrb[0].mxu0
        %v1935 = vadd.f32 %v910, %v1934
        %v1936 = vpop.f32.mrb[0].mxu0
        %v1937 = vadd.f32 %v906, %v1936
        %v1938 = vpop.f32.mrb[0].mxu0
        %v1939 = vadd.f32 %v910, %v1938
        %1940 = vmatprep.mubr.bf16.mxu0 %v736
        %1941 = vmatmul.mubr.bf16.gmra.mrb[0].mxu0 %v735
        %v1942 = vpop.f32.mrb[0].mxu0
        %v1943 = vadd.f32 %v906, %v1942
        %v1944 = vpop.f32.mrb[0].mxu0
        %v1945 = vadd.f32 %v910, %v1944
        %v1946 = vpop.f32.mrb[0].mxu0
        %v1947 = vadd.f32 %v906, %v1946
        %v1948 = vpop.f32.mrb[0].mxu0
        %v1949 = vadd.f32 %v910, %v1948
        %1950 = vmatprep.mubr.bf16.mxu0 %v738
        %1951 = vmatmul.mubr.bf16.gmra.mrb[0].mxu0 %v737
        %v1952 = vpop.f32.mrb[0].mxu0
        %v1953 = vadd.f32 %v906, %v1952
        %v1954 = vpop.f32.mrb[0].mxu0
        %v1955 = vadd.f32 %v910, %v1954
        %v1956 = vpop.f32.mrb[0].mxu0
        %v1957 = vadd.f32 %v906, %v1956
        %v1958 = vpop.f32.mrb[0].mxu0
        %v1959 = vadd.f32 %v910, %v1958
        %1960 = vmatprep.mubr.bf16.mxu0 %v740
        %1961 = vmatmul.mubr.bf16.gmra.mrb[0].mxu0 %v739
        %v1962 = vpop.f32.mrb[0].mxu0
        %v1963 = vadd.f32 %v906, %v1962
        %v1964 = vpop.f32.mrb[0].mxu0
        %v1965 = vadd.f32 %v910, %v1964
        %v1966 = vpop.f32.mrb[0].mxu0
        %v1967 = vadd.f32 %v906, %v1966
        %v1968 = vpop.f32.mrb[0].mxu0
        %v1969 = vadd.f32 %v910, %v1968
        %1970 = vmatprep.mubr.bf16.mxu0 %v742
        %1971 = vmatmul.mubr.bf16.gmra.mrb[0].mxu0 %v741
        %v1972 = vpop.f32.mrb[0].mxu0
        %v1973 = vadd.f32 %v906, %v1972
        %v1974 = vpop.f32.mrb[0].mxu0
        %v1975 = vadd.f32 %v910, %v1974
        %v1976 = vpop.f32.mrb[0].mxu0
        %v1977 = vadd.f32 %v906, %v1976
        %v1978 = vpop.f32.mrb[0].mxu0
        %v1979 = vadd.f32 %v910, %v1978
        %1980 = vmatprep.mubr.bf16.mxu0 %v744
        %1981 = vmatmul.mubr.bf16.gmra.mrb[0].mxu0 %v743
        %v1982 = vpop.f32.mrb[0].mxu0
        %v1983 = vadd.f32 %v906, %v1982
        %v1984 = vpop.f32.mrb[0].mxu0
        %v1985 = vadd.f32 %v910, %v1984
        %v1986 = vpop.f32.mrb[0].mxu0
        %v1987 = vadd.f32 %v906, %v1986
        %v1988 = vpop.f32.mrb[0].mxu0
        %v1989 = vadd.f32 %v910, %v1988
        %1990 = vmatprep.mubr.bf16.mxu0 %v746
        %1991 = vmatmul.mubr.bf16.gmra.mrb[0].mxu0 %v745
        %v1992 = vpop.f32.mrb[0].mxu0
        %v1993 = vadd.f32 %v906, %v1992
        %v1994 = vpop.f32.mrb[0].mxu0
        %v1995 = vadd.f32 %v910, %v1994
        %v1996 = vpop.f32.mrb[0].mxu0
        %v1997 = vadd.f32 %v906, %v1996
        %v1998 = vpop.f32.mrb[0].mxu0
        %v1999 = vadd.f32 %v910, %v1998
        %2000 = vmatprep.mubr.bf16.mxu0 %v748
        %2001 = vmatmul.mubr.bf16.gmra.mrb[0].mxu0 %v747
        %v2002 = vpop.f32.mrb[0].mxu0
        %v2003 = vadd.f32 %v906, %v2002
        %v2004 = vpop.f32.mrb[0].mxu0
        %v2005 = vadd.f32 %v910, %v2004
        %v2006 = vpop.f32.mrb[0].mxu0
        %v2007 = vadd.f32 %v906, %v2006
        %v2008 = vpop.f32.mrb[0].mxu0
        %v2009 = vadd.f32 %v910, %v2008
        %2010 = vdwg.mxu0
        %v2011 = vmax.f32 %v1594, 0.0
        %v2012 = vmax.f32 %v1596, 0.0
        %v2013 = vmax.f32 %v1707, 0.0
        %v2014 = vmax.f32 %v1709, 0.0
        %v2015 = vmax.f32 %v1820, 0.0
        %v2016 = vmax.f32 %v1822, 0.0
        %v2017 = vmax.f32 %v1933, 0.0
        %v2018 = vmax.f32 %v1935, 0.0
        %v2019 = vmax.f32 %v1598, 0.0
        %v2020 = vmax.f32 %v1600, 0.0
        %v2021 = vmax.f32 %v1711, 0.0
        %v2022 = vmax.f32 %v1713, 0.0
        %v2023 = vmax.f32 %v1824, 0.0
        %v2024 = vmax.f32 %v1826, 0.0
        %v2025 = vmax.f32 %v1937, 0.0
        %v2026 = vmax.f32 %v1939, 0.0
        %v2027 = vmax.f32 %v1604, 0.0
        %v2028 = vmax.f32 %v1606, 0.0
        %v2029 = vmax.f32 %v1717, 0.0
        %v2030 = vmax.f32 %v1719, 0.0
        %v2031 = vmax.f32 %v1830, 0.0
        %v2032 = vmax.f32 %v1832, 0.0
        %v2033 = vmax.f32 %v1943, 0.0
        %v2034 = vmax.f32 %v1945, 0.0
        %v2035 = vmax.f32 %v1608, 0.0
        %v2036 = vmax.f32 %v1610, 0.0
        %v2037 = vmax.f32 %v1721, 0.0
        %v2038 = vmax.f32 %v1723, 0.0
        %v2039 = vmax.f32 %v1834, 0.0
        %v2040 = vmax.f32 %v1836, 0.0
        %v2041 = vmax.f32 %v1947, 0.0
        %v2042 = vmax.f32 %v1949, 0.0
        %v2043 = vmax.f32 %v1614, 0.0
        %v2044 = vmax.f32 %v1616, 0.0
        %v2045 = vmax.f32 %v1727, 0.0
        %v2046 = vmax.f32 %v1729, 0.0
        %v2047 = vmax.f32 %v1840, 0.0
        %v2048 = vmax.f32 %v1842, 0.0
        %v2049 = vmax.f32 %v1953, 0.0
        %v2050 = vmax.f32 %v1955, 0.0
        %v2051 = vmax.f32 %v1618, 0.0
        %v2052 = vmax.f32 %v1620, 0.0
        %v2053 = vmax.f32 %v1731, 0.0
        %v2054 = vmax.f32 %v1733, 0.0
        %v2055 = vmax.f32 %v1844, 0.0
        %v2056 = vmax.f32 %v1846, 0.0
        %v2057 = vmax.f32 %v1957, 0.0
        %v2058 = vmax.f32 %v1959, 0.0
        %v2059 = vmax.f32 %v1624, 0.0
        %v2060 = vmax.f32 %v1626, 0.0
        %v2061 = vmax.f32 %v1737, 0.0
        %v2062 = vmax.f32 %v1739, 0.0
        %v2063 = vmax.f32 %v1850, 0.0
        %v2064 = vmax.f32 %v1852, 0.0
        %v2065 = vmax.f32 %v1963, 0.0
        %v2066 = vmax.f32 %v1965, 0.0
        %v2067 = vmax.f32 %v1628, 0.0
        %v2068 = vmax.f32 %v1630, 0.0
        %v2069 = vmax.f32 %v1741, 0.0
        %v2070 = vmax.f32 %v1743, 0.0
        %v2071 = vmax.f32 %v1854, 0.0
        %v2072 = vmax.f32 %v1856, 0.0
        %v2073 = vmax.f32 %v1967, 0.0
        %v2074 = vmax.f32 %v1969, 0.0
        %v2075 = vmax.f32 %v1634, 0.0
        %v2076 = vmax.f32 %v1636, 0.0
        %v2077 = vmax.f32 %v1747, 0.0
        %v2078 = vmax.f32 %v1749, 0.0
        %v2079 = vmax.f32 %v1860, 0.0
        %v2080 = vmax.f32 %v1862, 0.0
        %v2081 = vmax.f32 %v1973, 0.0
        %v2082 = vmax.f32 %v1975, 0.0
        %v2083 = vmax.f32 %v1638, 0.0
        %v2084 = vmax.f32 %v1640, 0.0
        %v2085 = vmax.f32 %v1751, 0.0
        %v2086 = vmax.f32 %v1753, 0.0
        %v2087 = vmax.f32 %v1864, 0.0
        %v2088 = vmax.f32 %v1866, 0.0
        %v2089 = vmax.f32 %v1977, 0.0
        %v2090 = vmax.f32 %v1979, 0.0
        %v2091 = vmax.f32 %v1644, 0.0
        %v2092 = vmax.f32 %v1646, 0.0
        %v2093 = vmax.f32 %v1757, 0.0
        %v2094 = vmax.f32 %v1759, 0.0
        %v2095 = vmax.f32 %v1870, 0.0
        %v2096 = vmax.f32 %v1872, 0.0
        %v2097 = vmax.f32 %v1983, 0.0
        %v2098 = vmax.f32 %v1985, 0.0
        %v2099 = vmax.f32 %v1648, 0.0
        %v2100 = vmax.f32 %v1650, 0.0
        %v2101 = vmax.f32 %v1761, 0.0
        %v2102 = vmax.f32 %v1763, 0.0
        %v2103 = vmax.f32 %v1874, 0.0
        %v2104 = vmax.f32 %v1876, 0.0
        %v2105 = vmax.f32 %v1987, 0.0
        %v2106 = vmax.f32 %v1989, 0.0
        %v2107 = vmax.f32 %v1654, 0.0
        %v2108 = vmax.f32 %v1656, 0.0
        %v2109 = vmax.f32 %v1767, 0.0
        %v2110 = vmax.f32 %v1769, 0.0
        %v2111 = vmax.f32 %v1880, 0.0
        %v2112 = vmax.f32 %v1882, 0.0
        %v2113 = vmax.f32 %v1993, 0.0
        %v2114 = vmax.f32 %v1995, 0.0
        %v2115 = vmax.f32 %v1658, 0.0
        %v2116 = vmax.f32 %v1660, 0.0
        %v2117 = vmax.f32 %v1771, 0.0
        %v2118 = vmax.f32 %v1773, 0.0
        %v2119 = vmax.f32 %v1884, 0.0
        %v2120 = vmax.f32 %v1886, 0.0
        %v2121 = vmax.f32 %v1997, 0.0
        %v2122 = vmax.f32 %v1999, 0.0
        %v2123 = vmax.f32 %v1664, 0.0
        %v2124 = vmax.f32 %v1666, 0.0
        %v2125 = vmax.f32 %v1777, 0.0
        %v2126 = vmax.f32 %v1779, 0.0
        %v2127 = vmax.f32 %v1890, 0.0
        %v2128 = vmax.f32 %v1892, 0.0
        %v2129 = vmax.f32 %v2003, 0.0
        %v2130 = vmax.f32 %v2005, 0.0
        %v2131 = vmax.f32 %v1668, 0.0
        %v2132 = vmax.f32 %v1670, 0.0
        %v2133 = vmax.f32 %v1781, 0.0
        %v2134 = vmax.f32 %v1783, 0.0
        %v2135 = vmax.f32 %v1894, 0.0
        %v2136 = vmax.f32 %v1896, 0.0
        %v2137 = vmax.f32 %v2007, 0.0
        %v2138 = vmax.f32 %v2009, 0.0
        %v2139 = vpack.c.bf16 %v2019, %v2011
        %v2140 = vpack.c.bf16 %v2020, %v2012
        %v2141 = vpack.c.bf16 %v2021, %v2013
        %v2142 = vpack.c.bf16 %v2022, %v2014
        %v2143 = vpack.c.bf16 %v2023, %v2015
        %v2144 = vpack.c.bf16 %v2024, %v2016
        %v2145 = vpack.c.bf16 %v2025, %v2017
        %v2146 = vpack.c.bf16 %v2026, %v2018
        %v2147 = vpack.c.bf16 %v2035, %v2027
        %v2148 = vpack.c.bf16 %v2036, %v2028
        %v2149 = vpack.c.bf16 %v2037, %v2029
        %v2150 = vpack.c.bf16 %v2038, %v2030
        %v2151 = vpack.c.bf16 %v2039, %v2031
        %v2152 = vpack.c.bf16 %v2040, %v2032
        %v2153 = vpack.c.bf16 %v2041, %v2033
        %v2154 = vpack.c.bf16 %v2042, %v2034
        %v2155 = vpack.c.bf16 %v2051, %v2043
        %v2156 = vpack.c.bf16 %v2052, %v2044
        %v2157 = vpack.c.bf16 %v2053, %v2045
        %v2158 = vpack.c.bf16 %v2054, %v2046
        %v2159 = vpack.c.bf16 %v2055, %v2047
        %v2160 = vpack.c.bf16 %v2056, %v2048
        %v2161 = vpack.c.bf16 %v2057, %v2049
        %v2162 = vpack.c.bf16 %v2058, %v2050
        %v2163 = vpack.c.bf16 %v2067, %v2059
        %v2164 = vpack.c.bf16 %v2068, %v2060
        %v2165 = vpack.c.bf16 %v2069, %v2061
        %v2166 = vpack.c.bf16 %v2070, %v2062
        %v2167 = vpack.c.bf16 %v2071, %v2063
        %v2168 = vpack.c.bf16 %v2072, %v2064
        %v2169 = vpack.c.bf16 %v2073, %v2065
        %v2170 = vpack.c.bf16 %v2074, %v2066
        %v2171 = vpack.c.bf16 %v2083, %v2075
        %v2172 = vpack.c.bf16 %v2084, %v2076
        %v2173 = vpack.c.bf16 %v2085, %v2077
        %v2174 = vpack.c.bf16 %v2086, %v2078
        %v2175 = vpack.c.bf16 %v2087, %v2079
        %v2176 = vpack.c.bf16 %v2088, %v2080
        %v2177 = vpack.c.bf16 %v2089, %v2081
        %v2178 = vpack.c.bf16 %v2090, %v2082
        %v2179 = vpack.c.bf16 %v2099, %v2091
        %v2180 = vpack.c.bf16 %v2100, %v2092
        %v2181 = vpack.c.bf16 %v2101, %v2093
        %v2182 = vpack.c.bf16 %v2102, %v2094
        %v2183 = vpack.c.bf16 %v2103, %v2095
        %v2184 = vpack.c.bf16 %v2104, %v2096
        %v2185 = vpack.c.bf16 %v2105, %v2097
        %v2186 = vpack.c.bf16 %v2106, %v2098
        %v2187 = vpack.c.bf16 %v2115, %v2107
        %v2188 = vpack.c.bf16 %v2116, %v2108
        %v2189 = vpack.c.bf16 %v2117, %v2109
        %v2190 = vpack.c.bf16 %v2118, %v2110
        %v2191 = vpack.c.bf16 %v2119, %v2111
        %v2192 = vpack.c.bf16 %v2120, %v2112
        %v2193 = vpack.c.bf16 %v2121, %v2113
        %v2194 = vpack.c.bf16 %v2122, %v2114
        %v2195 = vpack.c.bf16 %v2131, %v2123
        %v2196 = vpack.c.bf16 %v2132, %v2124
        %v2197 = vpack.c.bf16 %v2133, %v2125
        %v2198 = vpack.c.bf16 %v2134, %v2126
        %v2199 = vpack.c.bf16 %v2135, %v2127
        %v2200 = vpack.c.bf16 %v2136, %v2128
        %v2201 = vpack.c.bf16 %v2137, %v2129
        %v2202 = vpack.c.bf16 %v2138, %v2130
        %v2203 = vld [vmem:[#allocation8] sm:$0xff]
        %v2204 = vld [vmem:[#allocation8 + $0x8] sm:$0xff]
        %v2205 = vld [vmem:[#allocation8 + $0x10] sm:$0xff]
        %v2206 = vld [vmem:[#allocation8 + $0x18] sm:$0xff]
        %v2207 = vld [vmem:[#allocation8 + $0x20] sm:$0xff]
        %v2208 = vld [vmem:[#allocation8 + $0x28] sm:$0xff]
        %v2209 = vld [vmem:[#allocation8 + $0x30] sm:$0xff]
        %v2210 = vld [vmem:[#allocation8 + $0x38] sm:$0xff]
        %v2211 = vld [vmem:[#allocation8 + $0x40] sm:$0xff]
        %v2212 = vld [vmem:[#allocation8 + $0x48] sm:$0xff]
        %v2213 = vld [vmem:[#allocation8 + $0x50] sm:$0xff]
        %v2214 = vld [vmem:[#allocation8 + $0x58] sm:$0xff]
        %v2215 = vld [vmem:[#allocation8 + $0x60] sm:$0xff]
        %v2216 = vld [vmem:[#allocation8 + $0x68] sm:$0xff]
        %v2217 = vld [vmem:[#allocation8 + $0x70] sm:$0xff]
        %v2218 = vld [vmem:[#allocation8 + $0x78] sm:$0xff]
        %v2219 = vld [vmem:[#allocation8 + $0x80] sm:$0xff]
        %v2220 = vld [vmem:[#allocation8 + $0x88] sm:$0xff]
        %v2221 = vld [vmem:[#allocation8 + $0x90] sm:$0xff]
        %v2222 = vld [vmem:[#allocation8 + $0x98] sm:$0xff]
        %v2223 = vld [vmem:[#allocation8 + $0xa0] sm:$0xff]
        %v2224 = vld [vmem:[#allocation8 + $0xa8] sm:$0xff]
        %v2225 = vld [vmem:[#allocation8 + $0xb0] sm:$0xff]
        %v2226 = vld [vmem:[#allocation8 + $0xb8] sm:$0xff]
        %v2227 = vld [vmem:[#allocation8 + $0xc0] sm:$0xff]
        %v2228 = vld [vmem:[#allocation8 + $0xc8] sm:$0xff]
        %v2229 = vld [vmem:[#allocation8 + $0xd0] sm:$0xff]
        %v2230 = vld [vmem:[#allocation8 + $0xd8] sm:$0xff]
        %v2231 = vld [vmem:[#allocation8 + $0xe0] sm:$0xff]
        %v2232 = vld [vmem:[#allocation8 + $0xe8] sm:$0xff]
        %v2233 = vld [vmem:[#allocation8 + $0xf0] sm:$0xff]
        %v2234 = vld [vmem:[#allocation8 + $0xf8] sm:$0xff]
        %v2235 = vld [vmem:[#allocation8 + $0x100] sm:$0xff]
        %v2236 = vld [vmem:[#allocation8 + $0x108] sm:$0xff]
        %v2237 = vld [vmem:[#allocation8 + $0x110] sm:$0xff]
        %v2238 = vld [vmem:[#allocation8 + $0x118] sm:$0xff]
        %v2239 = vld [vmem:[#allocation8 + $0x120] sm:$0xff]
        %v2240 = vld [vmem:[#allocation8 + $0x128] sm:$0xff]
        %v2241 = vld [vmem:[#allocation8 + $0x130] sm:$0xff]
        %v2242 = vld [vmem:[#allocation8 + $0x138] sm:$0xff]
        %v2243 = vld [vmem:[#allocation8 + $0x140] sm:$0xff]
        %v2244 = vld [vmem:[#allocation8 + $0x148] sm:$0xff]
        %v2245 = vld [vmem:[#allocation8 + $0x150] sm:$0xff]
        %v2246 = vld [vmem:[#allocation8 + $0x158] sm:$0xff]
        %v2247 = vld [vmem:[#allocation8 + $0x160] sm:$0xff]
        %v2248 = vld [vmem:[#allocation8 + $0x168] sm:$0xff]
        %v2249 = vld [vmem:[#allocation8 + $0x170] sm:$0xff]
        %v2250 = vld [vmem:[#allocation8 + $0x178] sm:$0xff]
        %v2251 = vld [vmem:[#allocation8 + $0x180] sm:$0xff]
        %v2252 = vld [vmem:[#allocation8 + $0x188] sm:$0xff]
        %v2253 = vld [vmem:[#allocation8 + $0x190] sm:$0xff]
        %v2254 = vld [vmem:[#allocation8 + $0x198] sm:$0xff]
        %v2255 = vld [vmem:[#allocation8 + $0x1a0] sm:$0xff]
        %v2256 = vld [vmem:[#allocation8 + $0x1a8] sm:$0xff]
        %v2257 = vld [vmem:[#allocation8 + $0x1b0] sm:$0xff]
        %v2258 = vld [vmem:[#allocation8 + $0x1b8] sm:$0xff]
        %v2259 = vld [vmem:[#allocation8 + $0x1c0] sm:$0xff]
        %v2260 = vld [vmem:[#allocation8 + $0x1c8] sm:$0xff]
        %v2261 = vld [vmem:[#allocation8 + $0x1d0] sm:$0xff]
        %v2262 = vld [vmem:[#allocation8 + $0x1d8] sm:$0xff]
        %v2263 = vld [vmem:[#allocation8 + $0x1e0] sm:$0xff]
        %v2264 = vld [vmem:[#allocation8 + $0x1e8] sm:$0xff]
        %v2265 = vld [vmem:[#allocation8 + $0x1f0] sm:$0xff]
        %v2266 = vld [vmem:[#allocation8 + $0x1f8] sm:$0xff]
        %v2267 = vld [vmem:[#allocation8 + $0x200] sm:$0xff]
        %v2268 = vld [vmem:[#allocation8 + $0x208] sm:$0xff]
        %v2269 = vld [vmem:[#allocation8 + $0x210] sm:$0xff]
        %v2270 = vld [vmem:[#allocation8 + $0x218] sm:$0xff]
        %v2271 = vld [vmem:[#allocation8 + $0x220] sm:$0xff]
        %v2272 = vld [vmem:[#allocation8 + $0x228] sm:$0xff]
        %v2273 = vld [vmem:[#allocation8 + $0x230] sm:$0xff]
        %v2274 = vld [vmem:[#allocation8 + $0x238] sm:$0xff]
        %v2275 = vld [vmem:[#allocation8 + $0x240] sm:$0xff]
        %v2276 = vld [vmem:[#allocation8 + $0x248] sm:$0xff]
        %v2277 = vld [vmem:[#allocation8 + $0x250] sm:$0xff]
        %v2278 = vld [vmem:[#allocation8 + $0x258] sm:$0xff]
        %v2279 = vld [vmem:[#allocation8 + $0x260] sm:$0xff]
        %v2280 = vld [vmem:[#allocation8 + $0x268] sm:$0xff]
        %v2281 = vld [vmem:[#allocation8 + $0x270] sm:$0xff]
        %v2282 = vld [vmem:[#allocation8 + $0x278] sm:$0xff]
        %v2283 = vld [vmem:[#allocation8 + $0x280] sm:$0xff]
        %v2284 = vld [vmem:[#allocation8 + $0x288] sm:$0xff]
        %v2285 = vld [vmem:[#allocation8 + $0x290] sm:$0xff]
        %v2286 = vld [vmem:[#allocation8 + $0x298] sm:$0xff]
        %v2287 = vld [vmem:[#allocation8 + $0x2a0] sm:$0xff]
        %v2288 = vld [vmem:[#allocation8 + $0x2a8] sm:$0xff]
        %v2289 = vld [vmem:[#allocation8 + $0x2b0] sm:$0xff]
        %v2290 = vld [vmem:[#allocation8 + $0x2b8] sm:$0xff]
        %v2291 = vld [vmem:[#allocation8 + $0x2c0] sm:$0xff]
        %v2292 = vld [vmem:[#allocation8 + $0x2c8] sm:$0xff]
        %v2293 = vld [vmem:[#allocation8 + $0x2d0] sm:$0xff]
        %v2294 = vld [vmem:[#allocation8 + $0x2d8] sm:$0xff]
        %v2295 = vld [vmem:[#allocation8 + $0x2e0] sm:$0xff]
        %v2296 = vld [vmem:[#allocation8 + $0x2e8] sm:$0xff]
        %v2297 = vld [vmem:[#allocation8 + $0x2f0] sm:$0xff]
        %v2298 = vld [vmem:[#allocation8 + $0x2f8] sm:$0xff]
        %v2299 = vld [vmem:[#allocation8 + $0x300] sm:$0xff]
        %v2300 = vld [vmem:[#allocation8 + $0x308] sm:$0xff]
        %v2301 = vld [vmem:[#allocation8 + $0x310] sm:$0xff]
        %v2302 = vld [vmem:[#allocation8 + $0x318] sm:$0xff]
        %v2303 = vld [vmem:[#allocation8 + $0x320] sm:$0xff]
        %v2304 = vld [vmem:[#allocation8 + $0x328] sm:$0xff]
        %v2305 = vld [vmem:[#allocation8 + $0x330] sm:$0xff]
        %v2306 = vld [vmem:[#allocation8 + $0x338] sm:$0xff]
        %v2307 = vld [vmem:[#allocation8 + $0x340] sm:$0xff]
        %v2308 = vld [vmem:[#allocation8 + $0x348] sm:$0xff]
        %v2309 = vld [vmem:[#allocation8 + $0x350] sm:$0xff]
        %v2310 = vld [vmem:[#allocation8 + $0x358] sm:$0xff]
        %v2311 = vld [vmem:[#allocation8 + $0x360] sm:$0xff]
        %v2312 = vld [vmem:[#allocation8 + $0x368] sm:$0xff]
        %v2313 = vld [vmem:[#allocation8 + $0x370] sm:$0xff]
        %v2314 = vld [vmem:[#allocation8 + $0x378] sm:$0xff]
        %v2315 = vld [vmem:[#allocation8 + $0x380] sm:$0xff]
        %v2316 = vld [vmem:[#allocation8 + $0x388] sm:$0xff]
        %v2317 = vld [vmem:[#allocation8 + $0x390] sm:$0xff]
        %v2318 = vld [vmem:[#allocation8 + $0x398] sm:$0xff]
        %v2319 = vld [vmem:[#allocation8 + $0x3a0] sm:$0xff]
        %v2320 = vld [vmem:[#allocation8 + $0x3a8] sm:$0xff]
        %v2321 = vld [vmem:[#allocation8 + $0x3b0] sm:$0xff]
        %v2322 = vld [vmem:[#allocation8 + $0x3b8] sm:$0xff]
        %v2323 = vld [vmem:[#allocation8 + $0x3c0] sm:$0xff]
        %v2324 = vld [vmem:[#allocation8 + $0x3c8] sm:$0xff]
        %v2325 = vld [vmem:[#allocation8 + $0x3d0] sm:$0xff]
        %v2326 = vld [vmem:[#allocation8 + $0x3d8] sm:$0xff]
        %v2327 = vld [vmem:[#allocation8 + $0x3e0] sm:$0xff]
        %v2328 = vld [vmem:[#allocation8 + $0x3e8] sm:$0xff]
        %v2329 = vld [vmem:[#allocation8 + $0x3f0] sm:$0xff]
        %v2330 = vld [vmem:[#allocation8 + $0x3f8] sm:$0xff]
        %v2331 = vld [vmem:[#allocation8 + $0x400] sm:$0xff]
        %v2332 = vld [vmem:[#allocation8 + $0x408] sm:$0xff]
        %v2333 = vld [vmem:[#allocation8 + $0x410] sm:$0xff]
        %v2334 = vld [vmem:[#allocation8 + $0x418] sm:$0xff]
        %v2335 = vld [vmem:[#allocation8 + $0x420] sm:$0xff]
        %v2336 = vld [vmem:[#allocation8 + $0x428] sm:$0xff]
        %v2337 = vld [vmem:[#allocation8 + $0x430] sm:$0xff]
        %v2338 = vld [vmem:[#allocation8 + $0x438] sm:$0xff]
        %v2339 = vld [vmem:[#allocation8 + $0x440] sm:$0xff]
        %v2340 = vld [vmem:[#allocation8 + $0x448] sm:$0xff]
        %v2341 = vld [vmem:[#allocation8 + $0x450] sm:$0xff]
        %v2342 = vld [vmem:[#allocation8 + $0x458] sm:$0xff]
        %v2343 = vld [vmem:[#allocation8 + $0x460] sm:$0xff]
        %v2344 = vld [vmem:[#allocation8 + $0x468] sm:$0xff]
        %v2345 = vld [vmem:[#allocation8 + $0x470] sm:$0xff]
        %v2346 = vld [vmem:[#allocation8 + $0x478] sm:$0xff]
        %v2347 = vld [vmem:[#allocation8 + $0x480] sm:$0xff]
        %v2348 = vld [vmem:[#allocation8 + $0x488] sm:$0xff]
        %v2349 = vld [vmem:[#allocation8 + $0x490] sm:$0xff]
        %v2350 = vld [vmem:[#allocation8 + $0x498] sm:$0xff]
        %v2351 = vld [vmem:[#allocation8 + $0x4a0] sm:$0xff]
        %v2352 = vld [vmem:[#allocation8 + $0x4a8] sm:$0xff]
        %v2353 = vld [vmem:[#allocation8 + $0x4b0] sm:$0xff]
        %v2354 = vld [vmem:[#allocation8 + $0x4b8] sm:$0xff]
        %v2355 = vld [vmem:[#allocation8 + $0x4c0] sm:$0xff]
        %v2356 = vld [vmem:[#allocation8 + $0x4c8] sm:$0xff]
        %v2357 = vld [vmem:[#allocation8 + $0x4d0] sm:$0xff]
        %v2358 = vld [vmem:[#allocation8 + $0x4d8] sm:$0xff]
        %v2359 = vld [vmem:[#allocation8 + $0x4e0] sm:$0xff]
        %v2360 = vld [vmem:[#allocation8 + $0x4e8] sm:$0xff]
        %v2361 = vld [vmem:[#allocation8 + $0x4f0] sm:$0xff]
        %v2362 = vld [vmem:[#allocation8 + $0x4f8] sm:$0xff]
        %v2363 = vld [vmem:[#allocation8 + $0x500] sm:$0xff]
        %v2364 = vld [vmem:[#allocation8 + $0x508] sm:$0xff]
        %v2365 = vld [vmem:[#allocation8 + $0x510] sm:$0xff]
        %v2366 = vld [vmem:[#allocation8 + $0x518] sm:$0xff]
        %v2367 = vld [vmem:[#allocation8 + $0x520] sm:$0xff]
        %v2368 = vld [vmem:[#allocation8 + $0x528] sm:$0xff]
        %v2369 = vld [vmem:[#allocation8 + $0x530] sm:$0xff]
        %v2370 = vld [vmem:[#allocation8 + $0x538] sm:$0xff]
        %v2371 = vld [vmem:[#allocation8 + $0x540] sm:$0xff]
        %v2372 = vld [vmem:[#allocation8 + $0x548] sm:$0xff]
        %v2373 = vld [vmem:[#allocation8 + $0x550] sm:$0xff]
        %v2374 = vld [vmem:[#allocation8 + $0x558] sm:$0xff]
        %v2375 = vld [vmem:[#allocation8 + $0x560] sm:$0xff]
        %v2376 = vld [vmem:[#allocation8 + $0x568] sm:$0xff]
        %v2377 = vld [vmem:[#allocation8 + $0x570] sm:$0xff]
        %v2378 = vld [vmem:[#allocation8 + $0x578] sm:$0xff]
        %v2379 = vld [vmem:[#allocation8 + $0x580] sm:$0xff]
        %v2380 = vld [vmem:[#allocation8 + $0x588] sm:$0xff]
        %v2381 = vld [vmem:[#allocation8 + $0x590] sm:$0xff]
        %v2382 = vld [vmem:[#allocation8 + $0x598] sm:$0xff]
        %v2383 = vld [vmem:[#allocation8 + $0x5a0] sm:$0xff]
        %v2384 = vld [vmem:[#allocation8 + $0x5a8] sm:$0xff]
        %v2385 = vld [vmem:[#allocation8 + $0x5b0] sm:$0xff]
        %v2386 = vld [vmem:[#allocation8 + $0x5b8] sm:$0xff]
        %v2387 = vld [vmem:[#allocation8 + $0x5c0] sm:$0xff]
        %v2388 = vld [vmem:[#allocation8 + $0x5c8] sm:$0xff]
        %v2389 = vld [vmem:[#allocation8 + $0x5d0] sm:$0xff]
        %v2390 = vld [vmem:[#allocation8 + $0x5d8] sm:$0xff]
        %v2391 = vld [vmem:[#allocation8 + $0x5e0] sm:$0xff]
        %v2392 = vld [vmem:[#allocation8 + $0x5e8] sm:$0xff]
        %v2393 = vld [vmem:[#allocation8 + $0x5f0] sm:$0xff]
        %v2394 = vld [vmem:[#allocation8 + $0x5f8] sm:$0xff]
        %v2395 = vld [vmem:[#allocation8 + $0x600] sm:$0xff]
        %v2396 = vld [vmem:[#allocation8 + $0x608] sm:$0xff]
        %v2397 = vld [vmem:[#allocation8 + $0x610] sm:$0xff]
        %v2398 = vld [vmem:[#allocation8 + $0x618] sm:$0xff]
        %v2399 = vld [vmem:[#allocation8 + $0x620] sm:$0xff]
        %v2400 = vld [vmem:[#allocation8 + $0x628] sm:$0xff]
        %v2401 = vld [vmem:[#allocation8 + $0x630] sm:$0xff]
        %v2402 = vld [vmem:[#allocation8 + $0x638] sm:$0xff]
        %v2403 = vld [vmem:[#allocation8 + $0x640] sm:$0xff]
        %v2404 = vld [vmem:[#allocation8 + $0x648] sm:$0xff]
        %v2405 = vld [vmem:[#allocation8 + $0x650] sm:$0xff]
        %v2406 = vld [vmem:[#allocation8 + $0x658] sm:$0xff]
        %v2407 = vld [vmem:[#allocation8 + $0x660] sm:$0xff]
        %v2408 = vld [vmem:[#allocation8 + $0x668] sm:$0xff]
        %v2409 = vld [vmem:[#allocation8 + $0x670] sm:$0xff]
        %v2410 = vld [vmem:[#allocation8 + $0x678] sm:$0xff]
        %v2411 = vld [vmem:[#allocation8 + $0x680] sm:$0xff]
        %v2412 = vld [vmem:[#allocation8 + $0x688] sm:$0xff]
        %v2413 = vld [vmem:[#allocation8 + $0x690] sm:$0xff]
        %v2414 = vld [vmem:[#allocation8 + $0x698] sm:$0xff]
        %v2415 = vld [vmem:[#allocation8 + $0x6a0] sm:$0xff]
        %v2416 = vld [vmem:[#allocation8 + $0x6a8] sm:$0xff]
        %v2417 = vld [vmem:[#allocation8 + $0x6b0] sm:$0xff]
        %v2418 = vld [vmem:[#allocation8 + $0x6b8] sm:$0xff]
        %v2419 = vld [vmem:[#allocation8 + $0x6c0] sm:$0xff]
        %v2420 = vld [vmem:[#allocation8 + $0x6c8] sm:$0xff]
        %v2421 = vld [vmem:[#allocation8 + $0x6d0] sm:$0xff]
        %v2422 = vld [vmem:[#allocation8 + $0x6d8] sm:$0xff]
        %v2423 = vld [vmem:[#allocation8 + $0x6e0] sm:$0xff]
        %v2424 = vld [vmem:[#allocation8 + $0x6e8] sm:$0xff]
        %v2425 = vld [vmem:[#allocation8 + $0x6f0] sm:$0xff]
        %v2426 = vld [vmem:[#allocation8 + $0x6f8] sm:$0xff]
        %v2427 = vld [vmem:[#allocation8 + $0x700] sm:$0xff]
        %v2428 = vld [vmem:[#allocation8 + $0x708] sm:$0xff]
        %v2429 = vld [vmem:[#allocation8 + $0x710] sm:$0xff]
        %v2430 = vld [vmem:[#allocation8 + $0x718] sm:$0xff]
        %v2431 = vld [vmem:[#allocation8 + $0x720] sm:$0xff]
        %v2432 = vld [vmem:[#allocation8 + $0x728] sm:$0xff]
        %v2433 = vld [vmem:[#allocation8 + $0x730] sm:$0xff]
        %v2434 = vld [vmem:[#allocation8 + $0x738] sm:$0xff]
        %v2435 = vld [vmem:[#allocation8 + $0x740] sm:$0xff]
        %v2436 = vld [vmem:[#allocation8 + $0x748] sm:$0xff]
        %v2437 = vld [vmem:[#allocation8 + $0x750] sm:$0xff]
        %v2438 = vld [vmem:[#allocation8 + $0x758] sm:$0xff]
        %v2439 = vld [vmem:[#allocation8 + $0x760] sm:$0xff]
        %v2440 = vld [vmem:[#allocation8 + $0x768] sm:$0xff]
        %v2441 = vld [vmem:[#allocation8 + $0x770] sm:$0xff]
        %v2442 = vld [vmem:[#allocation8 + $0x778] sm:$0xff]
        %v2443 = vld [vmem:[#allocation8 + $0x780] sm:$0xff]
        %v2444 = vld [vmem:[#allocation8 + $0x788] sm:$0xff]
        %v2445 = vld [vmem:[#allocation8 + $0x790] sm:$0xff]
        %v2446 = vld [vmem:[#allocation8 + $0x798] sm:$0xff]
        %v2447 = vld [vmem:[#allocation8 + $0x7a0] sm:$0xff]
        %v2448 = vld [vmem:[#allocation8 + $0x7a8] sm:$0xff]
        %v2449 = vld [vmem:[#allocation8 + $0x7b0] sm:$0xff]
        %v2450 = vld [vmem:[#allocation8 + $0x7b8] sm:$0xff]
        %v2451 = vld [vmem:[#allocation8 + $0x7c0] sm:$0xff]
        %v2452 = vld [vmem:[#allocation8 + $0x7c8] sm:$0xff]
        %v2453 = vld [vmem:[#allocation8 + $0x7d0] sm:$0xff]
        %v2454 = vld [vmem:[#allocation8 + $0x7d8] sm:$0xff]
        %v2455 = vld [vmem:[#allocation8 + $0x7e0] sm:$0xff]
        %v2456 = vld [vmem:[#allocation8 + $0x7e8] sm:$0xff]
        %v2457 = vld [vmem:[#allocation8 + $0x7f0] sm:$0xff]
        %v2458 = vld [vmem:[#allocation8 + $0x7f8] sm:$0xff]
        %v2459 = vld [vmem:[#allocation10] sm:$0xf]
        %v2461 = vlaneseq
        %v2462 = vshrl.u32 %v2461, 7
        %v2463 = vsub.s32 0, %v2462
        %v2464 = vrot.slane %v2459, %v2463
        %v2465 = vlaneseq
        %v2466 = vshrl.u32 %v2465, 7
        %v2467 = vsub.s32 1, %v2466
        %v2468 = vrot.slane %v2459, %v2467
        %v2469 = vlaneseq
        %v2470 = vshrl.u32 %v2469, 7
        %v2471 = vsub.s32 2, %v2470
        %v2472 = vrot.slane %v2459, %v2471
        %v2473 = vlaneseq
        %v2474 = vshrl.u32 %v2473, 7
        %v2475 = vsub.s32 3, %v2474
        %v2476 = vrot.slane %v2459, %v2475
        %v2737 = vunpack.c.l.b16 %v2203
        %v2738 = vunpack.c.h.b16 %v2203
        %v2739 = vunpack.c.l.b16 %v2204
        %v2740 = vunpack.c.h.b16 %v2204
        %v2741 = vunpack.c.l.b16 %v2205
        %v2742 = vunpack.c.h.b16 %v2205
        %v2743 = vunpack.c.l.b16 %v2206
        %v2744 = vunpack.c.h.b16 %v2206
        %v2745 = vunpack.c.l.b16 %v2207
        %v2746 = vunpack.c.h.b16 %v2207
        %v2747 = vunpack.c.l.b16 %v2208
        %v2748 = vunpack.c.h.b16 %v2208
        %v2749 = vunpack.c.l.b16 %v2209
        %v2750 = vunpack.c.h.b16 %v2209
        %v2751 = vunpack.c.l.b16 %v2210
        %v2752 = vunpack.c.h.b16 %v2210
        %v2753 = vunpack.c.l.b16 %v2211
        %v2754 = vunpack.c.h.b16 %v2211
        %v2755 = vunpack.c.l.b16 %v2212
        %v2756 = vunpack.c.h.b16 %v2212
        %v2757 = vunpack.c.l.b16 %v2213
        %v2758 = vunpack.c.h.b16 %v2213
        %v2759 = vunpack.c.l.b16 %v2214
        %v2760 = vunpack.c.h.b16 %v2214
        %v2761 = vunpack.c.l.b16 %v2215
        %v2762 = vunpack.c.h.b16 %v2215
        %v2763 = vunpack.c.l.b16 %v2216
        %v2764 = vunpack.c.h.b16 %v2216
        %v2765 = vunpack.c.l.b16 %v2217
        %v2766 = vunpack.c.h.b16 %v2217
        %v2767 = vunpack.c.l.b16 %v2218
        %v2768 = vunpack.c.h.b16 %v2218
        %v2769 = vunpack.c.l.b16 %v2219
        %v2770 = vunpack.c.h.b16 %v2219
        %v2771 = vunpack.c.l.b16 %v2220
        %v2772 = vunpack.c.h.b16 %v2220
        %v2773 = vunpack.c.l.b16 %v2221
        %v2774 = vunpack.c.h.b16 %v2221
        %v2775 = vunpack.c.l.b16 %v2222
        %v2776 = vunpack.c.h.b16 %v2222
        %v2777 = vunpack.c.l.b16 %v2223
        %v2778 = vunpack.c.h.b16 %v2223
        %v2779 = vunpack.c.l.b16 %v2224
        %v2780 = vunpack.c.h.b16 %v2224
        %v2781 = vunpack.c.l.b16 %v2225
        %v2782 = vunpack.c.h.b16 %v2225
        %v2783 = vunpack.c.l.b16 %v2226
        %v2784 = vunpack.c.h.b16 %v2226
        %v2785 = vunpack.c.l.b16 %v2227
        %v2786 = vunpack.c.h.b16 %v2227
        %v2787 = vunpack.c.l.b16 %v2228
        %v2788 = vunpack.c.h.b16 %v2228
        %v2789 = vunpack.c.l.b16 %v2229
        %v2790 = vunpack.c.h.b16 %v2229
        %v2791 = vunpack.c.l.b16 %v2230
        %v2792 = vunpack.c.h.b16 %v2230
        %v2793 = vunpack.c.l.b16 %v2231
        %v2794 = vunpack.c.h.b16 %v2231
        %v2795 = vunpack.c.l.b16 %v2232
        %v2796 = vunpack.c.h.b16 %v2232
        %v2797 = vunpack.c.l.b16 %v2233
        %v2798 = vunpack.c.h.b16 %v2233
        %v2799 = vunpack.c.l.b16 %v2234
        %v2800 = vunpack.c.h.b16 %v2234
        %v2801 = vunpack.c.l.b16 %v2235
        %v2802 = vunpack.c.h.b16 %v2235
        %v2803 = vunpack.c.l.b16 %v2236
        %v2804 = vunpack.c.h.b16 %v2236
        %v2805 = vunpack.c.l.b16 %v2237
        %v2806 = vunpack.c.h.b16 %v2237
        %v2807 = vunpack.c.l.b16 %v2238
        %v2808 = vunpack.c.h.b16 %v2238
        %v2809 = vunpack.c.l.b16 %v2239
        %v2810 = vunpack.c.h.b16 %v2239
        %v2811 = vunpack.c.l.b16 %v2240
        %v2812 = vunpack.c.h.b16 %v2240
        %v2813 = vunpack.c.l.b16 %v2241
        %v2814 = vunpack.c.h.b16 %v2241
        %v2815 = vunpack.c.l.b16 %v2242
        %v2816 = vunpack.c.h.b16 %v2242
        %v2817 = vunpack.c.l.b16 %v2243
        %v2818 = vunpack.c.h.b16 %v2243
        %v2819 = vunpack.c.l.b16 %v2244
        %v2820 = vunpack.c.h.b16 %v2244
        %v2821 = vunpack.c.l.b16 %v2245
        %v2822 = vunpack.c.h.b16 %v2245
        %v2823 = vunpack.c.l.b16 %v2246
        %v2824 = vunpack.c.h.b16 %v2246
        %v2825 = vunpack.c.l.b16 %v2247
        %v2826 = vunpack.c.h.b16 %v2247
        %v2827 = vunpack.c.l.b16 %v2248
        %v2828 = vunpack.c.h.b16 %v2248
        %v2829 = vunpack.c.l.b16 %v2249
        %v2830 = vunpack.c.h.b16 %v2249
        %v2831 = vunpack.c.l.b16 %v2250
        %v2832 = vunpack.c.h.b16 %v2250
        %v2833 = vunpack.c.l.b16 %v2251
        %v2834 = vunpack.c.h.b16 %v2251
        %v2835 = vunpack.c.l.b16 %v2252
        %v2836 = vunpack.c.h.b16 %v2252
        %v2837 = vunpack.c.l.b16 %v2253
        %v2838 = vunpack.c.h.b16 %v2253
        %v2839 = vunpack.c.l.b16 %v2254
        %v2840 = vunpack.c.h.b16 %v2254
        %v2841 = vunpack.c.l.b16 %v2255
        %v2842 = vunpack.c.h.b16 %v2255
        %v2843 = vunpack.c.l.b16 %v2256
        %v2844 = vunpack.c.h.b16 %v2256
        %v2845 = vunpack.c.l.b16 %v2257
        %v2846 = vunpack.c.h.b16 %v2257
        %v2847 = vunpack.c.l.b16 %v2258
        %v2848 = vunpack.c.h.b16 %v2258
        %v2849 = vunpack.c.l.b16 %v2259
        %v2850 = vunpack.c.h.b16 %v2259
        %v2851 = vunpack.c.l.b16 %v2260
        %v2852 = vunpack.c.h.b16 %v2260
        %v2853 = vunpack.c.l.b16 %v2261
        %v2854 = vunpack.c.h.b16 %v2261
        %v2855 = vunpack.c.l.b16 %v2262
        %v2856 = vunpack.c.h.b16 %v2262
        %v2857 = vunpack.c.l.b16 %v2263
        %v2858 = vunpack.c.h.b16 %v2263
        %v2859 = vunpack.c.l.b16 %v2264
        %v2860 = vunpack.c.h.b16 %v2264
        %v2861 = vunpack.c.l.b16 %v2265
        %v2862 = vunpack.c.h.b16 %v2265
        %v2863 = vunpack.c.l.b16 %v2266
        %v2864 = vunpack.c.h.b16 %v2266
        %v2865 = vunpack.c.l.b16 %v2267
        %v2866 = vunpack.c.h.b16 %v2267
        %v2867 = vunpack.c.l.b16 %v2268
        %v2868 = vunpack.c.h.b16 %v2268
        %v2869 = vunpack.c.l.b16 %v2269
        %v2870 = vunpack.c.h.b16 %v2269
        %v2871 = vunpack.c.l.b16 %v2270
        %v2872 = vunpack.c.h.b16 %v2270
        %v2873 = vunpack.c.l.b16 %v2271
        %v2874 = vunpack.c.h.b16 %v2271
        %v2875 = vunpack.c.l.b16 %v2272
        %v2876 = vunpack.c.h.b16 %v2272
        %v2877 = vunpack.c.l.b16 %v2273
        %v2878 = vunpack.c.h.b16 %v2273
        %v2879 = vunpack.c.l.b16 %v2274
        %v2880 = vunpack.c.h.b16 %v2274
        %v2881 = vunpack.c.l.b16 %v2275
        %v2882 = vunpack.c.h.b16 %v2275
        %v2883 = vunpack.c.l.b16 %v2276
        %v2884 = vunpack.c.h.b16 %v2276
        %v2885 = vunpack.c.l.b16 %v2277
        %v2886 = vunpack.c.h.b16 %v2277
        %v2887 = vunpack.c.l.b16 %v2278
        %v2888 = vunpack.c.h.b16 %v2278
        %v2889 = vunpack.c.l.b16 %v2279
        %v2890 = vunpack.c.h.b16 %v2279
        %v2891 = vunpack.c.l.b16 %v2280
        %v2892 = vunpack.c.h.b16 %v2280
        %v2893 = vunpack.c.l.b16 %v2281
        %v2894 = vunpack.c.h.b16 %v2281
        %v2895 = vunpack.c.l.b16 %v2282
        %v2896 = vunpack.c.h.b16 %v2282
        %v2897 = vunpack.c.l.b16 %v2283
        %v2898 = vunpack.c.h.b16 %v2283
        %v2899 = vunpack.c.l.b16 %v2284
        %v2900 = vunpack.c.h.b16 %v2284
        %v2901 = vunpack.c.l.b16 %v2285
        %v2902 = vunpack.c.h.b16 %v2285
        %v2903 = vunpack.c.l.b16 %v2286
        %v2904 = vunpack.c.h.b16 %v2286
        %v2905 = vunpack.c.l.b16 %v2287
        %v2906 = vunpack.c.h.b16 %v2287
        %v2907 = vunpack.c.l.b16 %v2288
        %v2908 = vunpack.c.h.b16 %v2288
        %v2909 = vunpack.c.l.b16 %v2289
        %v2910 = vunpack.c.h.b16 %v2289
        %v2911 = vunpack.c.l.b16 %v2290
        %v2912 = vunpack.c.h.b16 %v2290
        %v2913 = vunpack.c.l.b16 %v2291
        %v2914 = vunpack.c.h.b16 %v2291
        %v2915 = vunpack.c.l.b16 %v2292
        %v2916 = vunpack.c.h.b16 %v2292
        %v2917 = vunpack.c.l.b16 %v2293
        %v2918 = vunpack.c.h.b16 %v2293
        %v2919 = vunpack.c.l.b16 %v2294
        %v2920 = vunpack.c.h.b16 %v2294
        %v2921 = vunpack.c.l.b16 %v2295
        %v2922 = vunpack.c.h.b16 %v2295
        %v2923 = vunpack.c.l.b16 %v2296
        %v2924 = vunpack.c.h.b16 %v2296
        %v2925 = vunpack.c.l.b16 %v2297
        %v2926 = vunpack.c.h.b16 %v2297
        %v2927 = vunpack.c.l.b16 %v2298
        %v2928 = vunpack.c.h.b16 %v2298
        %v2929 = vunpack.c.l.b16 %v2299
        %v2930 = vunpack.c.h.b16 %v2299
        %v2931 = vunpack.c.l.b16 %v2300
        %v2932 = vunpack.c.h.b16 %v2300
        %v2933 = vunpack.c.l.b16 %v2301
        %v2934 = vunpack.c.h.b16 %v2301
        %v2935 = vunpack.c.l.b16 %v2302
        %v2936 = vunpack.c.h.b16 %v2302
        %v2937 = vunpack.c.l.b16 %v2303
        %v2938 = vunpack.c.h.b16 %v2303
        %v2939 = vunpack.c.l.b16 %v2304
        %v2940 = vunpack.c.h.b16 %v2304
        %v2941 = vunpack.c.l.b16 %v2305
        %v2942 = vunpack.c.h.b16 %v2305
        %v2943 = vunpack.c.l.b16 %v2306
        %v2944 = vunpack.c.h.b16 %v2306
        %v2945 = vunpack.c.l.b16 %v2307
        %v2946 = vunpack.c.h.b16 %v2307
        %v2947 = vunpack.c.l.b16 %v2308
        %v2948 = vunpack.c.h.b16 %v2308
        %v2949 = vunpack.c.l.b16 %v2309
        %v2950 = vunpack.c.h.b16 %v2309
        %v2951 = vunpack.c.l.b16 %v2310
        %v2952 = vunpack.c.h.b16 %v2310
        %v2953 = vunpack.c.l.b16 %v2311
        %v2954 = vunpack.c.h.b16 %v2311
        %v2955 = vunpack.c.l.b16 %v2312
        %v2956 = vunpack.c.h.b16 %v2312
        %v2957 = vunpack.c.l.b16 %v2313
        %v2958 = vunpack.c.h.b16 %v2313
        %v2959 = vunpack.c.l.b16 %v2314
        %v2960 = vunpack.c.h.b16 %v2314
        %v2961 = vunpack.c.l.b16 %v2315
        %v2962 = vunpack.c.h.b16 %v2315
        %v2963 = vunpack.c.l.b16 %v2316
        %v2964 = vunpack.c.h.b16 %v2316
        %v2965 = vunpack.c.l.b16 %v2317
        %v2966 = vunpack.c.h.b16 %v2317
        %v2967 = vunpack.c.l.b16 %v2318
        %v2968 = vunpack.c.h.b16 %v2318
        %v2969 = vunpack.c.l.b16 %v2319
        %v2970 = vunpack.c.h.b16 %v2319
        %v2971 = vunpack.c.l.b16 %v2320
        %v2972 = vunpack.c.h.b16 %v2320
        %v2973 = vunpack.c.l.b16 %v2321
        %v2974 = vunpack.c.h.b16 %v2321
        %v2975 = vunpack.c.l.b16 %v2322
        %v2976 = vunpack.c.h.b16 %v2322
        %v2977 = vunpack.c.l.b16 %v2323
        %v2978 = vunpack.c.h.b16 %v2323
        %v2979 = vunpack.c.l.b16 %v2324
        %v2980 = vunpack.c.h.b16 %v2324
        %v2981 = vunpack.c.l.b16 %v2325
        %v2982 = vunpack.c.h.b16 %v2325
        %v2983 = vunpack.c.l.b16 %v2326
        %v2984 = vunpack.c.h.b16 %v2326
        %v2985 = vunpack.c.l.b16 %v2327
        %v2986 = vunpack.c.h.b16 %v2327
        %v2987 = vunpack.c.l.b16 %v2328
        %v2988 = vunpack.c.h.b16 %v2328
        %v2989 = vunpack.c.l.b16 %v2329
        %v2990 = vunpack.c.h.b16 %v2329
        %v2991 = vunpack.c.l.b16 %v2330
        %v2992 = vunpack.c.h.b16 %v2330
        %v2993 = vunpack.c.l.b16 %v2331
        %v2994 = vunpack.c.h.b16 %v2331
        %v2995 = vunpack.c.l.b16 %v2332
        %v2996 = vunpack.c.h.b16 %v2332
        %v2997 = vunpack.c.l.b16 %v2333
        %v2998 = vunpack.c.h.b16 %v2333
        %v2999 = vunpack.c.l.b16 %v2334
        %v3000 = vunpack.c.h.b16 %v2334
        %v3001 = vunpack.c.l.b16 %v2335
        %v3002 = vunpack.c.h.b16 %v2335
        %v3003 = vunpack.c.l.b16 %v2336
        %v3004 = vunpack.c.h.b16 %v2336
        %v3005 = vunpack.c.l.b16 %v2337
        %v3006 = vunpack.c.h.b16 %v2337
        %v3007 = vunpack.c.l.b16 %v2338
        %v3008 = vunpack.c.h.b16 %v2338
        %v3009 = vunpack.c.l.b16 %v2339
        %v3010 = vunpack.c.h.b16 %v2339
        %v3011 = vunpack.c.l.b16 %v2340
        %v3012 = vunpack.c.h.b16 %v2340
        %v3013 = vunpack.c.l.b16 %v2341
        %v3014 = vunpack.c.h.b16 %v2341
        %v3015 = vunpack.c.l.b16 %v2342
        %v3016 = vunpack.c.h.b16 %v2342
        %v3017 = vunpack.c.l.b16 %v2343
        %v3018 = vunpack.c.h.b16 %v2343
        %v3019 = vunpack.c.l.b16 %v2344
        %v3020 = vunpack.c.h.b16 %v2344
        %v3021 = vunpack.c.l.b16 %v2345
        %v3022 = vunpack.c.h.b16 %v2345
        %v3023 = vunpack.c.l.b16 %v2346
        %v3024 = vunpack.c.h.b16 %v2346
        %v3025 = vunpack.c.l.b16 %v2347
        %v3026 = vunpack.c.h.b16 %v2347
        %v3027 = vunpack.c.l.b16 %v2348
        %v3028 = vunpack.c.h.b16 %v2348
        %v3029 = vunpack.c.l.b16 %v2349
        %v3030 = vunpack.c.h.b16 %v2349
        %v3031 = vunpack.c.l.b16 %v2350
        %v3032 = vunpack.c.h.b16 %v2350
        %v3033 = vunpack.c.l.b16 %v2351
        %v3034 = vunpack.c.h.b16 %v2351
        %v3035 = vunpack.c.l.b16 %v2352
        %v3036 = vunpack.c.h.b16 %v2352
        %v3037 = vunpack.c.l.b16 %v2353
        %v3038 = vunpack.c.h.b16 %v2353
        %v3039 = vunpack.c.l.b16 %v2354
        %v3040 = vunpack.c.h.b16 %v2354
        %v3041 = vunpack.c.l.b16 %v2355
        %v3042 = vunpack.c.h.b16 %v2355
        %v3043 = vunpack.c.l.b16 %v2356
        %v3044 = vunpack.c.h.b16 %v2356
        %v3045 = vunpack.c.l.b16 %v2357
        %v3046 = vunpack.c.h.b16 %v2357
        %v3047 = vunpack.c.l.b16 %v2358
        %v3048 = vunpack.c.h.b16 %v2358
        %v3049 = vunpack.c.l.b16 %v2359
        %v3050 = vunpack.c.h.b16 %v2359
        %v3051 = vunpack.c.l.b16 %v2360
        %v3052 = vunpack.c.h.b16 %v2360
        %v3053 = vunpack.c.l.b16 %v2361
        %v3054 = vunpack.c.h.b16 %v2361
        %v3055 = vunpack.c.l.b16 %v2362
        %v3056 = vunpack.c.h.b16 %v2362
        %v3057 = vunpack.c.l.b16 %v2363
        %v3058 = vunpack.c.h.b16 %v2363
        %v3059 = vunpack.c.l.b16 %v2364
        %v3060 = vunpack.c.h.b16 %v2364
        %v3061 = vunpack.c.l.b16 %v2365
        %v3062 = vunpack.c.h.b16 %v2365
        %v3063 = vunpack.c.l.b16 %v2366
        %v3064 = vunpack.c.h.b16 %v2366
        %v3065 = vunpack.c.l.b16 %v2367
        %v3066 = vunpack.c.h.b16 %v2367
        %v3067 = vunpack.c.l.b16 %v2368
        %v3068 = vunpack.c.h.b16 %v2368
        %v3069 = vunpack.c.l.b16 %v2369
        %v3070 = vunpack.c.h.b16 %v2369
        %v3071 = vunpack.c.l.b16 %v2370
        %v3072 = vunpack.c.h.b16 %v2370
        %v3073 = vunpack.c.l.b16 %v2371
        %v3074 = vunpack.c.h.b16 %v2371
        %v3075 = vunpack.c.l.b16 %v2372
        %v3076 = vunpack.c.h.b16 %v2372
        %v3077 = vunpack.c.l.b16 %v2373
        %v3078 = vunpack.c.h.b16 %v2373
        %v3079 = vunpack.c.l.b16 %v2374
        %v3080 = vunpack.c.h.b16 %v2374
        %v3081 = vunpack.c.l.b16 %v2375
        %v3082 = vunpack.c.h.b16 %v2375
        %v3083 = vunpack.c.l.b16 %v2376
        %v3084 = vunpack.c.h.b16 %v2376
        %v3085 = vunpack.c.l.b16 %v2377
        %v3086 = vunpack.c.h.b16 %v2377
        %v3087 = vunpack.c.l.b16 %v2378
        %v3088 = vunpack.c.h.b16 %v2378
        %v3089 = vunpack.c.l.b16 %v2379
        %v3090 = vunpack.c.h.b16 %v2379
        %v3091 = vunpack.c.l.b16 %v2380
        %v3092 = vunpack.c.h.b16 %v2380
        %v3093 = vunpack.c.l.b16 %v2381
        %v3094 = vunpack.c.h.b16 %v2381
        %v3095 = vunpack.c.l.b16 %v2382
        %v3096 = vunpack.c.h.b16 %v2382
        %v3097 = vunpack.c.l.b16 %v2383
        %v3098 = vunpack.c.h.b16 %v2383
        %v3099 = vunpack.c.l.b16 %v2384
        %v3100 = vunpack.c.h.b16 %v2384
        %v3101 = vunpack.c.l.b16 %v2385
        %v3102 = vunpack.c.h.b16 %v2385
        %v3103 = vunpack.c.l.b16 %v2386
        %v3104 = vunpack.c.h.b16 %v2386
        %v3105 = vunpack.c.l.b16 %v2387
        %v3106 = vunpack.c.h.b16 %v2387
        %v3107 = vunpack.c.l.b16 %v2388
        %v3108 = vunpack.c.h.b16 %v2388
        %v3109 = vunpack.c.l.b16 %v2389
        %v3110 = vunpack.c.h.b16 %v2389
        %v3111 = vunpack.c.l.b16 %v2390
        %v3112 = vunpack.c.h.b16 %v2390
        %v3113 = vunpack.c.l.b16 %v2391
        %v3114 = vunpack.c.h.b16 %v2391
        %v3115 = vunpack.c.l.b16 %v2392
        %v3116 = vunpack.c.h.b16 %v2392
        %v3117 = vunpack.c.l.b16 %v2393
        %v3118 = vunpack.c.h.b16 %v2393
        %v3119 = vunpack.c.l.b16 %v2394
        %v3120 = vunpack.c.h.b16 %v2394
        %v3121 = vunpack.c.l.b16 %v2395
        %v3122 = vunpack.c.h.b16 %v2395
        %v3123 = vunpack.c.l.b16 %v2396
        %v3124 = vunpack.c.h.b16 %v2396
        %v3125 = vunpack.c.l.b16 %v2397
        %v3126 = vunpack.c.h.b16 %v2397
        %v3127 = vunpack.c.l.b16 %v2398
        %v3128 = vunpack.c.h.b16 %v2398
        %v3129 = vunpack.c.l.b16 %v2399
        %v3130 = vunpack.c.h.b16 %v2399
        %v3131 = vunpack.c.l.b16 %v2400
        %v3132 = vunpack.c.h.b16 %v2400
        %v3133 = vunpack.c.l.b16 %v2401
        %v3134 = vunpack.c.h.b16 %v2401
        %v3135 = vunpack.c.l.b16 %v2402
        %v3136 = vunpack.c.h.b16 %v2402
        %v3137 = vunpack.c.l.b16 %v2403
        %v3138 = vunpack.c.h.b16 %v2403
        %v3139 = vunpack.c.l.b16 %v2404
        %v3140 = vunpack.c.h.b16 %v2404
        %v3141 = vunpack.c.l.b16 %v2405
        %v3142 = vunpack.c.h.b16 %v2405
        %v3143 = vunpack.c.l.b16 %v2406
        %v3144 = vunpack.c.h.b16 %v2406
        %v3145 = vunpack.c.l.b16 %v2407
        %v3146 = vunpack.c.h.b16 %v2407
        %v3147 = vunpack.c.l.b16 %v2408
        %v3148 = vunpack.c.h.b16 %v2408
        %v3149 = vunpack.c.l.b16 %v2409
        %v3150 = vunpack.c.h.b16 %v2409
        %v3151 = vunpack.c.l.b16 %v2410
        %v3152 = vunpack.c.h.b16 %v2410
        %v3153 = vunpack.c.l.b16 %v2411
        %v3154 = vunpack.c.h.b16 %v2411
        %v3155 = vunpack.c.l.b16 %v2412
        %v3156 = vunpack.c.h.b16 %v2412
        %v3157 = vunpack.c.l.b16 %v2413
        %v3158 = vunpack.c.h.b16 %v2413
        %v3159 = vunpack.c.l.b16 %v2414
        %v3160 = vunpack.c.h.b16 %v2414
        %v3161 = vunpack.c.l.b16 %v2415
        %v3162 = vunpack.c.h.b16 %v2415
        %v3163 = vunpack.c.l.b16 %v2416
        %v3164 = vunpack.c.h.b16 %v2416
        %v3165 = vunpack.c.l.b16 %v2417
        %v3166 = vunpack.c.h.b16 %v2417
        %v3167 = vunpack.c.l.b16 %v2418
        %v3168 = vunpack.c.h.b16 %v2418
        %v3169 = vunpack.c.l.b16 %v2419
        %v3170 = vunpack.c.h.b16 %v2419
        %v3171 = vunpack.c.l.b16 %v2420
        %v3172 = vunpack.c.h.b16 %v2420
        %v3173 = vunpack.c.l.b16 %v2421
        %v3174 = vunpack.c.h.b16 %v2421
        %v3175 = vunpack.c.l.b16 %v2422
        %v3176 = vunpack.c.h.b16 %v2422
        %v3177 = vunpack.c.l.b16 %v2423
        %v3178 = vunpack.c.h.b16 %v2423
        %v3179 = vunpack.c.l.b16 %v2424
        %v3180 = vunpack.c.h.b16 %v2424
        %v3181 = vunpack.c.l.b16 %v2425
        %v3182 = vunpack.c.h.b16 %v2425
        %v3183 = vunpack.c.l.b16 %v2426
        %v3184 = vunpack.c.h.b16 %v2426
        %v3185 = vunpack.c.l.b16 %v2427
        %v3186 = vunpack.c.h.b16 %v2427
        %v3187 = vunpack.c.l.b16 %v2428
        %v3188 = vunpack.c.h.b16 %v2428
        %v3189 = vunpack.c.l.b16 %v2429
        %v3190 = vunpack.c.h.b16 %v2429
        %v3191 = vunpack.c.l.b16 %v2430
        %v3192 = vunpack.c.h.b16 %v2430
        %v3193 = vunpack.c.l.b16 %v2431
        %v3194 = vunpack.c.h.b16 %v2431
        %v3195 = vunpack.c.l.b16 %v2432
        %v3196 = vunpack.c.h.b16 %v2432
        %v3197 = vunpack.c.l.b16 %v2433
        %v3198 = vunpack.c.h.b16 %v2433
        %v3199 = vunpack.c.l.b16 %v2434
        %v3200 = vunpack.c.h.b16 %v2434
        %v3201 = vunpack.c.l.b16 %v2435
        %v3202 = vunpack.c.h.b16 %v2435
        %v3203 = vunpack.c.l.b16 %v2436
        %v3204 = vunpack.c.h.b16 %v2436
        %v3205 = vunpack.c.l.b16 %v2437
        %v3206 = vunpack.c.h.b16 %v2437
        %v3207 = vunpack.c.l.b16 %v2438
        %v3208 = vunpack.c.h.b16 %v2438
        %v3209 = vunpack.c.l.b16 %v2439
        %v3210 = vunpack.c.h.b16 %v2439
        %v3211 = vunpack.c.l.b16 %v2440
        %v3212 = vunpack.c.h.b16 %v2440
        %v3213 = vunpack.c.l.b16 %v2441
        %v3214 = vunpack.c.h.b16 %v2441
        %v3215 = vunpack.c.l.b16 %v2442
        %v3216 = vunpack.c.h.b16 %v2442
        %v3217 = vunpack.c.l.b16 %v2443
        %v3218 = vunpack.c.h.b16 %v2443
        %v3219 = vunpack.c.l.b16 %v2444
        %v3220 = vunpack.c.h.b16 %v2444
        %v3221 = vunpack.c.l.b16 %v2445
        %v3222 = vunpack.c.h.b16 %v2445
        %v3223 = vunpack.c.l.b16 %v2446
        %v3224 = vunpack.c.h.b16 %v2446
        %v3225 = vunpack.c.l.b16 %v2447
        %v3226 = vunpack.c.h.b16 %v2447
        %v3227 = vunpack.c.l.b16 %v2448
        %v3228 = vunpack.c.h.b16 %v2448
        %v3229 = vunpack.c.l.b16 %v2449
        %v3230 = vunpack.c.h.b16 %v2449
        %v3231 = vunpack.c.l.b16 %v2450
        %v3232 = vunpack.c.h.b16 %v2450
        %v3233 = vunpack.c.l.b16 %v2451
        %v3234 = vunpack.c.h.b16 %v2451
        %v3235 = vunpack.c.l.b16 %v2452
        %v3236 = vunpack.c.h.b16 %v2452
        %v3237 = vunpack.c.l.b16 %v2453
        %v3238 = vunpack.c.h.b16 %v2453
        %v3239 = vunpack.c.l.b16 %v2454
        %v3240 = vunpack.c.h.b16 %v2454
        %v3241 = vunpack.c.l.b16 %v2455
        %v3242 = vunpack.c.h.b16 %v2455
        %v3243 = vunpack.c.l.b16 %v2456
        %v3244 = vunpack.c.h.b16 %v2456
        %v3245 = vunpack.c.l.b16 %v2457
        %v3246 = vunpack.c.h.b16 %v2457
        %v3247 = vunpack.c.l.b16 %v2458
        %v3248 = vunpack.c.h.b16 %v2458
        %v3249 = vpack.c.b16 %v2741, %v2737
        %v3250 = vpack.c.b16 %v2742, %v2738
        %v3251 = vpack.c.b16 %v2743, %v2739
        %v3252 = vpack.c.b16 %v2744, %v2740
        %v3253 = vpack.c.b16 %v2749, %v2745
        %v3254 = vpack.c.b16 %v2750, %v2746
        %v3255 = vpack.c.b16 %v2751, %v2747
        %v3256 = vpack.c.b16 %v2752, %v2748
        %v3257 = vpack.c.b16 %v2757, %v2753
        %v3258 = vpack.c.b16 %v2758, %v2754
        %v3259 = vpack.c.b16 %v2759, %v2755
        %v3260 = vpack.c.b16 %v2760, %v2756
        %v3261 = vpack.c.b16 %v2765, %v2761
        %v3262 = vpack.c.b16 %v2766, %v2762
        %v3263 = vpack.c.b16 %v2767, %v2763
        %v3264 = vpack.c.b16 %v2768, %v2764
        %v3265 = vpack.c.b16 %v2773, %v2769
        %v3266 = vpack.c.b16 %v2774, %v2770
        %v3267 = vpack.c.b16 %v2775, %v2771
        %v3268 = vpack.c.b16 %v2776, %v2772
        %v3269 = vpack.c.b16 %v2781, %v2777
        %v3270 = vpack.c.b16 %v2782, %v2778
        %v3271 = vpack.c.b16 %v2783, %v2779
        %v3272 = vpack.c.b16 %v2784, %v2780
        %v3273 = vpack.c.b16 %v2789, %v2785
        %v3274 = vpack.c.b16 %v2790, %v2786
        %v3275 = vpack.c.b16 %v2791, %v2787
        %v3276 = vpack.c.b16 %v2792, %v2788
        %v3277 = vpack.c.b16 %v2797, %v2793
        %v3278 = vpack.c.b16 %v2798, %v2794
        %v3279 = vpack.c.b16 %v2799, %v2795
        %v3280 = vpack.c.b16 %v2800, %v2796
        %v3281 = vpack.c.b16 %v2805, %v2801
        %v3282 = vpack.c.b16 %v2806, %v2802
        %v3283 = vpack.c.b16 %v2807, %v2803
        %v3284 = vpack.c.b16 %v2808, %v2804
        %v3285 = vpack.c.b16 %v2813, %v2809
        %v3286 = vpack.c.b16 %v2814, %v2810
        %v3287 = vpack.c.b16 %v2815, %v2811
        %v3288 = vpack.c.b16 %v2816, %v2812
        %v3289 = vpack.c.b16 %v2821, %v2817
        %v3290 = vpack.c.b16 %v2822, %v2818
        %v3291 = vpack.c.b16 %v2823, %v2819
        %v3292 = vpack.c.b16 %v2824, %v2820
        %v3293 = vpack.c.b16 %v2829, %v2825
        %v3294 = vpack.c.b16 %v2830, %v2826
        %v3295 = vpack.c.b16 %v2831, %v2827
        %v3296 = vpack.c.b16 %v2832, %v2828
        %v3297 = vpack.c.b16 %v2837, %v2833
        %v3298 = vpack.c.b16 %v2838, %v2834
        %v3299 = vpack.c.b16 %v2839, %v2835
        %v3300 = vpack.c.b16 %v2840, %v2836
        %v3301 = vpack.c.b16 %v2845, %v2841
        %v3302 = vpack.c.b16 %v2846, %v2842
        %v3303 = vpack.c.b16 %v2847, %v2843
        %v3304 = vpack.c.b16 %v2848, %v2844
        %v3305 = vpack.c.b16 %v2853, %v2849
        %v3306 = vpack.c.b16 %v2854, %v2850
        %v3307 = vpack.c.b16 %v2855, %v2851
        %v3308 = vpack.c.b16 %v2856, %v2852
        %v3309 = vpack.c.b16 %v2861, %v2857
        %v3310 = vpack.c.b16 %v2862, %v2858
        %v3311 = vpack.c.b16 %v2863, %v2859
        %v3312 = vpack.c.b16 %v2864, %v2860
        %v3313 = vpack.c.b16 %v2869, %v2865
        %v3314 = vpack.c.b16 %v2870, %v2866
        %v3315 = vpack.c.b16 %v2871, %v2867
        %v3316 = vpack.c.b16 %v2872, %v2868
        %v3317 = vpack.c.b16 %v2877, %v2873
        %v3318 = vpack.c.b16 %v2878, %v2874
        %v3319 = vpack.c.b16 %v2879, %v2875
        %v3320 = vpack.c.b16 %v2880, %v2876
        %v3321 = vpack.c.b16 %v2885, %v2881
        %v3322 = vpack.c.b16 %v2886, %v2882
        %v3323 = vpack.c.b16 %v2887, %v2883
        %v3324 = vpack.c.b16 %v2888, %v2884
        %v3325 = vpack.c.b16 %v2893, %v2889
        %v3326 = vpack.c.b16 %v2894, %v2890
        %v3327 = vpack.c.b16 %v2895, %v2891
        %v3328 = vpack.c.b16 %v2896, %v2892
        %v3329 = vpack.c.b16 %v2901, %v2897
        %v3330 = vpack.c.b16 %v2902, %v2898
        %v3331 = vpack.c.b16 %v2903, %v2899
        %v3332 = vpack.c.b16 %v2904, %v2900
        %v3333 = vpack.c.b16 %v2909, %v2905
        %v3334 = vpack.c.b16 %v2910, %v2906
        %v3335 = vpack.c.b16 %v2911, %v2907
        %v3336 = vpack.c.b16 %v2912, %v2908
        %v3337 = vpack.c.b16 %v2917, %v2913
        %v3338 = vpack.c.b16 %v2918, %v2914
        %v3339 = vpack.c.b16 %v2919, %v2915
        %v3340 = vpack.c.b16 %v2920, %v2916
        %v3341 = vpack.c.b16 %v2925, %v2921
        %v3342 = vpack.c.b16 %v2926, %v2922
        %v3343 = vpack.c.b16 %v2927, %v2923
        %v3344 = vpack.c.b16 %v2928, %v2924
        %v3345 = vpack.c.b16 %v2933, %v2929
        %v3346 = vpack.c.b16 %v2934, %v2930
        %v3347 = vpack.c.b16 %v2935, %v2931
        %v3348 = vpack.c.b16 %v2936, %v2932
        %v3349 = vpack.c.b16 %v2941, %v2937
        %v3350 = vpack.c.b16 %v2942, %v2938
        %v3351 = vpack.c.b16 %v2943, %v2939
        %v3352 = vpack.c.b16 %v2944, %v2940
        %v3353 = vpack.c.b16 %v2949, %v2945
        %v3354 = vpack.c.b16 %v2950, %v2946
        %v3355 = vpack.c.b16 %v2951, %v2947
        %v3356 = vpack.c.b16 %v2952, %v2948
        %v3357 = vpack.c.b16 %v2957, %v2953
        %v3358 = vpack.c.b16 %v2958, %v2954
        %v3359 = vpack.c.b16 %v2959, %v2955
        %v3360 = vpack.c.b16 %v2960, %v2956
        %v3361 = vpack.c.b16 %v2965, %v2961
        %v3362 = vpack.c.b16 %v2966, %v2962
        %v3363 = vpack.c.b16 %v2967, %v2963
        %v3364 = vpack.c.b16 %v2968, %v2964
        %v3365 = vpack.c.b16 %v2973, %v2969
        %v3366 = vpack.c.b16 %v2974, %v2970
        %v3367 = vpack.c.b16 %v2975, %v2971
        %v3368 = vpack.c.b16 %v2976, %v2972
        %v3369 = vpack.c.b16 %v2981, %v2977
        %v3370 = vpack.c.b16 %v2982, %v2978
        %v3371 = vpack.c.b16 %v2983, %v2979
        %v3372 = vpack.c.b16 %v2984, %v2980
        %v3373 = vpack.c.b16 %v2989, %v2985
        %v3374 = vpack.c.b16 %v2990, %v2986
        %v3375 = vpack.c.b16 %v2991, %v2987
        %v3376 = vpack.c.b16 %v2992, %v2988
        %v3377 = vpack.c.b16 %v2997, %v2993
        %v3378 = vpack.c.b16 %v2998, %v2994
        %v3379 = vpack.c.b16 %v2999, %v2995
        %v3380 = vpack.c.b16 %v3000, %v2996
        %v3381 = vpack.c.b16 %v3005, %v3001
        %v3382 = vpack.c.b16 %v3006, %v3002
        %v3383 = vpack.c.b16 %v3007, %v3003
        %v3384 = vpack.c.b16 %v3008, %v3004
        %v3385 = vpack.c.b16 %v3013, %v3009
        %v3386 = vpack.c.b16 %v3014, %v3010
        %v3387 = vpack.c.b16 %v3015, %v3011
        %v3388 = vpack.c.b16 %v3016, %v3012
        %v3389 = vpack.c.b16 %v3021, %v3017
        %v3390 = vpack.c.b16 %v3022, %v3018
        %v3391 = vpack.c.b16 %v3023, %v3019
        %v3392 = vpack.c.b16 %v3024, %v3020
        %v3393 = vpack.c.b16 %v3029, %v3025
        %v3394 = vpack.c.b16 %v3030, %v3026
        %v3395 = vpack.c.b16 %v3031, %v3027
        %v3396 = vpack.c.b16 %v3032, %v3028
        %v3397 = vpack.c.b16 %v3037, %v3033
        %v3398 = vpack.c.b16 %v3038, %v3034
        %v3399 = vpack.c.b16 %v3039, %v3035
        %v3400 = vpack.c.b16 %v3040, %v3036
        %v3401 = vpack.c.b16 %v3045, %v3041
        %v3402 = vpack.c.b16 %v3046, %v3042
        %v3403 = vpack.c.b16 %v3047, %v3043
        %v3404 = vpack.c.b16 %v3048, %v3044
        %v3405 = vpack.c.b16 %v3053, %v3049
        %v3406 = vpack.c.b16 %v3054, %v3050
        %v3407 = vpack.c.b16 %v3055, %v3051
        %v3408 = vpack.c.b16 %v3056, %v3052
        %v3409 = vpack.c.b16 %v3061, %v3057
        %v3410 = vpack.c.b16 %v3062, %v3058
        %v3411 = vpack.c.b16 %v3063, %v3059
        %v3412 = vpack.c.b16 %v3064, %v3060
        %v3413 = vpack.c.b16 %v3069, %v3065
        %v3414 = vpack.c.b16 %v3070, %v3066
        %v3415 = vpack.c.b16 %v3071, %v3067
        %v3416 = vpack.c.b16 %v3072, %v3068
        %v3417 = vpack.c.b16 %v3077, %v3073
        %v3418 = vpack.c.b16 %v3078, %v3074
        %v3419 = vpack.c.b16 %v3079, %v3075
        %v3420 = vpack.c.b16 %v3080, %v3076
        %v3421 = vpack.c.b16 %v3085, %v3081
        %v3422 = vpack.c.b16 %v3086, %v3082
        %v3423 = vpack.c.b16 %v3087, %v3083
        %v3424 = vpack.c.b16 %v3088, %v3084
        %v3425 = vpack.c.b16 %v3093, %v3089
        %v3426 = vpack.c.b16 %v3094, %v3090
        %v3427 = vpack.c.b16 %v3095, %v3091
        %v3428 = vpack.c.b16 %v3096, %v3092
        %v3429 = vpack.c.b16 %v3101, %v3097
        %v3430 = vpack.c.b16 %v3102, %v3098
        %v3431 = vpack.c.b16 %v3103, %v3099
        %v3432 = vpack.c.b16 %v3104, %v3100
        %v3433 = vpack.c.b16 %v3109, %v3105
        %v3434 = vpack.c.b16 %v3110, %v3106
        %v3435 = vpack.c.b16 %v3111, %v3107
        %v3436 = vpack.c.b16 %v3112, %v3108
        %v3437 = vpack.c.b16 %v3117, %v3113
        %v3438 = vpack.c.b16 %v3118, %v3114
        %v3439 = vpack.c.b16 %v3119, %v3115
        %v3440 = vpack.c.b16 %v3120, %v3116
        %v3441 = vpack.c.b16 %v3125, %v3121
        %v3442 = vpack.c.b16 %v3126, %v3122
        %v3443 = vpack.c.b16 %v3127, %v3123
        %v3444 = vpack.c.b16 %v3128, %v3124
        %v3445 = vpack.c.b16 %v3133, %v3129
        %v3446 = vpack.c.b16 %v3134, %v3130
        %v3447 = vpack.c.b16 %v3135, %v3131
        %v3448 = vpack.c.b16 %v3136, %v3132
        %v3449 = vpack.c.b16 %v3141, %v3137
        %v3450 = vpack.c.b16 %v3142, %v3138
        %v3451 = vpack.c.b16 %v3143, %v3139
        %v3452 = vpack.c.b16 %v3144, %v3140
        %v3453 = vpack.c.b16 %v3149, %v3145
        %v3454 = vpack.c.b16 %v3150, %v3146
        %v3455 = vpack.c.b16 %v3151, %v3147
        %v3456 = vpack.c.b16 %v3152, %v3148
        %v3457 = vpack.c.b16 %v3157, %v3153
        %v3458 = vpack.c.b16 %v3158, %v3154
        %v3459 = vpack.c.b16 %v3159, %v3155
        %v3460 = vpack.c.b16 %v3160, %v3156
        %v3461 = vpack.c.b16 %v3165, %v3161
        %v3462 = vpack.c.b16 %v3166, %v3162
        %v3463 = vpack.c.b16 %v3167, %v3163
        %v3464 = vpack.c.b16 %v3168, %v3164
        %v3465 = vpack.c.b16 %v3173, %v3169
        %v3466 = vpack.c.b16 %v3174, %v3170
        %v3467 = vpack.c.b16 %v3175, %v3171
        %v3468 = vpack.c.b16 %v3176, %v3172
        %v3469 = vpack.c.b16 %v3181, %v3177
        %v3470 = vpack.c.b16 %v3182, %v3178
        %v3471 = vpack.c.b16 %v3183, %v3179
        %v3472 = vpack.c.b16 %v3184, %v3180
        %v3473 = vpack.c.b16 %v3189, %v3185
        %v3474 = vpack.c.b16 %v3190, %v3186
        %v3475 = vpack.c.b16 %v3191, %v3187
        %v3476 = vpack.c.b16 %v3192, %v3188
        %v3477 = vpack.c.b16 %v3197, %v3193
        %v3478 = vpack.c.b16 %v3198, %v3194
        %v3479 = vpack.c.b16 %v3199, %v3195
        %v3480 = vpack.c.b16 %v3200, %v3196
        %v3481 = vpack.c.b16 %v3205, %v3201
        %v3482 = vpack.c.b16 %v3206, %v3202
        %v3483 = vpack.c.b16 %v3207, %v3203
        %v3484 = vpack.c.b16 %v3208, %v3204
        %v3485 = vpack.c.b16 %v3213, %v3209
        %v3486 = vpack.c.b16 %v3214, %v3210
        %v3487 = vpack.c.b16 %v3215, %v3211
        %v3488 = vpack.c.b16 %v3216, %v3212
        %v3489 = vpack.c.b16 %v3221, %v3217
        %v3490 = vpack.c.b16 %v3222, %v3218
        %v3491 = vpack.c.b16 %v3223, %v3219
        %v3492 = vpack.c.b16 %v3224, %v3220
        %v3493 = vpack.c.b16 %v3229, %v3225
        %v3494 = vpack.c.b16 %v3230, %v3226
        %v3495 = vpack.c.b16 %v3231, %v3227
        %v3496 = vpack.c.b16 %v3232, %v3228
        %v3497 = vpack.c.b16 %v3237, %v3233
        %v3498 = vpack.c.b16 %v3238, %v3234
        %v3499 = vpack.c.b16 %v3239, %v3235
        %v3500 = vpack.c.b16 %v3240, %v3236
        %v3501 = vpack.c.b16 %v3245, %v3241
        %v3502 = vpack.c.b16 %v3246, %v3242
        %v3503 = vpack.c.b16 %v3247, %v3243
        %v3504 = vpack.c.b16 %v3248, %v3244
        %3761 = vmatprep.subr.bf16.mxu0 %v3250
        %3762 = vmatpush1.bf16.msra.mxu0 %v3249
        %3763 = vmatprep.subr.bf16.mxu0 %v3254
        %3764 = vmatpush1.bf16.msra.mxu0 %v3253
        %3765 = vmatprep.subr.bf16.mxu0 %v3258
        %3766 = vmatpush1.bf16.msra.mxu0 %v3257
        %3767 = vmatprep.subr.bf16.mxu0 %v3262
        %3768 = vmatpush1.bf16.msra.mxu0 %v3261
        %3769 = vmatprep.subr.bf16.mxu0 %v3266
        %3770 = vmatpush1.bf16.msra.mxu0 %v3265
        %3771 = vmatprep.subr.bf16.mxu0 %v3270
        %3772 = vmatpush1.bf16.msra.mxu0 %v3269
        %3773 = vmatprep.subr.bf16.mxu0 %v3274
        %3774 = vmatpush1.bf16.msra.mxu0 %v3273
        %3775 = vmatprep.subr.bf16.mxu0 %v3278
        %3776 = vmatpush1.bf16.msra.mxu0 %v3277
        %3777 = vmatprep.subr.bf16.mxu0 %v3282
        %3778 = vmatpush1.bf16.msra.mxu0 %v3281
        %3779 = vmatprep.subr.bf16.mxu0 %v3286
        %3780 = vmatpush1.bf16.msra.mxu0 %v3285
        %3781 = vmatprep.subr.bf16.mxu0 %v3290
        %3782 = vmatpush1.bf16.msra.mxu0 %v3289
        %3783 = vmatprep.subr.bf16.mxu0 %v3294
        %3784 = vmatpush1.bf16.msra.mxu0 %v3293
        %3785 = vmatprep.subr.bf16.mxu0 %v3298
        %3786 = vmatpush1.bf16.msra.mxu0 %v3297
        %3787 = vmatprep.subr.bf16.mxu0 %v3302
        %3788 = vmatpush1.bf16.msra.mxu0 %v3301
        %3789 = vmatprep.subr.bf16.mxu0 %v3306
        %3790 = vmatpush1.bf16.msra.mxu0 %v3305
        %3791 = vmatprep.subr.bf16.mxu0 %v3310
        %3792 = vmatpush1.bf16.msra.mxu0 %v3309
        %3793 = vmatprep.mubr.bf16.mxu0 %v2140
        %3794 = vmatmul.mubr.bf16.gmra.mrb[0].mxu0 %v2139
        %v3795 = vpop.f32.mrb[0].mxu0
        %v3796 = vadd.f32 %v2464, %v3795
        %v3797 = vpop.f32.mrb[0].mxu0
        %v3798 = vadd.f32 %v2468, %v3797
        %v3799 = vpop.f32.mrb[0].mxu0
        %v3800 = vadd.f32 %v2464, %v3799
        %v3801 = vpop.f32.mrb[0].mxu0
        %v3802 = vadd.f32 %v2468, %v3801
        %3803 = vmatprep.mubr.bf16.mxu0 %v2148
        %3804 = vmatmul.mubr.bf16.gmra.mrb[0].mxu0 %v2147
        %v3805 = vpop.f32.mrb[0].mxu0
        %v3806 = vadd.f32 %v2464, %v3805
        %v3807 = vpop.f32.mrb[0].mxu0
        %v3808 = vadd.f32 %v2468, %v3807
        %v3809 = vpop.f32.mrb[0].mxu0
        %v3810 = vadd.f32 %v2464, %v3809
        %v3811 = vpop.f32.mrb[0].mxu0
        %v3812 = vadd.f32 %v2468, %v3811
        %3813 = vmatprep.mubr.bf16.mxu0 %v2156
        %3814 = vmatmul.mubr.bf16.gmra.mrb[0].mxu0 %v2155
        %v3815 = vpop.f32.mrb[0].mxu0
        %v3816 = vadd.f32 %v2464, %v3815
        %v3817 = vpop.f32.mrb[0].mxu0
        %v3818 = vadd.f32 %v2468, %v3817
        %v3819 = vpop.f32.mrb[0].mxu0
        %v3820 = vadd.f32 %v2464, %v3819
        %v3821 = vpop.f32.mrb[0].mxu0
        %v3822 = vadd.f32 %v2468, %v3821
        %3823 = vmatprep.mubr.bf16.mxu0 %v2164
        %3824 = vmatmul.mubr.bf16.gmra.mrb[0].mxu0 %v2163
        %v3825 = vpop.f32.mrb[0].mxu0
        %v3826 = vadd.f32 %v2464, %v3825
        %v3827 = vpop.f32.mrb[0].mxu0
        %v3828 = vadd.f32 %v2468, %v3827
        %v3829 = vpop.f32.mrb[0].mxu0
        %v3830 = vadd.f32 %v2464, %v3829
        %v3831 = vpop.f32.mrb[0].mxu0
        %v3832 = vadd.f32 %v2468, %v3831
        %3833 = vmatprep.mubr.bf16.mxu0 %v2172
        %3834 = vmatmul.mubr.bf16.gmra.mrb[0].mxu0 %v2171
        %v3835 = vpop.f32.mrb[0].mxu0
        %v3836 = vadd.f32 %v2464, %v3835
        %v3837 = vpop.f32.mrb[0].mxu0
        %v3838 = vadd.f32 %v2468, %v3837
        %v3839 = vpop.f32.mrb[0].mxu0
        %v3840 = vadd.f32 %v2464, %v3839
        %v3841 = vpop.f32.mrb[0].mxu0
        %v3842 = vadd.f32 %v2468, %v3841
        %3843 = vmatprep.mubr.bf16.mxu0 %v2180
        %3844 = vmatmul.mubr.bf16.gmra.mrb[0].mxu0 %v2179
        %v3845 = vpop.f32.mrb[0].mxu0
        %v3846 = vadd.f32 %v2464, %v3845
        %v3847 = vpop.f32.mrb[0].mxu0
        %v3848 = vadd.f32 %v2468, %v3847
        %v3849 = vpop.f32.mrb[0].mxu0
        %v3850 = vadd.f32 %v2464, %v3849
        %v3851 = vpop.f32.mrb[0].mxu0
        %v3852 = vadd.f32 %v2468, %v3851
        %3853 = vmatprep.mubr.bf16.mxu0 %v2188
        %3854 = vmatmul.mubr.bf16.gmra.mrb[0].mxu0 %v2187
        %v3855 = vpop.f32.mrb[0].mxu0
        %v3856 = vadd.f32 %v2464, %v3855
        %v3857 = vpop.f32.mrb[0].mxu0
        %v3858 = vadd.f32 %v2468, %v3857
        %v3859 = vpop.f32.mrb[0].mxu0
        %v3860 = vadd.f32 %v2464, %v3859
        %v3861 = vpop.f32.mrb[0].mxu0
        %v3862 = vadd.f32 %v2468, %v3861
        %3863 = vmatprep.mubr.bf16.mxu0 %v2196
        %3864 = vmatmul.mubr.bf16.gmra.mrb[0].mxu0 %v2195
        %v3865 = vpop.f32.mrb[0].mxu0
        %v3866 = vadd.f32 %v2464, %v3865
        %v3867 = vpop.f32.mrb[0].mxu0
        %v3868 = vadd.f32 %v2468, %v3867
        %v3869 = vpop.f32.mrb[0].mxu0
        %v3870 = vadd.f32 %v2464, %v3869
        %v3871 = vpop.f32.mrb[0].mxu0
        %v3872 = vadd.f32 %v2468, %v3871
        %3873 = vdwg.mxu0
        %3874 = vmatprep.subr.bf16.mxu0 %v3314
        %3875 = vmatpush1.bf16.msra.mxu0 %v3313
        %3876 = vmatprep.subr.bf16.mxu0 %v3318
        %3877 = vmatpush1.bf16.msra.mxu0 %v3317
        %3878 = vmatprep.subr.bf16.mxu0 %v3322
        %3879 = vmatpush1.bf16.msra.mxu0 %v3321
        %3880 = vmatprep.subr.bf16.mxu0 %v3326
        %3881 = vmatpush1.bf16.msra.mxu0 %v3325
        %3882 = vmatprep.subr.bf16.mxu0 %v3330
        %3883 = vmatpush1.bf16.msra.mxu0 %v3329
        %3884 = vmatprep.subr.bf16.mxu0 %v3334
        %3885 = vmatpush1.bf16.msra.mxu0 %v3333
        %3886 = vmatprep.subr.bf16.mxu0 %v3338
        %3887 = vmatpush1.bf16.msra.mxu0 %v3337
        %3888 = vmatprep.subr.bf16.mxu0 %v3342
        %3889 = vmatpush1.bf16.msra.mxu0 %v3341
        %3890 = vmatprep.subr.bf16.mxu0 %v3346
        %3891 = vmatpush1.bf16.msra.mxu0 %v3345
        %3892 = vmatprep.subr.bf16.mxu0 %v3350
        %3893 = vmatpush1.bf16.msra.mxu0 %v3349
        %3894 = vmatprep.subr.bf16.mxu0 %v3354
        %3895 = vmatpush1.bf16.msra.mxu0 %v3353
        %3896 = vmatprep.subr.bf16.mxu0 %v3358
        %3897 = vmatpush1.bf16.msra.mxu0 %v3357
        %3898 = vmatprep.subr.bf16.mxu0 %v3362
        %3899 = vmatpush1.bf16.msra.mxu0 %v3361
        %3900 = vmatprep.subr.bf16.mxu0 %v3366
        %3901 = vmatpush1.bf16.msra.mxu0 %v3365
        %3902 = vmatprep.subr.bf16.mxu0 %v3370
        %3903 = vmatpush1.bf16.msra.mxu0 %v3369
        %3904 = vmatprep.subr.bf16.mxu0 %v3374
        %3905 = vmatpush1.bf16.msra.mxu0 %v3373
        %3906 = vmatprep.mubr.bf16.mxu0 %v2142
        %3907 = vmatmul.mubr.bf16.gmra.mrb[0].mxu0 %v2141
        %v3908 = vpop.f32.mrb[0].mxu0
        %v3909 = vadd.f32 %v3796, %v3908
        %v3910 = vpop.f32.mrb[0].mxu0
        %v3911 = vadd.f32 %v3798, %v3910
        %v3912 = vpop.f32.mrb[0].mxu0
        %v3913 = vadd.f32 %v3800, %v3912
        %v3914 = vpop.f32.mrb[0].mxu0
        %v3915 = vadd.f32 %v3802, %v3914
        %3916 = vmatprep.mubr.bf16.mxu0 %v2150
        %3917 = vmatmul.mubr.bf16.gmra.mrb[0].mxu0 %v2149
        %v3918 = vpop.f32.mrb[0].mxu0
        %v3919 = vadd.f32 %v3806, %v3918
        %v3920 = vpop.f32.mrb[0].mxu0
        %v3921 = vadd.f32 %v3808, %v3920
        %v3922 = vpop.f32.mrb[0].mxu0
        %v3923 = vadd.f32 %v3810, %v3922
        %v3924 = vpop.f32.mrb[0].mxu0
        %v3925 = vadd.f32 %v3812, %v3924
        %3926 = vmatprep.mubr.bf16.mxu0 %v2158
        %3927 = vmatmul.mubr.bf16.gmra.mrb[0].mxu0 %v2157
        %v3928 = vpop.f32.mrb[0].mxu0
        %v3929 = vadd.f32 %v3816, %v3928
        %v3930 = vpop.f32.mrb[0].mxu0
        %v3931 = vadd.f32 %v3818, %v3930
        %v3932 = vpop.f32.mrb[0].mxu0
        %v3933 = vadd.f32 %v3820, %v3932
        %v3934 = vpop.f32.mrb[0].mxu0
        %v3935 = vadd.f32 %v3822, %v3934
        %3936 = vmatprep.mubr.bf16.mxu0 %v2166
        %3937 = vmatmul.mubr.bf16.gmra.mrb[0].mxu0 %v2165
        %v3938 = vpop.f32.mrb[0].mxu0
        %v3939 = vadd.f32 %v3826, %v3938
        %v3940 = vpop.f32.mrb[0].mxu0
        %v3941 = vadd.f32 %v3828, %v3940
        %v3942 = vpop.f32.mrb[0].mxu0
        %v3943 = vadd.f32 %v3830, %v3942
        %v3944 = vpop.f32.mrb[0].mxu0
        %v3945 = vadd.f32 %v3832, %v3944
        %3946 = vmatprep.mubr.bf16.mxu0 %v2174
        %3947 = vmatmul.mubr.bf16.gmra.mrb[0].mxu0 %v2173
        %v3948 = vpop.f32.mrb[0].mxu0
        %v3949 = vadd.f32 %v3836, %v3948
        %v3950 = vpop.f32.mrb[0].mxu0
        %v3951 = vadd.f32 %v3838, %v3950
        %v3952 = vpop.f32.mrb[0].mxu0
        %v3953 = vadd.f32 %v3840, %v3952
        %v3954 = vpop.f32.mrb[0].mxu0
        %v3955 = vadd.f32 %v3842, %v3954
        %3956 = vmatprep.mubr.bf16.mxu0 %v2182
        %3957 = vmatmul.mubr.bf16.gmra.mrb[0].mxu0 %v2181
        %v3958 = vpop.f32.mrb[0].mxu0
        %v3959 = vadd.f32 %v3846, %v3958
        %v3960 = vpop.f32.mrb[0].mxu0
        %v3961 = vadd.f32 %v3848, %v3960
        %v3962 = vpop.f32.mrb[0].mxu0
        %v3963 = vadd.f32 %v3850, %v3962
        %v3964 = vpop.f32.mrb[0].mxu0
        %v3965 = vadd.f32 %v3852, %v3964
        %3966 = vmatprep.mubr.bf16.mxu0 %v2190
        %3967 = vmatmul.mubr.bf16.gmra.mrb[0].mxu0 %v2189
        %v3968 = vpop.f32.mrb[0].mxu0
        %v3969 = vadd.f32 %v3856, %v3968
        %v3970 = vpop.f32.mrb[0].mxu0
        %v3971 = vadd.f32 %v3858, %v3970
        %v3972 = vpop.f32.mrb[0].mxu0
        %v3973 = vadd.f32 %v3860, %v3972
        %v3974 = vpop.f32.mrb[0].mxu0
        %v3975 = vadd.f32 %v3862, %v3974
        %3976 = vmatprep.mubr.bf16.mxu0 %v2198
        %3977 = vmatmul.mubr.bf16.gmra.mrb[0].mxu0 %v2197
        %v3978 = vpop.f32.mrb[0].mxu0
        %v3979 = vadd.f32 %v3866, %v3978
        %v3980 = vpop.f32.mrb[0].mxu0
        %v3981 = vadd.f32 %v3868, %v3980
        %v3982 = vpop.f32.mrb[0].mxu0
        %v3983 = vadd.f32 %v3870, %v3982
        %v3984 = vpop.f32.mrb[0].mxu0
        %v3985 = vadd.f32 %v3872, %v3984
        %3986 = vdwg.mxu0
        %3987 = vmatprep.subr.bf16.mxu0 %v3378
        %3988 = vmatpush1.bf16.msra.mxu0 %v3377
        %3989 = vmatprep.subr.bf16.mxu0 %v3382
        %3990 = vmatpush1.bf16.msra.mxu0 %v3381
        %3991 = vmatprep.subr.bf16.mxu0 %v3386
        %3992 = vmatpush1.bf16.msra.mxu0 %v3385
        %3993 = vmatprep.subr.bf16.mxu0 %v3390
        %3994 = vmatpush1.bf16.msra.mxu0 %v3389
        %3995 = vmatprep.subr.bf16.mxu0 %v3394
        %3996 = vmatpush1.bf16.msra.mxu0 %v3393
        %3997 = vmatprep.subr.bf16.mxu0 %v3398
        %3998 = vmatpush1.bf16.msra.mxu0 %v3397
        %3999 = vmatprep.subr.bf16.mxu0 %v3402
        %4000 = vmatpush1.bf16.msra.mxu0 %v3401
        %4001 = vmatprep.subr.bf16.mxu0 %v3406
        %4002 = vmatpush1.bf16.msra.mxu0 %v3405
        %4003 = vmatprep.subr.bf16.mxu0 %v3410
        %4004 = vmatpush1.bf16.msra.mxu0 %v3409
        %4005 = vmatprep.subr.bf16.mxu0 %v3414
        %4006 = vmatpush1.bf16.msra.mxu0 %v3413
        %4007 = vmatprep.subr.bf16.mxu0 %v3418
        %4008 = vmatpush1.bf16.msra.mxu0 %v3417
        %4009 = vmatprep.subr.bf16.mxu0 %v3422
        %4010 = vmatpush1.bf16.msra.mxu0 %v3421
        %4011 = vmatprep.subr.bf16.mxu0 %v3426
        %4012 = vmatpush1.bf16.msra.mxu0 %v3425
        %4013 = vmatprep.subr.bf16.mxu0 %v3430
        %4014 = vmatpush1.bf16.msra.mxu0 %v3429
        %4015 = vmatprep.subr.bf16.mxu0 %v3434
        %4016 = vmatpush1.bf16.msra.mxu0 %v3433
        %4017 = vmatprep.subr.bf16.mxu0 %v3438
        %4018 = vmatpush1.bf16.msra.mxu0 %v3437
        %4019 = vmatprep.mubr.bf16.mxu0 %v2144
        %4020 = vmatmul.mubr.bf16.gmra.mrb[0].mxu0 %v2143
        %v4021 = vpop.f32.mrb[0].mxu0
        %v4022 = vadd.f32 %v3909, %v4021
        %v4023 = vpop.f32.mrb[0].mxu0
        %v4024 = vadd.f32 %v3911, %v4023
        %v4025 = vpop.f32.mrb[0].mxu0
        %v4026 = vadd.f32 %v3913, %v4025
        %v4027 = vpop.f32.mrb[0].mxu0
        %v4028 = vadd.f32 %v3915, %v4027
        %4029 = vmatprep.mubr.bf16.mxu0 %v2152
        %4030 = vmatmul.mubr.bf16.gmra.mrb[0].mxu0 %v2151
        %v4031 = vpop.f32.mrb[0].mxu0
        %v4032 = vadd.f32 %v3919, %v4031
        %v4033 = vpop.f32.mrb[0].mxu0
        %v4034 = vadd.f32 %v3921, %v4033
        %v4035 = vpop.f32.mrb[0].mxu0
        %v4036 = vadd.f32 %v3923, %v4035
        %v4037 = vpop.f32.mrb[0].mxu0
        %v4038 = vadd.f32 %v3925, %v4037
        %4039 = vmatprep.mubr.bf16.mxu0 %v2160
        %4040 = vmatmul.mubr.bf16.gmra.mrb[0].mxu0 %v2159
        %v4041 = vpop.f32.mrb[0].mxu0
        %v4042 = vadd.f32 %v3929, %v4041
        %v4043 = vpop.f32.mrb[0].mxu0
        %v4044 = vadd.f32 %v3931, %v4043
        %v4045 = vpop.f32.mrb[0].mxu0
        %v4046 = vadd.f32 %v3933, %v4045
        %v4047 = vpop.f32.mrb[0].mxu0
        %v4048 = vadd.f32 %v3935, %v4047
        %4049 = vmatprep.mubr.bf16.mxu0 %v2168
        %4050 = vmatmul.mubr.bf16.gmra.mrb[0].mxu0 %v2167
        %v4051 = vpop.f32.mrb[0].mxu0
        %v4052 = vadd.f32 %v3939, %v4051
        %v4053 = vpop.f32.mrb[0].mxu0
        %v4054 = vadd.f32 %v3941, %v4053
        %v4055 = vpop.f32.mrb[0].mxu0
        %v4056 = vadd.f32 %v3943, %v4055
        %v4057 = vpop.f32.mrb[0].mxu0
        %v4058 = vadd.f32 %v3945, %v4057
        %4059 = vmatprep.mubr.bf16.mxu0 %v2176
        %4060 = vmatmul.mubr.bf16.gmra.mrb[0].mxu0 %v2175
        %v4061 = vpop.f32.mrb[0].mxu0
        %v4062 = vadd.f32 %v3949, %v4061
        %v4063 = vpop.f32.mrb[0].mxu0
        %v4064 = vadd.f32 %v3951, %v4063
        %v4065 = vpop.f32.mrb[0].mxu0
        %v4066 = vadd.f32 %v3953, %v4065
        %v4067 = vpop.f32.mrb[0].mxu0
        %v4068 = vadd.f32 %v3955, %v4067
        %4069 = vmatprep.mubr.bf16.mxu0 %v2184
        %4070 = vmatmul.mubr.bf16.gmra.mrb[0].mxu0 %v2183
        %v4071 = vpop.f32.mrb[0].mxu0
        %v4072 = vadd.f32 %v3959, %v4071
        %v4073 = vpop.f32.mrb[0].mxu0
        %v4074 = vadd.f32 %v3961, %v4073
        %v4075 = vpop.f32.mrb[0].mxu0
        %v4076 = vadd.f32 %v3963, %v4075
        %v4077 = vpop.f32.mrb[0].mxu0
        %v4078 = vadd.f32 %v3965, %v4077
        %4079 = vmatprep.mubr.bf16.mxu0 %v2192
        %4080 = vmatmul.mubr.bf16.gmra.mrb[0].mxu0 %v2191
        %v4081 = vpop.f32.mrb[0].mxu0
        %v4082 = vadd.f32 %v3969, %v4081
        %v4083 = vpop.f32.mrb[0].mxu0
        %v4084 = vadd.f32 %v3971, %v4083
        %v4085 = vpop.f32.mrb[0].mxu0
        %v4086 = vadd.f32 %v3973, %v4085
        %v4087 = vpop.f32.mrb[0].mxu0
        %v4088 = vadd.f32 %v3975, %v4087
        %4089 = vmatprep.mubr.bf16.mxu0 %v2200
        %4090 = vmatmul.mubr.bf16.gmra.mrb[0].mxu0 %v2199
        %v4091 = vpop.f32.mrb[0].mxu0
        %v4092 = vadd.f32 %v3979, %v4091
        %v4093 = vpop.f32.mrb[0].mxu0
        %v4094 = vadd.f32 %v3981, %v4093
        %v4095 = vpop.f32.mrb[0].mxu0
        %v4096 = vadd.f32 %v3983, %v4095
        %v4097 = vpop.f32.mrb[0].mxu0
        %v4098 = vadd.f32 %v3985, %v4097
        %4099 = vdwg.mxu0
        %4100 = vmatprep.subr.bf16.mxu0 %v3442
        %4101 = vmatpush1.bf16.msra.mxu0 %v3441
        %4102 = vmatprep.subr.bf16.mxu0 %v3446
        %4103 = vmatpush1.bf16.msra.mxu0 %v3445
        %4104 = vmatprep.subr.bf16.mxu0 %v3450
        %4105 = vmatpush1.bf16.msra.mxu0 %v3449
        %4106 = vmatprep.subr.bf16.mxu0 %v3454
        %4107 = vmatpush1.bf16.msra.mxu0 %v3453
        %4108 = vmatprep.subr.bf16.mxu0 %v3458
        %4109 = vmatpush1.bf16.msra.mxu0 %v3457
        %4110 = vmatprep.subr.bf16.mxu0 %v3462
        %4111 = vmatpush1.bf16.msra.mxu0 %v3461
        %4112 = vmatprep.subr.bf16.mxu0 %v3466
        %4113 = vmatpush1.bf16.msra.mxu0 %v3465
        %4114 = vmatprep.subr.bf16.mxu0 %v3470
        %4115 = vmatpush1.bf16.msra.mxu0 %v3469
        %4116 = vmatprep.subr.bf16.mxu0 %v3474
        %4117 = vmatpush1.bf16.msra.mxu0 %v3473
        %4118 = vmatprep.subr.bf16.mxu0 %v3478
        %4119 = vmatpush1.bf16.msra.mxu0 %v3477
        %4120 = vmatprep.subr.bf16.mxu0 %v3482
        %4121 = vmatpush1.bf16.msra.mxu0 %v3481
        %4122 = vmatprep.subr.bf16.mxu0 %v3486
        %4123 = vmatpush1.bf16.msra.mxu0 %v3485
        %4124 = vmatprep.subr.bf16.mxu0 %v3490
        %4125 = vmatpush1.bf16.msra.mxu0 %v3489
        %4126 = vmatprep.subr.bf16.mxu0 %v3494
        %4127 = vmatpush1.bf16.msra.mxu0 %v3493
        %4128 = vmatprep.subr.bf16.mxu0 %v3498
        %4129 = vmatpush1.bf16.msra.mxu0 %v3497
        %4130 = vmatprep.subr.bf16.mxu0 %v3502
        %4131 = vmatpush1.bf16.msra.mxu0 %v3501
        %4132 = vmatprep.mubr.bf16.mxu0 %v2146
        %4133 = vmatmul.mubr.bf16.gmra.mrb[0].mxu0 %v2145
        %v4134 = vpop.f32.mrb[0].mxu0
        %v4135 = vadd.f32 %v4022, %v4134
        %v4136 = vpop.f32.mrb[0].mxu0
        %v4137 = vadd.f32 %v4024, %v4136
        %v4138 = vpop.f32.mrb[0].mxu0
        %v4139 = vadd.f32 %v4026, %v4138
        %v4140 = vpop.f32.mrb[0].mxu0
        %v4141 = vadd.f32 %v4028, %v4140
        %4142 = vmatprep.mubr.bf16.mxu0 %v2154
        %4143 = vmatmul.mubr.bf16.gmra.mrb[0].mxu0 %v2153
        %v4144 = vpop.f32.mrb[0].mxu0
        %v4145 = vadd.f32 %v4032, %v4144
        %v4146 = vpop.f32.mrb[0].mxu0
        %v4147 = vadd.f32 %v4034, %v4146
        %v4148 = vpop.f32.mrb[0].mxu0
        %v4149 = vadd.f32 %v4036, %v4148
        %v4150 = vpop.f32.mrb[0].mxu0
        %v4151 = vadd.f32 %v4038, %v4150
        %4152 = vmatprep.mubr.bf16.mxu0 %v2162
        %4153 = vmatmul.mubr.bf16.gmra.mrb[0].mxu0 %v2161
        %v4154 = vpop.f32.mrb[0].mxu0
        %v4155 = vadd.f32 %v4042, %v4154
        %v4156 = vpop.f32.mrb[0].mxu0
        %v4157 = vadd.f32 %v4044, %v4156
        %v4158 = vpop.f32.mrb[0].mxu0
        %v4159 = vadd.f32 %v4046, %v4158
        %v4160 = vpop.f32.mrb[0].mxu0
        %v4161 = vadd.f32 %v4048, %v4160
        %4162 = vmatprep.mubr.bf16.mxu0 %v2170
        %4163 = vmatmul.mubr.bf16.gmra.mrb[0].mxu0 %v2169
        %v4164 = vpop.f32.mrb[0].mxu0
        %v4165 = vadd.f32 %v4052, %v4164
        %v4166 = vpop.f32.mrb[0].mxu0
        %v4167 = vadd.f32 %v4054, %v4166
        %v4168 = vpop.f32.mrb[0].mxu0
        %v4169 = vadd.f32 %v4056, %v4168
        %v4170 = vpop.f32.mrb[0].mxu0
        %v4171 = vadd.f32 %v4058, %v4170
        %4172 = vmatprep.mubr.bf16.mxu0 %v2178
        %4173 = vmatmul.mubr.bf16.gmra.mrb[0].mxu0 %v2177
        %v4174 = vpop.f32.mrb[0].mxu0
        %v4175 = vadd.f32 %v4062, %v4174
        %v4176 = vpop.f32.mrb[0].mxu0
        %v4177 = vadd.f32 %v4064, %v4176
        %v4178 = vpop.f32.mrb[0].mxu0
        %v4179 = vadd.f32 %v4066, %v4178
        %v4180 = vpop.f32.mrb[0].mxu0
        %v4181 = vadd.f32 %v4068, %v4180
        %4182 = vmatprep.mubr.bf16.mxu0 %v2186
        %4183 = vmatmul.mubr.bf16.gmra.mrb[0].mxu0 %v2185
        %v4184 = vpop.f32.mrb[0].mxu0
        %v4185 = vadd.f32 %v4072, %v4184
        %v4186 = vpop.f32.mrb[0].mxu0
        %v4187 = vadd.f32 %v4074, %v4186
        %v4188 = vpop.f32.mrb[0].mxu0
        %v4189 = vadd.f32 %v4076, %v4188
        %v4190 = vpop.f32.mrb[0].mxu0
        %v4191 = vadd.f32 %v4078, %v4190
        %4192 = vmatprep.mubr.bf16.mxu0 %v2194
        %4193 = vmatmul.mubr.bf16.gmra.mrb[0].mxu0 %v2193
        %v4194 = vpop.f32.mrb[0].mxu0
        %v4195 = vadd.f32 %v4082, %v4194
        %v4196 = vpop.f32.mrb[0].mxu0
        %v4197 = vadd.f32 %v4084, %v4196
        %v4198 = vpop.f32.mrb[0].mxu0
        %v4199 = vadd.f32 %v4086, %v4198
        %v4200 = vpop.f32.mrb[0].mxu0
        %v4201 = vadd.f32 %v4088, %v4200
        %4202 = vmatprep.mubr.bf16.mxu0 %v2202
        %4203 = vmatmul.mubr.bf16.gmra.mrb[0].mxu0 %v2201
        %v4204 = vpop.f32.mrb[0].mxu0
        %v4205 = vadd.f32 %v4092, %v4204
        %v4206 = vpop.f32.mrb[0].mxu0
        %v4207 = vadd.f32 %v4094, %v4206
        %v4208 = vpop.f32.mrb[0].mxu0
        %v4209 = vadd.f32 %v4096, %v4208
        %v4210 = vpop.f32.mrb[0].mxu0
        %v4211 = vadd.f32 %v4098, %v4210
        %4212 = vdwg.mxu0
        %4213 = vmatprep.subr.bf16.mxu0 %v3252
        %4214 = vmatpush1.bf16.msra.mxu0 %v3251
        %4215 = vmatprep.subr.bf16.mxu0 %v3256
        %4216 = vmatpush1.bf16.msra.mxu0 %v3255
        %4217 = vmatprep.subr.bf16.mxu0 %v3260
        %4218 = vmatpush1.bf16.msra.mxu0 %v3259
        %4219 = vmatprep.subr.bf16.mxu0 %v3264
        %4220 = vmatpush1.bf16.msra.mxu0 %v3263
        %4221 = vmatprep.subr.bf16.mxu0 %v3268
        %4222 = vmatpush1.bf16.msra.mxu0 %v3267
        %4223 = vmatprep.subr.bf16.mxu0 %v3272
        %4224 = vmatpush1.bf16.msra.mxu0 %v3271
        %4225 = vmatprep.subr.bf16.mxu0 %v3276
        %4226 = vmatpush1.bf16.msra.mxu0 %v3275
        %4227 = vmatprep.subr.bf16.mxu0 %v3280
        %4228 = vmatpush1.bf16.msra.mxu0 %v3279
        %4229 = vmatprep.subr.bf16.mxu0 %v3284
        %4230 = vmatpush1.bf16.msra.mxu0 %v3283
        %4231 = vmatprep.subr.bf16.mxu0 %v3288
        %4232 = vmatpush1.bf16.msra.mxu0 %v3287
        %4233 = vmatprep.subr.bf16.mxu0 %v3292
        %4234 = vmatpush1.bf16.msra.mxu0 %v3291
        %4235 = vmatprep.subr.bf16.mxu0 %v3296
        %4236 = vmatpush1.bf16.msra.mxu0 %v3295
        %4237 = vmatprep.subr.bf16.mxu0 %v3300
        %4238 = vmatpush1.bf16.msra.mxu0 %v3299
        %4239 = vmatprep.subr.bf16.mxu0 %v3304
        %4240 = vmatpush1.bf16.msra.mxu0 %v3303
        %4241 = vmatprep.subr.bf16.mxu0 %v3308
        %4242 = vmatpush1.bf16.msra.mxu0 %v3307
        %4243 = vmatprep.subr.bf16.mxu0 %v3312
        %4244 = vmatpush1.bf16.msra.mxu0 %v3311
        %4245 = vmatprep.mubr.bf16.mxu0 %v2140
        %4246 = vmatmul.mubr.bf16.gmra.mrb[0].mxu0 %v2139
        %v4247 = vpop.f32.mrb[0].mxu0
        %v4248 = vadd.f32 %v2472, %v4247
        %v4249 = vpop.f32.mrb[0].mxu0
        %v4250 = vadd.f32 %v2476, %v4249
        %v4251 = vpop.f32.mrb[0].mxu0
        %v4252 = vadd.f32 %v2472, %v4251
        %v4253 = vpop.f32.mrb[0].mxu0
        %v4254 = vadd.f32 %v2476, %v4253
        %4255 = vmatprep.mubr.bf16.mxu0 %v2148
        %4256 = vmatmul.mubr.bf16.gmra.mrb[0].mxu0 %v2147
        %v4257 = vpop.f32.mrb[0].mxu0
        %v4258 = vadd.f32 %v2472, %v4257
        %v4259 = vpop.f32.mrb[0].mxu0
        %v4260 = vadd.f32 %v2476, %v4259
        %v4261 = vpop.f32.mrb[0].mxu0
        %v4262 = vadd.f32 %v2472, %v4261
        %v4263 = vpop.f32.mrb[0].mxu0
        %v4264 = vadd.f32 %v2476, %v4263
        %4265 = vmatprep.mubr.bf16.mxu0 %v2156
        %4266 = vmatmul.mubr.bf16.gmra.mrb[0].mxu0 %v2155
        %v4267 = vpop.f32.mrb[0].mxu0
        %v4268 = vadd.f32 %v2472, %v4267
        %v4269 = vpop.f32.mrb[0].mxu0
        %v4270 = vadd.f32 %v2476, %v4269
        %v4271 = vpop.f32.mrb[0].mxu0
        %v4272 = vadd.f32 %v2472, %v4271
        %v4273 = vpop.f32.mrb[0].mxu0
        %v4274 = vadd.f32 %v2476, %v4273
        %4275 = vmatprep.mubr.bf16.mxu0 %v2164
        %4276 = vmatmul.mubr.bf16.gmra.mrb[0].mxu0 %v2163
        %v4277 = vpop.f32.mrb[0].mxu0
        %v4278 = vadd.f32 %v2472, %v4277
        %v4279 = vpop.f32.mrb[0].mxu0
        %v4280 = vadd.f32 %v2476, %v4279
        %v4281 = vpop.f32.mrb[0].mxu0
        %v4282 = vadd.f32 %v2472, %v4281
        %v4283 = vpop.f32.mrb[0].mxu0
        %v4284 = vadd.f32 %v2476, %v4283
        %4285 = vmatprep.mubr.bf16.mxu0 %v2172
        %4286 = vmatmul.mubr.bf16.gmra.mrb[0].mxu0 %v2171
        %v4287 = vpop.f32.mrb[0].mxu0
        %v4288 = vadd.f32 %v2472, %v4287
        %v4289 = vpop.f32.mrb[0].mxu0
        %v4290 = vadd.f32 %v2476, %v4289
        %v4291 = vpop.f32.mrb[0].mxu0
        %v4292 = vadd.f32 %v2472, %v4291
        %v4293 = vpop.f32.mrb[0].mxu0
        %v4294 = vadd.f32 %v2476, %v4293
        %4295 = vmatprep.mubr.bf16.mxu0 %v2180
        %4296 = vmatmul.mubr.bf16.gmra.mrb[0].mxu0 %v2179
        %v4297 = vpop.f32.mrb[0].mxu0
        %v4298 = vadd.f32 %v2472, %v4297
        %v4299 = vpop.f32.mrb[0].mxu0
        %v4300 = vadd.f32 %v2476, %v4299
        %v4301 = vpop.f32.mrb[0].mxu0
        %v4302 = vadd.f32 %v2472, %v4301
        %v4303 = vpop.f32.mrb[0].mxu0
        %v4304 = vadd.f32 %v2476, %v4303
        %4305 = vmatprep.mubr.bf16.mxu0 %v2188
        %4306 = vmatmul.mubr.bf16.gmra.mrb[0].mxu0 %v2187
        %v4307 = vpop.f32.mrb[0].mxu0
        %v4308 = vadd.f32 %v2472, %v4307
        %v4309 = vpop.f32.mrb[0].mxu0
        %v4310 = vadd.f32 %v2476, %v4309
        %v4311 = vpop.f32.mrb[0].mxu0
        %v4312 = vadd.f32 %v2472, %v4311
        %v4313 = vpop.f32.mrb[0].mxu0
        %v4314 = vadd.f32 %v2476, %v4313
        %4315 = vmatprep.mubr.bf16.mxu0 %v2196
        %4316 = vmatmul.mubr.bf16.gmra.mrb[0].mxu0 %v2195
        %v4317 = vpop.f32.mrb[0].mxu0
        %v4318 = vadd.f32 %v2472, %v4317
        %v4319 = vpop.f32.mrb[0].mxu0
        %v4320 = vadd.f32 %v2476, %v4319
        %v4321 = vpop.f32.mrb[0].mxu0
        %v4322 = vadd.f32 %v2472, %v4321
        %v4323 = vpop.f32.mrb[0].mxu0
        %v4324 = vadd.f32 %v2476, %v4323
        %4325 = vdwg.mxu0
        %4326 = vmatprep.subr.bf16.mxu0 %v3316
        %4327 = vmatpush1.bf16.msra.mxu0 %v3315
        %4328 = vmatprep.subr.bf16.mxu0 %v3320
        %4329 = vmatpush1.bf16.msra.mxu0 %v3319
        %4330 = vmatprep.subr.bf16.mxu0 %v3324
        %4331 = vmatpush1.bf16.msra.mxu0 %v3323
        %4332 = vmatprep.subr.bf16.mxu0 %v3328
        %4333 = vmatpush1.bf16.msra.mxu0 %v3327
        %4334 = vmatprep.subr.bf16.mxu0 %v3332
        %4335 = vmatpush1.bf16.msra.mxu0 %v3331
        %4336 = vmatprep.subr.bf16.mxu0 %v3336
        %4337 = vmatpush1.bf16.msra.mxu0 %v3335
        %4338 = vmatprep.subr.bf16.mxu0 %v3340
        %4339 = vmatpush1.bf16.msra.mxu0 %v3339
        %4340 = vmatprep.subr.bf16.mxu0 %v3344
        %4341 = vmatpush1.bf16.msra.mxu0 %v3343
        %4342 = vmatprep.subr.bf16.mxu0 %v3348
        %4343 = vmatpush1.bf16.msra.mxu0 %v3347
        %4344 = vmatprep.subr.bf16.mxu0 %v3352
        %4345 = vmatpush1.bf16.msra.mxu0 %v3351
        %4346 = vmatprep.subr.bf16.mxu0 %v3356
        %4347 = vmatpush1.bf16.msra.mxu0 %v3355
        %4348 = vmatprep.subr.bf16.mxu0 %v3360
        %4349 = vmatpush1.bf16.msra.mxu0 %v3359
        %4350 = vmatprep.subr.bf16.mxu0 %v3364
        %4351 = vmatpush1.bf16.msra.mxu0 %v3363
        %4352 = vmatprep.subr.bf16.mxu0 %v3368
        %4353 = vmatpush1.bf16.msra.mxu0 %v3367
        %4354 = vmatprep.subr.bf16.mxu0 %v3372
        %4355 = vmatpush1.bf16.msra.mxu0 %v3371
        %4356 = vmatprep.subr.bf16.mxu0 %v3376
        %4357 = vmatpush1.bf16.msra.mxu0 %v3375
        %4358 = vmatprep.mubr.bf16.mxu0 %v2142
        %4359 = vmatmul.mubr.bf16.gmra.mrb[0].mxu0 %v2141
        %v4360 = vpop.f32.mrb[0].mxu0
        %v4361 = vadd.f32 %v4248, %v4360
        %v4362 = vpop.f32.mrb[0].mxu0
        %v4363 = vadd.f32 %v4250, %v4362
        %v4364 = vpop.f32.mrb[0].mxu0
        %v4365 = vadd.f32 %v4252, %v4364
        %v4366 = vpop.f32.mrb[0].mxu0
        %v4367 = vadd.f32 %v4254, %v4366
        %4368 = vmatprep.mubr.bf16.mxu0 %v2150
        %4369 = vmatmul.mubr.bf16.gmra.mrb[0].mxu0 %v2149
        %v4370 = vpop.f32.mrb[0].mxu0
        %v4371 = vadd.f32 %v4258, %v4370
        %v4372 = vpop.f32.mrb[0].mxu0
        %v4373 = vadd.f32 %v4260, %v4372
        %v4374 = vpop.f32.mrb[0].mxu0
        %v4375 = vadd.f32 %v4262, %v4374
        %v4376 = vpop.f32.mrb[0].mxu0
        %v4377 = vadd.f32 %v4264, %v4376
        %4378 = vmatprep.mubr.bf16.mxu0 %v2158
        %4379 = vmatmul.mubr.bf16.gmra.mrb[0].mxu0 %v2157
        %v4380 = vpop.f32.mrb[0].mxu0
        %v4381 = vadd.f32 %v4268, %v4380
        %v4382 = vpop.f32.mrb[0].mxu0
        %v4383 = vadd.f32 %v4270, %v4382
        %v4384 = vpop.f32.mrb[0].mxu0
        %v4385 = vadd.f32 %v4272, %v4384
        %v4386 = vpop.f32.mrb[0].mxu0
        %v4387 = vadd.f32 %v4274, %v4386
        %4388 = vmatprep.mubr.bf16.mxu0 %v2166
        %4389 = vmatmul.mubr.bf16.gmra.mrb[0].mxu0 %v2165
        %v4390 = vpop.f32.mrb[0].mxu0
        %v4391 = vadd.f32 %v4278, %v4390
        %v4392 = vpop.f32.mrb[0].mxu0
        %v4393 = vadd.f32 %v4280, %v4392
        %v4394 = vpop.f32.mrb[0].mxu0
        %v4395 = vadd.f32 %v4282, %v4394
        %v4396 = vpop.f32.mrb[0].mxu0
        %v4397 = vadd.f32 %v4284, %v4396
        %4398 = vmatprep.mubr.bf16.mxu0 %v2174
        %4399 = vmatmul.mubr.bf16.gmra.mrb[0].mxu0 %v2173
        %v4400 = vpop.f32.mrb[0].mxu0
        %v4401 = vadd.f32 %v4288, %v4400
        %v4402 = vpop.f32.mrb[0].mxu0
        %v4403 = vadd.f32 %v4290, %v4402
        %v4404 = vpop.f32.mrb[0].mxu0
        %v4405 = vadd.f32 %v4292, %v4404
        %v4406 = vpop.f32.mrb[0].mxu0
        %v4407 = vadd.f32 %v4294, %v4406
        %4408 = vmatprep.mubr.bf16.mxu0 %v2182
        %4409 = vmatmul.mubr.bf16.gmra.mrb[0].mxu0 %v2181
        %v4410 = vpop.f32.mrb[0].mxu0
        %v4411 = vadd.f32 %v4298, %v4410
        %v4412 = vpop.f32.mrb[0].mxu0
        %v4413 = vadd.f32 %v4300, %v4412
        %v4414 = vpop.f32.mrb[0].mxu0
        %v4415 = vadd.f32 %v4302, %v4414
        %v4416 = vpop.f32.mrb[0].mxu0
        %v4417 = vadd.f32 %v4304, %v4416
        %4418 = vmatprep.mubr.bf16.mxu0 %v2190
        %4419 = vmatmul.mubr.bf16.gmra.mrb[0].mxu0 %v2189
        %v4420 = vpop.f32.mrb[0].mxu0
        %v4421 = vadd.f32 %v4308, %v4420
        %v4422 = vpop.f32.mrb[0].mxu0
        %v4423 = vadd.f32 %v4310, %v4422
        %v4424 = vpop.f32.mrb[0].mxu0
        %v4425 = vadd.f32 %v4312, %v4424
        %v4426 = vpop.f32.mrb[0].mxu0
        %v4427 = vadd.f32 %v4314, %v4426
        %4428 = vmatprep.mubr.bf16.mxu0 %v2198
        %4429 = vmatmul.mubr.bf16.gmra.mrb[0].mxu0 %v2197
        %v4430 = vpop.f32.mrb[0].mxu0
        %v4431 = vadd.f32 %v4318, %v4430
        %v4432 = vpop.f32.mrb[0].mxu0
        %v4433 = vadd.f32 %v4320, %v4432
        %v4434 = vpop.f32.mrb[0].mxu0
        %v4435 = vadd.f32 %v4322, %v4434
        %v4436 = vpop.f32.mrb[0].mxu0
        %v4437 = vadd.f32 %v4324, %v4436
        %4438 = vdwg.mxu0
        %4439 = vmatprep.subr.bf16.mxu0 %v3380
        %4440 = vmatpush1.bf16.msra.mxu0 %v3379
        %4441 = vmatprep.subr.bf16.mxu0 %v3384
        %4442 = vmatpush1.bf16.msra.mxu0 %v3383
        %4443 = vmatprep.subr.bf16.mxu0 %v3388
        %4444 = vmatpush1.bf16.msra.mxu0 %v3387
        %4445 = vmatprep.subr.bf16.mxu0 %v3392
        %4446 = vmatpush1.bf16.msra.mxu0 %v3391
        %4447 = vmatprep.subr.bf16.mxu0 %v3396
        %4448 = vmatpush1.bf16.msra.mxu0 %v3395
        %4449 = vmatprep.subr.bf16.mxu0 %v3400
        %4450 = vmatpush1.bf16.msra.mxu0 %v3399
        %4451 = vmatprep.subr.bf16.mxu0 %v3404
        %4452 = vmatpush1.bf16.msra.mxu0 %v3403
        %4453 = vmatprep.subr.bf16.mxu0 %v3408
        %4454 = vmatpush1.bf16.msra.mxu0 %v3407
        %4455 = vmatprep.subr.bf16.mxu0 %v3412
        %4456 = vmatpush1.bf16.msra.mxu0 %v3411
        %4457 = vmatprep.subr.bf16.mxu0 %v3416
        %4458 = vmatpush1.bf16.msra.mxu0 %v3415
        %4459 = vmatprep.subr.bf16.mxu0 %v3420
        %4460 = vmatpush1.bf16.msra.mxu0 %v3419
        %4461 = vmatprep.subr.bf16.mxu0 %v3424
        %4462 = vmatpush1.bf16.msra.mxu0 %v3423
        %4463 = vmatprep.subr.bf16.mxu0 %v3428
        %4464 = vmatpush1.bf16.msra.mxu0 %v3427
        %4465 = vmatprep.subr.bf16.mxu0 %v3432
        %4466 = vmatpush1.bf16.msra.mxu0 %v3431
        %4467 = vmatprep.subr.bf16.mxu0 %v3436
        %4468 = vmatpush1.bf16.msra.mxu0 %v3435
        %4469 = vmatprep.subr.bf16.mxu0 %v3440
        %4470 = vmatpush1.bf16.msra.mxu0 %v3439
        %4471 = vmatprep.mubr.bf16.mxu0 %v2144
        %4472 = vmatmul.mubr.bf16.gmra.mrb[0].mxu0 %v2143
        %v4473 = vpop.f32.mrb[0].mxu0
        %v4474 = vadd.f32 %v4361, %v4473
        %v4475 = vpop.f32.mrb[0].mxu0
        %v4476 = vadd.f32 %v4363, %v4475
        %v4477 = vpop.f32.mrb[0].mxu0
        %v4478 = vadd.f32 %v4365, %v4477
        %v4479 = vpop.f32.mrb[0].mxu0
        %v4480 = vadd.f32 %v4367, %v4479
        %4481 = vmatprep.mubr.bf16.mxu0 %v2152
        %4482 = vmatmul.mubr.bf16.gmra.mrb[0].mxu0 %v2151
        %v4483 = vpop.f32.mrb[0].mxu0
        %v4484 = vadd.f32 %v4371, %v4483
        %v4485 = vpop.f32.mrb[0].mxu0
        %v4486 = vadd.f32 %v4373, %v4485
        %v4487 = vpop.f32.mrb[0].mxu0
        %v4488 = vadd.f32 %v4375, %v4487
        %v4489 = vpop.f32.mrb[0].mxu0
        %v4490 = vadd.f32 %v4377, %v4489
        %4491 = vmatprep.mubr.bf16.mxu0 %v2160
        %4492 = vmatmul.mubr.bf16.gmra.mrb[0].mxu0 %v2159
        %v4493 = vpop.f32.mrb[0].mxu0
        %v4494 = vadd.f32 %v4381, %v4493
        %v4495 = vpop.f32.mrb[0].mxu0
        %v4496 = vadd.f32 %v4383, %v4495
        %v4497 = vpop.f32.mrb[0].mxu0
        %v4498 = vadd.f32 %v4385, %v4497
        %v4499 = vpop.f32.mrb[0].mxu0
        %v4500 = vadd.f32 %v4387, %v4499
        %4501 = vmatprep.mubr.bf16.mxu0 %v2168
        %4502 = vmatmul.mubr.bf16.gmra.mrb[0].mxu0 %v2167
        %v4503 = vpop.f32.mrb[0].mxu0
        %v4504 = vadd.f32 %v4391, %v4503
        %v4505 = vpop.f32.mrb[0].mxu0
        %v4506 = vadd.f32 %v4393, %v4505
        %v4507 = vpop.f32.mrb[0].mxu0
        %v4508 = vadd.f32 %v4395, %v4507
        %v4509 = vpop.f32.mrb[0].mxu0
        %v4510 = vadd.f32 %v4397, %v4509
        %4511 = vmatprep.mubr.bf16.mxu0 %v2176
        %4512 = vmatmul.mubr.bf16.gmra.mrb[0].mxu0 %v2175
        %v4513 = vpop.f32.mrb[0].mxu0
        %v4514 = vadd.f32 %v4401, %v4513
        %v4515 = vpop.f32.mrb[0].mxu0
        %v4516 = vadd.f32 %v4403, %v4515
        %v4517 = vpop.f32.mrb[0].mxu0
        %v4518 = vadd.f32 %v4405, %v4517
        %v4519 = vpop.f32.mrb[0].mxu0
        %v4520 = vadd.f32 %v4407, %v4519
        %4521 = vmatprep.mubr.bf16.mxu0 %v2184
        %4522 = vmatmul.mubr.bf16.gmra.mrb[0].mxu0 %v2183
        %v4523 = vpop.f32.mrb[0].mxu0
        %v4524 = vadd.f32 %v4411, %v4523
        %v4525 = vpop.f32.mrb[0].mxu0
        %v4526 = vadd.f32 %v4413, %v4525
        %v4527 = vpop.f32.mrb[0].mxu0
        %v4528 = vadd.f32 %v4415, %v4527
        %v4529 = vpop.f32.mrb[0].mxu0
        %v4530 = vadd.f32 %v4417, %v4529
        %4531 = vmatprep.mubr.bf16.mxu0 %v2192
        %4532 = vmatmul.mubr.bf16.gmra.mrb[0].mxu0 %v2191
        %v4533 = vpop.f32.mrb[0].mxu0
        %v4534 = vadd.f32 %v4421, %v4533
        %v4535 = vpop.f32.mrb[0].mxu0
        %v4536 = vadd.f32 %v4423, %v4535
        %v4537 = vpop.f32.mrb[0].mxu0
        %v4538 = vadd.f32 %v4425, %v4537
        %v4539 = vpop.f32.mrb[0].mxu0
        %v4540 = vadd.f32 %v4427, %v4539
        %4541 = vmatprep.mubr.bf16.mxu0 %v2200
        %4542 = vmatmul.mubr.bf16.gmra.mrb[0].mxu0 %v2199
        %v4543 = vpop.f32.mrb[0].mxu0
        %v4544 = vadd.f32 %v4431, %v4543
        %v4545 = vpop.f32.mrb[0].mxu0
        %v4546 = vadd.f32 %v4433, %v4545
        %v4547 = vpop.f32.mrb[0].mxu0
        %v4548 = vadd.f32 %v4435, %v4547
        %v4549 = vpop.f32.mrb[0].mxu0
        %v4550 = vadd.f32 %v4437, %v4549
        %4551 = vdwg.mxu0
        %4552 = vmatprep.subr.bf16.mxu0 %v3444
        %4553 = vmatpush1.bf16.msra.mxu0 %v3443
        %4554 = vmatprep.subr.bf16.mxu0 %v3448
        %4555 = vmatpush1.bf16.msra.mxu0 %v3447
        %4556 = vmatprep.subr.bf16.mxu0 %v3452
        %4557 = vmatpush1.bf16.msra.mxu0 %v3451
        %4558 = vmatprep.subr.bf16.mxu0 %v3456
        %4559 = vmatpush1.bf16.msra.mxu0 %v3455
        %4560 = vmatprep.subr.bf16.mxu0 %v3460
        %4561 = vmatpush1.bf16.msra.mxu0 %v3459
        %4562 = vmatprep.subr.bf16.mxu0 %v3464
        %4563 = vmatpush1.bf16.msra.mxu0 %v3463
        %4564 = vmatprep.subr.bf16.mxu0 %v3468
        %4565 = vmatpush1.bf16.msra.mxu0 %v3467
        %4566 = vmatprep.subr.bf16.mxu0 %v3472
        %4567 = vmatpush1.bf16.msra.mxu0 %v3471
        %4568 = vmatprep.subr.bf16.mxu0 %v3476
        %4569 = vmatpush1.bf16.msra.mxu0 %v3475
        %4570 = vmatprep.subr.bf16.mxu0 %v3480
        %4571 = vmatpush1.bf16.msra.mxu0 %v3479
        %4572 = vmatprep.subr.bf16.mxu0 %v3484
        %4573 = vmatpush1.bf16.msra.mxu0 %v3483
        %4574 = vmatprep.subr.bf16.mxu0 %v3488
        %4575 = vmatpush1.bf16.msra.mxu0 %v3487
        %4576 = vmatprep.subr.bf16.mxu0 %v3492
        %4577 = vmatpush1.bf16.msra.mxu0 %v3491
        %4578 = vmatprep.subr.bf16.mxu0 %v3496
        %4579 = vmatpush1.bf16.msra.mxu0 %v3495
        %4580 = vmatprep.subr.bf16.mxu0 %v3500
        %4581 = vmatpush1.bf16.msra.mxu0 %v3499
        %4582 = vmatprep.subr.bf16.mxu0 %v3504
        %4583 = vmatpush1.bf16.msra.mxu0 %v3503
        %4584 = vmatprep.mubr.bf16.mxu0 %v2146
        %4585 = vmatmul.mubr.bf16.gmra.mrb[0].mxu0 %v2145
        %v4586 = vpop.f32.mrb[0].mxu0
        %v4587 = vadd.f32 %v4474, %v4586
        %v4588 = vpop.f32.mrb[0].mxu0
        %v4589 = vadd.f32 %v4476, %v4588
        %v4590 = vpop.f32.mrb[0].mxu0
        %v4591 = vadd.f32 %v4478, %v4590
        %v4592 = vpop.f32.mrb[0].mxu0
        %v4593 = vadd.f32 %v4480, %v4592
        %4594 = vmatprep.mubr.bf16.mxu0 %v2154
        %4595 = vmatmul.mubr.bf16.gmra.mrb[0].mxu0 %v2153
        %v4596 = vpop.f32.mrb[0].mxu0
        %v4597 = vadd.f32 %v4484, %v4596
        %v4598 = vpop.f32.mrb[0].mxu0
        %v4599 = vadd.f32 %v4486, %v4598
        %v4600 = vpop.f32.mrb[0].mxu0
        %v4601 = vadd.f32 %v4488, %v4600
        %v4602 = vpop.f32.mrb[0].mxu0
        %v4603 = vadd.f32 %v4490, %v4602
        %4604 = vmatprep.mubr.bf16.mxu0 %v2162
        %4605 = vmatmul.mubr.bf16.gmra.mrb[0].mxu0 %v2161
        %v4606 = vpop.f32.mrb[0].mxu0
        %v4607 = vadd.f32 %v4494, %v4606
        %v4608 = vpop.f32.mrb[0].mxu0
        %v4609 = vadd.f32 %v4496, %v4608
        %v4610 = vpop.f32.mrb[0].mxu0
        %v4611 = vadd.f32 %v4498, %v4610
        %v4612 = vpop.f32.mrb[0].mxu0
        %v4613 = vadd.f32 %v4500, %v4612
        %4614 = vmatprep.mubr.bf16.mxu0 %v2170
        %4615 = vmatmul.mubr.bf16.gmra.mrb[0].mxu0 %v2169
        %v4616 = vpop.f32.mrb[0].mxu0
        %v4617 = vadd.f32 %v4504, %v4616
        %v4618 = vpop.f32.mrb[0].mxu0
        %v4619 = vadd.f32 %v4506, %v4618
        %v4620 = vpop.f32.mrb[0].mxu0
        %v4621 = vadd.f32 %v4508, %v4620
        %v4622 = vpop.f32.mrb[0].mxu0
        %v4623 = vadd.f32 %v4510, %v4622
        %4624 = vmatprep.mubr.bf16.mxu0 %v2178
        %4625 = vmatmul.mubr.bf16.gmra.mrb[0].mxu0 %v2177
        %v4626 = vpop.f32.mrb[0].mxu0
        %v4627 = vadd.f32 %v4514, %v4626
        %v4628 = vpop.f32.mrb[0].mxu0
        %v4629 = vadd.f32 %v4516, %v4628
        %v4630 = vpop.f32.mrb[0].mxu0
        %v4631 = vadd.f32 %v4518, %v4630
        %v4632 = vpop.f32.mrb[0].mxu0
        %v4633 = vadd.f32 %v4520, %v4632
        %4634 = vmatprep.mubr.bf16.mxu0 %v2186
        %4635 = vmatmul.mubr.bf16.gmra.mrb[0].mxu0 %v2185
        %v4636 = vpop.f32.mrb[0].mxu0
        %v4637 = vadd.f32 %v4524, %v4636
        %v4638 = vpop.f32.mrb[0].mxu0
        %v4639 = vadd.f32 %v4526, %v4638
        %v4640 = vpop.f32.mrb[0].mxu0
        %v4641 = vadd.f32 %v4528, %v4640
        %v4642 = vpop.f32.mrb[0].mxu0
        %v4643 = vadd.f32 %v4530, %v4642
        %4644 = vmatprep.mubr.bf16.mxu0 %v2194
        %4645 = vmatmul.mubr.bf16.gmra.mrb[0].mxu0 %v2193
        %v4646 = vpop.f32.mrb[0].mxu0
        %v4647 = vadd.f32 %v4534, %v4646
        %v4648 = vpop.f32.mrb[0].mxu0
        %v4649 = vadd.f32 %v4536, %v4648
        %v4650 = vpop.f32.mrb[0].mxu0
        %v4651 = vadd.f32 %v4538, %v4650
        %v4652 = vpop.f32.mrb[0].mxu0
        %v4653 = vadd.f32 %v4540, %v4652
        %4654 = vmatprep.mubr.bf16.mxu0 %v2202
        %4655 = vmatmul.mubr.bf16.gmra.mrb[0].mxu0 %v2201
        %v4656 = vpop.f32.mrb[0].mxu0
        %v4657 = vadd.f32 %v4544, %v4656
        %v4658 = vpop.f32.mrb[0].mxu0
        %v4659 = vadd.f32 %v4546, %v4658
        %v4660 = vpop.f32.mrb[0].mxu0
        %v4661 = vadd.f32 %v4548, %v4660
        %v4662 = vpop.f32.mrb[0].mxu0
        %v4663 = vadd.f32 %v4550, %v4662
        %4664 = vdwg.mxu0
        %v4665 = vmax.f32 %v4135, 0.0
        %v4666 = vmax.f32 %v4137, 0.0
        %v4667 = vmax.f32 %v4587, 0.0
        %v4668 = vmax.f32 %v4589, 0.0
        %v4669 = vmax.f32 %v4139, 0.0
        %v4670 = vmax.f32 %v4141, 0.0
        %v4671 = vmax.f32 %v4591, 0.0
        %v4672 = vmax.f32 %v4593, 0.0
        %v4673 = vmax.f32 %v4145, 0.0
        %v4674 = vmax.f32 %v4147, 0.0
        %v4675 = vmax.f32 %v4597, 0.0
        %v4676 = vmax.f32 %v4599, 0.0
        %v4677 = vmax.f32 %v4149, 0.0
        %v4678 = vmax.f32 %v4151, 0.0
        %v4679 = vmax.f32 %v4601, 0.0
        %v4680 = vmax.f32 %v4603, 0.0
        %v4681 = vmax.f32 %v4155, 0.0
        %v4682 = vmax.f32 %v4157, 0.0
        %v4683 = vmax.f32 %v4607, 0.0
        %v4684 = vmax.f32 %v4609, 0.0
        %v4685 = vmax.f32 %v4159, 0.0
        %v4686 = vmax.f32 %v4161, 0.0
        %v4687 = vmax.f32 %v4611, 0.0
        %v4688 = vmax.f32 %v4613, 0.0
        %v4689 = vmax.f32 %v4165, 0.0
        %v4690 = vmax.f32 %v4167, 0.0
        %v4691 = vmax.f32 %v4617, 0.0
        %v4692 = vmax.f32 %v4619, 0.0
        %v4693 = vmax.f32 %v4169, 0.0
        %v4694 = vmax.f32 %v4171, 0.0
        %v4695 = vmax.f32 %v4621, 0.0
        %v4696 = vmax.f32 %v4623, 0.0
        %v4697 = vmax.f32 %v4175, 0.0
        %v4698 = vmax.f32 %v4177, 0.0
        %v4699 = vmax.f32 %v4627, 0.0
        %v4700 = vmax.f32 %v4629, 0.0
        %v4701 = vmax.f32 %v4179, 0.0
        %v4702 = vmax.f32 %v4181, 0.0
        %v4703 = vmax.f32 %v4631, 0.0
        %v4704 = vmax.f32 %v4633, 0.0
        %v4705 = vmax.f32 %v4185, 0.0
        %v4706 = vmax.f32 %v4187, 0.0
        %v4707 = vmax.f32 %v4637, 0.0
        %v4708 = vmax.f32 %v4639, 0.0
        %v4709 = vmax.f32 %v4189, 0.0
        %v4710 = vmax.f32 %v4191, 0.0
        %v4711 = vmax.f32 %v4641, 0.0
        %v4712 = vmax.f32 %v4643, 0.0
        %v4713 = vmax.f32 %v4195, 0.0
        %v4714 = vmax.f32 %v4197, 0.0
        %v4715 = vmax.f32 %v4647, 0.0
        %v4716 = vmax.f32 %v4649, 0.0
        %v4717 = vmax.f32 %v4199, 0.0
        %v4718 = vmax.f32 %v4201, 0.0
        %v4719 = vmax.f32 %v4651, 0.0
        %v4720 = vmax.f32 %v4653, 0.0
        %v4721 = vmax.f32 %v4205, 0.0
        %v4722 = vmax.f32 %v4207, 0.0
        %v4723 = vmax.f32 %v4657, 0.0
        %v4724 = vmax.f32 %v4659, 0.0
        %v4725 = vmax.f32 %v4209, 0.0
        %v4726 = vmax.f32 %v4211, 0.0
        %v4727 = vmax.f32 %v4661, 0.0
        %v4728 = vmax.f32 %v4663, 0.0
        %v4729 = vpack.c.bf16 %v4669, %v4665
        %v4730 = vpack.c.bf16 %v4670, %v4666
        %v4731 = vpack.c.bf16 %v4671, %v4667
        %v4732 = vpack.c.bf16 %v4672, %v4668
        %v4733 = vpack.c.bf16 %v4677, %v4673
        %v4734 = vpack.c.bf16 %v4678, %v4674
        %v4735 = vpack.c.bf16 %v4679, %v4675
        %v4736 = vpack.c.bf16 %v4680, %v4676
        %v4737 = vpack.c.bf16 %v4685, %v4681
        %v4738 = vpack.c.bf16 %v4686, %v4682
        %v4739 = vpack.c.bf16 %v4687, %v4683
        %v4740 = vpack.c.bf16 %v4688, %v4684
        %v4741 = vpack.c.bf16 %v4693, %v4689
        %v4742 = vpack.c.bf16 %v4694, %v4690
        %v4743 = vpack.c.bf16 %v4695, %v4691
        %v4744 = vpack.c.bf16 %v4696, %v4692
        %v4745 = vpack.c.bf16 %v4701, %v4697
        %v4746 = vpack.c.bf16 %v4702, %v4698
        %v4747 = vpack.c.bf16 %v4703, %v4699
        %v4748 = vpack.c.bf16 %v4704, %v4700
        %v4749 = vpack.c.bf16 %v4709, %v4705
        %v4750 = vpack.c.bf16 %v4710, %v4706
        %v4751 = vpack.c.bf16 %v4711, %v4707
        %v4752 = vpack.c.bf16 %v4712, %v4708
        %v4753 = vpack.c.bf16 %v4717, %v4713
        %v4754 = vpack.c.bf16 %v4718, %v4714
        %v4755 = vpack.c.bf16 %v4719, %v4715
        %v4756 = vpack.c.bf16 %v4720, %v4716
        %v4757 = vpack.c.bf16 %v4725, %v4721
        %v4758 = vpack.c.bf16 %v4726, %v4722
        %v4759 = vpack.c.bf16 %v4727, %v4723
        %v4760 = vpack.c.bf16 %v4728, %v4724
        %v4761 = vld [vmem:[#allocation11] sm:$0xff]
        %v4762 = vld [vmem:[#allocation11 + $0x8] sm:$0xff]
        %v4763 = vld [vmem:[#allocation11 + $0x10] sm:$0xff]
        %v4764 = vld [vmem:[#allocation11 + $0x18] sm:$0xff]
        %v4765 = vld [vmem:[#allocation11 + $0x20] sm:$0xff]
        %v4766 = vld [vmem:[#allocation11 + $0x28] sm:$0xff]
        %v4767 = vld [vmem:[#allocation11 + $0x30] sm:$0xff]
        %v4768 = vld [vmem:[#allocation11 + $0x38] sm:$0xff]
        %v4769 = vld [vmem:[#allocation11 + $0x40] sm:$0xff]
        %v4770 = vld [vmem:[#allocation11 + $0x48] sm:$0xff]
        %v4771 = vld [vmem:[#allocation11 + $0x50] sm:$0xff]
        %v4772 = vld [vmem:[#allocation11 + $0x58] sm:$0xff]
        %v4773 = vld [vmem:[#allocation11 + $0x60] sm:$0xff]
        %v4774 = vld [vmem:[#allocation11 + $0x68] sm:$0xff]
        %v4775 = vld [vmem:[#allocation11 + $0x70] sm:$0xff]
        %v4776 = vld [vmem:[#allocation11 + $0x78] sm:$0xff]
        %v4777 = vld [vmem:[#allocation11 + $0x80] sm:$0xff]
        %v4778 = vld [vmem:[#allocation11 + $0x88] sm:$0xff]
        %v4779 = vld [vmem:[#allocation11 + $0x90] sm:$0xff]
        %v4780 = vld [vmem:[#allocation11 + $0x98] sm:$0xff]
        %v4781 = vld [vmem:[#allocation11 + $0xa0] sm:$0xff]
        %v4782 = vld [vmem:[#allocation11 + $0xa8] sm:$0xff]
        %v4783 = vld [vmem:[#allocation11 + $0xb0] sm:$0xff]
        %v4784 = vld [vmem:[#allocation11 + $0xb8] sm:$0xff]
        %v4785 = vld [vmem:[#allocation11 + $0xc0] sm:$0xff]
        %v4786 = vld [vmem:[#allocation11 + $0xc8] sm:$0xff]
        %v4787 = vld [vmem:[#allocation11 + $0xd0] sm:$0xff]
        %v4788 = vld [vmem:[#allocation11 + $0xd8] sm:$0xff]
        %v4789 = vld [vmem:[#allocation11 + $0xe0] sm:$0xff]
        %v4790 = vld [vmem:[#allocation11 + $0xe8] sm:$0xff]
        %v4791 = vld [vmem:[#allocation11 + $0xf0] sm:$0xff]
        %v4792 = vld [vmem:[#allocation11 + $0xf8] sm:$0xff]
        %v4793 = vld [vmem:[#allocation11 + $0x100] sm:$0xff]
        %v4794 = vld [vmem:[#allocation11 + $0x108] sm:$0xff]
        %v4795 = vld [vmem:[#allocation11 + $0x110] sm:$0xff]
        %v4796 = vld [vmem:[#allocation11 + $0x118] sm:$0xff]
        %v4797 = vld [vmem:[#allocation11 + $0x120] sm:$0xff]
        %v4798 = vld [vmem:[#allocation11 + $0x128] sm:$0xff]
        %v4799 = vld [vmem:[#allocation11 + $0x130] sm:$0xff]
        %v4800 = vld [vmem:[#allocation11 + $0x138] sm:$0xff]
        %v4801 = vld [vmem:[#allocation11 + $0x140] sm:$0xff]
        %v4802 = vld [vmem:[#allocation11 + $0x148] sm:$0xff]
        %v4803 = vld [vmem:[#allocation11 + $0x150] sm:$0xff]
        %v4804 = vld [vmem:[#allocation11 + $0x158] sm:$0xff]
        %v4805 = vld [vmem:[#allocation11 + $0x160] sm:$0xff]
        %v4806 = vld [vmem:[#allocation11 + $0x168] sm:$0xff]
        %v4807 = vld [vmem:[#allocation11 + $0x170] sm:$0xff]
        %v4808 = vld [vmem:[#allocation11 + $0x178] sm:$0xff]
        %v4809 = vld [vmem:[#allocation11 + $0x180] sm:$0xff]
        %v4810 = vld [vmem:[#allocation11 + $0x188] sm:$0xff]
        %v4811 = vld [vmem:[#allocation11 + $0x190] sm:$0xff]
        %v4812 = vld [vmem:[#allocation11 + $0x198] sm:$0xff]
        %v4813 = vld [vmem:[#allocation11 + $0x1a0] sm:$0xff]
        %v4814 = vld [vmem:[#allocation11 + $0x1a8] sm:$0xff]
        %v4815 = vld [vmem:[#allocation11 + $0x1b0] sm:$0xff]
        %v4816 = vld [vmem:[#allocation11 + $0x1b8] sm:$0xff]
        %v4817 = vld [vmem:[#allocation11 + $0x1c0] sm:$0xff]
        %v4818 = vld [vmem:[#allocation11 + $0x1c8] sm:$0xff]
        %v4819 = vld [vmem:[#allocation11 + $0x1d0] sm:$0xff]
        %v4820 = vld [vmem:[#allocation11 + $0x1d8] sm:$0xff]
        %v4821 = vld [vmem:[#allocation11 + $0x1e0] sm:$0xff]
        %v4822 = vld [vmem:[#allocation11 + $0x1e8] sm:$0xff]
        %v4823 = vld [vmem:[#allocation11 + $0x1f0] sm:$0xff]
        %v4824 = vld [vmem:[#allocation11 + $0x1f8] sm:$0xff]
        %v4825 = vld [vmem:[%s7] sm:$0x3]
        %v4827 = vlaneseq
        %v4828 = vshrl.u32 %v4827, 7
        %v4829 = vsub.s32 0, %v4828
        %v4830 = vrot.slane %v4825, %v4829
        %v4831 = vlaneseq
        %v4832 = vshrl.u32 %v4831, 7
        %v4833 = vsub.s32 1, %v4832
        %v4834 = vrot.slane %v4825, %v4833
        %v4901 = vunpack.c.l.b16 %v4761
        %v4902 = vunpack.c.h.b16 %v4761
        %v4903 = vunpack.c.l.b16 %v4762
        %v4904 = vunpack.c.h.b16 %v4762
        %v4905 = vunpack.c.l.b16 %v4763
        %v4906 = vunpack.c.h.b16 %v4763
        %v4907 = vunpack.c.l.b16 %v4764
        %v4908 = vunpack.c.h.b16 %v4764
        %v4909 = vunpack.c.l.b16 %v4765
        %v4910 = vunpack.c.h.b16 %v4765
        %v4911 = vunpack.c.l.b16 %v4766
        %v4912 = vunpack.c.h.b16 %v4766
        %v4913 = vunpack.c.l.b16 %v4767
        %v4914 = vunpack.c.h.b16 %v4767
        %v4915 = vunpack.c.l.b16 %v4768
        %v4916 = vunpack.c.h.b16 %v4768
        %v4917 = vunpack.c.l.b16 %v4769
        %v4918 = vunpack.c.h.b16 %v4769
        %v4919 = vunpack.c.l.b16 %v4770
        %v4920 = vunpack.c.h.b16 %v4770
        %v4921 = vunpack.c.l.b16 %v4771
        %v4922 = vunpack.c.h.b16 %v4771
        %v4923 = vunpack.c.l.b16 %v4772
        %v4924 = vunpack.c.h.b16 %v4772
        %v4925 = vunpack.c.l.b16 %v4773
        %v4926 = vunpack.c.h.b16 %v4773
        %v4927 = vunpack.c.l.b16 %v4774
        %v4928 = vunpack.c.h.b16 %v4774
        %v4929 = vunpack.c.l.b16 %v4775
        %v4930 = vunpack.c.h.b16 %v4775
        %v4931 = vunpack.c.l.b16 %v4776
        %v4932 = vunpack.c.h.b16 %v4776
        %v4933 = vunpack.c.l.b16 %v4777
        %v4934 = vunpack.c.h.b16 %v4777
        %v4935 = vunpack.c.l.b16 %v4778
        %v4936 = vunpack.c.h.b16 %v4778
        %v4937 = vunpack.c.l.b16 %v4779
        %v4938 = vunpack.c.h.b16 %v4779
        %v4939 = vunpack.c.l.b16 %v4780
        %v4940 = vunpack.c.h.b16 %v4780
        %v4941 = vunpack.c.l.b16 %v4781
        %v4942 = vunpack.c.h.b16 %v4781
        %v4943 = vunpack.c.l.b16 %v4782
        %v4944 = vunpack.c.h.b16 %v4782
        %v4945 = vunpack.c.l.b16 %v4783
        %v4946 = vunpack.c.h.b16 %v4783
        %v4947 = vunpack.c.l.b16 %v4784
        %v4948 = vunpack.c.h.b16 %v4784
        %v4949 = vunpack.c.l.b16 %v4785
        %v4950 = vunpack.c.h.b16 %v4785
        %v4951 = vunpack.c.l.b16 %v4786
        %v4952 = vunpack.c.h.b16 %v4786
        %v4953 = vunpack.c.l.b16 %v4787
        %v4954 = vunpack.c.h.b16 %v4787
        %v4955 = vunpack.c.l.b16 %v4788
        %v4956 = vunpack.c.h.b16 %v4788
        %v4957 = vunpack.c.l.b16 %v4789
        %v4958 = vunpack.c.h.b16 %v4789
        %v4959 = vunpack.c.l.b16 %v4790
        %v4960 = vunpack.c.h.b16 %v4790
        %v4961 = vunpack.c.l.b16 %v4791
        %v4962 = vunpack.c.h.b16 %v4791
        %v4963 = vunpack.c.l.b16 %v4792
        %v4964 = vunpack.c.h.b16 %v4792
        %v4965 = vunpack.c.l.b16 %v4793
        %v4966 = vunpack.c.h.b16 %v4793
        %v4967 = vunpack.c.l.b16 %v4794
        %v4968 = vunpack.c.h.b16 %v4794
        %v4969 = vunpack.c.l.b16 %v4795
        %v4970 = vunpack.c.h.b16 %v4795
        %v4971 = vunpack.c.l.b16 %v4796
        %v4972 = vunpack.c.h.b16 %v4796
        %v4973 = vunpack.c.l.b16 %v4797
        %v4974 = vunpack.c.h.b16 %v4797
        %v4975 = vunpack.c.l.b16 %v4798
        %v4976 = vunpack.c.h.b16 %v4798
        %v4977 = vunpack.c.l.b16 %v4799
        %v4978 = vunpack.c.h.b16 %v4799
        %v4979 = vunpack.c.l.b16 %v4800
        %v4980 = vunpack.c.h.b16 %v4800
        %v4981 = vunpack.c.l.b16 %v4801
        %v4982 = vunpack.c.h.b16 %v4801
        %v4983 = vunpack.c.l.b16 %v4802
        %v4984 = vunpack.c.h.b16 %v4802
        %v4985 = vunpack.c.l.b16 %v4803
        %v4986 = vunpack.c.h.b16 %v4803
        %v4987 = vunpack.c.l.b16 %v4804
        %v4988 = vunpack.c.h.b16 %v4804
        %v4989 = vunpack.c.l.b16 %v4805
        %v4990 = vunpack.c.h.b16 %v4805
        %v4991 = vunpack.c.l.b16 %v4806
        %v4992 = vunpack.c.h.b16 %v4806
        %v4993 = vunpack.c.l.b16 %v4807
        %v4994 = vunpack.c.h.b16 %v4807
        %v4995 = vunpack.c.l.b16 %v4808
        %v4996 = vunpack.c.h.b16 %v4808
        %v4997 = vunpack.c.l.b16 %v4809
        %v4998 = vunpack.c.h.b16 %v4809
        %v4999 = vunpack.c.l.b16 %v4810
        %v5000 = vunpack.c.h.b16 %v4810
        %v5001 = vunpack.c.l.b16 %v4811
        %v5002 = vunpack.c.h.b16 %v4811
        %v5003 = vunpack.c.l.b16 %v4812
        %v5004 = vunpack.c.h.b16 %v4812
        %v5005 = vunpack.c.l.b16 %v4813
        %v5006 = vunpack.c.h.b16 %v4813
        %v5007 = vunpack.c.l.b16 %v4814
        %v5008 = vunpack.c.h.b16 %v4814
        %v5009 = vunpack.c.l.b16 %v4815
        %v5010 = vunpack.c.h.b16 %v4815
        %v5011 = vunpack.c.l.b16 %v4816
        %v5012 = vunpack.c.h.b16 %v4816
        %v5013 = vunpack.c.l.b16 %v4817
        %v5014 = vunpack.c.h.b16 %v4817
        %v5015 = vunpack.c.l.b16 %v4818
        %v5016 = vunpack.c.h.b16 %v4818
        %v5017 = vunpack.c.l.b16 %v4819
        %v5018 = vunpack.c.h.b16 %v4819
        %v5019 = vunpack.c.l.b16 %v4820
        %v5020 = vunpack.c.h.b16 %v4820
        %v5021 = vunpack.c.l.b16 %v4821
        %v5022 = vunpack.c.h.b16 %v4821
        %v5023 = vunpack.c.l.b16 %v4822
        %v5024 = vunpack.c.h.b16 %v4822
        %v5025 = vunpack.c.l.b16 %v4823
        %v5026 = vunpack.c.h.b16 %v4823
        %v5027 = vunpack.c.l.b16 %v4824
        %v5028 = vunpack.c.h.b16 %v4824
        %v5029 = vpack.c.b16 %v4903, %v4901
        %v5030 = vpack.c.b16 %v4904, %v4902
        %v5031 = vpack.c.b16 %v4907, %v4905
        %v5032 = vpack.c.b16 %v4908, %v4906
        %v5033 = vpack.c.b16 %v4911, %v4909
        %v5034 = vpack.c.b16 %v4912, %v4910
        %v5035 = vpack.c.b16 %v4915, %v4913
        %v5036 = vpack.c.b16 %v4916, %v4914
        %v5037 = vpack.c.b16 %v4919, %v4917
        %v5038 = vpack.c.b16 %v4920, %v4918
        %v5039 = vpack.c.b16 %v4923, %v4921
        %v5040 = vpack.c.b16 %v4924, %v4922
        %v5041 = vpack.c.b16 %v4927, %v4925
        %v5042 = vpack.c.b16 %v4928, %v4926
        %v5043 = vpack.c.b16 %v4931, %v4929
        %v5044 = vpack.c.b16 %v4932, %v4930
        %v5045 = vpack.c.b16 %v4935, %v4933
        %v5046 = vpack.c.b16 %v4936, %v4934
        %v5047 = vpack.c.b16 %v4939, %v4937
        %v5048 = vpack.c.b16 %v4940, %v4938
        %v5049 = vpack.c.b16 %v4943, %v4941
        %v5050 = vpack.c.b16 %v4944, %v4942
        %v5051 = vpack.c.b16 %v4947, %v4945
        %v5052 = vpack.c.b16 %v4948, %v4946
        %v5053 = vpack.c.b16 %v4951, %v4949
        %v5054 = vpack.c.b16 %v4952, %v4950
        %v5055 = vpack.c.b16 %v4955, %v4953
        %v5056 = vpack.c.b16 %v4956, %v4954
        %v5057 = vpack.c.b16 %v4959, %v4957
        %v5058 = vpack.c.b16 %v4960, %v4958
        %v5059 = vpack.c.b16 %v4963, %v4961
        %v5060 = vpack.c.b16 %v4964, %v4962
        %v5061 = vpack.c.b16 %v4967, %v4965
        %v5062 = vpack.c.b16 %v4968, %v4966
        %v5063 = vpack.c.b16 %v4971, %v4969
        %v5064 = vpack.c.b16 %v4972, %v4970
        %v5065 = vpack.c.b16 %v4975, %v4973
        %v5066 = vpack.c.b16 %v4976, %v4974
        %v5067 = vpack.c.b16 %v4979, %v4977
        %v5068 = vpack.c.b16 %v4980, %v4978
        %v5069 = vpack.c.b16 %v4983, %v4981
        %v5070 = vpack.c.b16 %v4984, %v4982
        %v5071 = vpack.c.b16 %v4987, %v4985
        %v5072 = vpack.c.b16 %v4988, %v4986
        %v5073 = vpack.c.b16 %v4991, %v4989
        %v5074 = vpack.c.b16 %v4992, %v4990
        %v5075 = vpack.c.b16 %v4995, %v4993
        %v5076 = vpack.c.b16 %v4996, %v4994
        %v5077 = vpack.c.b16 %v4999, %v4997
        %v5078 = vpack.c.b16 %v5000, %v4998
        %v5079 = vpack.c.b16 %v5003, %v5001
        %v5080 = vpack.c.b16 %v5004, %v5002
        %v5081 = vpack.c.b16 %v5007, %v5005
        %v5082 = vpack.c.b16 %v5008, %v5006
        %v5083 = vpack.c.b16 %v5011, %v5009
        %v5084 = vpack.c.b16 %v5012, %v5010
        %v5085 = vpack.c.b16 %v5015, %v5013
        %v5086 = vpack.c.b16 %v5016, %v5014
        %v5087 = vpack.c.b16 %v5019, %v5017
        %v5088 = vpack.c.b16 %v5020, %v5018
        %v5089 = vpack.c.b16 %v5023, %v5021
        %v5090 = vpack.c.b16 %v5024, %v5022
        %v5091 = vpack.c.b16 %v5027, %v5025
        %v5092 = vpack.c.b16 %v5028, %v5026
        %5157 = vmatprep.subr.bf16.mxu0 %v5030
        %5158 = vmatpush1.bf16.msra.mxu0 %v5029
        %5159 = vmatprep.subr.bf16.mxu0 %v5032
        %5160 = vmatpush1.bf16.msra.mxu0 %v5031
        %5161 = vmatprep.subr.bf16.mxu0 %v5034
        %5162 = vmatpush1.bf16.msra.mxu0 %v5033
        %5163 = vmatprep.subr.bf16.mxu0 %v5036
        %5164 = vmatpush1.bf16.msra.mxu0 %v5035
        %5165 = vmatprep.subr.bf16.mxu0 %v5038
        %5166 = vmatpush1.bf16.msra.mxu0 %v5037
        %5167 = vmatprep.subr.bf16.mxu0 %v5040
        %5168 = vmatpush1.bf16.msra.mxu0 %v5039
        %5169 = vmatprep.subr.bf16.mxu0 %v5042
        %5170 = vmatpush1.bf16.msra.mxu0 %v5041
        %5171 = vmatprep.subr.bf16.mxu0 %v5044
        %5172 = vmatpush1.bf16.msra.mxu0 %v5043
        %5173 = vmatprep.subr.bf16.mxu0 %v5046
        %5174 = vmatpush1.bf16.msra.mxu0 %v5045
        %5175 = vmatprep.subr.bf16.mxu0 %v5048
        %5176 = vmatpush1.bf16.msra.mxu0 %v5047
        %5177 = vmatprep.subr.bf16.mxu0 %v5050
        %5178 = vmatpush1.bf16.msra.mxu0 %v5049
        %5179 = vmatprep.subr.bf16.mxu0 %v5052
        %5180 = vmatpush1.bf16.msra.mxu0 %v5051
        %5181 = vmatprep.subr.bf16.mxu0 %v5054
        %5182 = vmatpush1.bf16.msra.mxu0 %v5053
        %5183 = vmatprep.subr.bf16.mxu0 %v5056
        %5184 = vmatpush1.bf16.msra.mxu0 %v5055
        %5185 = vmatprep.subr.bf16.mxu0 %v5058
        %5186 = vmatpush1.bf16.msra.mxu0 %v5057
        %5187 = vmatprep.subr.bf16.mxu0 %v5060
        %5188 = vmatpush1.bf16.msra.mxu0 %v5059
        %5189 = vmatprep.mubr.bf16.mxu0 %v4730
        %5190 = vmatmul.mubr.bf16.gmra.mrb[0].mxu0 %v4729
        %v5191 = vpop.f32.mrb[0].mxu0
        %v5192 = vadd.f32 %v4830, %v5191
        %v5193 = vpop.f32.mrb[0].mxu0
        %v5194 = vadd.f32 %v4834, %v5193
        %v5195 = vpop.f32.mrb[0].mxu0
        %v5196 = vadd.f32 %v4830, %v5195
        %v5197 = vpop.f32.mrb[0].mxu0
        %v5198 = vadd.f32 %v4834, %v5197
        %5199 = vmatprep.mubr.bf16.mxu0 %v4734
        %5200 = vmatmul.mubr.bf16.gmra.mrb[0].mxu0 %v4733
        %v5201 = vpop.f32.mrb[0].mxu0
        %v5202 = vadd.f32 %v4830, %v5201
        %v5203 = vpop.f32.mrb[0].mxu0
        %v5204 = vadd.f32 %v4834, %v5203
        %v5205 = vpop.f32.mrb[0].mxu0
        %v5206 = vadd.f32 %v4830, %v5205
        %v5207 = vpop.f32.mrb[0].mxu0
        %v5208 = vadd.f32 %v4834, %v5207
        %5209 = vmatprep.mubr.bf16.mxu0 %v4738
        %5210 = vmatmul.mubr.bf16.gmra.mrb[0].mxu0 %v4737
        %v5211 = vpop.f32.mrb[0].mxu0
        %v5212 = vadd.f32 %v4830, %v5211
        %v5213 = vpop.f32.mrb[0].mxu0
        %v5214 = vadd.f32 %v4834, %v5213
        %v5215 = vpop.f32.mrb[0].mxu0
        %v5216 = vadd.f32 %v4830, %v5215
        %v5217 = vpop.f32.mrb[0].mxu0
        %v5218 = vadd.f32 %v4834, %v5217
        %5219 = vmatprep.mubr.bf16.mxu0 %v4742
        %5220 = vmatmul.mubr.bf16.gmra.mrb[0].mxu0 %v4741
        %v5221 = vpop.f32.mrb[0].mxu0
        %v5222 = vadd.f32 %v4830, %v5221
        %v5223 = vpop.f32.mrb[0].mxu0
        %v5224 = vadd.f32 %v4834, %v5223
        %v5225 = vpop.f32.mrb[0].mxu0
        %v5226 = vadd.f32 %v4830, %v5225
        %v5227 = vpop.f32.mrb[0].mxu0
        %v5228 = vadd.f32 %v4834, %v5227
        %5229 = vmatprep.mubr.bf16.mxu0 %v4746
        %5230 = vmatmul.mubr.bf16.gmra.mrb[0].mxu0 %v4745
        %v5231 = vpop.f32.mrb[0].mxu0
        %v5232 = vadd.f32 %v4830, %v5231
        %v5233 = vpop.f32.mrb[0].mxu0
        %v5234 = vadd.f32 %v4834, %v5233
        %v5235 = vpop.f32.mrb[0].mxu0
        %v5236 = vadd.f32 %v4830, %v5235
        %v5237 = vpop.f32.mrb[0].mxu0
        %v5238 = vadd.f32 %v4834, %v5237
        %5239 = vmatprep.mubr.bf16.mxu0 %v4750
        %5240 = vmatmul.mubr.bf16.gmra.mrb[0].mxu0 %v4749
        %v5241 = vpop.f32.mrb[0].mxu0
        %v5242 = vadd.f32 %v4830, %v5241
        %v5243 = vpop.f32.mrb[0].mxu0
        %v5244 = vadd.f32 %v4834, %v5243
        %v5245 = vpop.f32.mrb[0].mxu0
        %v5246 = vadd.f32 %v4830, %v5245
        %v5247 = vpop.f32.mrb[0].mxu0
        %v5248 = vadd.f32 %v4834, %v5247
        %5249 = vmatprep.mubr.bf16.mxu0 %v4754
        %5250 = vmatmul.mubr.bf16.gmra.mrb[0].mxu0 %v4753
        %v5251 = vpop.f32.mrb[0].mxu0
        %v5252 = vadd.f32 %v4830, %v5251
        %v5253 = vpop.f32.mrb[0].mxu0
        %v5254 = vadd.f32 %v4834, %v5253
        %v5255 = vpop.f32.mrb[0].mxu0
        %v5256 = vadd.f32 %v4830, %v5255
        %v5257 = vpop.f32.mrb[0].mxu0
        %v5258 = vadd.f32 %v4834, %v5257
        %5259 = vmatprep.mubr.bf16.mxu0 %v4758
        %5260 = vmatmul.mubr.bf16.gmra.mrb[0].mxu0 %v4757
        %v5261 = vpop.f32.mrb[0].mxu0
        %v5262 = vadd.f32 %v4830, %v5261
        %v5263 = vpop.f32.mrb[0].mxu0
        %v5264 = vadd.f32 %v4834, %v5263
        %v5265 = vpop.f32.mrb[0].mxu0
        %v5266 = vadd.f32 %v4830, %v5265
        %v5267 = vpop.f32.mrb[0].mxu0
        %v5268 = vadd.f32 %v4834, %v5267
        %5269 = vdwg.mxu0
        %5270 = vmatprep.subr.bf16.mxu0 %v5062
        %5271 = vmatpush1.bf16.msra.mxu0 %v5061
        %5272 = vmatprep.subr.bf16.mxu0 %v5064
        %5273 = vmatpush1.bf16.msra.mxu0 %v5063
        %5274 = vmatprep.subr.bf16.mxu0 %v5066
        %5275 = vmatpush1.bf16.msra.mxu0 %v5065
        %5276 = vmatprep.subr.bf16.mxu0 %v5068
        %5277 = vmatpush1.bf16.msra.mxu0 %v5067
        %5278 = vmatprep.subr.bf16.mxu0 %v5070
        %5279 = vmatpush1.bf16.msra.mxu0 %v5069
        %5280 = vmatprep.subr.bf16.mxu0 %v5072
        %5281 = vmatpush1.bf16.msra.mxu0 %v5071
        %5282 = vmatprep.subr.bf16.mxu0 %v5074
        %5283 = vmatpush1.bf16.msra.mxu0 %v5073
        %5284 = vmatprep.subr.bf16.mxu0 %v5076
        %5285 = vmatpush1.bf16.msra.mxu0 %v5075
        %5286 = vmatprep.subr.bf16.mxu0 %v5078
        %5287 = vmatpush1.bf16.msra.mxu0 %v5077
        %5288 = vmatprep.subr.bf16.mxu0 %v5080
        %5289 = vmatpush1.bf16.msra.mxu0 %v5079
        %5290 = vmatprep.subr.bf16.mxu0 %v5082
        %5291 = vmatpush1.bf16.msra.mxu0 %v5081
        %5292 = vmatprep.subr.bf16.mxu0 %v5084
        %5293 = vmatpush1.bf16.msra.mxu0 %v5083
        %5294 = vmatprep.subr.bf16.mxu0 %v5086
        %5295 = vmatpush1.bf16.msra.mxu0 %v5085
        %5296 = vmatprep.subr.bf16.mxu0 %v5088
        %5297 = vmatpush1.bf16.msra.mxu0 %v5087
        %5298 = vmatprep.subr.bf16.mxu0 %v5090
        %5299 = vmatpush1.bf16.msra.mxu0 %v5089
        %5300 = vmatprep.subr.bf16.mxu0 %v5092
        %5301 = vmatpush1.bf16.msra.mxu0 %v5091
        %5302 = vmatprep.mubr.bf16.mxu0 %v4732
        %5303 = vmatmul.mubr.bf16.gmra.mrb[0].mxu0 %v4731
        %v5304 = vpop.f32.mrb[0].mxu0
        %v5305 = vadd.f32 %v5192, %v5304
        %v5306 = vpop.f32.mrb[0].mxu0
        %v5307 = vadd.f32 %v5194, %v5306
        %v5308 = vpop.f32.mrb[0].mxu0
        %v5309 = vadd.f32 %v5196, %v5308
        %v5310 = vpop.f32.mrb[0].mxu0
        %v5311 = vadd.f32 %v5198, %v5310
        %5312 = vmatprep.mubr.bf16.mxu0 %v4736
        %5313 = vmatmul.mubr.bf16.gmra.mrb[0].mxu0 %v4735
        %v5314 = vpop.f32.mrb[0].mxu0
        %v5315 = vadd.f32 %v5202, %v5314
        %v5316 = vpop.f32.mrb[0].mxu0
        %v5317 = vadd.f32 %v5204, %v5316
        %v5318 = vpop.f32.mrb[0].mxu0
        %v5319 = vadd.f32 %v5206, %v5318
        %v5320 = vpop.f32.mrb[0].mxu0
        %v5321 = vadd.f32 %v5208, %v5320
        %5322 = vmatprep.mubr.bf16.mxu0 %v4740
        %5323 = vmatmul.mubr.bf16.gmra.mrb[0].mxu0 %v4739
        %v5324 = vpop.f32.mrb[0].mxu0
        %v5325 = vadd.f32 %v5212, %v5324
        %v5326 = vpop.f32.mrb[0].mxu0
        %v5327 = vadd.f32 %v5214, %v5326
        %v5328 = vpop.f32.mrb[0].mxu0
        %v5329 = vadd.f32 %v5216, %v5328
        %v5330 = vpop.f32.mrb[0].mxu0
        %v5331 = vadd.f32 %v5218, %v5330
        %5332 = vmatprep.mubr.bf16.mxu0 %v4744
        %5333 = vmatmul.mubr.bf16.gmra.mrb[0].mxu0 %v4743
        %v5334 = vpop.f32.mrb[0].mxu0
        %v5335 = vadd.f32 %v5222, %v5334
        %v5336 = vpop.f32.mrb[0].mxu0
        %v5337 = vadd.f32 %v5224, %v5336
        %v5338 = vpop.f32.mrb[0].mxu0
        %v5339 = vadd.f32 %v5226, %v5338
        %v5340 = vpop.f32.mrb[0].mxu0
        %v5341 = vadd.f32 %v5228, %v5340
        %5342 = vmatprep.mubr.bf16.mxu0 %v4748
        %5343 = vmatmul.mubr.bf16.gmra.mrb[0].mxu0 %v4747
        %v5344 = vpop.f32.mrb[0].mxu0
        %v5345 = vadd.f32 %v5232, %v5344
        %v5346 = vpop.f32.mrb[0].mxu0
        %v5347 = vadd.f32 %v5234, %v5346
        %v5348 = vpop.f32.mrb[0].mxu0
        %v5349 = vadd.f32 %v5236, %v5348
        %v5350 = vpop.f32.mrb[0].mxu0
        %v5351 = vadd.f32 %v5238, %v5350
        %5352 = vmatprep.mubr.bf16.mxu0 %v4752
        %5353 = vmatmul.mubr.bf16.gmra.mrb[0].mxu0 %v4751
        %v5354 = vpop.f32.mrb[0].mxu0
        %v5355 = vadd.f32 %v5242, %v5354
        %v5356 = vpop.f32.mrb[0].mxu0
        %v5357 = vadd.f32 %v5244, %v5356
        %v5358 = vpop.f32.mrb[0].mxu0
        %v5359 = vadd.f32 %v5246, %v5358
        %v5360 = vpop.f32.mrb[0].mxu0
        %v5361 = vadd.f32 %v5248, %v5360
        %5362 = vmatprep.mubr.bf16.mxu0 %v4756
        %5363 = vmatmul.mubr.bf16.gmra.mrb[0].mxu0 %v4755
        %v5364 = vpop.f32.mrb[0].mxu0
        %v5365 = vadd.f32 %v5252, %v5364
        %v5366 = vpop.f32.mrb[0].mxu0
        %v5367 = vadd.f32 %v5254, %v5366
        %v5368 = vpop.f32.mrb[0].mxu0
        %v5369 = vadd.f32 %v5256, %v5368
        %v5370 = vpop.f32.mrb[0].mxu0
        %v5371 = vadd.f32 %v5258, %v5370
        %5372 = vmatprep.mubr.bf16.mxu0 %v4760
        %5373 = vmatmul.mubr.bf16.gmra.mrb[0].mxu0 %v4759
        %v5374 = vpop.f32.mrb[0].mxu0
        %v5375 = vadd.f32 %v5262, %v5374
        %v5376 = vpop.f32.mrb[0].mxu0
        %v5377 = vadd.f32 %v5264, %v5376
        %v5378 = vpop.f32.mrb[0].mxu0
        %v5379 = vadd.f32 %v5266, %v5378
        %v5380 = vpop.f32.mrb[0].mxu0
        %v5381 = vadd.f32 %v5268, %v5380
        %5382 = vdwg.mxu0
        %v5383 = vmul.f32 %v5307, 0.5
        %v5384 = vmul.f32 %v5311, 0.5
        %v5385 = vmul.f32 %v5317, 0.5
        %v5386 = vmul.f32 %v5321, 0.5
        %v5387 = vmul.f32 %v5327, 0.5
        %v5388 = vmul.f32 %v5331, 0.5
        %v5389 = vmul.f32 %v5337, 0.5
        %v5390 = vmul.f32 %v5341, 0.5
        %v5391 = vmul.f32 %v5347, 0.5
        %v5392 = vmul.f32 %v5351, 0.5
        %v5393 = vmul.f32 %v5357, 0.5
        %v5394 = vmul.f32 %v5361, 0.5
        %v5395 = vmul.f32 %v5367, 0.5
        %v5396 = vmul.f32 %v5371, 0.5
        %v5397 = vmul.f32 %v5377, 0.5
        %v5398 = vmul.f32 %v5381, 0.5
        %v5399 = vmul.f32 %v5383, 1.442695
        %v5400 = vpow.pop %v5399
        %v5401 = vmul.f32 %v5384, 1.442695
        %v5402 = vpow.pop %v5401
        %v5403 = vmul.f32 %v5385, 1.442695
        %v5404 = vpow.pop %v5403
        %v5405 = vmul.f32 %v5386, 1.442695
        %v5406 = vpow.pop %v5405
        %v5407 = vmul.f32 %v5387, 1.442695
        %v5408 = vpow.pop %v5407
        %v5409 = vmul.f32 %v5388, 1.442695
        %v5410 = vpow.pop %v5409
        %v5411 = vmul.f32 %v5389, 1.442695
        %v5412 = vpow.pop %v5411
        %v5413 = vmul.f32 %v5390, 1.442695
        %v5414 = vpow.pop %v5413
        %v5415 = vmul.f32 %v5391, 1.442695
        %v5416 = vpow.pop %v5415
        %v5417 = vmul.f32 %v5392, 1.442695
        %v5418 = vpow.pop %v5417
        %v5419 = vmul.f32 %v5393, 1.442695
        %v5420 = vpow.pop %v5419
        %v5421 = vmul.f32 %v5394, 1.442695
        %v5422 = vpow.pop %v5421
        %v5423 = vmul.f32 %v5395, 1.442695
        %v5424 = vpow.pop %v5423
        %v5425 = vmul.f32 %v5396, 1.442695
        %v5426 = vpow.pop %v5425
        %v5427 = vmul.f32 %v5397, 1.442695
        %v5428 = vpow.pop %v5427
        %v5429 = vmul.f32 %v5398, 1.442695
        %v5430 = vpow.pop %v5429
        %v5431 = vld [vmem:[%s592] sm:$0xff]
        %v5432 = vld [vmem:[%s592 + $0x8] sm:$0xff]
        %v5433 = vld [vmem:[%s592 + $0x10] sm:$0xff]
        %v5434 = vld [vmem:[%s592 + $0x18] sm:$0xff]
        %v5435 = vld [vmem:[%s592 + $0x20] sm:$0xff]
        %v5436 = vld [vmem:[%s592 + $0x28] sm:$0xff]
        %v5437 = vld [vmem:[%s592 + $0x30] sm:$0xff]
        %v5438 = vld [vmem:[%s592 + $0x38] sm:$0xff]
        %v5439 = vld [vmem:[%s592 + $0x40] sm:$0xff]
        %v5440 = vld [vmem:[%s592 + $0x48] sm:$0xff]
        %v5441 = vld [vmem:[%s592 + $0x50] sm:$0xff]
        %v5442 = vld [vmem:[%s592 + $0x58] sm:$0xff]
        %v5443 = vld [vmem:[%s592 + $0x60] sm:$0xff]
        %v5444 = vld [vmem:[%s592 + $0x68] sm:$0xff]
        %v5445 = vld [vmem:[%s592 + $0x70] sm:$0xff]
        %v5446 = vld [vmem:[%s592 + $0x78] sm:$0xff]
        %v5447 = vmul.f32 %v5431, %v5400
        %v5448 = vmul.f32 %v5432, %v5402
        %v5449 = vmul.f32 %v5433, %v5404
        %v5450 = vmul.f32 %v5434, %v5406
        %v5451 = vmul.f32 %v5435, %v5408
        %v5452 = vmul.f32 %v5436, %v5410
        %v5453 = vmul.f32 %v5437, %v5412
        %v5454 = vmul.f32 %v5438, %v5414
        %v5455 = vmul.f32 %v5439, %v5416
        %v5456 = vmul.f32 %v5440, %v5418
        %v5457 = vmul.f32 %v5441, %v5420
        %v5458 = vmul.f32 %v5442, %v5422
        %v5459 = vmul.f32 %v5443, %v5424
        %v5460 = vmul.f32 %v5444, %v5426
        %v5461 = vmul.f32 %v5445, %v5428
        %v5462 = vmul.f32 %v5446, %v5430
        %v5463 = vadd.f32 %v5305, %v5447
        %v5464 = vadd.f32 %v5309, %v5448
        %v5465 = vadd.f32 %v5315, %v5449
        %v5466 = vadd.f32 %v5319, %v5450
        %v5467 = vadd.f32 %v5325, %v5451
        %v5468 = vadd.f32 %v5329, %v5452
        %v5469 = vadd.f32 %v5335, %v5453
        %v5470 = vadd.f32 %v5339, %v5454
        %v5471 = vadd.f32 %v5345, %v5455
        %v5472 = vadd.f32 %v5349, %v5456
        %v5473 = vadd.f32 %v5355, %v5457
        %v5474 = vadd.f32 %v5359, %v5458
        %v5475 = vadd.f32 %v5365, %v5459
        %v5476 = vadd.f32 %v5369, %v5460
        %v5477 = vadd.f32 %v5375, %v5461
        %v5478 = vadd.f32 %v5379, %v5462
        %v5479 = vpack.c.bf16 %v5464, %v5463
        %v5480 = vpack.c.bf16 %v5466, %v5465
        %v5481 = vpack.c.bf16 %v5468, %v5467
        %v5482 = vpack.c.bf16 %v5470, %v5469
        %v5483 = vpack.c.bf16 %v5472, %v5471
        %v5484 = vpack.c.bf16 %v5474, %v5473
        %v5485 = vpack.c.bf16 %v5476, %v5475
        %v5486 = vpack.c.bf16 %v5478, %v5477
        %v5487 = vld [vmem:[#allocation13] sm:$0xff]
        %v5488 = vld [vmem:[#allocation13 + $0x8] sm:$0xff]
        %v5489 = vld [vmem:[#allocation13 + $0x10] sm:$0xff]
        %v5490 = vld [vmem:[#allocation13 + $0x18] sm:$0xff]
        %v5491 = vld [vmem:[#allocation13 + $0x20] sm:$0xff]
        %v5492 = vld [vmem:[#allocation13 + $0x28] sm:$0xff]
        %v5493 = vld [vmem:[#allocation13 + $0x30] sm:$0xff]
        %v5494 = vld [vmem:[#allocation13 + $0x38] sm:$0xff]
        %v5495 = vld [vmem:[#allocation13 + $0x40] sm:$0xff]
        %v5496 = vld [vmem:[#allocation13 + $0x48] sm:$0xff]
        %v5497 = vld [vmem:[#allocation13 + $0x50] sm:$0xff]
        %v5498 = vld [vmem:[#allocation13 + $0x58] sm:$0xff]
        %v5499 = vld [vmem:[#allocation13 + $0x60] sm:$0xff]
        %v5500 = vld [vmem:[#allocation13 + $0x68] sm:$0xff]
        %v5501 = vld [vmem:[#allocation13 + $0x70] sm:$0xff]
        %v5502 = vld [vmem:[#allocation13 + $0x78] sm:$0xff]
        %v5503 = vld [vmem:[#allocation13 + $0x80] sm:$0xff]
        %v5504 = vld [vmem:[#allocation13 + $0x88] sm:$0xff]
        %v5505 = vld [vmem:[#allocation13 + $0x90] sm:$0xff]
        %v5506 = vld [vmem:[#allocation13 + $0x98] sm:$0xff]
        %v5507 = vld [vmem:[#allocation13 + $0xa0] sm:$0xff]
        %v5508 = vld [vmem:[#allocation13 + $0xa8] sm:$0xff]
        %v5509 = vld [vmem:[#allocation13 + $0xb0] sm:$0xff]
        %v5510 = vld [vmem:[#allocation13 + $0xb8] sm:$0xff]
        %v5511 = vld [vmem:[#allocation13 + $0xc0] sm:$0xff]
        %v5512 = vld [vmem:[#allocation13 + $0xc8] sm:$0xff]
        %v5513 = vld [vmem:[#allocation13 + $0xd0] sm:$0xff]
        %v5514 = vld [vmem:[#allocation13 + $0xd8] sm:$0xff]
        %v5515 = vld [vmem:[#allocation13 + $0xe0] sm:$0xff]
        %v5516 = vld [vmem:[#allocation13 + $0xe8] sm:$0xff]
        %v5517 = vld [vmem:[#allocation13 + $0xf0] sm:$0xff]
        %v5518 = vld [vmem:[#allocation13 + $0xf8] sm:$0xff]
        %v5519 = vld [vmem:[%s9] sm:$0xf]
        %v5521 = vlaneseq
        %v5522 = vshrl.u32 %v5521, 7
        %v5523 = vsub.s32 0, %v5522
        %v5524 = vrot.slane %v5519, %v5523
        %v5525 = vlaneseq
        %v5526 = vshrl.u32 %v5525, 7
        %v5527 = vsub.s32 1, %v5526
        %v5528 = vrot.slane %v5519, %v5527
        %v5529 = vlaneseq
        %v5530 = vshrl.u32 %v5529, 7
        %v5531 = vsub.s32 2, %v5530
        %v5532 = vrot.slane %v5519, %v5531
        %v5533 = vlaneseq
        %v5534 = vshrl.u32 %v5533, 7
        %v5535 = vsub.s32 3, %v5534
        %v5536 = vrot.slane %v5519, %v5535
        %v5573 = vunpack.c.l.b16 %v5487
        %v5574 = vunpack.c.h.b16 %v5487
        %v5575 = vunpack.c.l.b16 %v5488
        %v5576 = vunpack.c.h.b16 %v5488
        %v5577 = vunpack.c.l.b16 %v5489
        %v5578 = vunpack.c.h.b16 %v5489
        %v5579 = vunpack.c.l.b16 %v5490
        %v5580 = vunpack.c.h.b16 %v5490
        %v5581 = vunpack.c.l.b16 %v5491
        %v5582 = vunpack.c.h.b16 %v5491
        %v5583 = vunpack.c.l.b16 %v5492
        %v5584 = vunpack.c.h.b16 %v5492
        %v5585 = vunpack.c.l.b16 %v5493
        %v5586 = vunpack.c.h.b16 %v5493
        %v5587 = vunpack.c.l.b16 %v5494
        %v5588 = vunpack.c.h.b16 %v5494
        %v5589 = vunpack.c.l.b16 %v5495
        %v5590 = vunpack.c.h.b16 %v5495
        %v5591 = vunpack.c.l.b16 %v5496
        %v5592 = vunpack.c.h.b16 %v5496
        %v5593 = vunpack.c.l.b16 %v5497
        %v5594 = vunpack.c.h.b16 %v5497
        %v5595 = vunpack.c.l.b16 %v5498
        %v5596 = vunpack.c.h.b16 %v5498
        %v5597 = vunpack.c.l.b16 %v5499
        %v5598 = vunpack.c.h.b16 %v5499
        %v5599 = vunpack.c.l.b16 %v5500
        %v5600 = vunpack.c.h.b16 %v5500
        %v5601 = vunpack.c.l.b16 %v5501
        %v5602 = vunpack.c.h.b16 %v5501
        %v5603 = vunpack.c.l.b16 %v5502
        %v5604 = vunpack.c.h.b16 %v5502
        %v5605 = vunpack.c.l.b16 %v5503
        %v5606 = vunpack.c.h.b16 %v5503
        %v5607 = vunpack.c.l.b16 %v5504
        %v5608 = vunpack.c.h.b16 %v5504
        %v5609 = vunpack.c.l.b16 %v5505
        %v5610 = vunpack.c.h.b16 %v5505
        %v5611 = vunpack.c.l.b16 %v5506
        %v5612 = vunpack.c.h.b16 %v5506
        %v5613 = vunpack.c.l.b16 %v5507
        %v5614 = vunpack.c.h.b16 %v5507
        %v5615 = vunpack.c.l.b16 %v5508
        %v5616 = vunpack.c.h.b16 %v5508
        %v5617 = vunpack.c.l.b16 %v5509
        %v5618 = vunpack.c.h.b16 %v5509
        %v5619 = vunpack.c.l.b16 %v5510
        %v5620 = vunpack.c.h.b16 %v5510
        %v5621 = vunpack.c.l.b16 %v5511
        %v5622 = vunpack.c.h.b16 %v5511
        %v5623 = vunpack.c.l.b16 %v5512
        %v5624 = vunpack.c.h.b16 %v5512
        %v5625 = vunpack.c.l.b16 %v5513
        %v5626 = vunpack.c.h.b16 %v5513
        %v5627 = vunpack.c.l.b16 %v5514
        %v5628 = vunpack.c.h.b16 %v5514
        %v5629 = vunpack.c.l.b16 %v5515
        %v5630 = vunpack.c.h.b16 %v5515
        %v5631 = vunpack.c.l.b16 %v5516
        %v5632 = vunpack.c.h.b16 %v5516
        %v5633 = vunpack.c.l.b16 %v5517
        %v5634 = vunpack.c.h.b16 %v5517
        %v5635 = vunpack.c.l.b16 %v5518
        %v5636 = vunpack.c.h.b16 %v5518
        %v5637 = vpack.c.b16 %v5577, %v5573
        %v5638 = vpack.c.b16 %v5578, %v5574
        %v5639 = vpack.c.b16 %v5579, %v5575
        %v5640 = vpack.c.b16 %v5580, %v5576
        %v5641 = vpack.c.b16 %v5585, %v5581
        %v5642 = vpack.c.b16 %v5586, %v5582
        %v5643 = vpack.c.b16 %v5587, %v5583
        %v5644 = vpack.c.b16 %v5588, %v5584
        %v5645 = vpack.c.b16 %v5593, %v5589
        %v5646 = vpack.c.b16 %v5594, %v5590
        %v5647 = vpack.c.b16 %v5595, %v5591
        %v5648 = vpack.c.b16 %v5596, %v5592
        %v5649 = vpack.c.b16 %v5601, %v5597
        %v5650 = vpack.c.b16 %v5602, %v5598
        %v5651 = vpack.c.b16 %v5603, %v5599
        %v5652 = vpack.c.b16 %v5604, %v5600
        %v5653 = vpack.c.b16 %v5609, %v5605
        %v5654 = vpack.c.b16 %v5610, %v5606
        %v5655 = vpack.c.b16 %v5611, %v5607
        %v5656 = vpack.c.b16 %v5612, %v5608
        %v5657 = vpack.c.b16 %v5617, %v5613
        %v5658 = vpack.c.b16 %v5618, %v5614
        %v5659 = vpack.c.b16 %v5619, %v5615
        %v5660 = vpack.c.b16 %v5620, %v5616
        %v5661 = vpack.c.b16 %v5625, %v5621
        %v5662 = vpack.c.b16 %v5626, %v5622
        %v5663 = vpack.c.b16 %v5627, %v5623
        %v5664 = vpack.c.b16 %v5628, %v5624
        %v5665 = vpack.c.b16 %v5633, %v5629
        %v5666 = vpack.c.b16 %v5634, %v5630
        %v5667 = vpack.c.b16 %v5635, %v5631
        %v5668 = vpack.c.b16 %v5636, %v5632
        %5701 = vmatprep.subr.bf16.mxu0 %v5638
        %5702 = vmatpush1.bf16.msra.mxu0 %v5637
        %5703 = vmatprep.subr.bf16.mxu0 %v5642
        %5704 = vmatpush1.bf16.msra.mxu0 %v5641
        %5705 = vmatprep.subr.bf16.mxu0 %v5646
        %5706 = vmatpush1.bf16.msra.mxu0 %v5645
        %5707 = vmatprep.subr.bf16.mxu0 %v5650
        %5708 = vmatpush1.bf16.msra.mxu0 %v5649
        %5709 = vmatprep.subr.bf16.mxu0 %v5654
        %5710 = vmatpush1.bf16.msra.mxu0 %v5653
        %5711 = vmatprep.subr.bf16.mxu0 %v5658
        %5712 = vmatpush1.bf16.msra.mxu0 %v5657
        %5713 = vmatprep.subr.bf16.mxu0 %v5662
        %5714 = vmatpush1.bf16.msra.mxu0 %v5661
        %5715 = vmatprep.subr.bf16.mxu0 %v5666
        %5716 = vmatpush1.bf16.msra.mxu0 %v5665
        %5717 = vmatprep.subr.bf16.mxu0 0
        %5718 = vmatpush1.bf16.msra.mxu0 0
        %5719 = vmatprep.subr.bf16.mxu0 0
        %5720 = vmatpush1.bf16.msra.mxu0 0
        %5721 = vmatprep.subr.bf16.mxu0 0
        %5722 = vmatpush1.bf16.msra.mxu0 0
        %5723 = vmatprep.subr.bf16.mxu0 0
        %5724 = vmatpush1.bf16.msra.mxu0 0
        %5725 = vmatprep.subr.bf16.mxu0 0
        %5726 = vmatpush1.bf16.msra.mxu0 0
        %5727 = vmatprep.subr.bf16.mxu0 0
        %5728 = vmatpush1.bf16.msra.mxu0 0
        %5729 = vmatprep.subr.bf16.mxu0 0
        %5730 = vmatpush1.bf16.msra.mxu0 0
        %5731 = vmatprep.subr.bf16.mxu0 0
        %5732 = vmatpush1.bf16.msra.mxu0 0
        %5733 = vmatprep.mubr.bf16.mxu0 0
        %5734 = vmatmul.mubr.bf16.gmra.mrb[0].mxu0 %v5479
        %v5735 = vpop.f32.mrb[0].mxu0
        %v5736 = vadd.f32 %v5524, %v5735
        %v5737 = vpop.f32.mrb[0].mxu0
        %v5738 = vadd.f32 %v5528, %v5737
        %v5739 = vpop.f32.mrb[0].mxu0
        %v5740 = vadd.f32 %v5524, %v5739
        %v5741 = vpop.f32.mrb[0].mxu0
        %v5742 = vadd.f32 %v5528, %v5741
        %5743 = vmatprep.mubr.bf16.mxu0 0
        %5744 = vmatmul.mubr.bf16.gmra.mrb[0].mxu0 %v5480
        %v5745 = vpop.f32.mrb[0].mxu0
        %v5746 = vadd.f32 %v5524, %v5745
        %v5747 = vpop.f32.mrb[0].mxu0
        %v5748 = vadd.f32 %v5528, %v5747
        %v5749 = vpop.f32.mrb[0].mxu0
        %v5750 = vadd.f32 %v5524, %v5749
        %v5751 = vpop.f32.mrb[0].mxu0
        %v5752 = vadd.f32 %v5528, %v5751
        %5753 = vmatprep.mubr.bf16.mxu0 0
        %5754 = vmatmul.mubr.bf16.gmra.mrb[0].mxu0 %v5481
        %v5755 = vpop.f32.mrb[0].mxu0
        %v5756 = vadd.f32 %v5524, %v5755
        %v5757 = vpop.f32.mrb[0].mxu0
        %v5758 = vadd.f32 %v5528, %v5757
        %v5759 = vpop.f32.mrb[0].mxu0
        %v5760 = vadd.f32 %v5524, %v5759
        %v5761 = vpop.f32.mrb[0].mxu0
        %v5762 = vadd.f32 %v5528, %v5761
        %5763 = vmatprep.mubr.bf16.mxu0 0
        %5764 = vmatmul.mubr.bf16.gmra.mrb[0].mxu0 %v5482
        %v5765 = vpop.f32.mrb[0].mxu0
        %v5766 = vadd.f32 %v5524, %v5765
        %v5767 = vpop.f32.mrb[0].mxu0
        %v5768 = vadd.f32 %v5528, %v5767
        %v5769 = vpop.f32.mrb[0].mxu0
        %v5770 = vadd.f32 %v5524, %v5769
        %v5771 = vpop.f32.mrb[0].mxu0
        %v5772 = vadd.f32 %v5528, %v5771
        %5773 = vmatprep.mubr.bf16.mxu0 0
        %5774 = vmatmul.mubr.bf16.gmra.mrb[0].mxu0 %v5483
        %v5775 = vpop.f32.mrb[0].mxu0
        %v5776 = vadd.f32 %v5524, %v5775
        %v5777 = vpop.f32.mrb[0].mxu0
        %v5778 = vadd.f32 %v5528, %v5777
        %v5779 = vpop.f32.mrb[0].mxu0
        %v5780 = vadd.f32 %v5524, %v5779
        %v5781 = vpop.f32.mrb[0].mxu0
        %v5782 = vadd.f32 %v5528, %v5781
        %5783 = vmatprep.mubr.bf16.mxu0 0
        %5784 = vmatmul.mubr.bf16.gmra.mrb[0].mxu0 %v5484
        %v5785 = vpop.f32.mrb[0].mxu0
        %v5786 = vadd.f32 %v5524, %v5785
        %v5787 = vpop.f32.mrb[0].mxu0
        %v5788 = vadd.f32 %v5528, %v5787
        %v5789 = vpop.f32.mrb[0].mxu0
        %v5790 = vadd.f32 %v5524, %v5789
        %v5791 = vpop.f32.mrb[0].mxu0
        %v5792 = vadd.f32 %v5528, %v5791
        %5793 = vmatprep.mubr.bf16.mxu0 0
        %5794 = vmatmul.mubr.bf16.gmra.mrb[0].mxu0 %v5485
        %v5795 = vpop.f32.mrb[0].mxu0
        %v5796 = vadd.f32 %v5524, %v5795
        %v5797 = vpop.f32.mrb[0].mxu0
        %v5798 = vadd.f32 %v5528, %v5797
        %v5799 = vpop.f32.mrb[0].mxu0
        %v5800 = vadd.f32 %v5524, %v5799
        %v5801 = vpop.f32.mrb[0].mxu0
        %v5802 = vadd.f32 %v5528, %v5801
        %5803 = vmatprep.mubr.bf16.mxu0 0
        %5804 = vmatmul.mubr.bf16.gmra.mrb[0].mxu0 %v5486
        %v5805 = vpop.f32.mrb[0].mxu0
        %v5806 = vadd.f32 %v5524, %v5805
        %v5807 = vpop.f32.mrb[0].mxu0
        %v5808 = vadd.f32 %v5528, %v5807
        %v5809 = vpop.f32.mrb[0].mxu0
        %v5810 = vadd.f32 %v5524, %v5809
        %v5811 = vpop.f32.mrb[0].mxu0
        %v5812 = vadd.f32 %v5528, %v5811
        %5813 = vdwg.mxu0
        %5814 = vmatprep.subr.bf16.mxu0 %v5640
        %5815 = vmatpush1.bf16.msra.mxu0 %v5639
        %5816 = vmatprep.subr.bf16.mxu0 %v5644
        %5817 = vmatpush1.bf16.msra.mxu0 %v5643
        %5818 = vmatprep.subr.bf16.mxu0 %v5648
        %5819 = vmatpush1.bf16.msra.mxu0 %v5647
        %5820 = vmatprep.subr.bf16.mxu0 %v5652
        %5821 = vmatpush1.bf16.msra.mxu0 %v5651
        %5822 = vmatprep.subr.bf16.mxu0 %v5656
        %5823 = vmatpush1.bf16.msra.mxu0 %v5655
        %5824 = vmatprep.subr.bf16.mxu0 %v5660
        %5825 = vmatpush1.bf16.msra.mxu0 %v5659
        %5826 = vmatprep.subr.bf16.mxu0 %v5664
        %5827 = vmatpush1.bf16.msra.mxu0 %v5663
        %5828 = vmatprep.subr.bf16.mxu0 %v5668
        %5829 = vmatpush1.bf16.msra.mxu0 %v5667
        %5830 = vmatprep.subr.bf16.mxu0 0
        %5831 = vmatpush1.bf16.msra.mxu0 0
        %5832 = vmatprep.subr.bf16.mxu0 0
        %5833 = vmatpush1.bf16.msra.mxu0 0
        %5834 = vmatprep.subr.bf16.mxu0 0
        %5835 = vmatpush1.bf16.msra.mxu0 0
        %5836 = vmatprep.subr.bf16.mxu0 0
        %5837 = vmatpush1.bf16.msra.mxu0 0
        %5838 = vmatprep.subr.bf16.mxu0 0
        %5839 = vmatpush1.bf16.msra.mxu0 0
        %5840 = vmatprep.subr.bf16.mxu0 0
        %5841 = vmatpush1.bf16.msra.mxu0 0
        %5842 = vmatprep.subr.bf16.mxu0 0
        %5843 = vmatpush1.bf16.msra.mxu0 0
        %5844 = vmatprep.subr.bf16.mxu0 0
        %5845 = vmatpush1.bf16.msra.mxu0 0
        %5846 = vmatprep.mubr.bf16.mxu0 0
        %5847 = vmatmul.mubr.bf16.gmra.mrb[0].mxu0 %v5479
        %v5848 = vpop.f32.mrb[0].mxu0
        %v5849 = vadd.f32 %v5532, %v5848
        %v5850 = vpop.f32.mrb[0].mxu0
        %v5851 = vadd.f32 %v5536, %v5850
        %v5852 = vpop.f32.mrb[0].mxu0
        %v5853 = vadd.f32 %v5532, %v5852
        %v5854 = vpop.f32.mrb[0].mxu0
        %v5855 = vadd.f32 %v5536, %v5854
        %5856 = vmatprep.mubr.bf16.mxu0 0
        %5857 = vmatmul.mubr.bf16.gmra.mrb[0].mxu0 %v5480
        %v5858 = vpop.f32.mrb[0].mxu0
        %v5859 = vadd.f32 %v5532, %v5858
        %v5860 = vpop.f32.mrb[0].mxu0
        %v5861 = vadd.f32 %v5536, %v5860
        %v5862 = vpop.f32.mrb[0].mxu0
        %v5863 = vadd.f32 %v5532, %v5862
        %v5864 = vpop.f32.mrb[0].mxu0
        %v5865 = vadd.f32 %v5536, %v5864
        %5866 = vmatprep.mubr.bf16.mxu0 0
        %5867 = vmatmul.mubr.bf16.gmra.mrb[0].mxu0 %v5481
        %v5868 = vpop.f32.mrb[0].mxu0
        %v5869 = vadd.f32 %v5532, %v5868
        %v5870 = vpop.f32.mrb[0].mxu0
        %v5871 = vadd.f32 %v5536, %v5870
        %v5872 = vpop.f32.mrb[0].mxu0
        %v5873 = vadd.f32 %v5532, %v5872
        %v5874 = vpop.f32.mrb[0].mxu0
        %v5875 = vadd.f32 %v5536, %v5874
        %5876 = vmatprep.mubr.bf16.mxu0 0
        %5877 = vmatmul.mubr.bf16.gmra.mrb[0].mxu0 %v5482
        %v5878 = vpop.f32.mrb[0].mxu0
        %v5879 = vadd.f32 %v5532, %v5878
        %v5880 = vpop.f32.mrb[0].mxu0
        %v5881 = vadd.f32 %v5536, %v5880
        %v5882 = vpop.f32.mrb[0].mxu0
        %v5883 = vadd.f32 %v5532, %v5882
        %v5884 = vpop.f32.mrb[0].mxu0
        %v5885 = vadd.f32 %v5536, %v5884
        %5886 = vmatprep.mubr.bf16.mxu0 0
        %5887 = vmatmul.mubr.bf16.gmra.mrb[0].mxu0 %v5483
        %v5888 = vpop.f32.mrb[0].mxu0
        %v5889 = vadd.f32 %v5532, %v5888
        %v5890 = vpop.f32.mrb[0].mxu0
        %v5891 = vadd.f32 %v5536, %v5890
        %v5892 = vpop.f32.mrb[0].mxu0
        %v5893 = vadd.f32 %v5532, %v5892
        %v5894 = vpop.f32.mrb[0].mxu0
        %v5895 = vadd.f32 %v5536, %v5894
        %5896 = vmatprep.mubr.bf16.mxu0 0
        %5897 = vmatmul.mubr.bf16.gmra.mrb[0].mxu0 %v5484
        %v5898 = vpop.f32.mrb[0].mxu0
        %v5899 = vadd.f32 %v5532, %v5898
        %v5900 = vpop.f32.mrb[0].mxu0
        %v5901 = vadd.f32 %v5536, %v5900
        %v5902 = vpop.f32.mrb[0].mxu0
        %v5903 = vadd.f32 %v5532, %v5902
        %v5904 = vpop.f32.mrb[0].mxu0
        %v5905 = vadd.f32 %v5536, %v5904
        %5906 = vmatprep.mubr.bf16.mxu0 0
        %5907 = vmatmul.mubr.bf16.gmra.mrb[0].mxu0 %v5485
        %v5908 = vpop.f32.mrb[0].mxu0
        %v5909 = vadd.f32 %v5532, %v5908
        %v5910 = vpop.f32.mrb[0].mxu0
        %v5911 = vadd.f32 %v5536, %v5910
        %v5912 = vpop.f32.mrb[0].mxu0
        %v5913 = vadd.f32 %v5532, %v5912
        %v5914 = vpop.f32.mrb[0].mxu0
        %v5915 = vadd.f32 %v5536, %v5914
        %5916 = vmatprep.mubr.bf16.mxu0 0
        %5917 = vmatmul.mubr.bf16.gmra.mrb[0].mxu0 %v5486
        %v5918 = vpop.f32.mrb[0].mxu0
        %v5919 = vadd.f32 %v5532, %v5918
        %v5920 = vpop.f32.mrb[0].mxu0
        %v5921 = vadd.f32 %v5536, %v5920
        %v5922 = vpop.f32.mrb[0].mxu0
        %v5923 = vadd.f32 %v5532, %v5922
        %v5924 = vpop.f32.mrb[0].mxu0
        %v5925 = vadd.f32 %v5536, %v5924
        %5926 = vdwg.mxu0
        %v5927 = vmax.f32 %v5736, 0.0
        %v5928 = vmax.f32 %v5738, 0.0
        %v5929 = vmax.f32 %v5849, 0.0
        %v5930 = vmax.f32 %v5851, 0.0
        %v5931 = vmax.f32 %v5740, 0.0
        %v5932 = vmax.f32 %v5742, 0.0
        %v5933 = vmax.f32 %v5853, 0.0
        %v5934 = vmax.f32 %v5855, 0.0
        %v5935 = vmax.f32 %v5746, 0.0
        %v5936 = vmax.f32 %v5748, 0.0
        %v5937 = vmax.f32 %v5859, 0.0
        %v5938 = vmax.f32 %v5861, 0.0
        %v5939 = vmax.f32 %v5750, 0.0
        %v5940 = vmax.f32 %v5752, 0.0
        %v5941 = vmax.f32 %v5863, 0.0
        %v5942 = vmax.f32 %v5865, 0.0
        %v5943 = vmax.f32 %v5756, 0.0
        %v5944 = vmax.f32 %v5758, 0.0
        %v5945 = vmax.f32 %v5869, 0.0
        %v5946 = vmax.f32 %v5871, 0.0
        %v5947 = vmax.f32 %v5760, 0.0
        %v5948 = vmax.f32 %v5762, 0.0
        %v5949 = vmax.f32 %v5873, 0.0
        %v5950 = vmax.f32 %v5875, 0.0
        %v5951 = vmax.f32 %v5766, 0.0
        %v5952 = vmax.f32 %v5768, 0.0
        %v5953 = vmax.f32 %v5879, 0.0
        %v5954 = vmax.f32 %v5881, 0.0
        %v5955 = vmax.f32 %v5770, 0.0
        %v5956 = vmax.f32 %v5772, 0.0
        %v5957 = vmax.f32 %v5883, 0.0
        %v5958 = vmax.f32 %v5885, 0.0
        %v5959 = vmax.f32 %v5776, 0.0
        %v5960 = vmax.f32 %v5778, 0.0
        %v5961 = vmax.f32 %v5889, 0.0
        %v5962 = vmax.f32 %v5891, 0.0
        %v5963 = vmax.f32 %v5780, 0.0
        %v5964 = vmax.f32 %v5782, 0.0
        %v5965 = vmax.f32 %v5893, 0.0
        %v5966 = vmax.f32 %v5895, 0.0
        %v5967 = vmax.f32 %v5786, 0.0
        %v5968 = vmax.f32 %v5788, 0.0
        %v5969 = vmax.f32 %v5899, 0.0
        %v5970 = vmax.f32 %v5901, 0.0
        %v5971 = vmax.f32 %v5790, 0.0
        %v5972 = vmax.f32 %v5792, 0.0
        %v5973 = vmax.f32 %v5903, 0.0
        %v5974 = vmax.f32 %v5905, 0.0
        %v5975 = vmax.f32 %v5796, 0.0
        %v5976 = vmax.f32 %v5798, 0.0
        %v5977 = vmax.f32 %v5909, 0.0
        %v5978 = vmax.f32 %v5911, 0.0
        %v5979 = vmax.f32 %v5800, 0.0
        %v5980 = vmax.f32 %v5802, 0.0
        %v5981 = vmax.f32 %v5913, 0.0
        %v5982 = vmax.f32 %v5915, 0.0
        %v5983 = vmax.f32 %v5806, 0.0
        %v5984 = vmax.f32 %v5808, 0.0
        %v5985 = vmax.f32 %v5919, 0.0
        %v5986 = vmax.f32 %v5921, 0.0
        %v5987 = vmax.f32 %v5810, 0.0
        %v5988 = vmax.f32 %v5812, 0.0
        %v5989 = vmax.f32 %v5923, 0.0
        %v5990 = vmax.f32 %v5925, 0.0
        %v5991 = vpack.c.bf16 %v5931, %v5927
        %v5992 = vpack.c.bf16 %v5932, %v5928
        %v5993 = vpack.c.bf16 %v5933, %v5929
        %v5994 = vpack.c.bf16 %v5934, %v5930
        %v5995 = vpack.c.bf16 %v5939, %v5935
        %v5996 = vpack.c.bf16 %v5940, %v5936
        %v5997 = vpack.c.bf16 %v5941, %v5937
        %v5998 = vpack.c.bf16 %v5942, %v5938
        %v5999 = vpack.c.bf16 %v5947, %v5943
        %v6000 = vpack.c.bf16 %v5948, %v5944
        %v6001 = vpack.c.bf16 %v5949, %v5945
        %v6002 = vpack.c.bf16 %v5950, %v5946
        %v6003 = vpack.c.bf16 %v5955, %v5951
        %v6004 = vpack.c.bf16 %v5956, %v5952
        %v6005 = vpack.c.bf16 %v5957, %v5953
        %v6006 = vpack.c.bf16 %v5958, %v5954
        %v6007 = vpack.c.bf16 %v5963, %v5959
        %v6008 = vpack.c.bf16 %v5964, %v5960
        %v6009 = vpack.c.bf16 %v5965, %v5961
        %v6010 = vpack.c.bf16 %v5966, %v5962
        %v6011 = vpack.c.bf16 %v5971, %v5967
        %v6012 = vpack.c.bf16 %v5972, %v5968
        %v6013 = vpack.c.bf16 %v5973, %v5969
        %v6014 = vpack.c.bf16 %v5974, %v5970
        %v6015 = vpack.c.bf16 %v5979, %v5975
        %v6016 = vpack.c.bf16 %v5980, %v5976
        %v6017 = vpack.c.bf16 %v5981, %v5977
        %v6018 = vpack.c.bf16 %v5982, %v5978
        %v6019 = vpack.c.bf16 %v5987, %v5983
        %v6020 = vpack.c.bf16 %v5988, %v5984
        %v6021 = vpack.c.bf16 %v5989, %v5985
        %v6022 = vpack.c.bf16 %v5990, %v5986
        %v6023 = vld [vmem:[#allocation14] sm:$0xff]
        %v6024 = vld [vmem:[#allocation14 + $0x8] sm:$0xff]
        %v6025 = vld [vmem:[#allocation14 + $0x10] sm:$0xff]
        %v6026 = vld [vmem:[#allocation14 + $0x18] sm:$0xff]
        %v6027 = vld [vmem:[#allocation14 + $0x20] sm:$0xff]
        %v6028 = vld [vmem:[#allocation14 + $0x28] sm:$0xff]
        %v6029 = vld [vmem:[#allocation14 + $0x30] sm:$0xff]
        %v6030 = vld [vmem:[#allocation14 + $0x38] sm:$0xff]
        %v6031 = vld [vmem:[#allocation14 + $0x40] sm:$0xff]
        %v6032 = vld [vmem:[#allocation14 + $0x48] sm:$0xff]
        %v6033 = vld [vmem:[#allocation14 + $0x50] sm:$0xff]
        %v6034 = vld [vmem:[#allocation14 + $0x58] sm:$0xff]
        %v6035 = vld [vmem:[#allocation14 + $0x60] sm:$0xff]
        %v6036 = vld [vmem:[#allocation14 + $0x68] sm:$0xff]
        %v6037 = vld [vmem:[#allocation14 + $0x70] sm:$0xff]
        %v6038 = vld [vmem:[#allocation14 + $0x78] sm:$0xff]
        %v6039 = vld [vmem:[#allocation14 + $0x80] sm:$0xff]
        %v6040 = vld [vmem:[#allocation14 + $0x88] sm:$0xff]
        %v6041 = vld [vmem:[#allocation14 + $0x90] sm:$0xff]
        %v6042 = vld [vmem:[#allocation14 + $0x98] sm:$0xff]
        %v6043 = vld [vmem:[#allocation14 + $0xa0] sm:$0xff]
        %v6044 = vld [vmem:[#allocation14 + $0xa8] sm:$0xff]
        %v6045 = vld [vmem:[#allocation14 + $0xb0] sm:$0xff]
        %v6046 = vld [vmem:[#allocation14 + $0xb8] sm:$0xff]
        %v6047 = vld [vmem:[#allocation14 + $0xc0] sm:$0xff]
        %v6048 = vld [vmem:[#allocation14 + $0xc8] sm:$0xff]
        %v6049 = vld [vmem:[#allocation14 + $0xd0] sm:$0xff]
        %v6050 = vld [vmem:[#allocation14 + $0xd8] sm:$0xff]
        %v6051 = vld [vmem:[#allocation14 + $0xe0] sm:$0xff]
        %v6052 = vld [vmem:[#allocation14 + $0xe8] sm:$0xff]
        %v6053 = vld [vmem:[#allocation14 + $0xf0] sm:$0xff]
        %v6054 = vld [vmem:[#allocation14 + $0xf8] sm:$0xff]
        %v6055 = vld [vmem:[#allocation14 + $0x100] sm:$0xff]
        %v6056 = vld [vmem:[#allocation14 + $0x108] sm:$0xff]
        %v6057 = vld [vmem:[#allocation14 + $0x110] sm:$0xff]
        %v6058 = vld [vmem:[#allocation14 + $0x118] sm:$0xff]
        %v6059 = vld [vmem:[#allocation14 + $0x120] sm:$0xff]
        %v6060 = vld [vmem:[#allocation14 + $0x128] sm:$0xff]
        %v6061 = vld [vmem:[#allocation14 + $0x130] sm:$0xff]
        %v6062 = vld [vmem:[#allocation14 + $0x138] sm:$0xff]
        %v6063 = vld [vmem:[#allocation14 + $0x140] sm:$0xff]
        %v6064 = vld [vmem:[#allocation14 + $0x148] sm:$0xff]
        %v6065 = vld [vmem:[#allocation14 + $0x150] sm:$0xff]
        %v6066 = vld [vmem:[#allocation14 + $0x158] sm:$0xff]
        %v6067 = vld [vmem:[#allocation14 + $0x160] sm:$0xff]
        %v6068 = vld [vmem:[#allocation14 + $0x168] sm:$0xff]
        %v6069 = vld [vmem:[#allocation14 + $0x170] sm:$0xff]
        %v6070 = vld [vmem:[#allocation14 + $0x178] sm:$0xff]
        %v6071 = vld [vmem:[#allocation14 + $0x180] sm:$0xff]
        %v6072 = vld [vmem:[#allocation14 + $0x188] sm:$0xff]
        %v6073 = vld [vmem:[#allocation14 + $0x190] sm:$0xff]
        %v6074 = vld [vmem:[#allocation14 + $0x198] sm:$0xff]
        %v6075 = vld [vmem:[#allocation14 + $0x1a0] sm:$0xff]
        %v6076 = vld [vmem:[#allocation14 + $0x1a8] sm:$0xff]
        %v6077 = vld [vmem:[#allocation14 + $0x1b0] sm:$0xff]
        %v6078 = vld [vmem:[#allocation14 + $0x1b8] sm:$0xff]
        %v6079 = vld [vmem:[#allocation14 + $0x1c0] sm:$0xff]
        %v6080 = vld [vmem:[#allocation14 + $0x1c8] sm:$0xff]
        %v6081 = vld [vmem:[#allocation14 + $0x1d0] sm:$0xff]
        %v6082 = vld [vmem:[#allocation14 + $0x1d8] sm:$0xff]
        %v6083 = vld [vmem:[#allocation14 + $0x1e0] sm:$0xff]
        %v6084 = vld [vmem:[#allocation14 + $0x1e8] sm:$0xff]
        %v6085 = vld [vmem:[#allocation14 + $0x1f0] sm:$0xff]
        %v6086 = vld [vmem:[#allocation14 + $0x1f8] sm:$0xff]
        %v6087 = vld [vmem:[#allocation14 + $0x200] sm:$0xff]
        %v6088 = vld [vmem:[#allocation14 + $0x208] sm:$0xff]
        %v6089 = vld [vmem:[#allocation14 + $0x210] sm:$0xff]
        %v6090 = vld [vmem:[#allocation14 + $0x218] sm:$0xff]
        %v6091 = vld [vmem:[#allocation14 + $0x220] sm:$0xff]
        %v6092 = vld [vmem:[#allocation14 + $0x228] sm:$0xff]
        %v6093 = vld [vmem:[#allocation14 + $0x230] sm:$0xff]
        %v6094 = vld [vmem:[#allocation14 + $0x238] sm:$0xff]
        %v6095 = vld [vmem:[#allocation14 + $0x240] sm:$0xff]
        %v6096 = vld [vmem:[#allocation14 + $0x248] sm:$0xff]
        %v6097 = vld [vmem:[#allocation14 + $0x250] sm:$0xff]
        %v6098 = vld [vmem:[#allocation14 + $0x258] sm:$0xff]
        %v6099 = vld [vmem:[#allocation14 + $0x260] sm:$0xff]
        %v6100 = vld [vmem:[#allocation14 + $0x268] sm:$0xff]
        %v6101 = vld [vmem:[#allocation14 + $0x270] sm:$0xff]
        %v6102 = vld [vmem:[#allocation14 + $0x278] sm:$0xff]
        %v6103 = vld [vmem:[#allocation14 + $0x280] sm:$0xff]
        %v6104 = vld [vmem:[#allocation14 + $0x288] sm:$0xff]
        %v6105 = vld [vmem:[#allocation14 + $0x290] sm:$0xff]
        %v6106 = vld [vmem:[#allocation14 + $0x298] sm:$0xff]
        %v6107 = vld [vmem:[#allocation14 + $0x2a0] sm:$0xff]
        %v6108 = vld [vmem:[#allocation14 + $0x2a8] sm:$0xff]
        %v6109 = vld [vmem:[#allocation14 + $0x2b0] sm:$0xff]
        %v6110 = vld [vmem:[#allocation14 + $0x2b8] sm:$0xff]
        %v6111 = vld [vmem:[#allocation14 + $0x2c0] sm:$0xff]
        %v6112 = vld [vmem:[#allocation14 + $0x2c8] sm:$0xff]
        %v6113 = vld [vmem:[#allocation14 + $0x2d0] sm:$0xff]
        %v6114 = vld [vmem:[#allocation14 + $0x2d8] sm:$0xff]
        %v6115 = vld [vmem:[#allocation14 + $0x2e0] sm:$0xff]
        %v6116 = vld [vmem:[#allocation14 + $0x2e8] sm:$0xff]
        %v6117 = vld [vmem:[#allocation14 + $0x2f0] sm:$0xff]
        %v6118 = vld [vmem:[#allocation14 + $0x2f8] sm:$0xff]
        %v6119 = vld [vmem:[#allocation14 + $0x300] sm:$0xff]
        %v6120 = vld [vmem:[#allocation14 + $0x308] sm:$0xff]
        %v6121 = vld [vmem:[#allocation14 + $0x310] sm:$0xff]
        %v6122 = vld [vmem:[#allocation14 + $0x318] sm:$0xff]
        %v6123 = vld [vmem:[#allocation14 + $0x320] sm:$0xff]
        %v6124 = vld [vmem:[#allocation14 + $0x328] sm:$0xff]
        %v6125 = vld [vmem:[#allocation14 + $0x330] sm:$0xff]
        %v6126 = vld [vmem:[#allocation14 + $0x338] sm:$0xff]
        %v6127 = vld [vmem:[#allocation14 + $0x340] sm:$0xff]
        %v6128 = vld [vmem:[#allocation14 + $0x348] sm:$0xff]
        %v6129 = vld [vmem:[#allocation14 + $0x350] sm:$0xff]
        %v6130 = vld [vmem:[#allocation14 + $0x358] sm:$0xff]
        %v6131 = vld [vmem:[#allocation14 + $0x360] sm:$0xff]
        %v6132 = vld [vmem:[#allocation14 + $0x368] sm:$0xff]
        %v6133 = vld [vmem:[#allocation14 + $0x370] sm:$0xff]
        %v6134 = vld [vmem:[#allocation14 + $0x378] sm:$0xff]
        %v6135 = vld [vmem:[#allocation14 + $0x380] sm:$0xff]
        %v6136 = vld [vmem:[#allocation14 + $0x388] sm:$0xff]
        %v6137 = vld [vmem:[#allocation14 + $0x390] sm:$0xff]
        %v6138 = vld [vmem:[#allocation14 + $0x398] sm:$0xff]
        %v6139 = vld [vmem:[#allocation14 + $0x3a0] sm:$0xff]
        %v6140 = vld [vmem:[#allocation14 + $0x3a8] sm:$0xff]
        %v6141 = vld [vmem:[#allocation14 + $0x3b0] sm:$0xff]
        %v6142 = vld [vmem:[#allocation14 + $0x3b8] sm:$0xff]
        %v6143 = vld [vmem:[#allocation14 + $0x3c0] sm:$0xff]
        %v6144 = vld [vmem:[#allocation14 + $0x3c8] sm:$0xff]
        %v6145 = vld [vmem:[#allocation14 + $0x3d0] sm:$0xff]
        %v6146 = vld [vmem:[#allocation14 + $0x3d8] sm:$0xff]
        %v6147 = vld [vmem:[#allocation14 + $0x3e0] sm:$0xff]
        %v6148 = vld [vmem:[#allocation14 + $0x3e8] sm:$0xff]
        %v6149 = vld [vmem:[#allocation14 + $0x3f0] sm:$0xff]
        %v6150 = vld [vmem:[#allocation14 + $0x3f8] sm:$0xff]
        %v6151 = vld [vmem:[#allocation14 + $0x400] sm:$0xff]
        %v6152 = vld [vmem:[#allocation14 + $0x408] sm:$0xff]
        %v6153 = vld [vmem:[#allocation14 + $0x410] sm:$0xff]
        %v6154 = vld [vmem:[#allocation14 + $0x418] sm:$0xff]
        %v6155 = vld [vmem:[#allocation14 + $0x420] sm:$0xff]
        %v6156 = vld [vmem:[#allocation14 + $0x428] sm:$0xff]
        %v6157 = vld [vmem:[#allocation14 + $0x430] sm:$0xff]
        %v6158 = vld [vmem:[#allocation14 + $0x438] sm:$0xff]
        %v6159 = vld [vmem:[#allocation14 + $0x440] sm:$0xff]
        %v6160 = vld [vmem:[#allocation14 + $0x448] sm:$0xff]
        %v6161 = vld [vmem:[#allocation14 + $0x450] sm:$0xff]
        %v6162 = vld [vmem:[#allocation14 + $0x458] sm:$0xff]
        %v6163 = vld [vmem:[#allocation14 + $0x460] sm:$0xff]
        %v6164 = vld [vmem:[#allocation14 + $0x468] sm:$0xff]
        %v6165 = vld [vmem:[#allocation14 + $0x470] sm:$0xff]
        %v6166 = vld [vmem:[#allocation14 + $0x478] sm:$0xff]
        %v6167 = vld [vmem:[#allocation14 + $0x480] sm:$0xff]
        %v6168 = vld [vmem:[#allocation14 + $0x488] sm:$0xff]
        %v6169 = vld [vmem:[#allocation14 + $0x490] sm:$0xff]
        %v6170 = vld [vmem:[#allocation14 + $0x498] sm:$0xff]
        %v6171 = vld [vmem:[#allocation14 + $0x4a0] sm:$0xff]
        %v6172 = vld [vmem:[#allocation14 + $0x4a8] sm:$0xff]
        %v6173 = vld [vmem:[#allocation14 + $0x4b0] sm:$0xff]
        %v6174 = vld [vmem:[#allocation14 + $0x4b8] sm:$0xff]
        %v6175 = vld [vmem:[#allocation14 + $0x4c0] sm:$0xff]
        %v6176 = vld [vmem:[#allocation14 + $0x4c8] sm:$0xff]
        %v6177 = vld [vmem:[#allocation14 + $0x4d0] sm:$0xff]
        %v6178 = vld [vmem:[#allocation14 + $0x4d8] sm:$0xff]
        %v6179 = vld [vmem:[#allocation14 + $0x4e0] sm:$0xff]
        %v6180 = vld [vmem:[#allocation14 + $0x4e8] sm:$0xff]
        %v6181 = vld [vmem:[#allocation14 + $0x4f0] sm:$0xff]
        %v6182 = vld [vmem:[#allocation14 + $0x4f8] sm:$0xff]
        %v6183 = vld [vmem:[#allocation14 + $0x500] sm:$0xff]
        %v6184 = vld [vmem:[#allocation14 + $0x508] sm:$0xff]
        %v6185 = vld [vmem:[#allocation14 + $0x510] sm:$0xff]
        %v6186 = vld [vmem:[#allocation14 + $0x518] sm:$0xff]
        %v6187 = vld [vmem:[#allocation14 + $0x520] sm:$0xff]
        %v6188 = vld [vmem:[#allocation14 + $0x528] sm:$0xff]
        %v6189 = vld [vmem:[#allocation14 + $0x530] sm:$0xff]
        %v6190 = vld [vmem:[#allocation14 + $0x538] sm:$0xff]
        %v6191 = vld [vmem:[#allocation14 + $0x540] sm:$0xff]
        %v6192 = vld [vmem:[#allocation14 + $0x548] sm:$0xff]
        %v6193 = vld [vmem:[#allocation14 + $0x550] sm:$0xff]
        %v6194 = vld [vmem:[#allocation14 + $0x558] sm:$0xff]
        %v6195 = vld [vmem:[#allocation14 + $0x560] sm:$0xff]
        %v6196 = vld [vmem:[#allocation14 + $0x568] sm:$0xff]
        %v6197 = vld [vmem:[#allocation14 + $0x570] sm:$0xff]
        %v6198 = vld [vmem:[#allocation14 + $0x578] sm:$0xff]
        %v6199 = vld [vmem:[#allocation14 + $0x580] sm:$0xff]
        %v6200 = vld [vmem:[#allocation14 + $0x588] sm:$0xff]
        %v6201 = vld [vmem:[#allocation14 + $0x590] sm:$0xff]
        %v6202 = vld [vmem:[#allocation14 + $0x598] sm:$0xff]
        %v6203 = vld [vmem:[#allocation14 + $0x5a0] sm:$0xff]
        %v6204 = vld [vmem:[#allocation14 + $0x5a8] sm:$0xff]
        %v6205 = vld [vmem:[#allocation14 + $0x5b0] sm:$0xff]
        %v6206 = vld [vmem:[#allocation14 + $0x5b8] sm:$0xff]
        %v6207 = vld [vmem:[#allocation14 + $0x5c0] sm:$0xff]
        %v6208 = vld [vmem:[#allocation14 + $0x5c8] sm:$0xff]
        %v6209 = vld [vmem:[#allocation14 + $0x5d0] sm:$0xff]
        %v6210 = vld [vmem:[#allocation14 + $0x5d8] sm:$0xff]
        %v6211 = vld [vmem:[#allocation14 + $0x5e0] sm:$0xff]
        %v6212 = vld [vmem:[#allocation14 + $0x5e8] sm:$0xff]
        %v6213 = vld [vmem:[#allocation14 + $0x5f0] sm:$0xff]
        %v6214 = vld [vmem:[#allocation14 + $0x5f8] sm:$0xff]
        %v6215 = vld [vmem:[#allocation14 + $0x600] sm:$0xff]
        %v6216 = vld [vmem:[#allocation14 + $0x608] sm:$0xff]
        %v6217 = vld [vmem:[#allocation14 + $0x610] sm:$0xff]
        %v6218 = vld [vmem:[#allocation14 + $0x618] sm:$0xff]
        %v6219 = vld [vmem:[#allocation14 + $0x620] sm:$0xff]
        %v6220 = vld [vmem:[#allocation14 + $0x628] sm:$0xff]
        %v6221 = vld [vmem:[#allocation14 + $0x630] sm:$0xff]
        %v6222 = vld [vmem:[#allocation14 + $0x638] sm:$0xff]
        %v6223 = vld [vmem:[#allocation14 + $0x640] sm:$0xff]
        %v6224 = vld [vmem:[#allocation14 + $0x648] sm:$0xff]
        %v6225 = vld [vmem:[#allocation14 + $0x650] sm:$0xff]
        %v6226 = vld [vmem:[#allocation14 + $0x658] sm:$0xff]
        %v6227 = vld [vmem:[#allocation14 + $0x660] sm:$0xff]
        %v6228 = vld [vmem:[#allocation14 + $0x668] sm:$0xff]
        %v6229 = vld [vmem:[#allocation14 + $0x670] sm:$0xff]
        %v6230 = vld [vmem:[#allocation14 + $0x678] sm:$0xff]
        %v6231 = vld [vmem:[#allocation14 + $0x680] sm:$0xff]
        %v6232 = vld [vmem:[#allocation14 + $0x688] sm:$0xff]
        %v6233 = vld [vmem:[#allocation14 + $0x690] sm:$0xff]
        %v6234 = vld [vmem:[#allocation14 + $0x698] sm:$0xff]
        %v6235 = vld [vmem:[#allocation14 + $0x6a0] sm:$0xff]
        %v6236 = vld [vmem:[#allocation14 + $0x6a8] sm:$0xff]
        %v6237 = vld [vmem:[#allocation14 + $0x6b0] sm:$0xff]
        %v6238 = vld [vmem:[#allocation14 + $0x6b8] sm:$0xff]
        %v6239 = vld [vmem:[#allocation14 + $0x6c0] sm:$0xff]
        %v6240 = vld [vmem:[#allocation14 + $0x6c8] sm:$0xff]
        %v6241 = vld [vmem:[#allocation14 + $0x6d0] sm:$0xff]
        %v6242 = vld [vmem:[#allocation14 + $0x6d8] sm:$0xff]
        %v6243 = vld [vmem:[#allocation14 + $0x6e0] sm:$0xff]
        %v6244 = vld [vmem:[#allocation14 + $0x6e8] sm:$0xff]
        %v6245 = vld [vmem:[#allocation14 + $0x6f0] sm:$0xff]
        %v6246 = vld [vmem:[#allocation14 + $0x6f8] sm:$0xff]
        %v6247 = vld [vmem:[#allocation14 + $0x700] sm:$0xff]
        %v6248 = vld [vmem:[#allocation14 + $0x708] sm:$0xff]
        %v6249 = vld [vmem:[#allocation14 + $0x710] sm:$0xff]
        %v6250 = vld [vmem:[#allocation14 + $0x718] sm:$0xff]
        %v6251 = vld [vmem:[#allocation14 + $0x720] sm:$0xff]
        %v6252 = vld [vmem:[#allocation14 + $0x728] sm:$0xff]
        %v6253 = vld [vmem:[#allocation14 + $0x730] sm:$0xff]
        %v6254 = vld [vmem:[#allocation14 + $0x738] sm:$0xff]
        %v6255 = vld [vmem:[#allocation14 + $0x740] sm:$0xff]
        %v6256 = vld [vmem:[#allocation14 + $0x748] sm:$0xff]
        %v6257 = vld [vmem:[#allocation14 + $0x750] sm:$0xff]
        %v6258 = vld [vmem:[#allocation14 + $0x758] sm:$0xff]
        %v6259 = vld [vmem:[#allocation14 + $0x760] sm:$0xff]
        %v6260 = vld [vmem:[#allocation14 + $0x768] sm:$0xff]
        %v6261 = vld [vmem:[#allocation14 + $0x770] sm:$0xff]
        %v6262 = vld [vmem:[#allocation14 + $0x778] sm:$0xff]
        %v6263 = vld [vmem:[#allocation14 + $0x780] sm:$0xff]
        %v6264 = vld [vmem:[#allocation14 + $0x788] sm:$0xff]
        %v6265 = vld [vmem:[#allocation14 + $0x790] sm:$0xff]
        %v6266 = vld [vmem:[#allocation14 + $0x798] sm:$0xff]
        %v6267 = vld [vmem:[#allocation14 + $0x7a0] sm:$0xff]
        %v6268 = vld [vmem:[#allocation14 + $0x7a8] sm:$0xff]
        %v6269 = vld [vmem:[#allocation14 + $0x7b0] sm:$0xff]
        %v6270 = vld [vmem:[#allocation14 + $0x7b8] sm:$0xff]
        %v6271 = vld [vmem:[#allocation14 + $0x7c0] sm:$0xff]
        %v6272 = vld [vmem:[#allocation14 + $0x7c8] sm:$0xff]
        %v6273 = vld [vmem:[#allocation14 + $0x7d0] sm:$0xff]
        %v6274 = vld [vmem:[#allocation14 + $0x7d8] sm:$0xff]
        %v6275 = vld [vmem:[#allocation14 + $0x7e0] sm:$0xff]
        %v6276 = vld [vmem:[#allocation14 + $0x7e8] sm:$0xff]
        %v6277 = vld [vmem:[#allocation14 + $0x7f0] sm:$0xff]
        %v6278 = vld [vmem:[#allocation14 + $0x7f8] sm:$0xff]
        %v6279 = vld [vmem:[%s11] sm:$0xff]
        %v6281 = vlaneseq
        %v6282 = vshrl.u32 %v6281, 7
        %v6283 = vsub.s32 0, %v6282
        %v6284 = vrot.slane %v6279, %v6283
        %v6285 = vlaneseq
        %v6286 = vshrl.u32 %v6285, 7
        %v6287 = vsub.s32 1, %v6286
        %v6288 = vrot.slane %v6279, %v6287
        %v6289 = vlaneseq
        %v6290 = vshrl.u32 %v6289, 7
        %v6291 = vsub.s32 2, %v6290
        %v6292 = vrot.slane %v6279, %v6291
        %v6293 = vlaneseq
        %v6294 = vshrl.u32 %v6293, 7
        %v6295 = vsub.s32 3, %v6294
        %v6296 = vrot.slane %v6279, %v6295
        %v6297 = vlaneseq
        %v6298 = vshrl.u32 %v6297, 7
        %v6299 = vsub.s32 4, %v6298
        %v6300 = vrot.slane %v6279, %v6299
        %v6301 = vlaneseq
        %v6302 = vshrl.u32 %v6301, 7
        %v6303 = vsub.s32 5, %v6302
        %v6304 = vrot.slane %v6279, %v6303
        %v6305 = vlaneseq
        %v6306 = vshrl.u32 %v6305, 7
        %v6307 = vsub.s32 6, %v6306
        %v6308 = vrot.slane %v6279, %v6307
        %v6309 = vlaneseq
        %v6310 = vshrl.u32 %v6309, 7
        %v6311 = vsub.s32 7, %v6310
        %v6312 = vrot.slane %v6279, %v6311
        %v6577 = vunpack.c.l.b16 %v6023
        %v6578 = vunpack.c.h.b16 %v6023
        %v6579 = vunpack.c.l.b16 %v6024
        %v6580 = vunpack.c.h.b16 %v6024
        %v6581 = vunpack.c.l.b16 %v6025
        %v6582 = vunpack.c.h.b16 %v6025
        %v6583 = vunpack.c.l.b16 %v6026
        %v6584 = vunpack.c.h.b16 %v6026
        %v6585 = vunpack.c.l.b16 %v6027
        %v6586 = vunpack.c.h.b16 %v6027
        %v6587 = vunpack.c.l.b16 %v6028
        %v6588 = vunpack.c.h.b16 %v6028
        %v6589 = vunpack.c.l.b16 %v6029
        %v6590 = vunpack.c.h.b16 %v6029
        %v6591 = vunpack.c.l.b16 %v6030
        %v6592 = vunpack.c.h.b16 %v6030
        %v6593 = vunpack.c.l.b16 %v6031
        %v6594 = vunpack.c.h.b16 %v6031
        %v6595 = vunpack.c.l.b16 %v6032
        %v6596 = vunpack.c.h.b16 %v6032
        %v6597 = vunpack.c.l.b16 %v6033
        %v6598 = vunpack.c.h.b16 %v6033
        %v6599 = vunpack.c.l.b16 %v6034
        %v6600 = vunpack.c.h.b16 %v6034
        %v6601 = vunpack.c.l.b16 %v6035
        %v6602 = vunpack.c.h.b16 %v6035
        %v6603 = vunpack.c.l.b16 %v6036
        %v6604 = vunpack.c.h.b16 %v6036
        %v6605 = vunpack.c.l.b16 %v6037
        %v6606 = vunpack.c.h.b16 %v6037
        %v6607 = vunpack.c.l.b16 %v6038
        %v6608 = vunpack.c.h.b16 %v6038
        %v6609 = vunpack.c.l.b16 %v6039
        %v6610 = vunpack.c.h.b16 %v6039
        %v6611 = vunpack.c.l.b16 %v6040
        %v6612 = vunpack.c.h.b16 %v6040
        %v6613 = vunpack.c.l.b16 %v6041
        %v6614 = vunpack.c.h.b16 %v6041
        %v6615 = vunpack.c.l.b16 %v6042
        %v6616 = vunpack.c.h.b16 %v6042
        %v6617 = vunpack.c.l.b16 %v6043
        %v6618 = vunpack.c.h.b16 %v6043
        %v6619 = vunpack.c.l.b16 %v6044
        %v6620 = vunpack.c.h.b16 %v6044
        %v6621 = vunpack.c.l.b16 %v6045
        %v6622 = vunpack.c.h.b16 %v6045
        %v6623 = vunpack.c.l.b16 %v6046
        %v6624 = vunpack.c.h.b16 %v6046
        %v6625 = vunpack.c.l.b16 %v6047
        %v6626 = vunpack.c.h.b16 %v6047
        %v6627 = vunpack.c.l.b16 %v6048
        %v6628 = vunpack.c.h.b16 %v6048
        %v6629 = vunpack.c.l.b16 %v6049
        %v6630 = vunpack.c.h.b16 %v6049
        %v6631 = vunpack.c.l.b16 %v6050
        %v6632 = vunpack.c.h.b16 %v6050
        %v6633 = vunpack.c.l.b16 %v6051
        %v6634 = vunpack.c.h.b16 %v6051
        %v6635 = vunpack.c.l.b16 %v6052
        %v6636 = vunpack.c.h.b16 %v6052
        %v6637 = vunpack.c.l.b16 %v6053
        %v6638 = vunpack.c.h.b16 %v6053
        %v6639 = vunpack.c.l.b16 %v6054
        %v6640 = vunpack.c.h.b16 %v6054
        %v6641 = vunpack.c.l.b16 %v6055
        %v6642 = vunpack.c.h.b16 %v6055
        %v6643 = vunpack.c.l.b16 %v6056
        %v6644 = vunpack.c.h.b16 %v6056
        %v6645 = vunpack.c.l.b16 %v6057
        %v6646 = vunpack.c.h.b16 %v6057
        %v6647 = vunpack.c.l.b16 %v6058
        %v6648 = vunpack.c.h.b16 %v6058
        %v6649 = vunpack.c.l.b16 %v6059
        %v6650 = vunpack.c.h.b16 %v6059
        %v6651 = vunpack.c.l.b16 %v6060
        %v6652 = vunpack.c.h.b16 %v6060
        %v6653 = vunpack.c.l.b16 %v6061
        %v6654 = vunpack.c.h.b16 %v6061
        %v6655 = vunpack.c.l.b16 %v6062
        %v6656 = vunpack.c.h.b16 %v6062
        %v6657 = vunpack.c.l.b16 %v6063
        %v6658 = vunpack.c.h.b16 %v6063
        %v6659 = vunpack.c.l.b16 %v6064
        %v6660 = vunpack.c.h.b16 %v6064
        %v6661 = vunpack.c.l.b16 %v6065
        %v6662 = vunpack.c.h.b16 %v6065
        %v6663 = vunpack.c.l.b16 %v6066
        %v6664 = vunpack.c.h.b16 %v6066
        %v6665 = vunpack.c.l.b16 %v6067
        %v6666 = vunpack.c.h.b16 %v6067
        %v6667 = vunpack.c.l.b16 %v6068
        %v6668 = vunpack.c.h.b16 %v6068
        %v6669 = vunpack.c.l.b16 %v6069
        %v6670 = vunpack.c.h.b16 %v6069
        %v6671 = vunpack.c.l.b16 %v6070
        %v6672 = vunpack.c.h.b16 %v6070
        %v6673 = vunpack.c.l.b16 %v6071
        %v6674 = vunpack.c.h.b16 %v6071
        %v6675 = vunpack.c.l.b16 %v6072
        %v6676 = vunpack.c.h.b16 %v6072
        %v6677 = vunpack.c.l.b16 %v6073
        %v6678 = vunpack.c.h.b16 %v6073
        %v6679 = vunpack.c.l.b16 %v6074
        %v6680 = vunpack.c.h.b16 %v6074
        %v6681 = vunpack.c.l.b16 %v6075
        %v6682 = vunpack.c.h.b16 %v6075
        %v6683 = vunpack.c.l.b16 %v6076
        %v6684 = vunpack.c.h.b16 %v6076
        %v6685 = vunpack.c.l.b16 %v6077
        %v6686 = vunpack.c.h.b16 %v6077
        %v6687 = vunpack.c.l.b16 %v6078
        %v6688 = vunpack.c.h.b16 %v6078
        %v6689 = vunpack.c.l.b16 %v6079
        %v6690 = vunpack.c.h.b16 %v6079
        %v6691 = vunpack.c.l.b16 %v6080
        %v6692 = vunpack.c.h.b16 %v6080
        %v6693 = vunpack.c.l.b16 %v6081
        %v6694 = vunpack.c.h.b16 %v6081
        %v6695 = vunpack.c.l.b16 %v6082
        %v6696 = vunpack.c.h.b16 %v6082
        %v6697 = vunpack.c.l.b16 %v6083
        %v6698 = vunpack.c.h.b16 %v6083
        %v6699 = vunpack.c.l.b16 %v6084
        %v6700 = vunpack.c.h.b16 %v6084
        %v6701 = vunpack.c.l.b16 %v6085
        %v6702 = vunpack.c.h.b16 %v6085
        %v6703 = vunpack.c.l.b16 %v6086
        %v6704 = vunpack.c.h.b16 %v6086
        %v6705 = vunpack.c.l.b16 %v6087
        %v6706 = vunpack.c.h.b16 %v6087
        %v6707 = vunpack.c.l.b16 %v6088
        %v6708 = vunpack.c.h.b16 %v6088
        %v6709 = vunpack.c.l.b16 %v6089
        %v6710 = vunpack.c.h.b16 %v6089
        %v6711 = vunpack.c.l.b16 %v6090
        %v6712 = vunpack.c.h.b16 %v6090
        %v6713 = vunpack.c.l.b16 %v6091
        %v6714 = vunpack.c.h.b16 %v6091
        %v6715 = vunpack.c.l.b16 %v6092
        %v6716 = vunpack.c.h.b16 %v6092
        %v6717 = vunpack.c.l.b16 %v6093
        %v6718 = vunpack.c.h.b16 %v6093
        %v6719 = vunpack.c.l.b16 %v6094
        %v6720 = vunpack.c.h.b16 %v6094
        %v6721 = vunpack.c.l.b16 %v6095
        %v6722 = vunpack.c.h.b16 %v6095
        %v6723 = vunpack.c.l.b16 %v6096
        %v6724 = vunpack.c.h.b16 %v6096
        %v6725 = vunpack.c.l.b16 %v6097
        %v6726 = vunpack.c.h.b16 %v6097
        %v6727 = vunpack.c.l.b16 %v6098
        %v6728 = vunpack.c.h.b16 %v6098
        %v6729 = vunpack.c.l.b16 %v6099
        %v6730 = vunpack.c.h.b16 %v6099
        %v6731 = vunpack.c.l.b16 %v6100
        %v6732 = vunpack.c.h.b16 %v6100
        %v6733 = vunpack.c.l.b16 %v6101
        %v6734 = vunpack.c.h.b16 %v6101
        %v6735 = vunpack.c.l.b16 %v6102
        %v6736 = vunpack.c.h.b16 %v6102
        %v6737 = vunpack.c.l.b16 %v6103
        %v6738 = vunpack.c.h.b16 %v6103
        %v6739 = vunpack.c.l.b16 %v6104
        %v6740 = vunpack.c.h.b16 %v6104
        %v6741 = vunpack.c.l.b16 %v6105
        %v6742 = vunpack.c.h.b16 %v6105
        %v6743 = vunpack.c.l.b16 %v6106
        %v6744 = vunpack.c.h.b16 %v6106
        %v6745 = vunpack.c.l.b16 %v6107
        %v6746 = vunpack.c.h.b16 %v6107
        %v6747 = vunpack.c.l.b16 %v6108
        %v6748 = vunpack.c.h.b16 %v6108
        %v6749 = vunpack.c.l.b16 %v6109
        %v6750 = vunpack.c.h.b16 %v6109
        %v6751 = vunpack.c.l.b16 %v6110
        %v6752 = vunpack.c.h.b16 %v6110
        %v6753 = vunpack.c.l.b16 %v6111
        %v6754 = vunpack.c.h.b16 %v6111
        %v6755 = vunpack.c.l.b16 %v6112
        %v6756 = vunpack.c.h.b16 %v6112
        %v6757 = vunpack.c.l.b16 %v6113
        %v6758 = vunpack.c.h.b16 %v6113
        %v6759 = vunpack.c.l.b16 %v6114
        %v6760 = vunpack.c.h.b16 %v6114
        %v6761 = vunpack.c.l.b16 %v6115
        %v6762 = vunpack.c.h.b16 %v6115
        %v6763 = vunpack.c.l.b16 %v6116
        %v6764 = vunpack.c.h.b16 %v6116
        %v6765 = vunpack.c.l.b16 %v6117
        %v6766 = vunpack.c.h.b16 %v6117
        %v6767 = vunpack.c.l.b16 %v6118
        %v6768 = vunpack.c.h.b16 %v6118
        %v6769 = vunpack.c.l.b16 %v6119
        %v6770 = vunpack.c.h.b16 %v6119
        %v6771 = vunpack.c.l.b16 %v6120
        %v6772 = vunpack.c.h.b16 %v6120
        %v6773 = vunpack.c.l.b16 %v6121
        %v6774 = vunpack.c.h.b16 %v6121
        %v6775 = vunpack.c.l.b16 %v6122
        %v6776 = vunpack.c.h.b16 %v6122
        %v6777 = vunpack.c.l.b16 %v6123
        %v6778 = vunpack.c.h.b16 %v6123
        %v6779 = vunpack.c.l.b16 %v6124
        %v6780 = vunpack.c.h.b16 %v6124
        %v6781 = vunpack.c.l.b16 %v6125
        %v6782 = vunpack.c.h.b16 %v6125
        %v6783 = vunpack.c.l.b16 %v6126
        %v6784 = vunpack.c.h.b16 %v6126
        %v6785 = vunpack.c.l.b16 %v6127
        %v6786 = vunpack.c.h.b16 %v6127
        %v6787 = vunpack.c.l.b16 %v6128
        %v6788 = vunpack.c.h.b16 %v6128
        %v6789 = vunpack.c.l.b16 %v6129
        %v6790 = vunpack.c.h.b16 %v6129
        %v6791 = vunpack.c.l.b16 %v6130
        %v6792 = vunpack.c.h.b16 %v6130
        %v6793 = vunpack.c.l.b16 %v6131
        %v6794 = vunpack.c.h.b16 %v6131
        %v6795 = vunpack.c.l.b16 %v6132
        %v6796 = vunpack.c.h.b16 %v6132
        %v6797 = vunpack.c.l.b16 %v6133
        %v6798 = vunpack.c.h.b16 %v6133
        %v6799 = vunpack.c.l.b16 %v6134
        %v6800 = vunpack.c.h.b16 %v6134
        %v6801 = vunpack.c.l.b16 %v6135
        %v6802 = vunpack.c.h.b16 %v6135
        %v6803 = vunpack.c.l.b16 %v6136
        %v6804 = vunpack.c.h.b16 %v6136
        %v6805 = vunpack.c.l.b16 %v6137
        %v6806 = vunpack.c.h.b16 %v6137
        %v6807 = vunpack.c.l.b16 %v6138
        %v6808 = vunpack.c.h.b16 %v6138
        %v6809 = vunpack.c.l.b16 %v6139
        %v6810 = vunpack.c.h.b16 %v6139
        %v6811 = vunpack.c.l.b16 %v6140
        %v6812 = vunpack.c.h.b16 %v6140
        %v6813 = vunpack.c.l.b16 %v6141
        %v6814 = vunpack.c.h.b16 %v6141
        %v6815 = vunpack.c.l.b16 %v6142
        %v6816 = vunpack.c.h.b16 %v6142
        %v6817 = vunpack.c.l.b16 %v6143
        %v6818 = vunpack.c.h.b16 %v6143
        %v6819 = vunpack.c.l.b16 %v6144
        %v6820 = vunpack.c.h.b16 %v6144
        %v6821 = vunpack.c.l.b16 %v6145
        %v6822 = vunpack.c.h.b16 %v6145
        %v6823 = vunpack.c.l.b16 %v6146
        %v6824 = vunpack.c.h.b16 %v6146
        %v6825 = vunpack.c.l.b16 %v6147
        %v6826 = vunpack.c.h.b16 %v6147
        %v6827 = vunpack.c.l.b16 %v6148
        %v6828 = vunpack.c.h.b16 %v6148
        %v6829 = vunpack.c.l.b16 %v6149
        %v6830 = vunpack.c.h.b16 %v6149
        %v6831 = vunpack.c.l.b16 %v6150
        %v6832 = vunpack.c.h.b16 %v6150
        %v6833 = vunpack.c.l.b16 %v6151
        %v6834 = vunpack.c.h.b16 %v6151
        %v6835 = vunpack.c.l.b16 %v6152
        %v6836 = vunpack.c.h.b16 %v6152
        %v6837 = vunpack.c.l.b16 %v6153
        %v6838 = vunpack.c.h.b16 %v6153
        %v6839 = vunpack.c.l.b16 %v6154
        %v6840 = vunpack.c.h.b16 %v6154
        %v6841 = vunpack.c.l.b16 %v6155
        %v6842 = vunpack.c.h.b16 %v6155
        %v6843 = vunpack.c.l.b16 %v6156
        %v6844 = vunpack.c.h.b16 %v6156
        %v6845 = vunpack.c.l.b16 %v6157
        %v6846 = vunpack.c.h.b16 %v6157
        %v6847 = vunpack.c.l.b16 %v6158
        %v6848 = vunpack.c.h.b16 %v6158
        %v6849 = vunpack.c.l.b16 %v6159
        %v6850 = vunpack.c.h.b16 %v6159
        %v6851 = vunpack.c.l.b16 %v6160
        %v6852 = vunpack.c.h.b16 %v6160
        %v6853 = vunpack.c.l.b16 %v6161
        %v6854 = vunpack.c.h.b16 %v6161
        %v6855 = vunpack.c.l.b16 %v6162
        %v6856 = vunpack.c.h.b16 %v6162
        %v6857 = vunpack.c.l.b16 %v6163
        %v6858 = vunpack.c.h.b16 %v6163
        %v6859 = vunpack.c.l.b16 %v6164
        %v6860 = vunpack.c.h.b16 %v6164
        %v6861 = vunpack.c.l.b16 %v6165
        %v6862 = vunpack.c.h.b16 %v6165
        %v6863 = vunpack.c.l.b16 %v6166
        %v6864 = vunpack.c.h.b16 %v6166
        %v6865 = vunpack.c.l.b16 %v6167
        %v6866 = vunpack.c.h.b16 %v6167
        %v6867 = vunpack.c.l.b16 %v6168
        %v6868 = vunpack.c.h.b16 %v6168
        %v6869 = vunpack.c.l.b16 %v6169
        %v6870 = vunpack.c.h.b16 %v6169
        %v6871 = vunpack.c.l.b16 %v6170
        %v6872 = vunpack.c.h.b16 %v6170
        %v6873 = vunpack.c.l.b16 %v6171
        %v6874 = vunpack.c.h.b16 %v6171
        %v6875 = vunpack.c.l.b16 %v6172
        %v6876 = vunpack.c.h.b16 %v6172
        %v6877 = vunpack.c.l.b16 %v6173
        %v6878 = vunpack.c.h.b16 %v6173
        %v6879 = vunpack.c.l.b16 %v6174
        %v6880 = vunpack.c.h.b16 %v6174
        %v6881 = vunpack.c.l.b16 %v6175
        %v6882 = vunpack.c.h.b16 %v6175
        %v6883 = vunpack.c.l.b16 %v6176
        %v6884 = vunpack.c.h.b16 %v6176
        %v6885 = vunpack.c.l.b16 %v6177
        %v6886 = vunpack.c.h.b16 %v6177
        %v6887 = vunpack.c.l.b16 %v6178
        %v6888 = vunpack.c.h.b16 %v6178
        %v6889 = vunpack.c.l.b16 %v6179
        %v6890 = vunpack.c.h.b16 %v6179
        %v6891 = vunpack.c.l.b16 %v6180
        %v6892 = vunpack.c.h.b16 %v6180
        %v6893 = vunpack.c.l.b16 %v6181
        %v6894 = vunpack.c.h.b16 %v6181
        %v6895 = vunpack.c.l.b16 %v6182
        %v6896 = vunpack.c.h.b16 %v6182
        %v6897 = vunpack.c.l.b16 %v6183
        %v6898 = vunpack.c.h.b16 %v6183
        %v6899 = vunpack.c.l.b16 %v6184
        %v6900 = vunpack.c.h.b16 %v6184
        %v6901 = vunpack.c.l.b16 %v6185
        %v6902 = vunpack.c.h.b16 %v6185
        %v6903 = vunpack.c.l.b16 %v6186
        %v6904 = vunpack.c.h.b16 %v6186
        %v6905 = vunpack.c.l.b16 %v6187
        %v6906 = vunpack.c.h.b16 %v6187
        %v6907 = vunpack.c.l.b16 %v6188
        %v6908 = vunpack.c.h.b16 %v6188
        %v6909 = vunpack.c.l.b16 %v6189
        %v6910 = vunpack.c.h.b16 %v6189
        %v6911 = vunpack.c.l.b16 %v6190
        %v6912 = vunpack.c.h.b16 %v6190
        %v6913 = vunpack.c.l.b16 %v6191
        %v6914 = vunpack.c.h.b16 %v6191
        %v6915 = vunpack.c.l.b16 %v6192
        %v6916 = vunpack.c.h.b16 %v6192
        %v6917 = vunpack.c.l.b16 %v6193
        %v6918 = vunpack.c.h.b16 %v6193
        %v6919 = vunpack.c.l.b16 %v6194
        %v6920 = vunpack.c.h.b16 %v6194
        %v6921 = vunpack.c.l.b16 %v6195
        %v6922 = vunpack.c.h.b16 %v6195
        %v6923 = vunpack.c.l.b16 %v6196
        %v6924 = vunpack.c.h.b16 %v6196
        %v6925 = vunpack.c.l.b16 %v6197
        %v6926 = vunpack.c.h.b16 %v6197
        %v6927 = vunpack.c.l.b16 %v6198
        %v6928 = vunpack.c.h.b16 %v6198
        %v6929 = vunpack.c.l.b16 %v6199
        %v6930 = vunpack.c.h.b16 %v6199
        %v6931 = vunpack.c.l.b16 %v6200
        %v6932 = vunpack.c.h.b16 %v6200
        %v6933 = vunpack.c.l.b16 %v6201
        %v6934 = vunpack.c.h.b16 %v6201
        %v6935 = vunpack.c.l.b16 %v6202
        %v6936 = vunpack.c.h.b16 %v6202
        %v6937 = vunpack.c.l.b16 %v6203
        %v6938 = vunpack.c.h.b16 %v6203
        %v6939 = vunpack.c.l.b16 %v6204
        %v6940 = vunpack.c.h.b16 %v6204
        %v6941 = vunpack.c.l.b16 %v6205
        %v6942 = vunpack.c.h.b16 %v6205
        %v6943 = vunpack.c.l.b16 %v6206
        %v6944 = vunpack.c.h.b16 %v6206
        %v6945 = vunpack.c.l.b16 %v6207
        %v6946 = vunpack.c.h.b16 %v6207
        %v6947 = vunpack.c.l.b16 %v6208
        %v6948 = vunpack.c.h.b16 %v6208
        %v6949 = vunpack.c.l.b16 %v6209
        %v6950 = vunpack.c.h.b16 %v6209
        %v6951 = vunpack.c.l.b16 %v6210
        %v6952 = vunpack.c.h.b16 %v6210
        %v6953 = vunpack.c.l.b16 %v6211
        %v6954 = vunpack.c.h.b16 %v6211
        %v6955 = vunpack.c.l.b16 %v6212
        %v6956 = vunpack.c.h.b16 %v6212
        %v6957 = vunpack.c.l.b16 %v6213
        %v6958 = vunpack.c.h.b16 %v6213
        %v6959 = vunpack.c.l.b16 %v6214
        %v6960 = vunpack.c.h.b16 %v6214
        %v6961 = vunpack.c.l.b16 %v6215
        %v6962 = vunpack.c.h.b16 %v6215
        %v6963 = vunpack.c.l.b16 %v6216
        %v6964 = vunpack.c.h.b16 %v6216
        %v6965 = vunpack.c.l.b16 %v6217
        %v6966 = vunpack.c.h.b16 %v6217
        %v6967 = vunpack.c.l.b16 %v6218
        %v6968 = vunpack.c.h.b16 %v6218
        %v6969 = vunpack.c.l.b16 %v6219
        %v6970 = vunpack.c.h.b16 %v6219
        %v6971 = vunpack.c.l.b16 %v6220
        %v6972 = vunpack.c.h.b16 %v6220
        %v6973 = vunpack.c.l.b16 %v6221
        %v6974 = vunpack.c.h.b16 %v6221
        %v6975 = vunpack.c.l.b16 %v6222
        %v6976 = vunpack.c.h.b16 %v6222
        %v6977 = vunpack.c.l.b16 %v6223
        %v6978 = vunpack.c.h.b16 %v6223
        %v6979 = vunpack.c.l.b16 %v6224
        %v6980 = vunpack.c.h.b16 %v6224
        %v6981 = vunpack.c.l.b16 %v6225
        %v6982 = vunpack.c.h.b16 %v6225
        %v6983 = vunpack.c.l.b16 %v6226
        %v6984 = vunpack.c.h.b16 %v6226
        %v6985 = vunpack.c.l.b16 %v6227
        %v6986 = vunpack.c.h.b16 %v6227
        %v6987 = vunpack.c.l.b16 %v6228
        %v6988 = vunpack.c.h.b16 %v6228
        %v6989 = vunpack.c.l.b16 %v6229
        %v6990 = vunpack.c.h.b16 %v6229
        %v6991 = vunpack.c.l.b16 %v6230
        %v6992 = vunpack.c.h.b16 %v6230
        %v6993 = vunpack.c.l.b16 %v6231
        %v6994 = vunpack.c.h.b16 %v6231
        %v6995 = vunpack.c.l.b16 %v6232
        %v6996 = vunpack.c.h.b16 %v6232
        %v6997 = vunpack.c.l.b16 %v6233
        %v6998 = vunpack.c.h.b16 %v6233
        %v6999 = vunpack.c.l.b16 %v6234
        %v7000 = vunpack.c.h.b16 %v6234
        %v7001 = vunpack.c.l.b16 %v6235
        %v7002 = vunpack.c.h.b16 %v6235
        %v7003 = vunpack.c.l.b16 %v6236
        %v7004 = vunpack.c.h.b16 %v6236
        %v7005 = vunpack.c.l.b16 %v6237
        %v7006 = vunpack.c.h.b16 %v6237
        %v7007 = vunpack.c.l.b16 %v6238
        %v7008 = vunpack.c.h.b16 %v6238
        %v7009 = vunpack.c.l.b16 %v6239
        %v7010 = vunpack.c.h.b16 %v6239
        %v7011 = vunpack.c.l.b16 %v6240
        %v7012 = vunpack.c.h.b16 %v6240
        %v7013 = vunpack.c.l.b16 %v6241
        %v7014 = vunpack.c.h.b16 %v6241
        %v7015 = vunpack.c.l.b16 %v6242
        %v7016 = vunpack.c.h.b16 %v6242
        %v7017 = vunpack.c.l.b16 %v6243
        %v7018 = vunpack.c.h.b16 %v6243
        %v7019 = vunpack.c.l.b16 %v6244
        %v7020 = vunpack.c.h.b16 %v6244
        %v7021 = vunpack.c.l.b16 %v6245
        %v7022 = vunpack.c.h.b16 %v6245
        %v7023 = vunpack.c.l.b16 %v6246
        %v7024 = vunpack.c.h.b16 %v6246
        %v7025 = vunpack.c.l.b16 %v6247
        %v7026 = vunpack.c.h.b16 %v6247
        %v7027 = vunpack.c.l.b16 %v6248
        %v7028 = vunpack.c.h.b16 %v6248
        %v7029 = vunpack.c.l.b16 %v6249
        %v7030 = vunpack.c.h.b16 %v6249
        %v7031 = vunpack.c.l.b16 %v6250
        %v7032 = vunpack.c.h.b16 %v6250
        %v7033 = vunpack.c.l.b16 %v6251
        %v7034 = vunpack.c.h.b16 %v6251
        %v7035 = vunpack.c.l.b16 %v6252
        %v7036 = vunpack.c.h.b16 %v6252
        %v7037 = vunpack.c.l.b16 %v6253
        %v7038 = vunpack.c.h.b16 %v6253
        %v7039 = vunpack.c.l.b16 %v6254
        %v7040 = vunpack.c.h.b16 %v6254
        %v7041 = vunpack.c.l.b16 %v6255
        %v7042 = vunpack.c.h.b16 %v6255
        %v7043 = vunpack.c.l.b16 %v6256
        %v7044 = vunpack.c.h.b16 %v6256
        %v7045 = vunpack.c.l.b16 %v6257
        %v7046 = vunpack.c.h.b16 %v6257
        %v7047 = vunpack.c.l.b16 %v6258
        %v7048 = vunpack.c.h.b16 %v6258
        %v7049 = vunpack.c.l.b16 %v6259
        %v7050 = vunpack.c.h.b16 %v6259
        %v7051 = vunpack.c.l.b16 %v6260
        %v7052 = vunpack.c.h.b16 %v6260
        %v7053 = vunpack.c.l.b16 %v6261
        %v7054 = vunpack.c.h.b16 %v6261
        %v7055 = vunpack.c.l.b16 %v6262
        %v7056 = vunpack.c.h.b16 %v6262
        %v7057 = vunpack.c.l.b16 %v6263
        %v7058 = vunpack.c.h.b16 %v6263
        %v7059 = vunpack.c.l.b16 %v6264
        %v7060 = vunpack.c.h.b16 %v6264
        %v7061 = vunpack.c.l.b16 %v6265
        %v7062 = vunpack.c.h.b16 %v6265
        %v7063 = vunpack.c.l.b16 %v6266
        %v7064 = vunpack.c.h.b16 %v6266
        %v7065 = vunpack.c.l.b16 %v6267
        %v7066 = vunpack.c.h.b16 %v6267
        %v7067 = vunpack.c.l.b16 %v6268
        %v7068 = vunpack.c.h.b16 %v6268
        %v7069 = vunpack.c.l.b16 %v6269
        %v7070 = vunpack.c.h.b16 %v6269
        %v7071 = vunpack.c.l.b16 %v6270
        %v7072 = vunpack.c.h.b16 %v6270
        %v7073 = vunpack.c.l.b16 %v6271
        %v7074 = vunpack.c.h.b16 %v6271
        %v7075 = vunpack.c.l.b16 %v6272
        %v7076 = vunpack.c.h.b16 %v6272
        %v7077 = vunpack.c.l.b16 %v6273
        %v7078 = vunpack.c.h.b16 %v6273
        %v7079 = vunpack.c.l.b16 %v6274
        %v7080 = vunpack.c.h.b16 %v6274
        %v7081 = vunpack.c.l.b16 %v6275
        %v7082 = vunpack.c.h.b16 %v6275
        %v7083 = vunpack.c.l.b16 %v6276
        %v7084 = vunpack.c.h.b16 %v6276
        %v7085 = vunpack.c.l.b16 %v6277
        %v7086 = vunpack.c.h.b16 %v6277
        %v7087 = vunpack.c.l.b16 %v6278
        %v7088 = vunpack.c.h.b16 %v6278
        %v7089 = vpack.c.b16 %v6585, %v6577
        %v7090 = vpack.c.b16 %v6586, %v6578
        %v7091 = vpack.c.b16 %v6587, %v6579
        %v7092 = vpack.c.b16 %v6588, %v6580
        %v7093 = vpack.c.b16 %v6589, %v6581
        %v7094 = vpack.c.b16 %v6590, %v6582
        %v7095 = vpack.c.b16 %v6591, %v6583
        %v7096 = vpack.c.b16 %v6592, %v6584
        %v7097 = vpack.c.b16 %v6601, %v6593
        %v7098 = vpack.c.b16 %v6602, %v6594
        %v7099 = vpack.c.b16 %v6603, %v6595
        %v7100 = vpack.c.b16 %v6604, %v6596
        %v7101 = vpack.c.b16 %v6605, %v6597
        %v7102 = vpack.c.b16 %v6606, %v6598
        %v7103 = vpack.c.b16 %v6607, %v6599
        %v7104 = vpack.c.b16 %v6608, %v6600
        %v7105 = vpack.c.b16 %v6617, %v6609
        %v7106 = vpack.c.b16 %v6618, %v6610
        %v7107 = vpack.c.b16 %v6619, %v6611
        %v7108 = vpack.c.b16 %v6620, %v6612
        %v7109 = vpack.c.b16 %v6621, %v6613
        %v7110 = vpack.c.b16 %v6622, %v6614
        %v7111 = vpack.c.b16 %v6623, %v6615
        %v7112 = vpack.c.b16 %v6624, %v6616
        %v7113 = vpack.c.b16 %v6633, %v6625
        %v7114 = vpack.c.b16 %v6634, %v6626
        %v7115 = vpack.c.b16 %v6635, %v6627
        %v7116 = vpack.c.b16 %v6636, %v6628
        %v7117 = vpack.c.b16 %v6637, %v6629
        %v7118 = vpack.c.b16 %v6638, %v6630
        %v7119 = vpack.c.b16 %v6639, %v6631
        %v7120 = vpack.c.b16 %v6640, %v6632
        %v7121 = vpack.c.b16 %v6649, %v6641
        %v7122 = vpack.c.b16 %v6650, %v6642
        %v7123 = vpack.c.b16 %v6651, %v6643
        %v7124 = vpack.c.b16 %v6652, %v6644
        %v7125 = vpack.c.b16 %v6653, %v6645
        %v7126 = vpack.c.b16 %v6654, %v6646
        %v7127 = vpack.c.b16 %v6655, %v6647
        %v7128 = vpack.c.b16 %v6656, %v6648
        %v7129 = vpack.c.b16 %v6665, %v6657
        %v7130 = vpack.c.b16 %v6666, %v6658
        %v7131 = vpack.c.b16 %v6667, %v6659
        %v7132 = vpack.c.b16 %v6668, %v6660
        %v7133 = vpack.c.b16 %v6669, %v6661
        %v7134 = vpack.c.b16 %v6670, %v6662
        %v7135 = vpack.c.b16 %v6671, %v6663
        %v7136 = vpack.c.b16 %v6672, %v6664
        %v7137 = vpack.c.b16 %v6681, %v6673
        %v7138 = vpack.c.b16 %v6682, %v6674
        %v7139 = vpack.c.b16 %v6683, %v6675
        %v7140 = vpack.c.b16 %v6684, %v6676
        %v7141 = vpack.c.b16 %v6685, %v6677
        %v7142 = vpack.c.b16 %v6686, %v6678
        %v7143 = vpack.c.b16 %v6687, %v6679
        %v7144 = vpack.c.b16 %v6688, %v6680
        %v7145 = vpack.c.b16 %v6697, %v6689
        %v7146 = vpack.c.b16 %v6698, %v6690
        %v7147 = vpack.c.b16 %v6699, %v6691
        %v7148 = vpack.c.b16 %v6700, %v6692
        %v7149 = vpack.c.b16 %v6701, %v6693
        %v7150 = vpack.c.b16 %v6702, %v6694
        %v7151 = vpack.c.b16 %v6703, %v6695
        %v7152 = vpack.c.b16 %v6704, %v6696
        %v7153 = vpack.c.b16 %v6713, %v6705
        %v7154 = vpack.c.b16 %v6714, %v6706
        %v7155 = vpack.c.b16 %v6715, %v6707
        %v7156 = vpack.c.b16 %v6716, %v6708
        %v7157 = vpack.c.b16 %v6717, %v6709
        %v7158 = vpack.c.b16 %v6718, %v6710
        %v7159 = vpack.c.b16 %v6719, %v6711
        %v7160 = vpack.c.b16 %v6720, %v6712
        %v7161 = vpack.c.b16 %v6729, %v6721
        %v7162 = vpack.c.b16 %v6730, %v6722
        %v7163 = vpack.c.b16 %v6731, %v6723
        %v7164 = vpack.c.b16 %v6732, %v6724
        %v7165 = vpack.c.b16 %v6733, %v6725
        %v7166 = vpack.c.b16 %v6734, %v6726
        %v7167 = vpack.c.b16 %v6735, %v6727
        %v7168 = vpack.c.b16 %v6736, %v6728
        %v7169 = vpack.c.b16 %v6745, %v6737
        %v7170 = vpack.c.b16 %v6746, %v6738
        %v7171 = vpack.c.b16 %v6747, %v6739
        %v7172 = vpack.c.b16 %v6748, %v6740
        %v7173 = vpack.c.b16 %v6749, %v6741
        %v7174 = vpack.c.b16 %v6750, %v6742
        %v7175 = vpack.c.b16 %v6751, %v6743
        %v7176 = vpack.c.b16 %v6752, %v6744
        %v7177 = vpack.c.b16 %v6761, %v6753
        %v7178 = vpack.c.b16 %v6762, %v6754
        %v7179 = vpack.c.b16 %v6763, %v6755
        %v7180 = vpack.c.b16 %v6764, %v6756
        %v7181 = vpack.c.b16 %v6765, %v6757
        %v7182 = vpack.c.b16 %v6766, %v6758
        %v7183 = vpack.c.b16 %v6767, %v6759
        %v7184 = vpack.c.b16 %v6768, %v6760
        %v7185 = vpack.c.b16 %v6777, %v6769
        %v7186 = vpack.c.b16 %v6778, %v6770
        %v7187 = vpack.c.b16 %v6779, %v6771
        %v7188 = vpack.c.b16 %v6780, %v6772
        %v7189 = vpack.c.b16 %v6781, %v6773
        %v7190 = vpack.c.b16 %v6782, %v6774
        %v7191 = vpack.c.b16 %v6783, %v6775
        %v7192 = vpack.c.b16 %v6784, %v6776
        %v7193 = vpack.c.b16 %v6793, %v6785
        %v7194 = vpack.c.b16 %v6794, %v6786
        %v7195 = vpack.c.b16 %v6795, %v6787
        %v7196 = vpack.c.b16 %v6796, %v6788
        %v7197 = vpack.c.b16 %v6797, %v6789
        %v7198 = vpack.c.b16 %v6798, %v6790
        %v7199 = vpack.c.b16 %v6799, %v6791
        %v7200 = vpack.c.b16 %v6800, %v6792
        %v7201 = vpack.c.b16 %v6809, %v6801
        %v7202 = vpack.c.b16 %v6810, %v6802
        %v7203 = vpack.c.b16 %v6811, %v6803
        %v7204 = vpack.c.b16 %v6812, %v6804
        %v7205 = vpack.c.b16 %v6813, %v6805
        %v7206 = vpack.c.b16 %v6814, %v6806
        %v7207 = vpack.c.b16 %v6815, %v6807
        %v7208 = vpack.c.b16 %v6816, %v6808
        %v7209 = vpack.c.b16 %v6825, %v6817
        %v7210 = vpack.c.b16 %v6826, %v6818
        %v7211 = vpack.c.b16 %v6827, %v6819
        %v7212 = vpack.c.b16 %v6828, %v6820
        %v7213 = vpack.c.b16 %v6829, %v6821
        %v7214 = vpack.c.b16 %v6830, %v6822
        %v7215 = vpack.c.b16 %v6831, %v6823
        %v7216 = vpack.c.b16 %v6832, %v6824
        %v7217 = vpack.c.b16 %v6841, %v6833
        %v7218 = vpack.c.b16 %v6842, %v6834
        %v7219 = vpack.c.b16 %v6843, %v6835
        %v7220 = vpack.c.b16 %v6844, %v6836
        %v7221 = vpack.c.b16 %v6845, %v6837
        %v7222 = vpack.c.b16 %v6846, %v6838
        %v7223 = vpack.c.b16 %v6847, %v6839
        %v7224 = vpack.c.b16 %v6848, %v6840
        %v7225 = vpack.c.b16 %v6857, %v6849
        %v7226 = vpack.c.b16 %v6858, %v6850
        %v7227 = vpack.c.b16 %v6859, %v6851
        %v7228 = vpack.c.b16 %v6860, %v6852
        %v7229 = vpack.c.b16 %v6861, %v6853
        %v7230 = vpack.c.b16 %v6862, %v6854
        %v7231 = vpack.c.b16 %v6863, %v6855
        %v7232 = vpack.c.b16 %v6864, %v6856
        %v7233 = vpack.c.b16 %v6873, %v6865
        %v7234 = vpack.c.b16 %v6874, %v6866
        %v7235 = vpack.c.b16 %v6875, %v6867
        %v7236 = vpack.c.b16 %v6876, %v6868
        %v7237 = vpack.c.b16 %v6877, %v6869
        %v7238 = vpack.c.b16 %v6878, %v6870
        %v7239 = vpack.c.b16 %v6879, %v6871
        %v7240 = vpack.c.b16 %v6880, %v6872
        %v7241 = vpack.c.b16 %v6889, %v6881
        %v7242 = vpack.c.b16 %v6890, %v6882
        %v7243 = vpack.c.b16 %v6891, %v6883
        %v7244 = vpack.c.b16 %v6892, %v6884
        %v7245 = vpack.c.b16 %v6893, %v6885
        %v7246 = vpack.c.b16 %v6894, %v6886
        %v7247 = vpack.c.b16 %v6895, %v6887
        %v7248 = vpack.c.b16 %v6896, %v6888
        %v7249 = vpack.c.b16 %v6905, %v6897
        %v7250 = vpack.c.b16 %v6906, %v6898
        %v7251 = vpack.c.b16 %v6907, %v6899
        %v7252 = vpack.c.b16 %v6908, %v6900
        %v7253 = vpack.c.b16 %v6909, %v6901
        %v7254 = vpack.c.b16 %v6910, %v6902
        %v7255 = vpack.c.b16 %v6911, %v6903
        %v7256 = vpack.c.b16 %v6912, %v6904
        %v7257 = vpack.c.b16 %v6921, %v6913
        %v7258 = vpack.c.b16 %v6922, %v6914
        %v7259 = vpack.c.b16 %v6923, %v6915
        %v7260 = vpack.c.b16 %v6924, %v6916
        %v7261 = vpack.c.b16 %v6925, %v6917
        %v7262 = vpack.c.b16 %v6926, %v6918
        %v7263 = vpack.c.b16 %v6927, %v6919
        %v7264 = vpack.c.b16 %v6928, %v6920
        %v7265 = vpack.c.b16 %v6937, %v6929
        %v7266 = vpack.c.b16 %v6938, %v6930
        %v7267 = vpack.c.b16 %v6939, %v6931
        %v7268 = vpack.c.b16 %v6940, %v6932
        %v7269 = vpack.c.b16 %v6941, %v6933
        %v7270 = vpack.c.b16 %v6942, %v6934
        %v7271 = vpack.c.b16 %v6943, %v6935
        %v7272 = vpack.c.b16 %v6944, %v6936
        %v7273 = vpack.c.b16 %v6953, %v6945
        %v7274 = vpack.c.b16 %v6954, %v6946
        %v7275 = vpack.c.b16 %v6955, %v6947
        %v7276 = vpack.c.b16 %v6956, %v6948
        %v7277 = vpack.c.b16 %v6957, %v6949
        %v7278 = vpack.c.b16 %v6958, %v6950
        %v7279 = vpack.c.b16 %v6959, %v6951
        %v7280 = vpack.c.b16 %v6960, %v6952
        %v7281 = vpack.c.b16 %v6969, %v6961
        %v7282 = vpack.c.b16 %v6970, %v6962
        %v7283 = vpack.c.b16 %v6971, %v6963
        %v7284 = vpack.c.b16 %v6972, %v6964
        %v7285 = vpack.c.b16 %v6973, %v6965
        %v7286 = vpack.c.b16 %v6974, %v6966
        %v7287 = vpack.c.b16 %v6975, %v6967
        %v7288 = vpack.c.b16 %v6976, %v6968
        %v7289 = vpack.c.b16 %v6985, %v6977
        %v7290 = vpack.c.b16 %v6986, %v6978
        %v7291 = vpack.c.b16 %v6987, %v6979
        %v7292 = vpack.c.b16 %v6988, %v6980
        %v7293 = vpack.c.b16 %v6989, %v6981
        %v7294 = vpack.c.b16 %v6990, %v6982
        %v7295 = vpack.c.b16 %v6991, %v6983
        %v7296 = vpack.c.b16 %v6992, %v6984
        %v7297 = vpack.c.b16 %v7001, %v6993
        %v7298 = vpack.c.b16 %v7002, %v6994
        %v7299 = vpack.c.b16 %v7003, %v6995
        %v7300 = vpack.c.b16 %v7004, %v6996
        %v7301 = vpack.c.b16 %v7005, %v6997
        %v7302 = vpack.c.b16 %v7006, %v6998
        %v7303 = vpack.c.b16 %v7007, %v6999
        %v7304 = vpack.c.b16 %v7008, %v7000
        %v7305 = vpack.c.b16 %v7017, %v7009
        %v7306 = vpack.c.b16 %v7018, %v7010
        %v7307 = vpack.c.b16 %v7019, %v7011
        %v7308 = vpack.c.b16 %v7020, %v7012
        %v7309 = vpack.c.b16 %v7021, %v7013
        %v7310 = vpack.c.b16 %v7022, %v7014
        %v7311 = vpack.c.b16 %v7023, %v7015
        %v7312 = vpack.c.b16 %v7024, %v7016
        %v7313 = vpack.c.b16 %v7033, %v7025
        %v7314 = vpack.c.b16 %v7034, %v7026
        %v7315 = vpack.c.b16 %v7035, %v7027
        %v7316 = vpack.c.b16 %v7036, %v7028
        %v7317 = vpack.c.b16 %v7037, %v7029
        %v7318 = vpack.c.b16 %v7038, %v7030
        %v7319 = vpack.c.b16 %v7039, %v7031
        %v7320 = vpack.c.b16 %v7040, %v7032
        %v7321 = vpack.c.b16 %v7049, %v7041
        %v7322 = vpack.c.b16 %v7050, %v7042
        %v7323 = vpack.c.b16 %v7051, %v7043
        %v7324 = vpack.c.b16 %v7052, %v7044
        %v7325 = vpack.c.b16 %v7053, %v7045
        %v7326 = vpack.c.b16 %v7054, %v7046
        %v7327 = vpack.c.b16 %v7055, %v7047
        %v7328 = vpack.c.b16 %v7056, %v7048
        %v7329 = vpack.c.b16 %v7065, %v7057
        %v7330 = vpack.c.b16 %v7066, %v7058
        %v7331 = vpack.c.b16 %v7067, %v7059
        %v7332 = vpack.c.b16 %v7068, %v7060
        %v7333 = vpack.c.b16 %v7069, %v7061
        %v7334 = vpack.c.b16 %v7070, %v7062
        %v7335 = vpack.c.b16 %v7071, %v7063
        %v7336 = vpack.c.b16 %v7072, %v7064
        %v7337 = vpack.c.b16 %v7081, %v7073
        %v7338 = vpack.c.b16 %v7082, %v7074
        %v7339 = vpack.c.b16 %v7083, %v7075
        %v7340 = vpack.c.b16 %v7084, %v7076
        %v7341 = vpack.c.b16 %v7085, %v7077
        %v7342 = vpack.c.b16 %v7086, %v7078
        %v7343 = vpack.c.b16 %v7087, %v7079
        %v7344 = vpack.c.b16 %v7088, %v7080
        %7601 = vmatprep.subr.bf16.mxu0 %v7090
        %7602 = vmatpush1.bf16.msra.mxu0 %v7089
        %7603 = vmatprep.subr.bf16.mxu0 %v7098
        %7604 = vmatpush1.bf16.msra.mxu0 %v7097
        %7605 = vmatprep.subr.bf16.mxu0 %v7106
        %7606 = vmatpush1.bf16.msra.mxu0 %v7105
        %7607 = vmatprep.subr.bf16.mxu0 %v7114
        %7608 = vmatpush1.bf16.msra.mxu0 %v7113
        %7609 = vmatprep.subr.bf16.mxu0 %v7122
        %7610 = vmatpush1.bf16.msra.mxu0 %v7121
        %7611 = vmatprep.subr.bf16.mxu0 %v7130
        %7612 = vmatpush1.bf16.msra.mxu0 %v7129
        %7613 = vmatprep.subr.bf16.mxu0 %v7138
        %7614 = vmatpush1.bf16.msra.mxu0 %v7137
        %7615 = vmatprep.subr.bf16.mxu0 %v7146
        %7616 = vmatpush1.bf16.msra.mxu0 %v7145
        %7617 = vmatprep.subr.bf16.mxu0 %v7154
        %7618 = vmatpush1.bf16.msra.mxu0 %v7153
        %7619 = vmatprep.subr.bf16.mxu0 %v7162
        %7620 = vmatpush1.bf16.msra.mxu0 %v7161
        %7621 = vmatprep.subr.bf16.mxu0 %v7170
        %7622 = vmatpush1.bf16.msra.mxu0 %v7169
        %7623 = vmatprep.subr.bf16.mxu0 %v7178
        %7624 = vmatpush1.bf16.msra.mxu0 %v7177
        %7625 = vmatprep.subr.bf16.mxu0 %v7186
        %7626 = vmatpush1.bf16.msra.mxu0 %v7185
        %7627 = vmatprep.subr.bf16.mxu0 %v7194
        %7628 = vmatpush1.bf16.msra.mxu0 %v7193
        %7629 = vmatprep.subr.bf16.mxu0 %v7202
        %7630 = vmatpush1.bf16.msra.mxu0 %v7201
        %7631 = vmatprep.subr.bf16.mxu0 %v7210
        %7632 = vmatpush1.bf16.msra.mxu0 %v7209
        %7633 = vmatprep.mubr.bf16.mxu0 %v5992
        %7634 = vmatmul.mubr.bf16.gmra.mrb[0].mxu0 %v5991
        %v7635 = vpop.f32.mrb[0].mxu0
        %v7636 = vadd.f32 %v6284, %v7635
        %v7637 = vpop.f32.mrb[0].mxu0
        %v7638 = vadd.f32 %v6288, %v7637
        %v7639 = vpop.f32.mrb[0].mxu0
        %v7640 = vadd.f32 %v6284, %v7639
        %v7641 = vpop.f32.mrb[0].mxu0
        %v7642 = vadd.f32 %v6288, %v7641
        %7643 = vmatprep.mubr.bf16.mxu0 %v5996
        %7644 = vmatmul.mubr.bf16.gmra.mrb[0].mxu0 %v5995
        %v7645 = vpop.f32.mrb[0].mxu0
        %v7646 = vadd.f32 %v6284, %v7645
        %v7647 = vpop.f32.mrb[0].mxu0
        %v7648 = vadd.f32 %v6288, %v7647
        %v7649 = vpop.f32.mrb[0].mxu0
        %v7650 = vadd.f32 %v6284, %v7649
        %v7651 = vpop.f32.mrb[0].mxu0
        %v7652 = vadd.f32 %v6288, %v7651
        %7653 = vmatprep.mubr.bf16.mxu0 %v6000
        %7654 = vmatmul.mubr.bf16.gmra.mrb[0].mxu0 %v5999
        %v7655 = vpop.f32.mrb[0].mxu0
        %v7656 = vadd.f32 %v6284, %v7655
        %v7657 = vpop.f32.mrb[0].mxu0
        %v7658 = vadd.f32 %v6288, %v7657
        %v7659 = vpop.f32.mrb[0].mxu0
        %v7660 = vadd.f32 %v6284, %v7659
        %v7661 = vpop.f32.mrb[0].mxu0
        %v7662 = vadd.f32 %v6288, %v7661
        %7663 = vmatprep.mubr.bf16.mxu0 %v6004
        %7664 = vmatmul.mubr.bf16.gmra.mrb[0].mxu0 %v6003
        %v7665 = vpop.f32.mrb[0].mxu0
        %v7666 = vadd.f32 %v6284, %v7665
        %v7667 = vpop.f32.mrb[0].mxu0
        %v7668 = vadd.f32 %v6288, %v7667
        %v7669 = vpop.f32.mrb[0].mxu0
        %v7670 = vadd.f32 %v6284, %v7669
        %v7671 = vpop.f32.mrb[0].mxu0
        %v7672 = vadd.f32 %v6288, %v7671
        %7673 = vmatprep.mubr.bf16.mxu0 %v6008
        %7674 = vmatmul.mubr.bf16.gmra.mrb[0].mxu0 %v6007
        %v7675 = vpop.f32.mrb[0].mxu0
        %v7676 = vadd.f32 %v6284, %v7675
        %v7677 = vpop.f32.mrb[0].mxu0
        %v7678 = vadd.f32 %v6288, %v7677
        %v7679 = vpop.f32.mrb[0].mxu0
        %v7680 = vadd.f32 %v6284, %v7679
        %v7681 = vpop.f32.mrb[0].mxu0
        %v7682 = vadd.f32 %v6288, %v7681
        %7683 = vmatprep.mubr.bf16.mxu0 %v6012
        %7684 = vmatmul.mubr.bf16.gmra.mrb[0].mxu0 %v6011
        %v7685 = vpop.f32.mrb[0].mxu0
        %v7686 = vadd.f32 %v6284, %v7685
        %v7687 = vpop.f32.mrb[0].mxu0
        %v7688 = vadd.f32 %v6288, %v7687
        %v7689 = vpop.f32.mrb[0].mxu0
        %v7690 = vadd.f32 %v6284, %v7689
        %v7691 = vpop.f32.mrb[0].mxu0
        %v7692 = vadd.f32 %v6288, %v7691
        %7693 = vmatprep.mubr.bf16.mxu0 %v6016
        %7694 = vmatmul.mubr.bf16.gmra.mrb[0].mxu0 %v6015
        %v7695 = vpop.f32.mrb[0].mxu0
        %v7696 = vadd.f32 %v6284, %v7695
        %v7697 = vpop.f32.mrb[0].mxu0
        %v7698 = vadd.f32 %v6288, %v7697
        %v7699 = vpop.f32.mrb[0].mxu0
        %v7700 = vadd.f32 %v6284, %v7699
        %v7701 = vpop.f32.mrb[0].mxu0
        %v7702 = vadd.f32 %v6288, %v7701
        %7703 = vmatprep.mubr.bf16.mxu0 %v6020
        %7704 = vmatmul.mubr.bf16.gmra.mrb[0].mxu0 %v6019
        %v7705 = vpop.f32.mrb[0].mxu0
        %v7706 = vadd.f32 %v6284, %v7705
        %v7707 = vpop.f32.mrb[0].mxu0
        %v7708 = vadd.f32 %v6288, %v7707
        %v7709 = vpop.f32.mrb[0].mxu0
        %v7710 = vadd.f32 %v6284, %v7709
        %v7711 = vpop.f32.mrb[0].mxu0
        %v7712 = vadd.f32 %v6288, %v7711
        %7713 = vdwg.mxu0
        %7714 = vmatprep.subr.bf16.mxu0 %v7218
        %7715 = vmatpush1.bf16.msra.mxu0 %v7217
        %7716 = vmatprep.subr.bf16.mxu0 %v7226
        %7717 = vmatpush1.bf16.msra.mxu0 %v7225
        %7718 = vmatprep.subr.bf16.mxu0 %v7234
        %7719 = vmatpush1.bf16.msra.mxu0 %v7233
        %7720 = vmatprep.subr.bf16.mxu0 %v7242
        %7721 = vmatpush1.bf16.msra.mxu0 %v7241
        %7722 = vmatprep.subr.bf16.mxu0 %v7250
        %7723 = vmatpush1.bf16.msra.mxu0 %v7249
        %7724 = vmatprep.subr.bf16.mxu0 %v7258
        %7725 = vmatpush1.bf16.msra.mxu0 %v7257
        %7726 = vmatprep.subr.bf16.mxu0 %v7266
        %7727 = vmatpush1.bf16.msra.mxu0 %v7265
        %7728 = vmatprep.subr.bf16.mxu0 %v7274
        %7729 = vmatpush1.bf16.msra.mxu0 %v7273
        %7730 = vmatprep.subr.bf16.mxu0 %v7282
        %7731 = vmatpush1.bf16.msra.mxu0 %v7281
        %7732 = vmatprep.subr.bf16.mxu0 %v7290
        %7733 = vmatpush1.bf16.msra.mxu0 %v7289
        %7734 = vmatprep.subr.bf16.mxu0 %v7298
        %7735 = vmatpush1.bf16.msra.mxu0 %v7297
        %7736 = vmatprep.subr.bf16.mxu0 %v7306
        %7737 = vmatpush1.bf16.msra.mxu0 %v7305
        %7738 = vmatprep.subr.bf16.mxu0 %v7314
        %7739 = vmatpush1.bf16.msra.mxu0 %v7313
        %7740 = vmatprep.subr.bf16.mxu0 %v7322
        %7741 = vmatpush1.bf16.msra.mxu0 %v7321
        %7742 = vmatprep.subr.bf16.mxu0 %v7330
        %7743 = vmatpush1.bf16.msra.mxu0 %v7329
        %7744 = vmatprep.subr.bf16.mxu0 %v7338
        %7745 = vmatpush1.bf16.msra.mxu0 %v7337
        %7746 = vmatprep.mubr.bf16.mxu0 %v5994
        %7747 = vmatmul.mubr.bf16.gmra.mrb[0].mxu0 %v5993
        %v7748 = vpop.f32.mrb[0].mxu0
        %v7749 = vadd.f32 %v7636, %v7748
        %v7750 = vpop.f32.mrb[0].mxu0
        %v7751 = vadd.f32 %v7638, %v7750
        %v7752 = vpop.f32.mrb[0].mxu0
        %v7753 = vadd.f32 %v7640, %v7752
        %v7754 = vpop.f32.mrb[0].mxu0
        %v7755 = vadd.f32 %v7642, %v7754
        %7756 = vmatprep.mubr.bf16.mxu0 %v5998
        %7757 = vmatmul.mubr.bf16.gmra.mrb[0].mxu0 %v5997
        %v7758 = vpop.f32.mrb[0].mxu0
        %v7759 = vadd.f32 %v7646, %v7758
        %v7760 = vpop.f32.mrb[0].mxu0
        %v7761 = vadd.f32 %v7648, %v7760
        %v7762 = vpop.f32.mrb[0].mxu0
        %v7763 = vadd.f32 %v7650, %v7762
        %v7764 = vpop.f32.mrb[0].mxu0
        %v7765 = vadd.f32 %v7652, %v7764
        %7766 = vmatprep.mubr.bf16.mxu0 %v6002
        %7767 = vmatmul.mubr.bf16.gmra.mrb[0].mxu0 %v6001
        %v7768 = vpop.f32.mrb[0].mxu0
        %v7769 = vadd.f32 %v7656, %v7768
        %v7770 = vpop.f32.mrb[0].mxu0
        %v7771 = vadd.f32 %v7658, %v7770
        %v7772 = vpop.f32.mrb[0].mxu0
        %v7773 = vadd.f32 %v7660, %v7772
        %v7774 = vpop.f32.mrb[0].mxu0
        %v7775 = vadd.f32 %v7662, %v7774
        %7776 = vmatprep.mubr.bf16.mxu0 %v6006
        %7777 = vmatmul.mubr.bf16.gmra.mrb[0].mxu0 %v6005
        %v7778 = vpop.f32.mrb[0].mxu0
        %v7779 = vadd.f32 %v7666, %v7778
        %v7780 = vpop.f32.mrb[0].mxu0
        %v7781 = vadd.f32 %v7668, %v7780
        %v7782 = vpop.f32.mrb[0].mxu0
        %v7783 = vadd.f32 %v7670, %v7782
        %v7784 = vpop.f32.mrb[0].mxu0
        %v7785 = vadd.f32 %v7672, %v7784
        %7786 = vmatprep.mubr.bf16.mxu0 %v6010
        %7787 = vmatmul.mubr.bf16.gmra.mrb[0].mxu0 %v6009
        %v7788 = vpop.f32.mrb[0].mxu0
        %v7789 = vadd.f32 %v7676, %v7788
        %v7790 = vpop.f32.mrb[0].mxu0
        %v7791 = vadd.f32 %v7678, %v7790
        %v7792 = vpop.f32.mrb[0].mxu0
        %v7793 = vadd.f32 %v7680, %v7792
        %v7794 = vpop.f32.mrb[0].mxu0
        %v7795 = vadd.f32 %v7682, %v7794
        %7796 = vmatprep.mubr.bf16.mxu0 %v6014
        %7797 = vmatmul.mubr.bf16.gmra.mrb[0].mxu0 %v6013
        %v7798 = vpop.f32.mrb[0].mxu0
        %v7799 = vadd.f32 %v7686, %v7798
        %v7800 = vpop.f32.mrb[0].mxu0
        %v7801 = vadd.f32 %v7688, %v7800
        %v7802 = vpop.f32.mrb[0].mxu0
        %v7803 = vadd.f32 %v7690, %v7802
        %v7804 = vpop.f32.mrb[0].mxu0
        %v7805 = vadd.f32 %v7692, %v7804
        %7806 = vmatprep.mubr.bf16.mxu0 %v6018
        %7807 = vmatmul.mubr.bf16.gmra.mrb[0].mxu0 %v6017
        %v7808 = vpop.f32.mrb[0].mxu0
        %v7809 = vadd.f32 %v7696, %v7808
        %v7810 = vpop.f32.mrb[0].mxu0
        %v7811 = vadd.f32 %v7698, %v7810
        %v7812 = vpop.f32.mrb[0].mxu0
        %v7813 = vadd.f32 %v7700, %v7812
        %v7814 = vpop.f32.mrb[0].mxu0
        %v7815 = vadd.f32 %v7702, %v7814
        %7816 = vmatprep.mubr.bf16.mxu0 %v6022
        %7817 = vmatmul.mubr.bf16.gmra.mrb[0].mxu0 %v6021
        %v7818 = vpop.f32.mrb[0].mxu0
        %v7819 = vadd.f32 %v7706, %v7818
        %v7820 = vpop.f32.mrb[0].mxu0
        %v7821 = vadd.f32 %v7708, %v7820
        %v7822 = vpop.f32.mrb[0].mxu0
        %v7823 = vadd.f32 %v7710, %v7822
        %v7824 = vpop.f32.mrb[0].mxu0
        %v7825 = vadd.f32 %v7712, %v7824
        %7826 = vdwg.mxu0
        %7827 = vmatprep.subr.bf16.mxu0 %v7092
        %7828 = vmatpush1.bf16.msra.mxu0 %v7091
        %7829 = vmatprep.subr.bf16.mxu0 %v7100
        %7830 = vmatpush1.bf16.msra.mxu0 %v7099
        %7831 = vmatprep.subr.bf16.mxu0 %v7108
        %7832 = vmatpush1.bf16.msra.mxu0 %v7107
        %7833 = vmatprep.subr.bf16.mxu0 %v7116
        %7834 = vmatpush1.bf16.msra.mxu0 %v7115
        %7835 = vmatprep.subr.bf16.mxu0 %v7124
        %7836 = vmatpush1.bf16.msra.mxu0 %v7123
        %7837 = vmatprep.subr.bf16.mxu0 %v7132
        %7838 = vmatpush1.bf16.msra.mxu0 %v7131
        %7839 = vmatprep.subr.bf16.mxu0 %v7140
        %7840 = vmatpush1.bf16.msra.mxu0 %v7139
        %7841 = vmatprep.subr.bf16.mxu0 %v7148
        %7842 = vmatpush1.bf16.msra.mxu0 %v7147
        %7843 = vmatprep.subr.bf16.mxu0 %v7156
        %7844 = vmatpush1.bf16.msra.mxu0 %v7155
        %7845 = vmatprep.subr.bf16.mxu0 %v7164
        %7846 = vmatpush1.bf16.msra.mxu0 %v7163
        %7847 = vmatprep.subr.bf16.mxu0 %v7172
        %7848 = vmatpush1.bf16.msra.mxu0 %v7171
        %7849 = vmatprep.subr.bf16.mxu0 %v7180
        %7850 = vmatpush1.bf16.msra.mxu0 %v7179
        %7851 = vmatprep.subr.bf16.mxu0 %v7188
        %7852 = vmatpush1.bf16.msra.mxu0 %v7187
        %7853 = vmatprep.subr.bf16.mxu0 %v7196
        %7854 = vmatpush1.bf16.msra.mxu0 %v7195
        %7855 = vmatprep.subr.bf16.mxu0 %v7204
        %7856 = vmatpush1.bf16.msra.mxu0 %v7203
        %7857 = vmatprep.subr.bf16.mxu0 %v7212
        %7858 = vmatpush1.bf16.msra.mxu0 %v7211
        %7859 = vmatprep.mubr.bf16.mxu0 %v5992
        %7860 = vmatmul.mubr.bf16.gmra.mrb[0].mxu0 %v5991
        %v7861 = vpop.f32.mrb[0].mxu0
        %v7862 = vadd.f32 %v6292, %v7861
        %v7863 = vpop.f32.mrb[0].mxu0
        %v7864 = vadd.f32 %v6296, %v7863
        %v7865 = vpop.f32.mrb[0].mxu0
        %v7866 = vadd.f32 %v6292, %v7865
        %v7867 = vpop.f32.mrb[0].mxu0
        %v7868 = vadd.f32 %v6296, %v7867
        %7869 = vmatprep.mubr.bf16.mxu0 %v5996
        %7870 = vmatmul.mubr.bf16.gmra.mrb[0].mxu0 %v5995
        %v7871 = vpop.f32.mrb[0].mxu0
        %v7872 = vadd.f32 %v6292, %v7871
        %v7873 = vpop.f32.mrb[0].mxu0
        %v7874 = vadd.f32 %v6296, %v7873
        %v7875 = vpop.f32.mrb[0].mxu0
        %v7876 = vadd.f32 %v6292, %v7875
        %v7877 = vpop.f32.mrb[0].mxu0
        %v7878 = vadd.f32 %v6296, %v7877
        %7879 = vmatprep.mubr.bf16.mxu0 %v6000
        %7880 = vmatmul.mubr.bf16.gmra.mrb[0].mxu0 %v5999
        %v7881 = vpop.f32.mrb[0].mxu0
        %v7882 = vadd.f32 %v6292, %v7881
        %v7883 = vpop.f32.mrb[0].mxu0
        %v7884 = vadd.f32 %v6296, %v7883
        %v7885 = vpop.f32.mrb[0].mxu0
        %v7886 = vadd.f32 %v6292, %v7885
        %v7887 = vpop.f32.mrb[0].mxu0
        %v7888 = vadd.f32 %v6296, %v7887
        %7889 = vmatprep.mubr.bf16.mxu0 %v6004
        %7890 = vmatmul.mubr.bf16.gmra.mrb[0].mxu0 %v6003
        %v7891 = vpop.f32.mrb[0].mxu0
        %v7892 = vadd.f32 %v6292, %v7891
        %v7893 = vpop.f32.mrb[0].mxu0
        %v7894 = vadd.f32 %v6296, %v7893
        %v7895 = vpop.f32.mrb[0].mxu0
        %v7896 = vadd.f32 %v6292, %v7895
        %v7897 = vpop.f32.mrb[0].mxu0
        %v7898 = vadd.f32 %v6296, %v7897
        %7899 = vmatprep.mubr.bf16.mxu0 %v6008
        %7900 = vmatmul.mubr.bf16.gmra.mrb[0].mxu0 %v6007
        %v7901 = vpop.f32.mrb[0].mxu0
        %v7902 = vadd.f32 %v6292, %v7901
        %v7903 = vpop.f32.mrb[0].mxu0
        %v7904 = vadd.f32 %v6296, %v7903
        %v7905 = vpop.f32.mrb[0].mxu0
        %v7906 = vadd.f32 %v6292, %v7905
        %v7907 = vpop.f32.mrb[0].mxu0
        %v7908 = vadd.f32 %v6296, %v7907
        %7909 = vmatprep.mubr.bf16.mxu0 %v6012
        %7910 = vmatmul.mubr.bf16.gmra.mrb[0].mxu0 %v6011
        %v7911 = vpop.f32.mrb[0].mxu0
        %v7912 = vadd.f32 %v6292, %v7911
        %v7913 = vpop.f32.mrb[0].mxu0
        %v7914 = vadd.f32 %v6296, %v7913
        %v7915 = vpop.f32.mrb[0].mxu0
        %v7916 = vadd.f32 %v6292, %v7915
        %v7917 = vpop.f32.mrb[0].mxu0
        %v7918 = vadd.f32 %v6296, %v7917
        %7919 = vmatprep.mubr.bf16.mxu0 %v6016
        %7920 = vmatmul.mubr.bf16.gmra.mrb[0].mxu0 %v6015
        %v7921 = vpop.f32.mrb[0].mxu0
        %v7922 = vadd.f32 %v6292, %v7921
        %v7923 = vpop.f32.mrb[0].mxu0
        %v7924 = vadd.f32 %v6296, %v7923
        %v7925 = vpop.f32.mrb[0].mxu0
        %v7926 = vadd.f32 %v6292, %v7925
        %v7927 = vpop.f32.mrb[0].mxu0
        %v7928 = vadd.f32 %v6296, %v7927
        %7929 = vmatprep.mubr.bf16.mxu0 %v6020
        %7930 = vmatmul.mubr.bf16.gmra.mrb[0].mxu0 %v6019
        %v7931 = vpop.f32.mrb[0].mxu0
        %v7932 = vadd.f32 %v6292, %v7931
        %v7933 = vpop.f32.mrb[0].mxu0
        %v7934 = vadd.f32 %v6296, %v7933
        %v7935 = vpop.f32.mrb[0].mxu0
        %v7936 = vadd.f32 %v6292, %v7935
        %v7937 = vpop.f32.mrb[0].mxu0
        %v7938 = vadd.f32 %v6296, %v7937
        %7939 = vdwg.mxu0
        %7940 = vmatprep.subr.bf16.mxu0 %v7220
        %7941 = vmatpush1.bf16.msra.mxu0 %v7219
        %7942 = vmatprep.subr.bf16.mxu0 %v7228
        %7943 = vmatpush1.bf16.msra.mxu0 %v7227
        %7944 = vmatprep.subr.bf16.mxu0 %v7236
        %7945 = vmatpush1.bf16.msra.mxu0 %v7235
        %7946 = vmatprep.subr.bf16.mxu0 %v7244
        %7947 = vmatpush1.bf16.msra.mxu0 %v7243
        %7948 = vmatprep.subr.bf16.mxu0 %v7252
        %7949 = vmatpush1.bf16.msra.mxu0 %v7251
        %7950 = vmatprep.subr.bf16.mxu0 %v7260
        %7951 = vmatpush1.bf16.msra.mxu0 %v7259
        %7952 = vmatprep.subr.bf16.mxu0 %v7268
        %7953 = vmatpush1.bf16.msra.mxu0 %v7267
        %7954 = vmatprep.subr.bf16.mxu0 %v7276
        %7955 = vmatpush1.bf16.msra.mxu0 %v7275
        %7956 = vmatprep.subr.bf16.mxu0 %v7284
        %7957 = vmatpush1.bf16.msra.mxu0 %v7283
        %7958 = vmatprep.subr.bf16.mxu0 %v7292
        %7959 = vmatpush1.bf16.msra.mxu0 %v7291
        %7960 = vmatprep.subr.bf16.mxu0 %v7300
        %7961 = vmatpush1.bf16.msra.mxu0 %v7299
        %7962 = vmatprep.subr.bf16.mxu0 %v7308
        %7963 = vmatpush1.bf16.msra.mxu0 %v7307
        %7964 = vmatprep.subr.bf16.mxu0 %v7316
        %7965 = vmatpush1.bf16.msra.mxu0 %v7315
        %7966 = vmatprep.subr.bf16.mxu0 %v7324
        %7967 = vmatpush1.bf16.msra.mxu0 %v7323
        %7968 = vmatprep.subr.bf16.mxu0 %v7332
        %7969 = vmatpush1.bf16.msra.mxu0 %v7331
        %7970 = vmatprep.subr.bf16.mxu0 %v7340
        %7971 = vmatpush1.bf16.msra.mxu0 %v7339
        %7972 = vmatprep.mubr.bf16.mxu0 %v5994
        %7973 = vmatmul.mubr.bf16.gmra.mrb[0].mxu0 %v5993
        %v7974 = vpop.f32.mrb[0].mxu0
        %v7975 = vadd.f32 %v7862, %v7974
        %v7976 = vpop.f32.mrb[0].mxu0
        %v7977 = vadd.f32 %v7864, %v7976
        %v7978 = vpop.f32.mrb[0].mxu0
        %v7979 = vadd.f32 %v7866, %v7978
        %v7980 = vpop.f32.mrb[0].mxu0
        %v7981 = vadd.f32 %v7868, %v7980
        %7982 = vmatprep.mubr.bf16.mxu0 %v5998
        %7983 = vmatmul.mubr.bf16.gmra.mrb[0].mxu0 %v5997
        %v7984 = vpop.f32.mrb[0].mxu0
        %v7985 = vadd.f32 %v7872, %v7984
        %v7986 = vpop.f32.mrb[0].mxu0
        %v7987 = vadd.f32 %v7874, %v7986
        %v7988 = vpop.f32.mrb[0].mxu0
        %v7989 = vadd.f32 %v7876, %v7988
        %v7990 = vpop.f32.mrb[0].mxu0
        %v7991 = vadd.f32 %v7878, %v7990
        %7992 = vmatprep.mubr.bf16.mxu0 %v6002
        %7993 = vmatmul.mubr.bf16.gmra.mrb[0].mxu0 %v6001
        %v7994 = vpop.f32.mrb[0].mxu0
        %v7995 = vadd.f32 %v7882, %v7994
        %v7996 = vpop.f32.mrb[0].mxu0
        %v7997 = vadd.f32 %v7884, %v7996
        %v7998 = vpop.f32.mrb[0].mxu0
        %v7999 = vadd.f32 %v7886, %v7998
        %v8000 = vpop.f32.mrb[0].mxu0
        %v8001 = vadd.f32 %v7888, %v8000
        %8002 = vmatprep.mubr.bf16.mxu0 %v6006
        %8003 = vmatmul.mubr.bf16.gmra.mrb[0].mxu0 %v6005
        %v8004 = vpop.f32.mrb[0].mxu0
        %v8005 = vadd.f32 %v7892, %v8004
        %v8006 = vpop.f32.mrb[0].mxu0
        %v8007 = vadd.f32 %v7894, %v8006
        %v8008 = vpop.f32.mrb[0].mxu0
        %v8009 = vadd.f32 %v7896, %v8008
        %v8010 = vpop.f32.mrb[0].mxu0
        %v8011 = vadd.f32 %v7898, %v8010
        %8012 = vmatprep.mubr.bf16.mxu0 %v6010
        %8013 = vmatmul.mubr.bf16.gmra.mrb[0].mxu0 %v6009
        %v8014 = vpop.f32.mrb[0].mxu0
        %v8015 = vadd.f32 %v7902, %v8014
        %v8016 = vpop.f32.mrb[0].mxu0
        %v8017 = vadd.f32 %v7904, %v8016
        %v8018 = vpop.f32.mrb[0].mxu0
        %v8019 = vadd.f32 %v7906, %v8018
        %v8020 = vpop.f32.mrb[0].mxu0
        %v8021 = vadd.f32 %v7908, %v8020
        %8022 = vmatprep.mubr.bf16.mxu0 %v6014
        %8023 = vmatmul.mubr.bf16.gmra.mrb[0].mxu0 %v6013
        %v8024 = vpop.f32.mrb[0].mxu0
        %v8025 = vadd.f32 %v7912, %v8024
        %v8026 = vpop.f32.mrb[0].mxu0
        %v8027 = vadd.f32 %v7914, %v8026
        %v8028 = vpop.f32.mrb[0].mxu0
        %v8029 = vadd.f32 %v7916, %v8028
        %v8030 = vpop.f32.mrb[0].mxu0
        %v8031 = vadd.f32 %v7918, %v8030
        %8032 = vmatprep.mubr.bf16.mxu0 %v6018
        %8033 = vmatmul.mubr.bf16.gmra.mrb[0].mxu0 %v6017
        %v8034 = vpop.f32.mrb[0].mxu0
        %v8035 = vadd.f32 %v7922, %v8034
        %v8036 = vpop.f32.mrb[0].mxu0
        %v8037 = vadd.f32 %v7924, %v8036
        %v8038 = vpop.f32.mrb[0].mxu0
        %v8039 = vadd.f32 %v7926, %v8038
        %v8040 = vpop.f32.mrb[0].mxu0
        %v8041 = vadd.f32 %v7928, %v8040
        %8042 = vmatprep.mubr.bf16.mxu0 %v6022
        %8043 = vmatmul.mubr.bf16.gmra.mrb[0].mxu0 %v6021
        %v8044 = vpop.f32.mrb[0].mxu0
        %v8045 = vadd.f32 %v7932, %v8044
        %v8046 = vpop.f32.mrb[0].mxu0
        %v8047 = vadd.f32 %v7934, %v8046
        %v8048 = vpop.f32.mrb[0].mxu0
        %v8049 = vadd.f32 %v7936, %v8048
        %v8050 = vpop.f32.mrb[0].mxu0
        %v8051 = vadd.f32 %v7938, %v8050
        %8052 = vdwg.mxu0
        %8053 = vmatprep.subr.bf16.mxu0 %v7094
        %8054 = vmatpush1.bf16.msra.mxu0 %v7093
        %8055 = vmatprep.subr.bf16.mxu0 %v7102
        %8056 = vmatpush1.bf16.msra.mxu0 %v7101
        %8057 = vmatprep.subr.bf16.mxu0 %v7110
        %8058 = vmatpush1.bf16.msra.mxu0 %v7109
        %8059 = vmatprep.subr.bf16.mxu0 %v7118
        %8060 = vmatpush1.bf16.msra.mxu0 %v7117
        %8061 = vmatprep.subr.bf16.mxu0 %v7126
        %8062 = vmatpush1.bf16.msra.mxu0 %v7125
        %8063 = vmatprep.subr.bf16.mxu0 %v7134
        %8064 = vmatpush1.bf16.msra.mxu0 %v7133
        %8065 = vmatprep.subr.bf16.mxu0 %v7142
        %8066 = vmatpush1.bf16.msra.mxu0 %v7141
        %8067 = vmatprep.subr.bf16.mxu0 %v7150
        %8068 = vmatpush1.bf16.msra.mxu0 %v7149
        %8069 = vmatprep.subr.bf16.mxu0 %v7158
        %8070 = vmatpush1.bf16.msra.mxu0 %v7157
        %8071 = vmatprep.subr.bf16.mxu0 %v7166
        %8072 = vmatpush1.bf16.msra.mxu0 %v7165
        %8073 = vmatprep.subr.bf16.mxu0 %v7174
        %8074 = vmatpush1.bf16.msra.mxu0 %v7173
        %8075 = vmatprep.subr.bf16.mxu0 %v7182
        %8076 = vmatpush1.bf16.msra.mxu0 %v7181
        %8077 = vmatprep.subr.bf16.mxu0 %v7190
        %8078 = vmatpush1.bf16.msra.mxu0 %v7189
        %8079 = vmatprep.subr.bf16.mxu0 %v7198
        %8080 = vmatpush1.bf16.msra.mxu0 %v7197
        %8081 = vmatprep.subr.bf16.mxu0 %v7206
        %8082 = vmatpush1.bf16.msra.mxu0 %v7205
        %8083 = vmatprep.subr.bf16.mxu0 %v7214
        %8084 = vmatpush1.bf16.msra.mxu0 %v7213
        %8085 = vmatprep.mubr.bf16.mxu0 %v5992
        %8086 = vmatmul.mubr.bf16.gmra.mrb[0].mxu0 %v5991
        %v8087 = vpop.f32.mrb[0].mxu0
        %v8088 = vadd.f32 %v6300, %v8087
        %v8089 = vpop.f32.mrb[0].mxu0
        %v8090 = vadd.f32 %v6304, %v8089
        %v8091 = vpop.f32.mrb[0].mxu0
        %v8092 = vadd.f32 %v6300, %v8091
        %v8093 = vpop.f32.mrb[0].mxu0
        %v8094 = vadd.f32 %v6304, %v8093
        %8095 = vmatprep.mubr.bf16.mxu0 %v5996
        %8096 = vmatmul.mubr.bf16.gmra.mrb[0].mxu0 %v5995
        %v8097 = vpop.f32.mrb[0].mxu0
        %v8098 = vadd.f32 %v6300, %v8097
        %v8099 = vpop.f32.mrb[0].mxu0
        %v8100 = vadd.f32 %v6304, %v8099
        %v8101 = vpop.f32.mrb[0].mxu0
        %v8102 = vadd.f32 %v6300, %v8101
        %v8103 = vpop.f32.mrb[0].mxu0
        %v8104 = vadd.f32 %v6304, %v8103
        %8105 = vmatprep.mubr.bf16.mxu0 %v6000
        %8106 = vmatmul.mubr.bf16.gmra.mrb[0].mxu0 %v5999
        %v8107 = vpop.f32.mrb[0].mxu0
        %v8108 = vadd.f32 %v6300, %v8107
        %v8109 = vpop.f32.mrb[0].mxu0
        %v8110 = vadd.f32 %v6304, %v8109
        %v8111 = vpop.f32.mrb[0].mxu0
        %v8112 = vadd.f32 %v6300, %v8111
        %v8113 = vpop.f32.mrb[0].mxu0
        %v8114 = vadd.f32 %v6304, %v8113
        %8115 = vmatprep.mubr.bf16.mxu0 %v6004
        %8116 = vmatmul.mubr.bf16.gmra.mrb[0].mxu0 %v6003
        %v8117 = vpop.f32.mrb[0].mxu0
        %v8118 = vadd.f32 %v6300, %v8117
        %v8119 = vpop.f32.mrb[0].mxu0
        %v8120 = vadd.f32 %v6304, %v8119
        %v8121 = vpop.f32.mrb[0].mxu0
        %v8122 = vadd.f32 %v6300, %v8121
        %v8123 = vpop.f32.mrb[0].mxu0
        %v8124 = vadd.f32 %v6304, %v8123
        %8125 = vmatprep.mubr.bf16.mxu0 %v6008
        %8126 = vmatmul.mubr.bf16.gmra.mrb[0].mxu0 %v6007
        %v8127 = vpop.f32.mrb[0].mxu0
        %v8128 = vadd.f32 %v6300, %v8127
        %v8129 = vpop.f32.mrb[0].mxu0
        %v8130 = vadd.f32 %v6304, %v8129
        %v8131 = vpop.f32.mrb[0].mxu0
        %v8132 = vadd.f32 %v6300, %v8131
        %v8133 = vpop.f32.mrb[0].mxu0
        %v8134 = vadd.f32 %v6304, %v8133
        %8135 = vmatprep.mubr.bf16.mxu0 %v6012
        %8136 = vmatmul.mubr.bf16.gmra.mrb[0].mxu0 %v6011
        %v8137 = vpop.f32.mrb[0].mxu0
        %v8138 = vadd.f32 %v6300, %v8137
        %v8139 = vpop.f32.mrb[0].mxu0
        %v8140 = vadd.f32 %v6304, %v8139
        %v8141 = vpop.f32.mrb[0].mxu0
        %v8142 = vadd.f32 %v6300, %v8141
        %v8143 = vpop.f32.mrb[0].mxu0
        %v8144 = vadd.f32 %v6304, %v8143
        %8145 = vmatprep.mubr.bf16.mxu0 %v6016
        %8146 = vmatmul.mubr.bf16.gmra.mrb[0].mxu0 %v6015
        %v8147 = vpop.f32.mrb[0].mxu0
        %v8148 = vadd.f32 %v6300, %v8147
        %v8149 = vpop.f32.mrb[0].mxu0
        %v8150 = vadd.f32 %v6304, %v8149
        %v8151 = vpop.f32.mrb[0].mxu0
        %v8152 = vadd.f32 %v6300, %v8151
        %v8153 = vpop.f32.mrb[0].mxu0
        %v8154 = vadd.f32 %v6304, %v8153
        %8155 = vmatprep.mubr.bf16.mxu0 %v6020
        %8156 = vmatmul.mubr.bf16.gmra.mrb[0].mxu0 %v6019
        %v8157 = vpop.f32.mrb[0].mxu0
        %v8158 = vadd.f32 %v6300, %v8157
        %v8159 = vpop.f32.mrb[0].mxu0
        %v8160 = vadd.f32 %v6304, %v8159
        %v8161 = vpop.f32.mrb[0].mxu0
        %v8162 = vadd.f32 %v6300, %v8161
        %v8163 = vpop.f32.mrb[0].mxu0
        %v8164 = vadd.f32 %v6304, %v8163
        %8165 = vdwg.mxu0
        %8166 = vmatprep.subr.bf16.mxu0 %v7222
        %8167 = vmatpush1.bf16.msra.mxu0 %v7221
        %8168 = vmatprep.subr.bf16.mxu0 %v7230
        %8169 = vmatpush1.bf16.msra.mxu0 %v7229
        %8170 = vmatprep.subr.bf16.mxu0 %v7238
        %8171 = vmatpush1.bf16.msra.mxu0 %v7237
        %8172 = vmatprep.subr.bf16.mxu0 %v7246
        %8173 = vmatpush1.bf16.msra.mxu0 %v7245
        %8174 = vmatprep.subr.bf16.mxu0 %v7254
        %8175 = vmatpush1.bf16.msra.mxu0 %v7253
        %8176 = vmatprep.subr.bf16.mxu0 %v7262
        %8177 = vmatpush1.bf16.msra.mxu0 %v7261
        %8178 = vmatprep.subr.bf16.mxu0 %v7270
        %8179 = vmatpush1.bf16.msra.mxu0 %v7269
        %8180 = vmatprep.subr.bf16.mxu0 %v7278
        %8181 = vmatpush1.bf16.msra.mxu0 %v7277
        %8182 = vmatprep.subr.bf16.mxu0 %v7286
        %8183 = vmatpush1.bf16.msra.mxu0 %v7285
        %8184 = vmatprep.subr.bf16.mxu0 %v7294
        %8185 = vmatpush1.bf16.msra.mxu0 %v7293
        %8186 = vmatprep.subr.bf16.mxu0 %v7302
        %8187 = vmatpush1.bf16.msra.mxu0 %v7301
        %8188 = vmatprep.subr.bf16.mxu0 %v7310
        %8189 = vmatpush1.bf16.msra.mxu0 %v7309
        %8190 = vmatprep.subr.bf16.mxu0 %v7318
        %8191 = vmatpush1.bf16.msra.mxu0 %v7317
        %8192 = vmatprep.subr.bf16.mxu0 %v7326
        %8193 = vmatpush1.bf16.msra.mxu0 %v7325
        %8194 = vmatprep.subr.bf16.mxu0 %v7334
        %8195 = vmatpush1.bf16.msra.mxu0 %v7333
        %8196 = vmatprep.subr.bf16.mxu0 %v7342
        %8197 = vmatpush1.bf16.msra.mxu0 %v7341
        %8198 = vmatprep.mubr.bf16.mxu0 %v5994
        %8199 = vmatmul.mubr.bf16.gmra.mrb[0].mxu0 %v5993
        %v8200 = vpop.f32.mrb[0].mxu0
        %v8201 = vadd.f32 %v8088, %v8200
        %v8202 = vpop.f32.mrb[0].mxu0
        %v8203 = vadd.f32 %v8090, %v8202
        %v8204 = vpop.f32.mrb[0].mxu0
        %v8205 = vadd.f32 %v8092, %v8204
        %v8206 = vpop.f32.mrb[0].mxu0
        %v8207 = vadd.f32 %v8094, %v8206
        %8208 = vmatprep.mubr.bf16.mxu0 %v5998
        %8209 = vmatmul.mubr.bf16.gmra.mrb[0].mxu0 %v5997
        %v8210 = vpop.f32.mrb[0].mxu0
        %v8211 = vadd.f32 %v8098, %v8210
        %v8212 = vpop.f32.mrb[0].mxu0
        %v8213 = vadd.f32 %v8100, %v8212
        %v8214 = vpop.f32.mrb[0].mxu0
        %v8215 = vadd.f32 %v8102, %v8214
        %v8216 = vpop.f32.mrb[0].mxu0
        %v8217 = vadd.f32 %v8104, %v8216
        %8218 = vmatprep.mubr.bf16.mxu0 %v6002
        %8219 = vmatmul.mubr.bf16.gmra.mrb[0].mxu0 %v6001
        %v8220 = vpop.f32.mrb[0].mxu0
        %v8221 = vadd.f32 %v8108, %v8220
        %v8222 = vpop.f32.mrb[0].mxu0
        %v8223 = vadd.f32 %v8110, %v8222
        %v8224 = vpop.f32.mrb[0].mxu0
        %v8225 = vadd.f32 %v8112, %v8224
        %v8226 = vpop.f32.mrb[0].mxu0
        %v8227 = vadd.f32 %v8114, %v8226
        %8228 = vmatprep.mubr.bf16.mxu0 %v6006
        %8229 = vmatmul.mubr.bf16.gmra.mrb[0].mxu0 %v6005
        %v8230 = vpop.f32.mrb[0].mxu0
        %v8231 = vadd.f32 %v8118, %v8230
        %v8232 = vpop.f32.mrb[0].mxu0
        %v8233 = vadd.f32 %v8120, %v8232
        %v8234 = vpop.f32.mrb[0].mxu0
        %v8235 = vadd.f32 %v8122, %v8234
        %v8236 = vpop.f32.mrb[0].mxu0
        %v8237 = vadd.f32 %v8124, %v8236
        %8238 = vmatprep.mubr.bf16.mxu0 %v6010
        %8239 = vmatmul.mubr.bf16.gmra.mrb[0].mxu0 %v6009
        %v8240 = vpop.f32.mrb[0].mxu0
        %v8241 = vadd.f32 %v8128, %v8240
        %v8242 = vpop.f32.mrb[0].mxu0
        %v8243 = vadd.f32 %v8130, %v8242
        %v8244 = vpop.f32.mrb[0].mxu0
        %v8245 = vadd.f32 %v8132, %v8244
        %v8246 = vpop.f32.mrb[0].mxu0
        %v8247 = vadd.f32 %v8134, %v8246
        %8248 = vmatprep.mubr.bf16.mxu0 %v6014
        %8249 = vmatmul.mubr.bf16.gmra.mrb[0].mxu0 %v6013
        %v8250 = vpop.f32.mrb[0].mxu0
        %v8251 = vadd.f32 %v8138, %v8250
        %v8252 = vpop.f32.mrb[0].mxu0
        %v8253 = vadd.f32 %v8140, %v8252
        %v8254 = vpop.f32.mrb[0].mxu0
        %v8255 = vadd.f32 %v8142, %v8254
        %v8256 = vpop.f32.mrb[0].mxu0
        %v8257 = vadd.f32 %v8144, %v8256
        %8258 = vmatprep.mubr.bf16.mxu0 %v6018
        %8259 = vmatmul.mubr.bf16.gmra.mrb[0].mxu0 %v6017
        %v8260 = vpop.f32.mrb[0].mxu0
        %v8261 = vadd.f32 %v8148, %v8260
        %v8262 = vpop.f32.mrb[0].mxu0
        %v8263 = vadd.f32 %v8150, %v8262
        %v8264 = vpop.f32.mrb[0].mxu0
        %v8265 = vadd.f32 %v8152, %v8264
        %v8266 = vpop.f32.mrb[0].mxu0
        %v8267 = vadd.f32 %v8154, %v8266
        %8268 = vmatprep.mubr.bf16.mxu0 %v6022
        %8269 = vmatmul.mubr.bf16.gmra.mrb[0].mxu0 %v6021
        %v8270 = vpop.f32.mrb[0].mxu0
        %v8271 = vadd.f32 %v8158, %v8270
        %v8272 = vpop.f32.mrb[0].mxu0
        %v8273 = vadd.f32 %v8160, %v8272
        %v8274 = vpop.f32.mrb[0].mxu0
        %v8275 = vadd.f32 %v8162, %v8274
        %v8276 = vpop.f32.mrb[0].mxu0
        %v8277 = vadd.f32 %v8164, %v8276
        %8278 = vdwg.mxu0
        %8279 = vmatprep.subr.bf16.mxu0 %v7096
        %8280 = vmatpush1.bf16.msra.mxu0 %v7095
        %8281 = vmatprep.subr.bf16.mxu0 %v7104
        %8282 = vmatpush1.bf16.msra.mxu0 %v7103
        %8283 = vmatprep.subr.bf16.mxu0 %v7112
        %8284 = vmatpush1.bf16.msra.mxu0 %v7111
        %8285 = vmatprep.subr.bf16.mxu0 %v7120
        %8286 = vmatpush1.bf16.msra.mxu0 %v7119
        %8287 = vmatprep.subr.bf16.mxu0 %v7128
        %8288 = vmatpush1.bf16.msra.mxu0 %v7127
        %8289 = vmatprep.subr.bf16.mxu0 %v7136
        %8290 = vmatpush1.bf16.msra.mxu0 %v7135
        %8291 = vmatprep.subr.bf16.mxu0 %v7144
        %8292 = vmatpush1.bf16.msra.mxu0 %v7143
        %8293 = vmatprep.subr.bf16.mxu0 %v7152
        %8294 = vmatpush1.bf16.msra.mxu0 %v7151
        %8295 = vmatprep.subr.bf16.mxu0 %v7160
        %8296 = vmatpush1.bf16.msra.mxu0 %v7159
        %8297 = vmatprep.subr.bf16.mxu0 %v7168
        %8298 = vmatpush1.bf16.msra.mxu0 %v7167
        %8299 = vmatprep.subr.bf16.mxu0 %v7176
        %8300 = vmatpush1.bf16.msra.mxu0 %v7175
        %8301 = vmatprep.subr.bf16.mxu0 %v7184
        %8302 = vmatpush1.bf16.msra.mxu0 %v7183
        %8303 = vmatprep.subr.bf16.mxu0 %v7192
        %8304 = vmatpush1.bf16.msra.mxu0 %v7191
        %8305 = vmatprep.subr.bf16.mxu0 %v7200
        %8306 = vmatpush1.bf16.msra.mxu0 %v7199
        %8307 = vmatprep.subr.bf16.mxu0 %v7208
        %8308 = vmatpush1.bf16.msra.mxu0 %v7207
        %8309 = vmatprep.subr.bf16.mxu0 %v7216
        %8310 = vmatpush1.bf16.msra.mxu0 %v7215
        %8311 = vmatprep.mubr.bf16.mxu0 %v5992
        %8312 = vmatmul.mubr.bf16.gmra.mrb[0].mxu0 %v5991
        %v8313 = vpop.f32.mrb[0].mxu0
        %v8314 = vadd.f32 %v6308, %v8313
        %v8315 = vpop.f32.mrb[0].mxu0
        %v8316 = vadd.f32 %v6312, %v8315
        %v8317 = vpop.f32.mrb[0].mxu0
        %v8318 = vadd.f32 %v6308, %v8317
        %v8319 = vpop.f32.mrb[0].mxu0
        %v8320 = vadd.f32 %v6312, %v8319
        %8321 = vmatprep.mubr.bf16.mxu0 %v5996
        %8322 = vmatmul.mubr.bf16.gmra.mrb[0].mxu0 %v5995
        %v8323 = vpop.f32.mrb[0].mxu0
        %v8324 = vadd.f32 %v6308, %v8323
        %v8325 = vpop.f32.mrb[0].mxu0
        %v8326 = vadd.f32 %v6312, %v8325
        %v8327 = vpop.f32.mrb[0].mxu0
        %v8328 = vadd.f32 %v6308, %v8327
        %v8329 = vpop.f32.mrb[0].mxu0
        %v8330 = vadd.f32 %v6312, %v8329
        %8331 = vmatprep.mubr.bf16.mxu0 %v6000
        %8332 = vmatmul.mubr.bf16.gmra.mrb[0].mxu0 %v5999
        %v8333 = vpop.f32.mrb[0].mxu0
        %v8334 = vadd.f32 %v6308, %v8333
        %v8335 = vpop.f32.mrb[0].mxu0
        %v8336 = vadd.f32 %v6312, %v8335
        %v8337 = vpop.f32.mrb[0].mxu0
        %v8338 = vadd.f32 %v6308, %v8337
        %v8339 = vpop.f32.mrb[0].mxu0
        %v8340 = vadd.f32 %v6312, %v8339
        %8341 = vmatprep.mubr.bf16.mxu0 %v6004
        %8342 = vmatmul.mubr.bf16.gmra.mrb[0].mxu0 %v6003
        %v8343 = vpop.f32.mrb[0].mxu0
        %v8344 = vadd.f32 %v6308, %v8343
        %v8345 = vpop.f32.mrb[0].mxu0
        %v8346 = vadd.f32 %v6312, %v8345
        %v8347 = vpop.f32.mrb[0].mxu0
        %v8348 = vadd.f32 %v6308, %v8347
        %v8349 = vpop.f32.mrb[0].mxu0
        %v8350 = vadd.f32 %v6312, %v8349
        %8351 = vmatprep.mubr.bf16.mxu0 %v6008
        %8352 = vmatmul.mubr.bf16.gmra.mrb[0].mxu0 %v6007
        %v8353 = vpop.f32.mrb[0].mxu0
        %v8354 = vadd.f32 %v6308, %v8353
        %v8355 = vpop.f32.mrb[0].mxu0
        %v8356 = vadd.f32 %v6312, %v8355
        %v8357 = vpop.f32.mrb[0].mxu0
        %v8358 = vadd.f32 %v6308, %v8357
        %v8359 = vpop.f32.mrb[0].mxu0
        %v8360 = vadd.f32 %v6312, %v8359
        %8361 = vmatprep.mubr.bf16.mxu0 %v6012
        %8362 = vmatmul.mubr.bf16.gmra.mrb[0].mxu0 %v6011
        %v8363 = vpop.f32.mrb[0].mxu0
        %v8364 = vadd.f32 %v6308, %v8363
        %v8365 = vpop.f32.mrb[0].mxu0
        %v8366 = vadd.f32 %v6312, %v8365
        %v8367 = vpop.f32.mrb[0].mxu0
        %v8368 = vadd.f32 %v6308, %v8367
        %v8369 = vpop.f32.mrb[0].mxu0
        %v8370 = vadd.f32 %v6312, %v8369
        %8371 = vmatprep.mubr.bf16.mxu0 %v6016
        %8372 = vmatmul.mubr.bf16.gmra.mrb[0].mxu0 %v6015
        %v8373 = vpop.f32.mrb[0].mxu0
        %v8374 = vadd.f32 %v6308, %v8373
        %v8375 = vpop.f32.mrb[0].mxu0
        %v8376 = vadd.f32 %v6312, %v8375
        %v8377 = vpop.f32.mrb[0].mxu0
        %v8378 = vadd.f32 %v6308, %v8377
        %v8379 = vpop.f32.mrb[0].mxu0
        %v8380 = vadd.f32 %v6312, %v8379
        %8381 = vmatprep.mubr.bf16.mxu0 %v6020
        %8382 = vmatmul.mubr.bf16.gmra.mrb[0].mxu0 %v6019
        %v8383 = vpop.f32.mrb[0].mxu0
        %v8384 = vadd.f32 %v6308, %v8383
        %v8385 = vpop.f32.mrb[0].mxu0
        %v8386 = vadd.f32 %v6312, %v8385
        %v8387 = vpop.f32.mrb[0].mxu0
        %v8388 = vadd.f32 %v6308, %v8387
        %v8389 = vpop.f32.mrb[0].mxu0
        %v8390 = vadd.f32 %v6312, %v8389
        %8391 = vdwg.mxu0
        %8392 = vmatprep.subr.bf16.mxu0 %v7224
        %8393 = vmatpush1.bf16.msra.mxu0 %v7223
        %8394 = vmatprep.subr.bf16.mxu0 %v7232
        %8395 = vmatpush1.bf16.msra.mxu0 %v7231
        %8396 = vmatprep.subr.bf16.mxu0 %v7240
        %8397 = vmatpush1.bf16.msra.mxu0 %v7239
        %8398 = vmatprep.subr.bf16.mxu0 %v7248
        %8399 = vmatpush1.bf16.msra.mxu0 %v7247
        %8400 = vmatprep.subr.bf16.mxu0 %v7256
        %8401 = vmatpush1.bf16.msra.mxu0 %v7255
        %8402 = vmatprep.subr.bf16.mxu0 %v7264
        %8403 = vmatpush1.bf16.msra.mxu0 %v7263
        %8404 = vmatprep.subr.bf16.mxu0 %v7272
        %8405 = vmatpush1.bf16.msra.mxu0 %v7271
        %8406 = vmatprep.subr.bf16.mxu0 %v7280
        %8407 = vmatpush1.bf16.msra.mxu0 %v7279
        %8408 = vmatprep.subr.bf16.mxu0 %v7288
        %8409 = vmatpush1.bf16.msra.mxu0 %v7287
        %8410 = vmatprep.subr.bf16.mxu0 %v7296
        %8411 = vmatpush1.bf16.msra.mxu0 %v7295
        %8412 = vmatprep.subr.bf16.mxu0 %v7304
        %8413 = vmatpush1.bf16.msra.mxu0 %v7303
        %8414 = vmatprep.subr.bf16.mxu0 %v7312
        %8415 = vmatpush1.bf16.msra.mxu0 %v7311
        %8416 = vmatprep.subr.bf16.mxu0 %v7320
        %8417 = vmatpush1.bf16.msra.mxu0 %v7319
        %8418 = vmatprep.subr.bf16.mxu0 %v7328
        %8419 = vmatpush1.bf16.msra.mxu0 %v7327
        %8420 = vmatprep.subr.bf16.mxu0 %v7336
        %8421 = vmatpush1.bf16.msra.mxu0 %v7335
        %8422 = vmatprep.subr.bf16.mxu0 %v7344
        %8423 = vmatpush1.bf16.msra.mxu0 %v7343
        %8424 = vmatprep.mubr.bf16.mxu0 %v5994
        %8425 = vmatmul.mubr.bf16.gmra.mrb[0].mxu0 %v5993
        %v8426 = vpop.f32.mrb[0].mxu0
        %v8427 = vadd.f32 %v8314, %v8426
        %v8428 = vpop.f32.mrb[0].mxu0
        %v8429 = vadd.f32 %v8316, %v8428
        %v8430 = vpop.f32.mrb[0].mxu0
        %v8431 = vadd.f32 %v8318, %v8430
        %v8432 = vpop.f32.mrb[0].mxu0
        %v8433 = vadd.f32 %v8320, %v8432
        %8434 = vmatprep.mubr.bf16.mxu0 %v5998
        %8435 = vmatmul.mubr.bf16.gmra.mrb[0].mxu0 %v5997
        %v8436 = vpop.f32.mrb[0].mxu0
        %v8437 = vadd.f32 %v8324, %v8436
        %v8438 = vpop.f32.mrb[0].mxu0
        %v8439 = vadd.f32 %v8326, %v8438
        %v8440 = vpop.f32.mrb[0].mxu0
        %v8441 = vadd.f32 %v8328, %v8440
        %v8442 = vpop.f32.mrb[0].mxu0
        %v8443 = vadd.f32 %v8330, %v8442
        %8444 = vmatprep.mubr.bf16.mxu0 %v6002
        %8445 = vmatmul.mubr.bf16.gmra.mrb[0].mxu0 %v6001
        %v8446 = vpop.f32.mrb[0].mxu0
        %v8447 = vadd.f32 %v8334, %v8446
        %v8448 = vpop.f32.mrb[0].mxu0
        %v8449 = vadd.f32 %v8336, %v8448
        %v8450 = vpop.f32.mrb[0].mxu0
        %v8451 = vadd.f32 %v8338, %v8450
        %v8452 = vpop.f32.mrb[0].mxu0
        %v8453 = vadd.f32 %v8340, %v8452
        %8454 = vmatprep.mubr.bf16.mxu0 %v6006
        %8455 = vmatmul.mubr.bf16.gmra.mrb[0].mxu0 %v6005
        %v8456 = vpop.f32.mrb[0].mxu0
        %v8457 = vadd.f32 %v8344, %v8456
        %v8458 = vpop.f32.mrb[0].mxu0
        %v8459 = vadd.f32 %v8346, %v8458
        %v8460 = vpop.f32.mrb[0].mxu0
        %v8461 = vadd.f32 %v8348, %v8460
        %v8462 = vpop.f32.mrb[0].mxu0
        %v8463 = vadd.f32 %v8350, %v8462
        %8464 = vmatprep.mubr.bf16.mxu0 %v6010
        %8465 = vmatmul.mubr.bf16.gmra.mrb[0].mxu0 %v6009
        %v8466 = vpop.f32.mrb[0].mxu0
        %v8467 = vadd.f32 %v8354, %v8466
        %v8468 = vpop.f32.mrb[0].mxu0
        %v8469 = vadd.f32 %v8356, %v8468
        %v8470 = vpop.f32.mrb[0].mxu0
        %v8471 = vadd.f32 %v8358, %v8470
        %v8472 = vpop.f32.mrb[0].mxu0
        %v8473 = vadd.f32 %v8360, %v8472
        %8474 = vmatprep.mubr.bf16.mxu0 %v6014
        %8475 = vmatmul.mubr.bf16.gmra.mrb[0].mxu0 %v6013
        %v8476 = vpop.f32.mrb[0].mxu0
        %v8477 = vadd.f32 %v8364, %v8476
        %v8478 = vpop.f32.mrb[0].mxu0
        %v8479 = vadd.f32 %v8366, %v8478
        %v8480 = vpop.f32.mrb[0].mxu0
        %v8481 = vadd.f32 %v8368, %v8480
        %v8482 = vpop.f32.mrb[0].mxu0
        %v8483 = vadd.f32 %v8370, %v8482
        %8484 = vmatprep.mubr.bf16.mxu0 %v6018
        %8485 = vmatmul.mubr.bf16.gmra.mrb[0].mxu0 %v6017
        %v8486 = vpop.f32.mrb[0].mxu0
        %v8487 = vadd.f32 %v8374, %v8486
        %v8488 = vpop.f32.mrb[0].mxu0
        %v8489 = vadd.f32 %v8376, %v8488
        %v8490 = vpop.f32.mrb[0].mxu0
        %v8491 = vadd.f32 %v8378, %v8490
        %v8492 = vpop.f32.mrb[0].mxu0
        %v8493 = vadd.f32 %v8380, %v8492
        %8494 = vmatprep.mubr.bf16.mxu0 %v6022
        %8495 = vmatmul.mubr.bf16.gmra.mrb[0].mxu0 %v6021
        %v8496 = vpop.f32.mrb[0].mxu0
        %v8497 = vadd.f32 %v8384, %v8496
        %v8498 = vpop.f32.mrb[0].mxu0
        %v8499 = vadd.f32 %v8386, %v8498
        %v8500 = vpop.f32.mrb[0].mxu0
        %v8501 = vadd.f32 %v8388, %v8500
        %v8502 = vpop.f32.mrb[0].mxu0
        %v8503 = vadd.f32 %v8390, %v8502
        %8504 = vdwg.mxu0
        %v8505 = vmax.f32 %v7749, 0.0
        %v8506 = vmax.f32 %v7751, 0.0
        %v8507 = vmax.f32 %v7975, 0.0
        %v8508 = vmax.f32 %v7977, 0.0
        %v8509 = vmax.f32 %v8201, 0.0
        %v8510 = vmax.f32 %v8203, 0.0
        %v8511 = vmax.f32 %v8427, 0.0
        %v8512 = vmax.f32 %v8429, 0.0
        %v8513 = vmax.f32 %v7753, 0.0
        %v8514 = vmax.f32 %v7755, 0.0
        %v8515 = vmax.f32 %v7979, 0.0
        %v8516 = vmax.f32 %v7981, 0.0
        %v8517 = vmax.f32 %v8205, 0.0
        %v8518 = vmax.f32 %v8207, 0.0
        %v8519 = vmax.f32 %v8431, 0.0
        %v8520 = vmax.f32 %v8433, 0.0
        %v8521 = vmax.f32 %v7759, 0.0
        %v8522 = vmax.f32 %v7761, 0.0
        %v8523 = vmax.f32 %v7985, 0.0
        %v8524 = vmax.f32 %v7987, 0.0
        %v8525 = vmax.f32 %v8211, 0.0
        %v8526 = vmax.f32 %v8213, 0.0
        %v8527 = vmax.f32 %v8437, 0.0
        %v8528 = vmax.f32 %v8439, 0.0
        %v8529 = vmax.f32 %v7763, 0.0
        %v8530 = vmax.f32 %v7765, 0.0
        %v8531 = vmax.f32 %v7989, 0.0
        %v8532 = vmax.f32 %v7991, 0.0
        %v8533 = vmax.f32 %v8215, 0.0
        %v8534 = vmax.f32 %v8217, 0.0
        %v8535 = vmax.f32 %v8441, 0.0
        %v8536 = vmax.f32 %v8443, 0.0
        %v8537 = vmax.f32 %v7769, 0.0
        %v8538 = vmax.f32 %v7771, 0.0
        %v8539 = vmax.f32 %v7995, 0.0
        %v8540 = vmax.f32 %v7997, 0.0
        %v8541 = vmax.f32 %v8221, 0.0
        %v8542 = vmax.f32 %v8223, 0.0
        %v8543 = vmax.f32 %v8447, 0.0
        %v8544 = vmax.f32 %v8449, 0.0
        %v8545 = vmax.f32 %v7773, 0.0
        %v8546 = vmax.f32 %v7775, 0.0
        %v8547 = vmax.f32 %v7999, 0.0
        %v8548 = vmax.f32 %v8001, 0.0
        %v8549 = vmax.f32 %v8225, 0.0
        %v8550 = vmax.f32 %v8227, 0.0
        %v8551 = vmax.f32 %v8451, 0.0
        %v8552 = vmax.f32 %v8453, 0.0
        %v8553 = vmax.f32 %v7779, 0.0
        %v8554 = vmax.f32 %v7781, 0.0
        %v8555 = vmax.f32 %v8005, 0.0
        %v8556 = vmax.f32 %v8007, 0.0
        %v8557 = vmax.f32 %v8231, 0.0
        %v8558 = vmax.f32 %v8233, 0.0
        %v8559 = vmax.f32 %v8457, 0.0
        %v8560 = vmax.f32 %v8459, 0.0
        %v8561 = vmax.f32 %v7783, 0.0
        %v8562 = vmax.f32 %v7785, 0.0
        %v8563 = vmax.f32 %v8009, 0.0
        %v8564 = vmax.f32 %v8011, 0.0
        %v8565 = vmax.f32 %v8235, 0.0
        %v8566 = vmax.f32 %v8237, 0.0
        %v8567 = vmax.f32 %v8461, 0.0
        %v8568 = vmax.f32 %v8463, 0.0
        %v8569 = vmax.f32 %v7789, 0.0
        %v8570 = vmax.f32 %v7791, 0.0
        %v8571 = vmax.f32 %v8015, 0.0
        %v8572 = vmax.f32 %v8017, 0.0
        %v8573 = vmax.f32 %v8241, 0.0
        %v8574 = vmax.f32 %v8243, 0.0
        %v8575 = vmax.f32 %v8467, 0.0
        %v8576 = vmax.f32 %v8469, 0.0
        %v8577 = vmax.f32 %v7793, 0.0
        %v8578 = vmax.f32 %v7795, 0.0
        %v8579 = vmax.f32 %v8019, 0.0
        %v8580 = vmax.f32 %v8021, 0.0
        %v8581 = vmax.f32 %v8245, 0.0
        %v8582 = vmax.f32 %v8247, 0.0
        %v8583 = vmax.f32 %v8471, 0.0
        %v8584 = vmax.f32 %v8473, 0.0
        %v8585 = vmax.f32 %v7799, 0.0
        %v8586 = vmax.f32 %v7801, 0.0
        %v8587 = vmax.f32 %v8025, 0.0
        %v8588 = vmax.f32 %v8027, 0.0
        %v8589 = vmax.f32 %v8251, 0.0
        %v8590 = vmax.f32 %v8253, 0.0
        %v8591 = vmax.f32 %v8477, 0.0
        %v8592 = vmax.f32 %v8479, 0.0
        %v8593 = vmax.f32 %v7803, 0.0
        %v8594 = vmax.f32 %v7805, 0.0
        %v8595 = vmax.f32 %v8029, 0.0
        %v8596 = vmax.f32 %v8031, 0.0
        %v8597 = vmax.f32 %v8255, 0.0
        %v8598 = vmax.f32 %v8257, 0.0
        %v8599 = vmax.f32 %v8481, 0.0
        %v8600 = vmax.f32 %v8483, 0.0
        %v8601 = vmax.f32 %v7809, 0.0
        %v8602 = vmax.f32 %v7811, 0.0
        %v8603 = vmax.f32 %v8035, 0.0
        %v8604 = vmax.f32 %v8037, 0.0
        %v8605 = vmax.f32 %v8261, 0.0
        %v8606 = vmax.f32 %v8263, 0.0
        %v8607 = vmax.f32 %v8487, 0.0
        %v8608 = vmax.f32 %v8489, 0.0
        %v8609 = vmax.f32 %v7813, 0.0
        %v8610 = vmax.f32 %v7815, 0.0
        %v8611 = vmax.f32 %v8039, 0.0
        %v8612 = vmax.f32 %v8041, 0.0
        %v8613 = vmax.f32 %v8265, 0.0
        %v8614 = vmax.f32 %v8267, 0.0
        %v8615 = vmax.f32 %v8491, 0.0
        %v8616 = vmax.f32 %v8493, 0.0
        %v8617 = vmax.f32 %v7819, 0.0
        %v8618 = vmax.f32 %v7821, 0.0
        %v8619 = vmax.f32 %v8045, 0.0
        %v8620 = vmax.f32 %v8047, 0.0
        %v8621 = vmax.f32 %v8271, 0.0
        %v8622 = vmax.f32 %v8273, 0.0
        %v8623 = vmax.f32 %v8497, 0.0
        %v8624 = vmax.f32 %v8499, 0.0
        %v8625 = vmax.f32 %v7823, 0.0
        %v8626 = vmax.f32 %v7825, 0.0
        %v8627 = vmax.f32 %v8049, 0.0
        %v8628 = vmax.f32 %v8051, 0.0
        %v8629 = vmax.f32 %v8275, 0.0
        %v8630 = vmax.f32 %v8277, 0.0
        %v8631 = vmax.f32 %v8501, 0.0
        %v8632 = vmax.f32 %v8503, 0.0
        %v8633 = vpack.c.bf16 %v8513, %v8505
        %v8634 = vpack.c.bf16 %v8514, %v8506
        %v8635 = vpack.c.bf16 %v8515, %v8507
        %v8636 = vpack.c.bf16 %v8516, %v8508
        %v8637 = vpack.c.bf16 %v8517, %v8509
        %v8638 = vpack.c.bf16 %v8518, %v8510
        %v8639 = vpack.c.bf16 %v8519, %v8511
        %v8640 = vpack.c.bf16 %v8520, %v8512
        %v8641 = vpack.c.bf16 %v8529, %v8521
        %v8642 = vpack.c.bf16 %v8530, %v8522
        %v8643 = vpack.c.bf16 %v8531, %v8523
        %v8644 = vpack.c.bf16 %v8532, %v8524
        %v8645 = vpack.c.bf16 %v8533, %v8525
        %v8646 = vpack.c.bf16 %v8534, %v8526
        %v8647 = vpack.c.bf16 %v8535, %v8527
        %v8648 = vpack.c.bf16 %v8536, %v8528
        %v8649 = vpack.c.bf16 %v8545, %v8537
        %v8650 = vpack.c.bf16 %v8546, %v8538
        %v8651 = vpack.c.bf16 %v8547, %v8539
        %v8652 = vpack.c.bf16 %v8548, %v8540
        %v8653 = vpack.c.bf16 %v8549, %v8541
        %v8654 = vpack.c.bf16 %v8550, %v8542
        %v8655 = vpack.c.bf16 %v8551, %v8543
        %v8656 = vpack.c.bf16 %v8552, %v8544
        %v8657 = vpack.c.bf16 %v8561, %v8553
        %v8658 = vpack.c.bf16 %v8562, %v8554
        %v8659 = vpack.c.bf16 %v8563, %v8555
        %v8660 = vpack.c.bf16 %v8564, %v8556
        %v8661 = vpack.c.bf16 %v8565, %v8557
        %v8662 = vpack.c.bf16 %v8566, %v8558
        %v8663 = vpack.c.bf16 %v8567, %v8559
        %v8664 = vpack.c.bf16 %v8568, %v8560
        %v8665 = vpack.c.bf16 %v8577, %v8569
        %v8666 = vpack.c.bf16 %v8578, %v8570
        %v8667 = vpack.c.bf16 %v8579, %v8571
        %v8668 = vpack.c.bf16 %v8580, %v8572
        %v8669 = vpack.c.bf16 %v8581, %v8573
        %v8670 = vpack.c.bf16 %v8582, %v8574
        %v8671 = vpack.c.bf16 %v8583, %v8575
        %v8672 = vpack.c.bf16 %v8584, %v8576
        %v8673 = vpack.c.bf16 %v8593, %v8585
        %v8674 = vpack.c.bf16 %v8594, %v8586
        %v8675 = vpack.c.bf16 %v8595, %v8587
        %v8676 = vpack.c.bf16 %v8596, %v8588
        %v8677 = vpack.c.bf16 %v8597, %v8589
        %v8678 = vpack.c.bf16 %v8598, %v8590
        %v8679 = vpack.c.bf16 %v8599, %v8591
        %v8680 = vpack.c.bf16 %v8600, %v8592
        %v8681 = vpack.c.bf16 %v8609, %v8601
        %v8682 = vpack.c.bf16 %v8610, %v8602
        %v8683 = vpack.c.bf16 %v8611, %v8603
        %v8684 = vpack.c.bf16 %v8612, %v8604
        %v8685 = vpack.c.bf16 %v8613, %v8605
        %v8686 = vpack.c.bf16 %v8614, %v8606
        %v8687 = vpack.c.bf16 %v8615, %v8607
        %v8688 = vpack.c.bf16 %v8616, %v8608
        %v8689 = vpack.c.bf16 %v8625, %v8617
        %v8690 = vpack.c.bf16 %v8626, %v8618
        %v8691 = vpack.c.bf16 %v8627, %v8619
        %v8692 = vpack.c.bf16 %v8628, %v8620
        %v8693 = vpack.c.bf16 %v8629, %v8621
        %v8694 = vpack.c.bf16 %v8630, %v8622
        %v8695 = vpack.c.bf16 %v8631, %v8623
        %v8696 = vpack.c.bf16 %v8632, %v8624
        %v8697 = vld [vmem:[#allocation16] sm:$0xff]
        %v8698 = vld [vmem:[#allocation16 + $0x8] sm:$0xff]
        %v8699 = vld [vmem:[#allocation16 + $0x10] sm:$0xff]
        %v8700 = vld [vmem:[#allocation16 + $0x18] sm:$0xff]
        %v8701 = vld [vmem:[#allocation16 + $0x20] sm:$0xff]
        %v8702 = vld [vmem:[#allocation16 + $0x28] sm:$0xff]
        %v8703 = vld [vmem:[#allocation16 + $0x30] sm:$0xff]
        %v8704 = vld [vmem:[#allocation16 + $0x38] sm:$0xff]
        %v8705 = vld [vmem:[#allocation16 + $0x40] sm:$0xff]
        %v8706 = vld [vmem:[#allocation16 + $0x48] sm:$0xff]
        %v8707 = vld [vmem:[#allocation16 + $0x50] sm:$0xff]
        %v8708 = vld [vmem:[#allocation16 + $0x58] sm:$0xff]
        %v8709 = vld [vmem:[#allocation16 + $0x60] sm:$0xff]
        %v8710 = vld [vmem:[#allocation16 + $0x68] sm:$0xff]
        %v8711 = vld [vmem:[#allocation16 + $0x70] sm:$0xff]
        %v8712 = vld [vmem:[#allocation16 + $0x78] sm:$0xff]
        %v8713 = vld [vmem:[#allocation16 + $0x80] sm:$0xff]
        %v8714 = vld [vmem:[#allocation16 + $0x88] sm:$0xff]
        %v8715 = vld [vmem:[#allocation16 + $0x90] sm:$0xff]
        %v8716 = vld [vmem:[#allocation16 + $0x98] sm:$0xff]
        %v8717 = vld [vmem:[#allocation16 + $0xa0] sm:$0xff]
        %v8718 = vld [vmem:[#allocation16 + $0xa8] sm:$0xff]
        %v8719 = vld [vmem:[#allocation16 + $0xb0] sm:$0xff]
        %v8720 = vld [vmem:[#allocation16 + $0xb8] sm:$0xff]
        %v8721 = vld [vmem:[#allocation16 + $0xc0] sm:$0xff]
        %v8722 = vld [vmem:[#allocation16 + $0xc8] sm:$0xff]
        %v8723 = vld [vmem:[#allocation16 + $0xd0] sm:$0xff]
        %v8724 = vld [vmem:[#allocation16 + $0xd8] sm:$0xff]
        %v8725 = vld [vmem:[#allocation16 + $0xe0] sm:$0xff]
        %v8726 = vld [vmem:[#allocation16 + $0xe8] sm:$0xff]
        %v8727 = vld [vmem:[#allocation16 + $0xf0] sm:$0xff]
        %v8728 = vld [vmem:[#allocation16 + $0xf8] sm:$0xff]
        %v8729 = vld [vmem:[#allocation16 + $0x100] sm:$0xff]
        %v8730 = vld [vmem:[#allocation16 + $0x108] sm:$0xff]
        %v8731 = vld [vmem:[#allocation16 + $0x110] sm:$0xff]
        %v8732 = vld [vmem:[#allocation16 + $0x118] sm:$0xff]
        %v8733 = vld [vmem:[#allocation16 + $0x120] sm:$0xff]
        %v8734 = vld [vmem:[#allocation16 + $0x128] sm:$0xff]
        %v8735 = vld [vmem:[#allocation16 + $0x130] sm:$0xff]
        %v8736 = vld [vmem:[#allocation16 + $0x138] sm:$0xff]
        %v8737 = vld [vmem:[#allocation16 + $0x140] sm:$0xff]
        %v8738 = vld [vmem:[#allocation16 + $0x148] sm:$0xff]
        %v8739 = vld [vmem:[#allocation16 + $0x150] sm:$0xff]
        %v8740 = vld [vmem:[#allocation16 + $0x158] sm:$0xff]
        %v8741 = vld [vmem:[#allocation16 + $0x160] sm:$0xff]
        %v8742 = vld [vmem:[#allocation16 + $0x168] sm:$0xff]
        %v8743 = vld [vmem:[#allocation16 + $0x170] sm:$0xff]
        %v8744 = vld [vmem:[#allocation16 + $0x178] sm:$0xff]
        %v8745 = vld [vmem:[#allocation16 + $0x180] sm:$0xff]
        %v8746 = vld [vmem:[#allocation16 + $0x188] sm:$0xff]
        %v8747 = vld [vmem:[#allocation16 + $0x190] sm:$0xff]
        %v8748 = vld [vmem:[#allocation16 + $0x198] sm:$0xff]
        %v8749 = vld [vmem:[#allocation16 + $0x1a0] sm:$0xff]
        %v8750 = vld [vmem:[#allocation16 + $0x1a8] sm:$0xff]
        %v8751 = vld [vmem:[#allocation16 + $0x1b0] sm:$0xff]
        %v8752 = vld [vmem:[#allocation16 + $0x1b8] sm:$0xff]
        %v8753 = vld [vmem:[#allocation16 + $0x1c0] sm:$0xff]
        %v8754 = vld [vmem:[#allocation16 + $0x1c8] sm:$0xff]
        %v8755 = vld [vmem:[#allocation16 + $0x1d0] sm:$0xff]
        %v8756 = vld [vmem:[#allocation16 + $0x1d8] sm:$0xff]
        %v8757 = vld [vmem:[#allocation16 + $0x1e0] sm:$0xff]
        %v8758 = vld [vmem:[#allocation16 + $0x1e8] sm:$0xff]
        %v8759 = vld [vmem:[#allocation16 + $0x1f0] sm:$0xff]
        %v8760 = vld [vmem:[#allocation16 + $0x1f8] sm:$0xff]
        %v8761 = vld [vmem:[#allocation16 + $0x200] sm:$0xff]
        %v8762 = vld [vmem:[#allocation16 + $0x208] sm:$0xff]
        %v8763 = vld [vmem:[#allocation16 + $0x210] sm:$0xff]
        %v8764 = vld [vmem:[#allocation16 + $0x218] sm:$0xff]
        %v8765 = vld [vmem:[#allocation16 + $0x220] sm:$0xff]
        %v8766 = vld [vmem:[#allocation16 + $0x228] sm:$0xff]
        %v8767 = vld [vmem:[#allocation16 + $0x230] sm:$0xff]
        %v8768 = vld [vmem:[#allocation16 + $0x238] sm:$0xff]
        %v8769 = vld [vmem:[#allocation16 + $0x240] sm:$0xff]
        %v8770 = vld [vmem:[#allocation16 + $0x248] sm:$0xff]
        %v8771 = vld [vmem:[#allocation16 + $0x250] sm:$0xff]
        %v8772 = vld [vmem:[#allocation16 + $0x258] sm:$0xff]
        %v8773 = vld [vmem:[#allocation16 + $0x260] sm:$0xff]
        %v8774 = vld [vmem:[#allocation16 + $0x268] sm:$0xff]
        %v8775 = vld [vmem:[#allocation16 + $0x270] sm:$0xff]
        %v8776 = vld [vmem:[#allocation16 + $0x278] sm:$0xff]
        %v8777 = vld [vmem:[#allocation16 + $0x280] sm:$0xff]
        %v8778 = vld [vmem:[#allocation16 + $0x288] sm:$0xff]
        %v8779 = vld [vmem:[#allocation16 + $0x290] sm:$0xff]
        %v8780 = vld [vmem:[#allocation16 + $0x298] sm:$0xff]
        %v8781 = vld [vmem:[#allocation16 + $0x2a0] sm:$0xff]
        %v8782 = vld [vmem:[#allocation16 + $0x2a8] sm:$0xff]
        %v8783 = vld [vmem:[#allocation16 + $0x2b0] sm:$0xff]
        %v8784 = vld [vmem:[#allocation16 + $0x2b8] sm:$0xff]
        %v8785 = vld [vmem:[#allocation16 + $0x2c0] sm:$0xff]
        %v8786 = vld [vmem:[#allocation16 + $0x2c8] sm:$0xff]
        %v8787 = vld [vmem:[#allocation16 + $0x2d0] sm:$0xff]
        %v8788 = vld [vmem:[#allocation16 + $0x2d8] sm:$0xff]
        %v8789 = vld [vmem:[#allocation16 + $0x2e0] sm:$0xff]
        %v8790 = vld [vmem:[#allocation16 + $0x2e8] sm:$0xff]
        %v8791 = vld [vmem:[#allocation16 + $0x2f0] sm:$0xff]
        %v8792 = vld [vmem:[#allocation16 + $0x2f8] sm:$0xff]
        %v8793 = vld [vmem:[#allocation16 + $0x300] sm:$0xff]
        %v8794 = vld [vmem:[#allocation16 + $0x308] sm:$0xff]
        %v8795 = vld [vmem:[#allocation16 + $0x310] sm:$0xff]
        %v8796 = vld [vmem:[#allocation16 + $0x318] sm:$0xff]
        %v8797 = vld [vmem:[#allocation16 + $0x320] sm:$0xff]
        %v8798 = vld [vmem:[#allocation16 + $0x328] sm:$0xff]
        %v8799 = vld [vmem:[#allocation16 + $0x330] sm:$0xff]
        %v8800 = vld [vmem:[#allocation16 + $0x338] sm:$0xff]
        %v8801 = vld [vmem:[#allocation16 + $0x340] sm:$0xff]
        %v8802 = vld [vmem:[#allocation16 + $0x348] sm:$0xff]
        %v8803 = vld [vmem:[#allocation16 + $0x350] sm:$0xff]
        %v8804 = vld [vmem:[#allocation16 + $0x358] sm:$0xff]
        %v8805 = vld [vmem:[#allocation16 + $0x360] sm:$0xff]
        %v8806 = vld [vmem:[#allocation16 + $0x368] sm:$0xff]
        %v8807 = vld [vmem:[#allocation16 + $0x370] sm:$0xff]
        %v8808 = vld [vmem:[#allocation16 + $0x378] sm:$0xff]
        %v8809 = vld [vmem:[#allocation16 + $0x380] sm:$0xff]
        %v8810 = vld [vmem:[#allocation16 + $0x388] sm:$0xff]
        %v8811 = vld [vmem:[#allocation16 + $0x390] sm:$0xff]
        %v8812 = vld [vmem:[#allocation16 + $0x398] sm:$0xff]
        %v8813 = vld [vmem:[#allocation16 + $0x3a0] sm:$0xff]
        %v8814 = vld [vmem:[#allocation16 + $0x3a8] sm:$0xff]
        %v8815 = vld [vmem:[#allocation16 + $0x3b0] sm:$0xff]
        %v8816 = vld [vmem:[#allocation16 + $0x3b8] sm:$0xff]
        %v8817 = vld [vmem:[#allocation16 + $0x3c0] sm:$0xff]
        %v8818 = vld [vmem:[#allocation16 + $0x3c8] sm:$0xff]
        %v8819 = vld [vmem:[#allocation16 + $0x3d0] sm:$0xff]
        %v8820 = vld [vmem:[#allocation16 + $0x3d8] sm:$0xff]
        %v8821 = vld [vmem:[#allocation16 + $0x3e0] sm:$0xff]
        %v8822 = vld [vmem:[#allocation16 + $0x3e8] sm:$0xff]
        %v8823 = vld [vmem:[#allocation16 + $0x3f0] sm:$0xff]
        %v8824 = vld [vmem:[#allocation16 + $0x3f8] sm:$0xff]
        %v8825 = vld [vmem:[%s13] sm:$0x3]
        %v8827 = vlaneseq
        %v8828 = vshrl.u32 %v8827, 7
        %v8829 = vsub.s32 0, %v8828
        %v8830 = vrot.slane %v8825, %v8829
        %v8831 = vlaneseq
        %v8832 = vshrl.u32 %v8831, 7
        %v8833 = vsub.s32 1, %v8832
        %v8834 = vrot.slane %v8825, %v8833
        %v8965 = vunpack.c.l.b16 %v8697
        %v8966 = vunpack.c.h.b16 %v8697
        %v8967 = vunpack.c.l.b16 %v8698
        %v8968 = vunpack.c.h.b16 %v8698
        %v8969 = vunpack.c.l.b16 %v8699
        %v8970 = vunpack.c.h.b16 %v8699
        %v8971 = vunpack.c.l.b16 %v8700
        %v8972 = vunpack.c.h.b16 %v8700
        %v8973 = vunpack.c.l.b16 %v8701
        %v8974 = vunpack.c.h.b16 %v8701
        %v8975 = vunpack.c.l.b16 %v8702
        %v8976 = vunpack.c.h.b16 %v8702
        %v8977 = vunpack.c.l.b16 %v8703
        %v8978 = vunpack.c.h.b16 %v8703
        %v8979 = vunpack.c.l.b16 %v8704
        %v8980 = vunpack.c.h.b16 %v8704
        %v8981 = vunpack.c.l.b16 %v8705
        %v8982 = vunpack.c.h.b16 %v8705
        %v8983 = vunpack.c.l.b16 %v8706
        %v8984 = vunpack.c.h.b16 %v8706
        %v8985 = vunpack.c.l.b16 %v8707
        %v8986 = vunpack.c.h.b16 %v8707
        %v8987 = vunpack.c.l.b16 %v8708
        %v8988 = vunpack.c.h.b16 %v8708
        %v8989 = vunpack.c.l.b16 %v8709
        %v8990 = vunpack.c.h.b16 %v8709
        %v8991 = vunpack.c.l.b16 %v8710
        %v8992 = vunpack.c.h.b16 %v8710
        %v8993 = vunpack.c.l.b16 %v8711
        %v8994 = vunpack.c.h.b16 %v8711
        %v8995 = vunpack.c.l.b16 %v8712
        %v8996 = vunpack.c.h.b16 %v8712
        %v8997 = vunpack.c.l.b16 %v8713
        %v8998 = vunpack.c.h.b16 %v8713
        %v8999 = vunpack.c.l.b16 %v8714
        %v9000 = vunpack.c.h.b16 %v8714
        %v9001 = vunpack.c.l.b16 %v8715
        %v9002 = vunpack.c.h.b16 %v8715
        %v9003 = vunpack.c.l.b16 %v8716
        %v9004 = vunpack.c.h.b16 %v8716
        %v9005 = vunpack.c.l.b16 %v8717
        %v9006 = vunpack.c.h.b16 %v8717
        %v9007 = vunpack.c.l.b16 %v8718
        %v9008 = vunpack.c.h.b16 %v8718
        %v9009 = vunpack.c.l.b16 %v8719
        %v9010 = vunpack.c.h.b16 %v8719
        %v9011 = vunpack.c.l.b16 %v8720
        %v9012 = vunpack.c.h.b16 %v8720
        %v9013 = vunpack.c.l.b16 %v8721
        %v9014 = vunpack.c.h.b16 %v8721
        %v9015 = vunpack.c.l.b16 %v8722
        %v9016 = vunpack.c.h.b16 %v8722
        %v9017 = vunpack.c.l.b16 %v8723
        %v9018 = vunpack.c.h.b16 %v8723
        %v9019 = vunpack.c.l.b16 %v8724
        %v9020 = vunpack.c.h.b16 %v8724
        %v9021 = vunpack.c.l.b16 %v8725
        %v9022 = vunpack.c.h.b16 %v8725
        %v9023 = vunpack.c.l.b16 %v8726
        %v9024 = vunpack.c.h.b16 %v8726
        %v9025 = vunpack.c.l.b16 %v8727
        %v9026 = vunpack.c.h.b16 %v8727
        %v9027 = vunpack.c.l.b16 %v8728
        %v9028 = vunpack.c.h.b16 %v8728
        %v9029 = vunpack.c.l.b16 %v8729
        %v9030 = vunpack.c.h.b16 %v8729
        %v9031 = vunpack.c.l.b16 %v8730
        %v9032 = vunpack.c.h.b16 %v8730
        %v9033 = vunpack.c.l.b16 %v8731
        %v9034 = vunpack.c.h.b16 %v8731
        %v9035 = vunpack.c.l.b16 %v8732
        %v9036 = vunpack.c.h.b16 %v8732
        %v9037 = vunpack.c.l.b16 %v8733
        %v9038 = vunpack.c.h.b16 %v8733
        %v9039 = vunpack.c.l.b16 %v8734
        %v9040 = vunpack.c.h.b16 %v8734
        %v9041 = vunpack.c.l.b16 %v8735
        %v9042 = vunpack.c.h.b16 %v8735
        %v9043 = vunpack.c.l.b16 %v8736
        %v9044 = vunpack.c.h.b16 %v8736
        %v9045 = vunpack.c.l.b16 %v8737
        %v9046 = vunpack.c.h.b16 %v8737
        %v9047 = vunpack.c.l.b16 %v8738
        %v9048 = vunpack.c.h.b16 %v8738
        %v9049 = vunpack.c.l.b16 %v8739
        %v9050 = vunpack.c.h.b16 %v8739
        %v9051 = vunpack.c.l.b16 %v8740
        %v9052 = vunpack.c.h.b16 %v8740
        %v9053 = vunpack.c.l.b16 %v8741
        %v9054 = vunpack.c.h.b16 %v8741
        %v9055 = vunpack.c.l.b16 %v8742
        %v9056 = vunpack.c.h.b16 %v8742
        %v9057 = vunpack.c.l.b16 %v8743
        %v9058 = vunpack.c.h.b16 %v8743
        %v9059 = vunpack.c.l.b16 %v8744
        %v9060 = vunpack.c.h.b16 %v8744
        %v9061 = vunpack.c.l.b16 %v8745
        %v9062 = vunpack.c.h.b16 %v8745
        %v9063 = vunpack.c.l.b16 %v8746
        %v9064 = vunpack.c.h.b16 %v8746
        %v9065 = vunpack.c.l.b16 %v8747
        %v9066 = vunpack.c.h.b16 %v8747
        %v9067 = vunpack.c.l.b16 %v8748
        %v9068 = vunpack.c.h.b16 %v8748
        %v9069 = vunpack.c.l.b16 %v8749
        %v9070 = vunpack.c.h.b16 %v8749
        %v9071 = vunpack.c.l.b16 %v8750
        %v9072 = vunpack.c.h.b16 %v8750
        %v9073 = vunpack.c.l.b16 %v8751
        %v9074 = vunpack.c.h.b16 %v8751
        %v9075 = vunpack.c.l.b16 %v8752
        %v9076 = vunpack.c.h.b16 %v8752
        %v9077 = vunpack.c.l.b16 %v8753
        %v9078 = vunpack.c.h.b16 %v8753
        %v9079 = vunpack.c.l.b16 %v8754
        %v9080 = vunpack.c.h.b16 %v8754
        %v9081 = vunpack.c.l.b16 %v8755
        %v9082 = vunpack.c.h.b16 %v8755
        %v9083 = vunpack.c.l.b16 %v8756
        %v9084 = vunpack.c.h.b16 %v8756
        %v9085 = vunpack.c.l.b16 %v8757
        %v9086 = vunpack.c.h.b16 %v8757
        %v9087 = vunpack.c.l.b16 %v8758
        %v9088 = vunpack.c.h.b16 %v8758
        %v9089 = vunpack.c.l.b16 %v8759
        %v9090 = vunpack.c.h.b16 %v8759
        %v9091 = vunpack.c.l.b16 %v8760
        %v9092 = vunpack.c.h.b16 %v8760
        %v9093 = vunpack.c.l.b16 %v8761
        %v9094 = vunpack.c.h.b16 %v8761
        %v9095 = vunpack.c.l.b16 %v8762
        %v9096 = vunpack.c.h.b16 %v8762
        %v9097 = vunpack.c.l.b16 %v8763
        %v9098 = vunpack.c.h.b16 %v8763
        %v9099 = vunpack.c.l.b16 %v8764
        %v9100 = vunpack.c.h.b16 %v8764
        %v9101 = vunpack.c.l.b16 %v8765
        %v9102 = vunpack.c.h.b16 %v8765
        %v9103 = vunpack.c.l.b16 %v8766
        %v9104 = vunpack.c.h.b16 %v8766
        %v9105 = vunpack.c.l.b16 %v8767
        %v9106 = vunpack.c.h.b16 %v8767
        %v9107 = vunpack.c.l.b16 %v8768
        %v9108 = vunpack.c.h.b16 %v8768
        %v9109 = vunpack.c.l.b16 %v8769
        %v9110 = vunpack.c.h.b16 %v8769
        %v9111 = vunpack.c.l.b16 %v8770
        %v9112 = vunpack.c.h.b16 %v8770
        %v9113 = vunpack.c.l.b16 %v8771
        %v9114 = vunpack.c.h.b16 %v8771
        %v9115 = vunpack.c.l.b16 %v8772
        %v9116 = vunpack.c.h.b16 %v8772
        %v9117 = vunpack.c.l.b16 %v8773
        %v9118 = vunpack.c.h.b16 %v8773
        %v9119 = vunpack.c.l.b16 %v8774
        %v9120 = vunpack.c.h.b16 %v8774
        %v9121 = vunpack.c.l.b16 %v8775
        %v9122 = vunpack.c.h.b16 %v8775
        %v9123 = vunpack.c.l.b16 %v8776
        %v9124 = vunpack.c.h.b16 %v8776
        %v9125 = vunpack.c.l.b16 %v8777
        %v9126 = vunpack.c.h.b16 %v8777
        %v9127 = vunpack.c.l.b16 %v8778
        %v9128 = vunpack.c.h.b16 %v8778
        %v9129 = vunpack.c.l.b16 %v8779
        %v9130 = vunpack.c.h.b16 %v8779
        %v9131 = vunpack.c.l.b16 %v8780
        %v9132 = vunpack.c.h.b16 %v8780
        %v9133 = vunpack.c.l.b16 %v8781
        %v9134 = vunpack.c.h.b16 %v8781
        %v9135 = vunpack.c.l.b16 %v8782
        %v9136 = vunpack.c.h.b16 %v8782
        %v9137 = vunpack.c.l.b16 %v8783
        %v9138 = vunpack.c.h.b16 %v8783
        %v9139 = vunpack.c.l.b16 %v8784
        %v9140 = vunpack.c.h.b16 %v8784
        %v9141 = vunpack.c.l.b16 %v8785
        %v9142 = vunpack.c.h.b16 %v8785
        %v9143 = vunpack.c.l.b16 %v8786
        %v9144 = vunpack.c.h.b16 %v8786
        %v9145 = vunpack.c.l.b16 %v8787
        %v9146 = vunpack.c.h.b16 %v8787
        %v9147 = vunpack.c.l.b16 %v8788
        %v9148 = vunpack.c.h.b16 %v8788
        %v9149 = vunpack.c.l.b16 %v8789
        %v9150 = vunpack.c.h.b16 %v8789
        %v9151 = vunpack.c.l.b16 %v8790
        %v9152 = vunpack.c.h.b16 %v8790
        %v9153 = vunpack.c.l.b16 %v8791
        %v9154 = vunpack.c.h.b16 %v8791
        %v9155 = vunpack.c.l.b16 %v8792
        %v9156 = vunpack.c.h.b16 %v8792
        %v9157 = vunpack.c.l.b16 %v8793
        %v9158 = vunpack.c.h.b16 %v8793
        %v9159 = vunpack.c.l.b16 %v8794
        %v9160 = vunpack.c.h.b16 %v8794
        %v9161 = vunpack.c.l.b16 %v8795
        %v9162 = vunpack.c.h.b16 %v8795
        %v9163 = vunpack.c.l.b16 %v8796
        %v9164 = vunpack.c.h.b16 %v8796
        %v9165 = vunpack.c.l.b16 %v8797
        %v9166 = vunpack.c.h.b16 %v8797
        %v9167 = vunpack.c.l.b16 %v8798
        %v9168 = vunpack.c.h.b16 %v8798
        %v9169 = vunpack.c.l.b16 %v8799
        %v9170 = vunpack.c.h.b16 %v8799
        %v9171 = vunpack.c.l.b16 %v8800
        %v9172 = vunpack.c.h.b16 %v8800
        %v9173 = vunpack.c.l.b16 %v8801
        %v9174 = vunpack.c.h.b16 %v8801
        %v9175 = vunpack.c.l.b16 %v8802
        %v9176 = vunpack.c.h.b16 %v8802
        %v9177 = vunpack.c.l.b16 %v8803
        %v9178 = vunpack.c.h.b16 %v8803
        %v9179 = vunpack.c.l.b16 %v8804
        %v9180 = vunpack.c.h.b16 %v8804
        %v9181 = vunpack.c.l.b16 %v8805
        %v9182 = vunpack.c.h.b16 %v8805
        %v9183 = vunpack.c.l.b16 %v8806
        %v9184 = vunpack.c.h.b16 %v8806
        %v9185 = vunpack.c.l.b16 %v8807
        %v9186 = vunpack.c.h.b16 %v8807
        %v9187 = vunpack.c.l.b16 %v8808
        %v9188 = vunpack.c.h.b16 %v8808
        %v9189 = vunpack.c.l.b16 %v8809
        %v9190 = vunpack.c.h.b16 %v8809
        %v9191 = vunpack.c.l.b16 %v8810
        %v9192 = vunpack.c.h.b16 %v8810
        %v9193 = vunpack.c.l.b16 %v8811
        %v9194 = vunpack.c.h.b16 %v8811
        %v9195 = vunpack.c.l.b16 %v8812
        %v9196 = vunpack.c.h.b16 %v8812
        %v9197 = vunpack.c.l.b16 %v8813
        %v9198 = vunpack.c.h.b16 %v8813
        %v9199 = vunpack.c.l.b16 %v8814
        %v9200 = vunpack.c.h.b16 %v8814
        %v9201 = vunpack.c.l.b16 %v8815
        %v9202 = vunpack.c.h.b16 %v8815
        %v9203 = vunpack.c.l.b16 %v8816
        %v9204 = vunpack.c.h.b16 %v8816
        %v9205 = vunpack.c.l.b16 %v8817
        %v9206 = vunpack.c.h.b16 %v8817
        %v9207 = vunpack.c.l.b16 %v8818
        %v9208 = vunpack.c.h.b16 %v8818
        %v9209 = vunpack.c.l.b16 %v8819
        %v9210 = vunpack.c.h.b16 %v8819
        %v9211 = vunpack.c.l.b16 %v8820
        %v9212 = vunpack.c.h.b16 %v8820
        %v9213 = vunpack.c.l.b16 %v8821
        %v9214 = vunpack.c.h.b16 %v8821
        %v9215 = vunpack.c.l.b16 %v8822
        %v9216 = vunpack.c.h.b16 %v8822
        %v9217 = vunpack.c.l.b16 %v8823
        %v9218 = vunpack.c.h.b16 %v8823
        %v9219 = vunpack.c.l.b16 %v8824
        %v9220 = vunpack.c.h.b16 %v8824
        %v9221 = vpack.c.b16 %v8967, %v8965
        %v9222 = vpack.c.b16 %v8968, %v8966
        %v9223 = vpack.c.b16 %v8971, %v8969
        %v9224 = vpack.c.b16 %v8972, %v8970
        %v9225 = vpack.c.b16 %v8975, %v8973
        %v9226 = vpack.c.b16 %v8976, %v8974
        %v9227 = vpack.c.b16 %v8979, %v8977
        %v9228 = vpack.c.b16 %v8980, %v8978
        %v9229 = vpack.c.b16 %v8983, %v8981
        %v9230 = vpack.c.b16 %v8984, %v8982
        %v9231 = vpack.c.b16 %v8987, %v8985
        %v9232 = vpack.c.b16 %v8988, %v8986
        %v9233 = vpack.c.b16 %v8991, %v8989
        %v9234 = vpack.c.b16 %v8992, %v8990
        %v9235 = vpack.c.b16 %v8995, %v8993
        %v9236 = vpack.c.b16 %v8996, %v8994
        %v9237 = vpack.c.b16 %v8999, %v8997
        %v9238 = vpack.c.b16 %v9000, %v8998
        %v9239 = vpack.c.b16 %v9003, %v9001
        %v9240 = vpack.c.b16 %v9004, %v9002
        %v9241 = vpack.c.b16 %v9007, %v9005
        %v9242 = vpack.c.b16 %v9008, %v9006
        %v9243 = vpack.c.b16 %v9011, %v9009
        %v9244 = vpack.c.b16 %v9012, %v9010
        %v9245 = vpack.c.b16 %v9015, %v9013
        %v9246 = vpack.c.b16 %v9016, %v9014
        %v9247 = vpack.c.b16 %v9019, %v9017
        %v9248 = vpack.c.b16 %v9020, %v9018
        %v9249 = vpack.c.b16 %v9023, %v9021
        %v9250 = vpack.c.b16 %v9024, %v9022
        %v9251 = vpack.c.b16 %v9027, %v9025
        %v9252 = vpack.c.b16 %v9028, %v9026
        %v9253 = vpack.c.b16 %v9031, %v9029
        %v9254 = vpack.c.b16 %v9032, %v9030
        %v9255 = vpack.c.b16 %v9035, %v9033
        %v9256 = vpack.c.b16 %v9036, %v9034
        %v9257 = vpack.c.b16 %v9039, %v9037
        %v9258 = vpack.c.b16 %v9040, %v9038
        %v9259 = vpack.c.b16 %v9043, %v9041
        %v9260 = vpack.c.b16 %v9044, %v9042
        %v9261 = vpack.c.b16 %v9047, %v9045
        %v9262 = vpack.c.b16 %v9048, %v9046
        %v9263 = vpack.c.b16 %v9051, %v9049
        %v9264 = vpack.c.b16 %v9052, %v9050
        %v9265 = vpack.c.b16 %v9055, %v9053
        %v9266 = vpack.c.b16 %v9056, %v9054
        %v9267 = vpack.c.b16 %v9059, %v9057
        %v9268 = vpack.c.b16 %v9060, %v9058
        %v9269 = vpack.c.b16 %v9063, %v9061
        %v9270 = vpack.c.b16 %v9064, %v9062
        %v9271 = vpack.c.b16 %v9067, %v9065
        %v9272 = vpack.c.b16 %v9068, %v9066
        %v9273 = vpack.c.b16 %v9071, %v9069
        %v9274 = vpack.c.b16 %v9072, %v9070
        %v9275 = vpack.c.b16 %v9075, %v9073
        %v9276 = vpack.c.b16 %v9076, %v9074
        %v9277 = vpack.c.b16 %v9079, %v9077
        %v9278 = vpack.c.b16 %v9080, %v9078
        %v9279 = vpack.c.b16 %v9083, %v9081
        %v9280 = vpack.c.b16 %v9084, %v9082
        %v9281 = vpack.c.b16 %v9087, %v9085
        %v9282 = vpack.c.b16 %v9088, %v9086
        %v9283 = vpack.c.b16 %v9091, %v9089
        %v9284 = vpack.c.b16 %v9092, %v9090
        %v9285 = vpack.c.b16 %v9095, %v9093
        %v9286 = vpack.c.b16 %v9096, %v9094
        %v9287 = vpack.c.b16 %v9099, %v9097
        %v9288 = vpack.c.b16 %v9100, %v9098
        %v9289 = vpack.c.b16 %v9103, %v9101
        %v9290 = vpack.c.b16 %v9104, %v9102
        %v9291 = vpack.c.b16 %v9107, %v9105
        %v9292 = vpack.c.b16 %v9108, %v9106
        %v9293 = vpack.c.b16 %v9111, %v9109
        %v9294 = vpack.c.b16 %v9112, %v9110
        %v9295 = vpack.c.b16 %v9115, %v9113
        %v9296 = vpack.c.b16 %v9116, %v9114
        %v9297 = vpack.c.b16 %v9119, %v9117
        %v9298 = vpack.c.b16 %v9120, %v9118
        %v9299 = vpack.c.b16 %v9123, %v9121
        %v9300 = vpack.c.b16 %v9124, %v9122
        %v9301 = vpack.c.b16 %v9127, %v9125
        %v9302 = vpack.c.b16 %v9128, %v9126
        %v9303 = vpack.c.b16 %v9131, %v9129
        %v9304 = vpack.c.b16 %v9132, %v9130
        %v9305 = vpack.c.b16 %v9135, %v9133
        %v9306 = vpack.c.b16 %v9136, %v9134
        %v9307 = vpack.c.b16 %v9139, %v9137
        %v9308 = vpack.c.b16 %v9140, %v9138
        %v9309 = vpack.c.b16 %v9143, %v9141
        %v9310 = vpack.c.b16 %v9144, %v9142
        %v9311 = vpack.c.b16 %v9147, %v9145
        %v9312 = vpack.c.b16 %v9148, %v9146
        %v9313 = vpack.c.b16 %v9151, %v9149
        %v9314 = vpack.c.b16 %v9152, %v9150
        %v9315 = vpack.c.b16 %v9155, %v9153
        %v9316 = vpack.c.b16 %v9156, %v9154
        %v9317 = vpack.c.b16 %v9159, %v9157
        %v9318 = vpack.c.b16 %v9160, %v9158
        %v9319 = vpack.c.b16 %v9163, %v9161
        %v9320 = vpack.c.b16 %v9164, %v9162
        %v9321 = vpack.c.b16 %v9167, %v9165
        %v9322 = vpack.c.b16 %v9168, %v9166
        %v9323 = vpack.c.b16 %v9171, %v9169
        %v9324 = vpack.c.b16 %v9172, %v9170
        %v9325 = vpack.c.b16 %v9175, %v9173
        %v9326 = vpack.c.b16 %v9176, %v9174
        %v9327 = vpack.c.b16 %v9179, %v9177
        %v9328 = vpack.c.b16 %v9180, %v9178
        %v9329 = vpack.c.b16 %v9183, %v9181
        %v9330 = vpack.c.b16 %v9184, %v9182
        %v9331 = vpack.c.b16 %v9187, %v9185
        %v9332 = vpack.c.b16 %v9188, %v9186
        %v9333 = vpack.c.b16 %v9191, %v9189
        %v9334 = vpack.c.b16 %v9192, %v9190
        %v9335 = vpack.c.b16 %v9195, %v9193
        %v9336 = vpack.c.b16 %v9196, %v9194
        %v9337 = vpack.c.b16 %v9199, %v9197
        %v9338 = vpack.c.b16 %v9200, %v9198
        %v9339 = vpack.c.b16 %v9203, %v9201
        %v9340 = vpack.c.b16 %v9204, %v9202
        %v9341 = vpack.c.b16 %v9207, %v9205
        %v9342 = vpack.c.b16 %v9208, %v9206
        %v9343 = vpack.c.b16 %v9211, %v9209
        %v9344 = vpack.c.b16 %v9212, %v9210
        %v9345 = vpack.c.b16 %v9215, %v9213
        %v9346 = vpack.c.b16 %v9216, %v9214
        %v9347 = vpack.c.b16 %v9219, %v9217
        %v9348 = vpack.c.b16 %v9220, %v9218
        %9477 = vmatprep.subr.bf16.mxu0 %v9222
        %9478 = vmatpush1.bf16.msra.mxu0 %v9221
        %9479 = vmatprep.subr.bf16.mxu0 %v9224
        %9480 = vmatpush1.bf16.msra.mxu0 %v9223
        %9481 = vmatprep.subr.bf16.mxu0 %v9226
        %9482 = vmatpush1.bf16.msra.mxu0 %v9225
        %9483 = vmatprep.subr.bf16.mxu0 %v9228
        %9484 = vmatpush1.bf16.msra.mxu0 %v9227
        %9485 = vmatprep.subr.bf16.mxu0 %v9230
        %9486 = vmatpush1.bf16.msra.mxu0 %v9229
        %9487 = vmatprep.subr.bf16.mxu0 %v9232
        %9488 = vmatpush1.bf16.msra.mxu0 %v9231
        %9489 = vmatprep.subr.bf16.mxu0 %v9234
        %9490 = vmatpush1.bf16.msra.mxu0 %v9233
        %9491 = vmatprep.subr.bf16.mxu0 %v9236
        %9492 = vmatpush1.bf16.msra.mxu0 %v9235
        %9493 = vmatprep.subr.bf16.mxu0 %v9238
        %9494 = vmatpush1.bf16.msra.mxu0 %v9237
        %9495 = vmatprep.subr.bf16.mxu0 %v9240
        %9496 = vmatpush1.bf16.msra.mxu0 %v9239
        %9497 = vmatprep.subr.bf16.mxu0 %v9242
        %9498 = vmatpush1.bf16.msra.mxu0 %v9241
        %9499 = vmatprep.subr.bf16.mxu0 %v9244
        %9500 = vmatpush1.bf16.msra.mxu0 %v9243
        %9501 = vmatprep.subr.bf16.mxu0 %v9246
        %9502 = vmatpush1.bf16.msra.mxu0 %v9245
        %9503 = vmatprep.subr.bf16.mxu0 %v9248
        %9504 = vmatpush1.bf16.msra.mxu0 %v9247
        %9505 = vmatprep.subr.bf16.mxu0 %v9250
        %9506 = vmatpush1.bf16.msra.mxu0 %v9249
        %9507 = vmatprep.subr.bf16.mxu0 %v9252
        %9508 = vmatpush1.bf16.msra.mxu0 %v9251
        %9509 = vmatprep.mubr.bf16.mxu0 %v8634
        %9510 = vmatmul.mubr.bf16.gmra.mrb[0].mxu0 %v8633
        %v9511 = vpop.f32.mrb[0].mxu0
        %v9512 = vadd.f32 %v8830, %v9511
        %v9513 = vpop.f32.mrb[0].mxu0
        %v9514 = vadd.f32 %v8834, %v9513
        %v9515 = vpop.f32.mrb[0].mxu0
        %v9516 = vadd.f32 %v8830, %v9515
        %v9517 = vpop.f32.mrb[0].mxu0
        %v9518 = vadd.f32 %v8834, %v9517
        %9519 = vmatprep.mubr.bf16.mxu0 %v8642
        %9520 = vmatmul.mubr.bf16.gmra.mrb[0].mxu0 %v8641
        %v9521 = vpop.f32.mrb[0].mxu0
        %v9522 = vadd.f32 %v8830, %v9521
        %v9523 = vpop.f32.mrb[0].mxu0
        %v9524 = vadd.f32 %v8834, %v9523
        %v9525 = vpop.f32.mrb[0].mxu0
        %v9526 = vadd.f32 %v8830, %v9525
        %v9527 = vpop.f32.mrb[0].mxu0
        %v9528 = vadd.f32 %v8834, %v9527
        %9529 = vmatprep.mubr.bf16.mxu0 %v8650
        %9530 = vmatmul.mubr.bf16.gmra.mrb[0].mxu0 %v8649
        %v9531 = vpop.f32.mrb[0].mxu0
        %v9532 = vadd.f32 %v8830, %v9531
        %v9533 = vpop.f32.mrb[0].mxu0
        %v9534 = vadd.f32 %v8834, %v9533
        %v9535 = vpop.f32.mrb[0].mxu0
        %v9536 = vadd.f32 %v8830, %v9535
        %v9537 = vpop.f32.mrb[0].mxu0
        %v9538 = vadd.f32 %v8834, %v9537
        %9539 = vmatprep.mubr.bf16.mxu0 %v8658
        %9540 = vmatmul.mubr.bf16.gmra.mrb[0].mxu0 %v8657
        %v9541 = vpop.f32.mrb[0].mxu0
        %v9542 = vadd.f32 %v8830, %v9541
        %v9543 = vpop.f32.mrb[0].mxu0
        %v9544 = vadd.f32 %v8834, %v9543
        %v9545 = vpop.f32.mrb[0].mxu0
        %v9546 = vadd.f32 %v8830, %v9545
        %v9547 = vpop.f32.mrb[0].mxu0
        %v9548 = vadd.f32 %v8834, %v9547
        %9549 = vmatprep.mubr.bf16.mxu0 %v8666
        %9550 = vmatmul.mubr.bf16.gmra.mrb[0].mxu0 %v8665
        %v9551 = vpop.f32.mrb[0].mxu0
        %v9552 = vadd.f32 %v8830, %v9551
        %v9553 = vpop.f32.mrb[0].mxu0
        %v9554 = vadd.f32 %v8834, %v9553
        %v9555 = vpop.f32.mrb[0].mxu0
        %v9556 = vadd.f32 %v8830, %v9555
        %v9557 = vpop.f32.mrb[0].mxu0
        %v9558 = vadd.f32 %v8834, %v9557
        %9559 = vmatprep.mubr.bf16.mxu0 %v8674
        %9560 = vmatmul.mubr.bf16.gmra.mrb[0].mxu0 %v8673
        %v9561 = vpop.f32.mrb[0].mxu0
        %v9562 = vadd.f32 %v8830, %v9561
        %v9563 = vpop.f32.mrb[0].mxu0
        %v9564 = vadd.f32 %v8834, %v9563
        %v9565 = vpop.f32.mrb[0].mxu0
        %v9566 = vadd.f32 %v8830, %v9565
        %v9567 = vpop.f32.mrb[0].mxu0
        %v9568 = vadd.f32 %v8834, %v9567
        %9569 = vmatprep.mubr.bf16.mxu0 %v8682
        %9570 = vmatmul.mubr.bf16.gmra.mrb[0].mxu0 %v8681
        %v9571 = vpop.f32.mrb[0].mxu0
        %v9572 = vadd.f32 %v8830, %v9571
        %v9573 = vpop.f32.mrb[0].mxu0
        %v9574 = vadd.f32 %v8834, %v9573
        %v9575 = vpop.f32.mrb[0].mxu0
        %v9576 = vadd.f32 %v8830, %v9575
        %v9577 = vpop.f32.mrb[0].mxu0
        %v9578 = vadd.f32 %v8834, %v9577
        %9579 = vmatprep.mubr.bf16.mxu0 %v8690
        %9580 = vmatmul.mubr.bf16.gmra.mrb[0].mxu0 %v8689
        %v9581 = vpop.f32.mrb[0].mxu0
        %v9582 = vadd.f32 %v8830, %v9581
        %v9583 = vpop.f32.mrb[0].mxu0
        %v9584 = vadd.f32 %v8834, %v9583
        %v9585 = vpop.f32.mrb[0].mxu0
        %v9586 = vadd.f32 %v8830, %v9585
        %v9587 = vpop.f32.mrb[0].mxu0
        %v9588 = vadd.f32 %v8834, %v9587
        %9589 = vdwg.mxu0
        %9590 = vmatprep.subr.bf16.mxu0 %v9254
        %9591 = vmatpush1.bf16.msra.mxu0 %v9253
        %9592 = vmatprep.subr.bf16.mxu0 %v9256
        %9593 = vmatpush1.bf16.msra.mxu0 %v9255
        %9594 = vmatprep.subr.bf16.mxu0 %v9258
        %9595 = vmatpush1.bf16.msra.mxu0 %v9257
        %9596 = vmatprep.subr.bf16.mxu0 %v9260
        %9597 = vmatpush1.bf16.msra.mxu0 %v9259
        %9598 = vmatprep.subr.bf16.mxu0 %v9262
        %9599 = vmatpush1.bf16.msra.mxu0 %v9261
        %9600 = vmatprep.subr.bf16.mxu0 %v9264
        %9601 = vmatpush1.bf16.msra.mxu0 %v9263
        %9602 = vmatprep.subr.bf16.mxu0 %v9266
        %9603 = vmatpush1.bf16.msra.mxu0 %v9265
        %9604 = vmatprep.subr.bf16.mxu0 %v9268
        %9605 = vmatpush1.bf16.msra.mxu0 %v9267
        %9606 = vmatprep.subr.bf16.mxu0 %v9270
        %9607 = vmatpush1.bf16.msra.mxu0 %v9269
        %9608 = vmatprep.subr.bf16.mxu0 %v9272
        %9609 = vmatpush1.bf16.msra.mxu0 %v9271
        %9610 = vmatprep.subr.bf16.mxu0 %v9274
        %9611 = vmatpush1.bf16.msra.mxu0 %v9273
        %9612 = vmatprep.subr.bf16.mxu0 %v9276
        %9613 = vmatpush1.bf16.msra.mxu0 %v9275
        %9614 = vmatprep.subr.bf16.mxu0 %v9278
        %9615 = vmatpush1.bf16.msra.mxu0 %v9277
        %9616 = vmatprep.subr.bf16.mxu0 %v9280
        %9617 = vmatpush1.bf16.msra.mxu0 %v9279
        %9618 = vmatprep.subr.bf16.mxu0 %v9282
        %9619 = vmatpush1.bf16.msra.mxu0 %v9281
        %9620 = vmatprep.subr.bf16.mxu0 %v9284
        %9621 = vmatpush1.bf16.msra.mxu0 %v9283
        %9622 = vmatprep.mubr.bf16.mxu0 %v8636
        %9623 = vmatmul.mubr.bf16.gmra.mrb[0].mxu0 %v8635
        %v9624 = vpop.f32.mrb[0].mxu0
        %v9625 = vadd.f32 %v9512, %v9624
        %v9626 = vpop.f32.mrb[0].mxu0
        %v9627 = vadd.f32 %v9514, %v9626
        %v9628 = vpop.f32.mrb[0].mxu0
        %v9629 = vadd.f32 %v9516, %v9628
        %v9630 = vpop.f32.mrb[0].mxu0
        %v9631 = vadd.f32 %v9518, %v9630
        %9632 = vmatprep.mubr.bf16.mxu0 %v8644
        %9633 = vmatmul.mubr.bf16.gmra.mrb[0].mxu0 %v8643
        %v9634 = vpop.f32.mrb[0].mxu0
        %v9635 = vadd.f32 %v9522, %v9634
        %v9636 = vpop.f32.mrb[0].mxu0
        %v9637 = vadd.f32 %v9524, %v9636
        %v9638 = vpop.f32.mrb[0].mxu0
        %v9639 = vadd.f32 %v9526, %v9638
        %v9640 = vpop.f32.mrb[0].mxu0
        %v9641 = vadd.f32 %v9528, %v9640
        %9642 = vmatprep.mubr.bf16.mxu0 %v8652
        %9643 = vmatmul.mubr.bf16.gmra.mrb[0].mxu0 %v8651
        %v9644 = vpop.f32.mrb[0].mxu0
        %v9645 = vadd.f32 %v9532, %v9644
        %v9646 = vpop.f32.mrb[0].mxu0
        %v9647 = vadd.f32 %v9534, %v9646
        %v9648 = vpop.f32.mrb[0].mxu0
        %v9649 = vadd.f32 %v9536, %v9648
        %v9650 = vpop.f32.mrb[0].mxu0
        %v9651 = vadd.f32 %v9538, %v9650
        %9652 = vmatprep.mubr.bf16.mxu0 %v8660
        %9653 = vmatmul.mubr.bf16.gmra.mrb[0].mxu0 %v8659
        %v9654 = vpop.f32.mrb[0].mxu0
        %v9655 = vadd.f32 %v9542, %v9654
        %v9656 = vpop.f32.mrb[0].mxu0
        %v9657 = vadd.f32 %v9544, %v9656
        %v9658 = vpop.f32.mrb[0].mxu0
        %v9659 = vadd.f32 %v9546, %v9658
        %v9660 = vpop.f32.mrb[0].mxu0
        %v9661 = vadd.f32 %v9548, %v9660
        %9662 = vmatprep.mubr.bf16.mxu0 %v8668
        %9663 = vmatmul.mubr.bf16.gmra.mrb[0].mxu0 %v8667
        %v9664 = vpop.f32.mrb[0].mxu0
        %v9665 = vadd.f32 %v9552, %v9664
        %v9666 = vpop.f32.mrb[0].mxu0
        %v9667 = vadd.f32 %v9554, %v9666
        %v9668 = vpop.f32.mrb[0].mxu0
        %v9669 = vadd.f32 %v9556, %v9668
        %v9670 = vpop.f32.mrb[0].mxu0
        %v9671 = vadd.f32 %v9558, %v9670
        %9672 = vmatprep.mubr.bf16.mxu0 %v8676
        %9673 = vmatmul.mubr.bf16.gmra.mrb[0].mxu0 %v8675
        %v9674 = vpop.f32.mrb[0].mxu0
        %v9675 = vadd.f32 %v9562, %v9674
        %v9676 = vpop.f32.mrb[0].mxu0
        %v9677 = vadd.f32 %v9564, %v9676
        %v9678 = vpop.f32.mrb[0].mxu0
        %v9679 = vadd.f32 %v9566, %v9678
        %v9680 = vpop.f32.mrb[0].mxu0
        %v9681 = vadd.f32 %v9568, %v9680
        %9682 = vmatprep.mubr.bf16.mxu0 %v8684
        %9683 = vmatmul.mubr.bf16.gmra.mrb[0].mxu0 %v8683
        %v9684 = vpop.f32.mrb[0].mxu0
        %v9685 = vadd.f32 %v9572, %v9684
        %v9686 = vpop.f32.mrb[0].mxu0
        %v9687 = vadd.f32 %v9574, %v9686
        %v9688 = vpop.f32.mrb[0].mxu0
        %v9689 = vadd.f32 %v9576, %v9688
        %v9690 = vpop.f32.mrb[0].mxu0
        %v9691 = vadd.f32 %v9578, %v9690
        %9692 = vmatprep.mubr.bf16.mxu0 %v8692
        %9693 = vmatmul.mubr.bf16.gmra.mrb[0].mxu0 %v8691
        %v9694 = vpop.f32.mrb[0].mxu0
        %v9695 = vadd.f32 %v9582, %v9694
        %v9696 = vpop.f32.mrb[0].mxu0
        %v9697 = vadd.f32 %v9584, %v9696
        %v9698 = vpop.f32.mrb[0].mxu0
        %v9699 = vadd.f32 %v9586, %v9698
        %v9700 = vpop.f32.mrb[0].mxu0
        %v9701 = vadd.f32 %v9588, %v9700
        %9702 = vdwg.mxu0
        %9703 = vmatprep.subr.bf16.mxu0 %v9286
        %9704 = vmatpush1.bf16.msra.mxu0 %v9285
        %9705 = vmatprep.subr.bf16.mxu0 %v9288
        %9706 = vmatpush1.bf16.msra.mxu0 %v9287
        %9707 = vmatprep.subr.bf16.mxu0 %v9290
        %9708 = vmatpush1.bf16.msra.mxu0 %v9289
        %9709 = vmatprep.subr.bf16.mxu0 %v9292
        %9710 = vmatpush1.bf16.msra.mxu0 %v9291
        %9711 = vmatprep.subr.bf16.mxu0 %v9294
        %9712 = vmatpush1.bf16.msra.mxu0 %v9293
        %9713 = vmatprep.subr.bf16.mxu0 %v9296
        %9714 = vmatpush1.bf16.msra.mxu0 %v9295
        %9715 = vmatprep.subr.bf16.mxu0 %v9298
        %9716 = vmatpush1.bf16.msra.mxu0 %v9297
        %9717 = vmatprep.subr.bf16.mxu0 %v9300
        %9718 = vmatpush1.bf16.msra.mxu0 %v9299
        %9719 = vmatprep.subr.bf16.mxu0 %v9302
        %9720 = vmatpush1.bf16.msra.mxu0 %v9301
        %9721 = vmatprep.subr.bf16.mxu0 %v9304
        %9722 = vmatpush1.bf16.msra.mxu0 %v9303
        %9723 = vmatprep.subr.bf16.mxu0 %v9306
        %9724 = vmatpush1.bf16.msra.mxu0 %v9305
        %9725 = vmatprep.subr.bf16.mxu0 %v9308
        %9726 = vmatpush1.bf16.msra.mxu0 %v9307
        %9727 = vmatprep.subr.bf16.mxu0 %v9310
        %9728 = vmatpush1.bf16.msra.mxu0 %v9309
        %9729 = vmatprep.subr.bf16.mxu0 %v9312
        %9730 = vmatpush1.bf16.msra.mxu0 %v9311
        %9731 = vmatprep.subr.bf16.mxu0 %v9314
        %9732 = vmatpush1.bf16.msra.mxu0 %v9313
        %9733 = vmatprep.subr.bf16.mxu0 %v9316
        %9734 = vmatpush1.bf16.msra.mxu0 %v9315
        %9735 = vmatprep.mubr.bf16.mxu0 %v8638
        %9736 = vmatmul.mubr.bf16.gmra.mrb[0].mxu0 %v8637
        %v9737 = vpop.f32.mrb[0].mxu0
        %v9738 = vadd.f32 %v9625, %v9737
        %v9739 = vpop.f32.mrb[0].mxu0
        %v9740 = vadd.f32 %v9627, %v9739
        %v9741 = vpop.f32.mrb[0].mxu0
        %v9742 = vadd.f32 %v9629, %v9741
        %v9743 = vpop.f32.mrb[0].mxu0
        %v9744 = vadd.f32 %v9631, %v9743
        %9745 = vmatprep.mubr.bf16.mxu0 %v8646
        %9746 = vmatmul.mubr.bf16.gmra.mrb[0].mxu0 %v8645
        %v9747 = vpop.f32.mrb[0].mxu0
        %v9748 = vadd.f32 %v9635, %v9747
        %v9749 = vpop.f32.mrb[0].mxu0
        %v9750 = vadd.f32 %v9637, %v9749
        %v9751 = vpop.f32.mrb[0].mxu0
        %v9752 = vadd.f32 %v9639, %v9751
        %v9753 = vpop.f32.mrb[0].mxu0
        %v9754 = vadd.f32 %v9641, %v9753
        %9755 = vmatprep.mubr.bf16.mxu0 %v8654
        %9756 = vmatmul.mubr.bf16.gmra.mrb[0].mxu0 %v8653
        %v9757 = vpop.f32.mrb[0].mxu0
        %v9758 = vadd.f32 %v9645, %v9757
        %v9759 = vpop.f32.mrb[0].mxu0
        %v9760 = vadd.f32 %v9647, %v9759
        %v9761 = vpop.f32.mrb[0].mxu0
        %v9762 = vadd.f32 %v9649, %v9761
        %v9763 = vpop.f32.mrb[0].mxu0
        %v9764 = vadd.f32 %v9651, %v9763
        %9765 = vmatprep.mubr.bf16.mxu0 %v8662
        %9766 = vmatmul.mubr.bf16.gmra.mrb[0].mxu0 %v8661
        %v9767 = vpop.f32.mrb[0].mxu0
        %v9768 = vadd.f32 %v9655, %v9767
        %v9769 = vpop.f32.mrb[0].mxu0
        %v9770 = vadd.f32 %v9657, %v9769
        %v9771 = vpop.f32.mrb[0].mxu0
        %v9772 = vadd.f32 %v9659, %v9771
        %v9773 = vpop.f32.mrb[0].mxu0
        %v9774 = vadd.f32 %v9661, %v9773
        %9775 = vmatprep.mubr.bf16.mxu0 %v8670
        %9776 = vmatmul.mubr.bf16.gmra.mrb[0].mxu0 %v8669
        %v9777 = vpop.f32.mrb[0].mxu0
        %v9778 = vadd.f32 %v9665, %v9777
        %v9779 = vpop.f32.mrb[0].mxu0
        %v9780 = vadd.f32 %v9667, %v9779
        %v9781 = vpop.f32.mrb[0].mxu0
        %v9782 = vadd.f32 %v9669, %v9781
        %v9783 = vpop.f32.mrb[0].mxu0
        %v9784 = vadd.f32 %v9671, %v9783
        %9785 = vmatprep.mubr.bf16.mxu0 %v8678
        %9786 = vmatmul.mubr.bf16.gmra.mrb[0].mxu0 %v8677
        %v9787 = vpop.f32.mrb[0].mxu0
        %v9788 = vadd.f32 %v9675, %v9787
        %v9789 = vpop.f32.mrb[0].mxu0
        %v9790 = vadd.f32 %v9677, %v9789
        %v9791 = vpop.f32.mrb[0].mxu0
        %v9792 = vadd.f32 %v9679, %v9791
        %v9793 = vpop.f32.mrb[0].mxu0
        %v9794 = vadd.f32 %v9681, %v9793
        %9795 = vmatprep.mubr.bf16.mxu0 %v8686
        %9796 = vmatmul.mubr.bf16.gmra.mrb[0].mxu0 %v8685
        %v9797 = vpop.f32.mrb[0].mxu0
        %v9798 = vadd.f32 %v9685, %v9797
        %v9799 = vpop.f32.mrb[0].mxu0
        %v9800 = vadd.f32 %v9687, %v9799
        %v9801 = vpop.f32.mrb[0].mxu0
        %v9802 = vadd.f32 %v9689, %v9801
        %v9803 = vpop.f32.mrb[0].mxu0
        %v9804 = vadd.f32 %v9691, %v9803
        %9805 = vmatprep.mubr.bf16.mxu0 %v8694
        %9806 = vmatmul.mubr.bf16.gmra.mrb[0].mxu0 %v8693
        %v9807 = vpop.f32.mrb[0].mxu0
        %v9808 = vadd.f32 %v9695, %v9807
        %v9809 = vpop.f32.mrb[0].mxu0
        %v9810 = vadd.f32 %v9697, %v9809
        %v9811 = vpop.f32.mrb[0].mxu0
        %v9812 = vadd.f32 %v9699, %v9811
        %v9813 = vpop.f32.mrb[0].mxu0
        %v9814 = vadd.f32 %v9701, %v9813
        %9815 = vdwg.mxu0
        %9816 = vmatprep.subr.bf16.mxu0 %v9318
        %9817 = vmatpush1.bf16.msra.mxu0 %v9317
        %9818 = vmatprep.subr.bf16.mxu0 %v9320
        %9819 = vmatpush1.bf16.msra.mxu0 %v9319
        %9820 = vmatprep.subr.bf16.mxu0 %v9322
        %9821 = vmatpush1.bf16.msra.mxu0 %v9321
        %9822 = vmatprep.subr.bf16.mxu0 %v9324
        %9823 = vmatpush1.bf16.msra.mxu0 %v9323
        %9824 = vmatprep.subr.bf16.mxu0 %v9326
        %9825 = vmatpush1.bf16.msra.mxu0 %v9325
        %9826 = vmatprep.subr.bf16.mxu0 %v9328
        %9827 = vmatpush1.bf16.msra.mxu0 %v9327
        %9828 = vmatprep.subr.bf16.mxu0 %v9330
        %9829 = vmatpush1.bf16.msra.mxu0 %v9329
        %9830 = vmatprep.subr.bf16.mxu0 %v9332
        %9831 = vmatpush1.bf16.msra.mxu0 %v9331
        %9832 = vmatprep.subr.bf16.mxu0 %v9334
        %9833 = vmatpush1.bf16.msra.mxu0 %v9333
        %9834 = vmatprep.subr.bf16.mxu0 %v9336
        %9835 = vmatpush1.bf16.msra.mxu0 %v9335
        %9836 = vmatprep.subr.bf16.mxu0 %v9338
        %9837 = vmatpush1.bf16.msra.mxu0 %v9337
        %9838 = vmatprep.subr.bf16.mxu0 %v9340
        %9839 = vmatpush1.bf16.msra.mxu0 %v9339
        %9840 = vmatprep.subr.bf16.mxu0 %v9342
        %9841 = vmatpush1.bf16.msra.mxu0 %v9341
        %9842 = vmatprep.subr.bf16.mxu0 %v9344
        %9843 = vmatpush1.bf16.msra.mxu0 %v9343
        %9844 = vmatprep.subr.bf16.mxu0 %v9346
        %9845 = vmatpush1.bf16.msra.mxu0 %v9345
        %9846 = vmatprep.subr.bf16.mxu0 %v9348
        %9847 = vmatpush1.bf16.msra.mxu0 %v9347
        %9848 = vmatprep.mubr.bf16.mxu0 %v8640
        %9849 = vmatmul.mubr.bf16.gmra.mrb[0].mxu0 %v8639
        %v9850 = vpop.f32.mrb[0].mxu0
        %v9851 = vadd.f32 %v9738, %v9850
        %v9852 = vpop.f32.mrb[0].mxu0
        %v9853 = vadd.f32 %v9740, %v9852
        %v9854 = vpop.f32.mrb[0].mxu0
        %v9855 = vadd.f32 %v9742, %v9854
        %v9856 = vpop.f32.mrb[0].mxu0
        %v9857 = vadd.f32 %v9744, %v9856
        %9858 = vmatprep.mubr.bf16.mxu0 %v8648
        %9859 = vmatmul.mubr.bf16.gmra.mrb[0].mxu0 %v8647
        %v9860 = vpop.f32.mrb[0].mxu0
        %v9861 = vadd.f32 %v9748, %v9860
        %v9862 = vpop.f32.mrb[0].mxu0
        %v9863 = vadd.f32 %v9750, %v9862
        %v9864 = vpop.f32.mrb[0].mxu0
        %v9865 = vadd.f32 %v9752, %v9864
        %v9866 = vpop.f32.mrb[0].mxu0
        %v9867 = vadd.f32 %v9754, %v9866
        %9868 = vmatprep.mubr.bf16.mxu0 %v8656
        %9869 = vmatmul.mubr.bf16.gmra.mrb[0].mxu0 %v8655
        %v9870 = vpop.f32.mrb[0].mxu0
        %v9871 = vadd.f32 %v9758, %v9870
        %v9872 = vpop.f32.mrb[0].mxu0
        %v9873 = vadd.f32 %v9760, %v9872
        %v9874 = vpop.f32.mrb[0].mxu0
        %v9875 = vadd.f32 %v9762, %v9874
        %v9876 = vpop.f32.mrb[0].mxu0
        %v9877 = vadd.f32 %v9764, %v9876
        %9878 = vmatprep.mubr.bf16.mxu0 %v8664
        %9879 = vmatmul.mubr.bf16.gmra.mrb[0].mxu0 %v8663
        %v9880 = vpop.f32.mrb[0].mxu0
        %v9881 = vadd.f32 %v9768, %v9880
        %v9882 = vpop.f32.mrb[0].mxu0
        %v9883 = vadd.f32 %v9770, %v9882
        %v9884 = vpop.f32.mrb[0].mxu0
        %v9885 = vadd.f32 %v9772, %v9884
        %v9886 = vpop.f32.mrb[0].mxu0
        %v9887 = vadd.f32 %v9774, %v9886
        %9888 = vmatprep.mubr.bf16.mxu0 %v8672
        %9889 = vmatmul.mubr.bf16.gmra.mrb[0].mxu0 %v8671
        %v9890 = vpop.f32.mrb[0].mxu0
        %v9891 = vadd.f32 %v9778, %v9890
        %v9892 = vpop.f32.mrb[0].mxu0
        %v9893 = vadd.f32 %v9780, %v9892
        %v9894 = vpop.f32.mrb[0].mxu0
        %v9895 = vadd.f32 %v9782, %v9894
        %v9896 = vpop.f32.mrb[0].mxu0
        %v9897 = vadd.f32 %v9784, %v9896
        %9898 = vmatprep.mubr.bf16.mxu0 %v8680
        %9899 = vmatmul.mubr.bf16.gmra.mrb[0].mxu0 %v8679
        %v9900 = vpop.f32.mrb[0].mxu0
        %v9901 = vadd.f32 %v9788, %v9900
        %v9902 = vpop.f32.mrb[0].mxu0
        %v9903 = vadd.f32 %v9790, %v9902
        %v9904 = vpop.f32.mrb[0].mxu0
        %v9905 = vadd.f32 %v9792, %v9904
        %v9906 = vpop.f32.mrb[0].mxu0
        %v9907 = vadd.f32 %v9794, %v9906
        %9908 = vmatprep.mubr.bf16.mxu0 %v8688
        %9909 = vmatmul.mubr.bf16.gmra.mrb[0].mxu0 %v8687
        %v9910 = vpop.f32.mrb[0].mxu0
        %v9911 = vadd.f32 %v9798, %v9910
        %v9912 = vpop.f32.mrb[0].mxu0
        %v9913 = vadd.f32 %v9800, %v9912
        %v9914 = vpop.f32.mrb[0].mxu0
        %v9915 = vadd.f32 %v9802, %v9914
        %v9916 = vpop.f32.mrb[0].mxu0
        %v9917 = vadd.f32 %v9804, %v9916
        %9918 = vmatprep.mubr.bf16.mxu0 %v8696
        %9919 = vmatmul.mubr.bf16.gmra.mrb[0].mxu0 %v8695
        %v9920 = vpop.f32.mrb[0].mxu0
        %v9921 = vadd.f32 %v9808, %v9920
        %v9922 = vpop.f32.mrb[0].mxu0
        %v9923 = vadd.f32 %v9810, %v9922
        %v9924 = vpop.f32.mrb[0].mxu0
        %v9925 = vadd.f32 %v9812, %v9924
        %v9926 = vpop.f32.mrb[0].mxu0
        %v9927 = vadd.f32 %v9814, %v9926
        %9928 = vdwg.mxu0
        %v9929 = vxor.u32 %v9851, 2147483648
        %v9930 = vxor.u32 %v9853, 2147483648
        %v9931 = vxor.u32 %v9855, 2147483648
        %v9932 = vxor.u32 %v9857, 2147483648
        %v9933 = vxor.u32 %v9861, 2147483648
        %v9934 = vxor.u32 %v9863, 2147483648
        %v9935 = vxor.u32 %v9865, 2147483648
        %v9936 = vxor.u32 %v9867, 2147483648
        %v9937 = vxor.u32 %v9871, 2147483648
        %v9938 = vxor.u32 %v9873, 2147483648
        %v9939 = vxor.u32 %v9875, 2147483648
        %v9940 = vxor.u32 %v9877, 2147483648
        %v9941 = vxor.u32 %v9881, 2147483648
        %v9942 = vxor.u32 %v9883, 2147483648
        %v9943 = vxor.u32 %v9885, 2147483648
        %v9944 = vxor.u32 %v9887, 2147483648
        %v9945 = vxor.u32 %v9891, 2147483648
        %v9946 = vxor.u32 %v9893, 2147483648
        %v9947 = vxor.u32 %v9895, 2147483648
        %v9948 = vxor.u32 %v9897, 2147483648
        %v9949 = vxor.u32 %v9901, 2147483648
        %v9950 = vxor.u32 %v9903, 2147483648
        %v9951 = vxor.u32 %v9905, 2147483648
        %v9952 = vxor.u32 %v9907, 2147483648
        %v9953 = vxor.u32 %v9911, 2147483648
        %v9954 = vxor.u32 %v9913, 2147483648
        %v9955 = vxor.u32 %v9915, 2147483648
        %v9956 = vxor.u32 %v9917, 2147483648
        %v9957 = vxor.u32 %v9921, 2147483648
        %v9958 = vxor.u32 %v9923, 2147483648
        %v9959 = vxor.u32 %v9925, 2147483648
        %v9960 = vxor.u32 %v9927, 2147483648
        %v9961 = vmul.f32 %v9929, 1.442695
        %v9962 = vpow.pop %v9961
        %v9963 = vmul.f32 %v9930, 1.442695
        %v9964 = vpow.pop %v9963
        %v9965 = vmul.f32 %v9931, 1.442695
        %v9966 = vpow.pop %v9965
        %v9967 = vmul.f32 %v9932, 1.442695
        %v9968 = vpow.pop %v9967
        %v9969 = vmul.f32 %v9933, 1.442695
        %v9970 = vpow.pop %v9969
        %v9971 = vmul.f32 %v9934, 1.442695
        %v9972 = vpow.pop %v9971
        %v9973 = vmul.f32 %v9935, 1.442695
        %v9974 = vpow.pop %v9973
        %v9975 = vmul.f32 %v9936, 1.442695
        %v9976 = vpow.pop %v9975
        %v9977 = vmul.f32 %v9937, 1.442695
        %v9978 = vpow.pop %v9977
        %v9979 = vmul.f32 %v9938, 1.442695
        %v9980 = vpow.pop %v9979
        %v9981 = vmul.f32 %v9939, 1.442695
        %v9982 = vpow.pop %v9981
        %v9983 = vmul.f32 %v9940, 1.442695
        %v9984 = vpow.pop %v9983
        %v9985 = vmul.f32 %v9941, 1.442695
        %v9986 = vpow.pop %v9985
        %v9987 = vmul.f32 %v9942, 1.442695
        %v9988 = vpow.pop %v9987
        %v9989 = vmul.f32 %v9943, 1.442695
        %v9990 = vpow.pop %v9989
        %v9991 = vmul.f32 %v9944, 1.442695
        %v9992 = vpow.pop %v9991
        %v9993 = vmul.f32 %v9945, 1.442695
        %v9994 = vpow.pop %v9993
        %v9995 = vmul.f32 %v9946, 1.442695
        %v9996 = vpow.pop %v9995
        %v9997 = vmul.f32 %v9947, 1.442695
        %v9998 = vpow.pop %v9997
        %v9999 = vmul.f32 %v9948, 1.442695
        %v10000 = vpow.pop %v9999
        %v10001 = vmul.f32 %v9949, 1.442695
        %v10002 = vpow.pop %v10001
        %v10003 = vmul.f32 %v9950, 1.442695
        %v10004 = vpow.pop %v10003
        %v10005 = vmul.f32 %v9951, 1.442695
        %v10006 = vpow.pop %v10005
        %v10007 = vmul.f32 %v9952, 1.442695
        %v10008 = vpow.pop %v10007
        %v10009 = vmul.f32 %v9953, 1.442695
        %v10010 = vpow.pop %v10009
        %v10011 = vmul.f32 %v9954, 1.442695
        %v10012 = vpow.pop %v10011
        %v10013 = vmul.f32 %v9955, 1.442695
        %v10014 = vpow.pop %v10013
        %v10015 = vmul.f32 %v9956, 1.442695
        %v10016 = vpow.pop %v10015
        %v10017 = vmul.f32 %v9957, 1.442695
        %v10018 = vpow.pop %v10017
        %v10019 = vmul.f32 %v9958, 1.442695
        %v10020 = vpow.pop %v10019
        %v10021 = vmul.f32 %v9959, 1.442695
        %v10022 = vpow.pop %v10021
        %v10023 = vmul.f32 %v9960, 1.442695
        %v10024 = vpow.pop %v10023
        %v10025 = vadd.f32 %v9962, 1.0
        %v10026 = vadd.f32 %v9964, 1.0
        %v10027 = vadd.f32 %v9966, 1.0
        %v10028 = vadd.f32 %v9968, 1.0
        %v10029 = vadd.f32 %v9970, 1.0
        %v10030 = vadd.f32 %v9972, 1.0
        %v10031 = vadd.f32 %v9974, 1.0
        %v10032 = vadd.f32 %v9976, 1.0
        %v10033 = vadd.f32 %v9978, 1.0
        %v10034 = vadd.f32 %v9980, 1.0
        %v10035 = vadd.f32 %v9982, 1.0
        %v10036 = vadd.f32 %v9984, 1.0
        %v10037 = vadd.f32 %v9986, 1.0
        %v10038 = vadd.f32 %v9988, 1.0
        %v10039 = vadd.f32 %v9990, 1.0
        %v10040 = vadd.f32 %v9992, 1.0
        %v10041 = vadd.f32 %v9994, 1.0
        %v10042 = vadd.f32 %v9996, 1.0
        %v10043 = vadd.f32 %v9998, 1.0
        %v10044 = vadd.f32 %v10000, 1.0
        %v10045 = vadd.f32 %v10002, 1.0
        %v10046 = vadd.f32 %v10004, 1.0
        %v10047 = vadd.f32 %v10006, 1.0
        %v10048 = vadd.f32 %v10008, 1.0
        %v10049 = vadd.f32 %v10010, 1.0
        %v10050 = vadd.f32 %v10012, 1.0
        %v10051 = vadd.f32 %v10014, 1.0
        %v10052 = vadd.f32 %v10016, 1.0
        %v10053 = vadd.f32 %v10018, 1.0
        %v10054 = vadd.f32 %v10020, 1.0
        %v10055 = vadd.f32 %v10022, 1.0
        %v10056 = vadd.f32 %v10024, 1.0
        %v10057 = vrcp.pop %v10025
        %v10058 = vmul.f32 1.0, %v10057
        %v10059 = vrcp.pop %v10026
        %v10060 = vmul.f32 1.0, %v10059
        %v10061 = vrcp.pop %v10027
        %v10062 = vmul.f32 1.0, %v10061
        %v10063 = vrcp.pop %v10028
        %v10064 = vmul.f32 1.0, %v10063
        %v10065 = vrcp.pop %v10029
        %v10066 = vmul.f32 1.0, %v10065
        %v10067 = vrcp.pop %v10030
        %v10068 = vmul.f32 1.0, %v10067
        %v10069 = vrcp.pop %v10031
        %v10070 = vmul.f32 1.0, %v10069
        %v10071 = vrcp.pop %v10032
        %v10072 = vmul.f32 1.0, %v10071
        %v10073 = vrcp.pop %v10033
        %v10074 = vmul.f32 1.0, %v10073
        %v10075 = vrcp.pop %v10034
        %v10076 = vmul.f32 1.0, %v10075
        %v10077 = vrcp.pop %v10035
        %v10078 = vmul.f32 1.0, %v10077
        %v10079 = vrcp.pop %v10036
        %v10080 = vmul.f32 1.0, %v10079
        %v10081 = vrcp.pop %v10037
        %v10082 = vmul.f32 1.0, %v10081
        %v10083 = vrcp.pop %v10038
        %v10084 = vmul.f32 1.0, %v10083
        %v10085 = vrcp.pop %v10039
        %v10086 = vmul.f32 1.0, %v10085
        %v10087 = vrcp.pop %v10040
        %v10088 = vmul.f32 1.0, %v10087
        %v10089 = vrcp.pop %v10041
        %v10090 = vmul.f32 1.0, %v10089
        %v10091 = vrcp.pop %v10042
        %v10092 = vmul.f32 1.0, %v10091
        %v10093 = vrcp.pop %v10043
        %v10094 = vmul.f32 1.0, %v10093
        %v10095 = vrcp.pop %v10044
        %v10096 = vmul.f32 1.0, %v10095
        %v10097 = vrcp.pop %v10045
        %v10098 = vmul.f32 1.0, %v10097
        %v10099 = vrcp.pop %v10046
        %v10100 = vmul.f32 1.0, %v10099
        %v10101 = vrcp.pop %v10047
        %v10102 = vmul.f32 1.0, %v10101
        %v10103 = vrcp.pop %v10048
        %v10104 = vmul.f32 1.0, %v10103
        %v10105 = vrcp.pop %v10049
        %v10106 = vmul.f32 1.0, %v10105
        %v10107 = vrcp.pop %v10050
        %v10108 = vmul.f32 1.0, %v10107
        %v10109 = vrcp.pop %v10051
        %v10110 = vmul.f32 1.0, %v10109
        %v10111 = vrcp.pop %v10052
        %v10112 = vmul.f32 1.0, %v10111
        %v10113 = vrcp.pop %v10053
        %v10114 = vmul.f32 1.0, %v10113
        %v10115 = vrcp.pop %v10054
        %v10116 = vmul.f32 1.0, %v10115
        %v10117 = vrcp.pop %v10055
        %v10118 = vmul.f32 1.0, %v10117
        %v10119 = vrcp.pop %v10056
        %v10120 = vmul.f32 1.0, %v10119
        %10121 = vst [vmem:[%s669] sm:$0xff] %v10058
        %10122 = vst [vmem:[%s669 + $0x8] sm:$0xff] %v10060
        %10123 = vst [vmem:[%s669 + $0x10] sm:$0xff] %v10062
        %10124 = vst [vmem:[%s669 + $0x18] sm:$0xff] %v10064
        %10125 = vst [vmem:[%s669 + $0x20] sm:$0xff] %v10066
        %10126 = vst [vmem:[%s669 + $0x28] sm:$0xff] %v10068
        %10127 = vst [vmem:[%s669 + $0x30] sm:$0xff] %v10070
        %10128 = vst [vmem:[%s669 + $0x38] sm:$0xff] %v10072
        %10129 = vst [vmem:[%s669 + $0x40] sm:$0xff] %v10074
        %10130 = vst [vmem:[%s669 + $0x48] sm:$0xff] %v10076
        %10131 = vst [vmem:[%s669 + $0x50] sm:$0xff] %v10078
        %10132 = vst [vmem:[%s669 + $0x58] sm:$0xff] %v10080
        %10133 = vst [vmem:[%s669 + $0x60] sm:$0xff] %v10082
        %10134 = vst [vmem:[%s669 + $0x68] sm:$0xff] %v10084
        %10135 = vst [vmem:[%s669 + $0x70] sm:$0xff] %v10086
        %10136 = vst [vmem:[%s669 + $0x78] sm:$0xff] %v10088
        %10137 = vst [vmem:[%s669 + $0x80] sm:$0xff] %v10090
        %10138 = vst [vmem:[%s669 + $0x88] sm:$0xff] %v10092
        %10139 = vst [vmem:[%s669 + $0x90] sm:$0xff] %v10094
        %10140 = vst [vmem:[%s669 + $0x98] sm:$0xff] %v10096
        %10141 = vst [vmem:[%s669 + $0xa0] sm:$0xff] %v10098
        %10142 = vst [vmem:[%s669 + $0xa8] sm:$0xff] %v10100
        %10143 = vst [vmem:[%s669 + $0xb0] sm:$0xff] %v10102
        %10144 = vst [vmem:[%s669 + $0xb8] sm:$0xff] %v10104
        %10145 = vst [vmem:[%s669 + $0xc0] sm:$0xff] %v10106
        %10146 = vst [vmem:[%s669 + $0xc8] sm:$0xff] %v10108
        %10147 = vst [vmem:[%s669 + $0xd0] sm:$0xff] %v10110
        %10148 = vst [vmem:[%s669 + $0xd8] sm:$0xff] %v10112
        %10149 = vst [vmem:[%s669 + $0xe0] sm:$0xff] %v10114
        %10150 = vst [vmem:[%s669 + $0xe8] sm:$0xff] %v10116
        %10151 = vst [vmem:[%s669 + $0xf0] sm:$0xff] %v10118
        %10152 = vst [vmem:[%s669 + $0xf8] sm:$0xff] %v10120
        %10153 = vst [vmem:[%s676] sm:$0xff] %v5305
        %10154 = vst [vmem:[%s676 + $0x8] sm:$0xff] %v5307
        %10155 = vst [vmem:[%s676 + $0x10] sm:$0xff] %v5309
        %10156 = vst [vmem:[%s676 + $0x18] sm:$0xff] %v5311
        %10157 = vst [vmem:[%s676 + $0x20] sm:$0xff] %v5315
        %10158 = vst [vmem:[%s676 + $0x28] sm:$0xff] %v5317
        %10159 = vst [vmem:[%s676 + $0x30] sm:$0xff] %v5319
        %10160 = vst [vmem:[%s676 + $0x38] sm:$0xff] %v5321
        %10161 = vst [vmem:[%s676 + $0x40] sm:$0xff] %v5325
        %10162 = vst [vmem:[%s676 + $0x48] sm:$0xff] %v5327
        %10163 = vst [vmem:[%s676 + $0x50] sm:$0xff] %v5329
        %10164 = vst [vmem:[%s676 + $0x58] sm:$0xff] %v5331
        %10165 = vst [vmem:[%s676 + $0x60] sm:$0xff] %v5335
        %10166 = vst [vmem:[%s676 + $0x68] sm:$0xff] %v5337
        %10167 = vst [vmem:[%s676 + $0x70] sm:$0xff] %v5339
        %10168 = vst [vmem:[%s676 + $0x78] sm:$0xff] %v5341
        %10169 = vst [vmem:[%s676 + $0x80] sm:$0xff] %v5345
        %10170 = vst [vmem:[%s676 + $0x88] sm:$0xff] %v5347
        %10171 = vst [vmem:[%s676 + $0x90] sm:$0xff] %v5349
        %10172 = vst [vmem:[%s676 + $0x98] sm:$0xff] %v5351
        %10173 = vst [vmem:[%s676 + $0xa0] sm:$0xff] %v5355
        %10174 = vst [vmem:[%s676 + $0xa8] sm:$0xff] %v5357
        %10175 = vst [vmem:[%s676 + $0xb0] sm:$0xff] %v5359
        %10176 = vst [vmem:[%s676 + $0xb8] sm:$0xff] %v5361
        %10177 = vst [vmem:[%s676 + $0xc0] sm:$0xff] %v5365
        %10178 = vst [vmem:[%s676 + $0xc8] sm:$0xff] %v5367
        %10179 = vst [vmem:[%s676 + $0xd0] sm:$0xff] %v5369
        %10180 = vst [vmem:[%s676 + $0xd8] sm:$0xff] %v5371
        %10181 = vst [vmem:[%s676 + $0xe0] sm:$0xff] %v5375
        %10182 = vst [vmem:[%s676 + $0xe8] sm:$0xff] %v5377
        %10183 = vst [vmem:[%s676 + $0xf0] sm:$0xff] %v5379
        %10184 = vst [vmem:[%s676 + $0xf8] sm:$0xff] %v5381
        %s10185 = sand.u32 %s354, 1
        %s10186 = scalar_lea.sflag [#allocation4], %s10185
        %s10187 = sand.u32 %s354, 1
        %s10188 = smul.addr %s10187, 256
        %s10189 = scalar_lea.vmem [#allocation17], %s10188
        %s10190 = sand.u32 %s380, 1
        %s10191 = scalar_lea.sflag [#allocation19], %s10190
        %s10192 = sand.u32 %s380, 1
        %s10193 = smul.addr %s10192, 256
        %s10194 = scalar_lea.vmem [#allocation18], %s10193
        // Predicated region
        $region113: #{tpu_custom_call.1} parent=75 // pred_check
          %p10195 = pneg %p364
        $region114: #{tpu_custom_call.1} parent=75 // pred_check_branch
          %10197 = sbr.rel (%p10195) target = $region116
        $region115: #{tpu_custom_call.1} parent=75 // pred_region
          %s10198 = smul.u32 16, %s42
          %s10199 = ssub.s32 25, %s10198
          %p10200 = scmp.lt.s32.totalorder %s10199, 16
          %s10201 = scalar_select %p10200, %s10199, 16
          %s10202 = smul.u32 128, %s10201
          %s10203 = smul.u32 %s10202, 2
          %s10205 = ssub.s32 4096, %s10203
          %10206 = vsyncadd %s10186, %s10205
          %p10207 = scmp.ne.s32.totalorder 0, %s10203
          %s10208 = smul.addr %s10198, 2
          %s10209 = smul.addr %s10208, 128
          %s10210 = scalar_lea.hbm %s14, %s10209
          %s10211 = smul.u32 16, %s10201
          %s10212 = sshll.u32 %s10189, 4
          %s10213 = int_to_ptr.vmem [resolvable:$true] %s10212
          %s10214 = sshll.u32 %s10211, 4
          %10218 = dma.vmem_to_hbm [thread:$0]  (%p10207), %s10213, %s10214, %s10210, %s10186, 256, 256, 16
        $region116: #{tpu_custom_call.1} parent=75 // pred_fallthru
          _
        // Predicated region
        $region117: #{tpu_custom_call.1} parent=75 // pred_check
          %p10219 = pneg %p390
        $region118: #{tpu_custom_call.1} parent=75 // pred_check_branch
          %10221 = sbr.rel (%p10219) target = $region120
        $region119: #{tpu_custom_call.1} parent=75 // pred_region
          %s10222 = smul.u32 16, %s42
          %s10223 = ssub.s32 25, %s10222
          %p10224 = scmp.lt.s32.totalorder %s10223, 16
          %s10225 = scalar_select %p10224, %s10223, 16
          %s10226 = smul.u32 128, %s10225
          %s10227 = smul.u32 %s10226, 2
          %s10229 = ssub.s32 4096, %s10227
          %10230 = vsyncadd %s10191, %s10229
          %p10231 = scmp.ne.s32.totalorder 0, %s10227
          %s10232 = smul.addr %s10222, 2
          %s10233 = smul.addr %s10232, 128
          %s10234 = scalar_lea.hbm %s15, %s10233
          %s10235 = smul.u32 16, %s10225
          %s10236 = sshll.u32 %s10194, 4
          %s10237 = int_to_ptr.vmem [resolvable:$true] %s10236
          %s10238 = sshll.u32 %s10235, 4
          %10242 = dma.vmem_to_hbm [thread:$0]  (%p10231), %s10237, %s10238, %s10234, %s10191, 256, 256, 16
        $region120: #{tpu_custom_call.1} parent=75 // pred_fallthru
          _
      $region76: #{tpu_custom_call.1} parent=5 // pred_fallthru
        _
      %p10243 = scmp.le.s32.totalorder 2, %s37
      // Predicated region
      $region121: #{tpu_custom_call.1} parent=5 // pred_check
        %p10244 = pneg %p10243
      $region122: #{tpu_custom_call.1} parent=5 // pred_check_branch
        %10246 = sbr.rel (%p10244) target = $region124
      $region123: #{tpu_custom_call.1} parent=5 // pred_region
        %s10247 = ssub.s32 %s37, 2
        // Predicated region
        $region125: #{tpu_custom_call.1} parent=123 // pred_check
          %p10248 = pneg %p370
        $region126: #{tpu_custom_call.1} parent=123 // pred_check_branch
          %10250 = sbr.rel (%p10248) target = $region128
        $region127: #{tpu_custom_call.1} parent=123 // pred_region
          %s10251 = sand.u32 %s355, 1
          %s10252 = scalar_lea.sflag [#allocation4], %s10251
          %s10253 = sand.u32 %s355, 1
          %s10254 = smul.addr %s10253, 256
          %s10255 = scalar_lea.vmem [#allocation17], %s10254
          %10256 = dma.done %s10252, 4096
        $region128: #{tpu_custom_call.1} parent=123 // pred_fallthru
          _
        // Predicated region
        $region129: #{tpu_custom_call.1} parent=123 // pred_check
          %p10257 = pneg %p396
        $region130: #{tpu_custom_call.1} parent=123 // pred_check_branch
          %10259 = sbr.rel (%p10257) target = $region132
        $region131: #{tpu_custom_call.1} parent=123 // pred_region
          %s10260 = sand.u32 %s381, 1
          %s10261 = scalar_lea.sflag [#allocation19], %s10260
          %s10262 = sand.u32 %s381, 1
          %s10263 = smul.addr %s10262, 256
          %s10264 = scalar_lea.vmem [#allocation18], %s10263
          %10265 = dma.done %s10261, 4096
        $region132: #{tpu_custom_call.1} parent=123 // pred_fallthru
          _
      $region124: #{tpu_custom_call.1} parent=5 // pred_fallthru
        _
    $region6: #{tpu_custom_call.1} parent=1 // loop_footer
      %s41 = sadd.s32 1, %s37
    $region7: #{tpu_custom_call.1} parent=1 // loop_footer_branch
      %36 = sbr.rel target = $region3
    $region8: #{tpu_custom_call.1} parent=1 // loop_exit
      _
    %10266 = vsyncpa [#allocation3], 1
    %s10267 = scalar_lea.sflag [#allocation3], 1
    %10268 = vsyncpa %s10267, 1
    %10269 = vsyncpa [#allocation6], 1
    %s10270 = scalar_lea.sflag [#allocation6], 1
    %10271 = vsyncpa %s10270, 1
    %10272 = vsyncpa [#allocation9], 1
    %10273 = vsyncpa [#allocation12], 1
    %10274 = vsyncpa [#allocation15], 1
    %10275 = vsyncpa [#allocation4], 1
    %s10276 = scalar_lea.sflag [#allocation4], 1
    %10277 = vsyncpa %s10276, 1
    %10278 = vsyncpa [#allocation19], 1
    %s10279 = scalar_lea.sflag [#allocation19], 1
    %10280 = vsyncpa %s10279, 1

</llo_original>
